<compile_context>
chip_gen: v5e
topology: v5e:2x2
jax: 0.10.0
libtpu: 0.0.40
codegen_flags: <defaults>
</compile_context>

<pallas_src>
import math

import jax
import jax.numpy as jnp
from jax import lax
from jax.experimental import pallas as pl
from jax.experimental.pallas import tpu as pltpu

N_NODES = 32
N_FEAT = 1000
N_HID = 128
D_FLAT = N_NODES * N_HID      # 4096
D_FC1 = 512
D_FC2 = 256
N_CLS = 2
BN_EPS = 1e-5


# ---------------------------------------------------------------------------
# Fully fused kernel: corrcoef + GCN(2 layers) + flatten + MLP head + softmax.
# ---------------------------------------------------------------------------
def fused_kernel(x_ref, gc1_ref, gc2_ref,
                 hw1_ref, hb1_ref, hw2_ref, hb2_ref, hw3_ref, hb3_ref,
                 out_ref):
    x = x_ref[...]                                     # (bt, N, F) f32
    bt, n, f = x.shape
    h = gc1_ref.shape[-1]

    # ---- per-sample Pearson correlation (kept in f32 for precision) ----
    mean = jnp.mean(x, axis=-1, keepdims=True)         # (bt, N, 1)
    xc = x - mean                                      # centered rows
    # Centered Gram; its diagonal is the unnormalized per-row variance, so no
    # separate sum(xc*xc) pass and no xn = xc*rsqrt(d) materialization.
    g = jnp.einsum("bnf,bmf->bnm", xc, xc,
                   preferred_element_type=jnp.float32)            # (bt, N, N)
    eye = (lax.broadcasted_iota(jnp.int32, (1, n, n), 1) ==
           lax.broadcasted_iota(jnp.int32, (1, n, n), 2))
    gdiag = jnp.where(eye, g, 0.0)
    inv_row = lax.rsqrt(jnp.sum(gdiag, axis=2, keepdims=True))    # (bt, N, 1)
    inv_col = lax.rsqrt(jnp.sum(gdiag, axis=1, keepdims=True))    # (bt, 1, N)
    # Zero-variance rows give inf/NaN here, exactly like np.corrcoef.
    adj = jnp.clip(g * inv_row * inv_col, -1.0, 1.0)
    adj_b = adj.astype(jnp.bfloat16)                   # clipped to [-1,1] -> safe

    # ---- GCN layer 1: one big (bt*N, F) @ (F, H) projection on the MXU ----
    xb = x.reshape(bt * n, f).astype(jnp.bfloat16)
    s1 = jnp.dot(xb, gc1_ref[...], preferred_element_type=jnp.float32)
    s1 = s1.reshape(bt, n, h).astype(jnp.bfloat16)
    h1 = jnp.einsum("bnm,bmh->bnh", adj_b, s1,
                    preferred_element_type=jnp.float32)

    # ---- GCN layer 2 ----
    s2 = jnp.dot(h1.reshape(bt * n, h).astype(jnp.bfloat16), gc2_ref[...],
                 preferred_element_type=jnp.float32)
    s2 = s2.reshape(bt, n, h).astype(jnp.bfloat16)
    h2 = jnp.einsum("bnm,bmh->bnh", adj_b, s2,
                    preferred_element_type=jnp.float32)           # (bt, N, H)

    # ---- flatten (node-major, like nn.Flatten) + MLP head ----
    # Lane-dim concatenation of the 32 node slices avoids a lane-expanding
    # reshape; feeds a single K=4096 matmul against the resident head weights.
    h2_flat = jnp.concatenate([h2[:, i, :] for i in range(n)],
                              axis=-1).astype(jnp.bfloat16)       # (bt, N*H)
    # Dropout p=0.3: eval mode -> identity.  BN1/BN2 folded into w1/b1, w2/b2.
    z1 = jnp.dot(h2_flat, hw1_ref[...],
                 preferred_element_type=jnp.float32) + hb1_ref[...]   # (bt, 512)
    z2 = jnp.dot(z1.astype(jnp.bfloat16), hw2_ref[...],
                 preferred_element_type=jnp.float32) + hb2_ref[...]   # (bt, 256)
    logits = jnp.dot(z2, hw3_ref[...],
                     preferred_element_type=jnp.float32) + hb3_ref[...]  # (bt, 2)

    m = jnp.max(logits, axis=-1, keepdims=True)
    e = jnp.exp(logits - m)
    out_ref[...] = e / jnp.sum(e, axis=-1, keepdims=True)


# ---------------------------------------------------------------------------
# Per-generation tiling / VMEM plan.
# ---------------------------------------------------------------------------
def _device_kind():
    try:
        return jax.devices()[0].device_kind.lower()
    except Exception:
        return ""


def _plan(batch):
    """Pick (batch_tile, padded_batch, vmem_limit_bytes) for this TPU."""
    kind = _device_kind()
    if "v5" in kind:
        # 128 MiB physical VMEM, 16 MiB default scoped limit -> raise it.
        bt_max, vmem, two_tc = 16, 100 * 2**20, False
    elif "v7" in kind or "7x" in kind:
        # 64 MiB physical VMEM per TensorCore, 2 TensorCores per chip.
        bt_max, vmem, two_tc = 16, 48 * 2**20, True
    else:
        # v6e (and default): 128 MiB physical VMEM, single TensorCore.
        bt_max, vmem, two_tc = 32, 100 * 2**20, False

    # Dual-TensorCore parts need >= 2 grid steps so "parallel" can shard work.
    target = pl.cdiv(batch, 2) if (two_tc and batch >= 2) else batch
    bt = min(bt_max, target)
    if bt < batch and bt % 8 != 0:
        # Multi-step grid: keep the batch tile sublane-aligned (multiple of 8)
        # so the (bt, 2) output block satisfies TPU tiling rules.
        bt = max(8, (bt // 8) * 8)
    b_pad = bt * pl.cdiv(batch, bt)
    return bt, b_pad, vmem


def _fused_call(x_pad, p, bt, vmem_limit):
    b_pad = x_pad.shape[0]
    grid = (b_pad // bt,)
    head = p["head"]
    return pl.pallas_call(
        fused_kernel,
        out_shape=jax.ShapeDtypeStruct((b_pad, N_CLS), jnp.float32),
        grid=grid,
        in_specs=[
            pl.BlockSpec((bt, N_NODES, N_FEAT), lambda b: (b, 0, 0)),
            # Weights: constant index maps -> fetched once, resident in VMEM.
            pl.BlockSpec((N_FEAT, N_HID), lambda b: (0, 0)),
            pl.BlockSpec((N_HID, N_HID), lambda b: (0, 0)),
            pl.BlockSpec((D_FLAT, D_FC1), lambda b: (0, 0)),
            pl.BlockSpec((1, D_FC1), lambda b: (0, 0)),
            pl.BlockSpec((D_FC1, D_FC2), lambda b: (0, 0)),
            pl.BlockSpec((1, D_FC2), lambda b: (0, 0)),
            pl.BlockSpec((D_FC2, N_CLS), lambda b: (0, 0)),
            pl.BlockSpec((1, N_CLS), lambda b: (0, 0)),
        ],
        out_specs=pl.BlockSpec((bt, N_CLS), lambda b: (b, 0)),
        compiler_params=pltpu.CompilerParams(
            dimension_semantics=("parallel",),
            vmem_limit_bytes=vmem_limit),
    )(x_pad, p["gc1_w"], p["gc2_w"],
      head["w1"], head["b1"], head["w2"], head["b2"], head["w3"], head["b3"])


# ---------------------------------------------------------------------------
# Parameter init (matches the module's parameter SHAPES, deterministic) and
# kernel-ready preparation (eval-mode BN folding + bf16 cast of GEMM operands).
# ---------------------------------------------------------------------------
def _xavier_uniform(key, shape, gain):
    fan_in, fan_out = shape
    bound = gain * math.sqrt(6.0 / (fan_in + fan_out))
    return jax.random.uniform(key, shape, jnp.float32, -bound, bound)


def _linear(key, fan_in, fan_out):
    kw, kb = jax.random.split(key)
    bound = 1.0 / math.sqrt(fan_in)
    w = jax.random.uniform(kw, (fan_in, fan_out), jnp.float32, -bound, bound)
    b = jax.random.uniform(kb, (1, fan_out), jnp.float32, -bound, bound)
    return w, b


def init_params(key):
    keys = jax.random.split(key, 8)
    gain = math.sqrt(2.0)
    gc1_w = _xavier_uniform(keys[0], (N_FEAT, N_HID), gain)
    gc2_w = _xavier_uniform(keys[1], (N_HID, N_HID), gain)
    # NOTE: GraphConvolution defines a bias parameter but never uses it in
    # forward, so it is omitted here.

    w1, b1 = _linear(keys[2], D_FLAT, D_FC1)
    w2, b2 = _linear(keys[3], D_FC1, D_FC2)
    w3, b3 = _linear(keys[4], D_FC2, N_CLS)

    def bn(dim):
        return (jnp.ones((1, dim), jnp.float32),    # gamma
                jnp.zeros((1, dim), jnp.float32),   # beta
                jnp.zeros((1, dim), jnp.float32),   # running_mean
                jnp.ones((1, dim), jnp.float32))    # running_var

    g1, be1, m1, v1 = bn(D_FC1)
    g2, be2, m2, v2 = bn(D_FC2)

    return {
        "gc1_w": gc1_w, "gc2_w": gc2_w,
        "w1": w1, "b1": b1, "g1": g1, "be1": be1, "m1": m1, "v1": v1,
        "w2": w2, "b2": b2, "g2": g2, "be2": be2, "m2": m2, "v2": v2,
        "w3": w3, "b3": b3,
    }


def prepare_params(raw):
    """Fold eval-mode BatchNorm into the preceding Linear and cast the large
    GEMM operands to bf16 (f32 accumulation happens in-kernel)."""
    def fold(w, b, gamma, beta, mean, var):
        scale = gamma * lax.rsqrt(var + BN_EPS)          # (1, out)
        return w * scale, (b - mean) * scale + beta

    w1f, b1f = fold(raw["w1"], raw["b1"], raw["g1"], raw["be1"],
                    raw["m1"], raw["v1"])
    w2f, b2f = fold(raw["w2"], raw["b2"], raw["g2"], raw["be2"],
                    raw["m2"], raw["v2"])
    return {
        "gc1_w": raw["gc1_w"].astype(jnp.bfloat16),
        "gc2_w": raw["gc2_w"].astype(jnp.bfloat16),
        "head": {
            "w1": w1f.astype(jnp.bfloat16), "b1": b1f,
            "w2": w2f.astype(jnp.bfloat16), "b2": b2f,
            "w3": raw["w3"], "b3": raw["b3"],
        },
    }


# ---------------------------------------------------------------------------
# Full model forward (single fused pallas_call).
# ---------------------------------------------------------------------------
@jax.jit
def model_forward(x, params):
    batch = x.shape[0]
    bt, b_pad, vmem = _plan(batch)
    if b_pad != batch:
        # Zero-pad the batch so every block is full; padded rows are NaN
        # (zero-variance corrcoef rows) but per-sample-confined and sliced off.
        x = jnp.pad(x, ((0, b_pad - batch), (0, 0), (0, 0)))
    out = _fused_call(x, params, bt, vmem)
    return out[:batch]


if __name__ == "__main__":
    key = jax.random.PRNGKey(0)
    kx, kp = jax.random.split(key)

    B = 4
    x = jax.random.normal(kx, (B, N_NODES, N_FEAT), dtype=jnp.float32)
    raw_params = init_params(kp)
    params = prepare_params(raw_params)

    out = model_forward(x, params)
    jax.block_until_ready(out)

    assert out.shape == (B, N_CLS)
    assert bool(jnp.all(jnp.isfinite(out)))
    # softmax rows sum to 1
    assert bool(jnp.allclose(jnp.sum(out, axis=1), 1.0, atol=1e-5))
    print("KERNEL_OK")
</pallas_src>

<mosaic_0001>
module attributes {stable_mosaic.version = 11 : i64} {
  func.func @fused_kernel(%arg0: i32, %arg1: memref<4x32x1000xf32, #tpu.memory_space<vmem>>, %arg2: memref<1000x128xbf16, #tpu.memory_space<vmem>>, %arg3: memref<128x128xbf16, #tpu.memory_space<vmem>>, %arg4: memref<4096x512xbf16, #tpu.memory_space<vmem>>, %arg5: memref<1x512xf32, #tpu.memory_space<vmem>>, %arg6: memref<512x256xbf16, #tpu.memory_space<vmem>>, %arg7: memref<1x256xf32, #tpu.memory_space<vmem>>, %arg8: memref<256x2xf32, #tpu.memory_space<vmem>>, %arg9: memref<1x2xf32, #tpu.memory_space<vmem>>, %arg10: memref<4x2xf32, #tpu.memory_space<vmem>>) attributes {dimension_semantics = [#tpu.dimension_semantics<parallel>], iteration_bounds = array<i64: 1>, scalar_prefetch = 0 : i64, scratch_operands = 0 : i64, tpu.core_type = #tpu.core_type<tc>, window_params = [{transform_indices = @transform_0, window_bounds = array<i64: 4, 32, 1000>}, {pipeline_mode = #tpu.pipeline_mode<synchronous>, transform_indices = @transform_1, window_bounds = array<i64: 1000, 128>}, {pipeline_mode = #tpu.pipeline_mode<synchronous>, transform_indices = @transform_2, window_bounds = array<i64: 128, 128>}, {pipeline_mode = #tpu.pipeline_mode<synchronous>, transform_indices = @transform_3, window_bounds = array<i64: 4096, 512>}, {pipeline_mode = #tpu.pipeline_mode<synchronous>, transform_indices = @transform_4, window_bounds = array<i64: 1, 512>}, {pipeline_mode = #tpu.pipeline_mode<synchronous>, transform_indices = @transform_5, window_bounds = array<i64: 512, 256>}, {pipeline_mode = #tpu.pipeline_mode<synchronous>, transform_indices = @transform_6, window_bounds = array<i64: 1, 256>}, {pipeline_mode = #tpu.pipeline_mode<synchronous>, transform_indices = @transform_7, window_bounds = array<i64: 256, 2>}, {pipeline_mode = #tpu.pipeline_mode<synchronous>, transform_indices = @transform_8, window_bounds = array<i64: 1, 2>}, {transform_indices = @transform_9, window_bounds = array<i64: 4, 2>}]} {
    %c0 = arith.constant 0 : index
    %c0_0 = arith.constant 0 : index
    %c0_1 = arith.constant 0 : index
    %0 = vector.load %arg1[%c0, %c0_0, %c0_1] : memref<4x32x1000xf32, #tpu.memory_space<vmem>>, vector<4x32x1000xf32>
    %cst = arith.constant dense<0.000000e+00> : vector<4x32xf32>
    %1 = vector.multi_reduction <add>, %0, %cst [2] : vector<4x32x1000xf32> to vector<4x32xf32>
    %2 = vector.shape_cast %1 : vector<4x32xf32> to vector<4x32x1xf32>
    %cst_2 = arith.constant 1.000000e+03 : f32
    %3 = vector.broadcast %cst_2 : f32 to vector<4x32x1xf32>
    %4 = arith.divf %2, %3 : vector<4x32x1xf32>
    %5 = vector.broadcast %4 : vector<4x32x1xf32> to vector<4x32x1000xf32>
    %6 = arith.subf %0, %5 : vector<4x32x1000xf32>
    "tpu.trace_start"() <{level = 10 : i32, message = "bnf,bmf->bnm"}> : () -> ()
    %cst_3 = arith.constant dense<0.000000e+00> : vector<4x32x32xf32>
    %7 = tpu.matmul %6, %6, %cst_3 {dimension_numbers = #tpu.dot_dimension_numbers<[2], [2], [1], [1], [0, 0, 0, 1, 1, 1], [0], [0]>} : vector<4x32x1000xf32>, vector<4x32x1000xf32>, vector<4x32x32xf32> -> vector<4x32x32xf32>
    "tpu.trace_stop"() : () -> ()
    %8 = tpu.iota {dimensions = array<i32: 1>} : vector<1x32x32xi32>
    %9 = tpu.iota {dimensions = array<i32: 2>} : vector<1x32x32xi32>
    %10 = arith.cmpi eq, %8, %9 : vector<1x32x32xi32>
    %cst_4 = arith.constant 0.000000e+00 : f32
    %11 = vector.shape_cast %10 : vector<1x32x32xi1> to vector<1x32x32xi1>
    %12 = vector.broadcast %11 : vector<1x32x32xi1> to vector<4x32x32xi1>
    %13 = vector.broadcast %cst_4 : f32 to vector<4x32x32xf32>
    %14 = arith.select %12, %7, %13 : vector<4x32x32xi1>, vector<4x32x32xf32>
    %cst_5 = arith.constant dense<0.000000e+00> : vector<4x32xf32>
    %15 = vector.multi_reduction <add>, %14, %cst_5 [2] : vector<4x32x32xf32> to vector<4x32xf32>
    %16 = vector.shape_cast %15 : vector<4x32xf32> to vector<4x32x1xf32>
    %17 = math.rsqrt %16 : vector<4x32x1xf32>
    %cst_6 = arith.constant dense<0.000000e+00> : vector<4x32xf32>
    %18 = vector.multi_reduction <add>, %14, %cst_6 [1] : vector<4x32x32xf32> to vector<4x32xf32>
    %19 = vector.shape_cast %18 : vector<4x32xf32> to vector<4x1x32xf32>
    %20 = math.rsqrt %19 : vector<4x1x32xf32>
    %21 = vector.broadcast %17 : vector<4x32x1xf32> to vector<4x32x32xf32>
    %22 = arith.mulf %7, %21 : vector<4x32x32xf32>
    %23 = vector.broadcast %20 : vector<4x1x32xf32> to vector<4x32x32xf32>
    %24 = arith.mulf %22, %23 : vector<4x32x32xf32>
    %cst_7 = arith.constant -1.000000e+00 : f32
    %cst_8 = arith.constant 1.000000e+00 : f32
    %25 = vector.broadcast %cst_7 : f32 to vector<4x32x32xf32>
    %26 = arith.maximumf %25, %24 : vector<4x32x32xf32>
    %27 = vector.broadcast %cst_8 : f32 to vector<4x32x32xf32>
    %28 = arith.minimumf %27, %26 : vector<4x32x32xf32>
    %29 = arith.truncf %28 : vector<4x32x32xf32> to vector<4x32x32xbf16>
    %30 = vector.shape_cast %0 : vector<4x32x1000xf32> to vector<128x1000xf32>
    %31 = arith.truncf %30 : vector<128x1000xf32> to vector<128x1000xbf16>
    %c0_9 = arith.constant 0 : index
    %c0_10 = arith.constant 0 : index
    %32 = vector.load %arg2[%c0_9, %c0_10] : memref<1000x128xbf16, #tpu.memory_space<vmem>>, vector<1000x128xbf16>
    %cst_11 = arith.constant dense<0.000000e+00> : vector<128x128xf32>
    %33 = tpu.matmul %31, %32, %cst_11 {dimension_numbers = #tpu.dot_dimension_numbers<[1], [0], [0], [1], [0, 0, 1, 1], [], []>} : vector<128x1000xbf16>, vector<1000x128xbf16>, vector<128x128xf32> -> vector<128x128xf32>
    %34 = vector.shape_cast %33 : vector<128x128xf32> to vector<4x32x128xf32>
    %35 = arith.truncf %34 : vector<4x32x128xf32> to vector<4x32x128xbf16>
    "tpu.trace_start"() <{level = 10 : i32, message = "bnm,bmh->bnh"}> : () -> ()
    %cst_12 = arith.constant dense<0.000000e+00> : vector<4x32x128xf32>
    %36 = tpu.matmul %29, %35, %cst_12 {dimension_numbers = #tpu.dot_dimension_numbers<[2], [1], [1], [2], [0, 0, 0, 1, 1, 2], [0], [0]>} : vector<4x32x32xbf16>, vector<4x32x128xbf16>, vector<4x32x128xf32> -> vector<4x32x128xf32>
    "tpu.trace_stop"() : () -> ()
    %37 = vector.shape_cast %36 : vector<4x32x128xf32> to vector<128x128xf32>
    %38 = arith.truncf %37 : vector<128x128xf32> to vector<128x128xbf16>
    %c0_13 = arith.constant 0 : index
    %c0_14 = arith.constant 0 : index
    %39 = vector.load %arg3[%c0_13, %c0_14] : memref<128x128xbf16, #tpu.memory_space<vmem>>, vector<128x128xbf16>
    %cst_15 = arith.constant dense<0.000000e+00> : vector<128x128xf32>
    %40 = tpu.matmul %38, %39, %cst_15 {dimension_numbers = #tpu.dot_dimension_numbers<[1], [0], [0], [1], [0, 0, 1, 1], [], []>} : vector<128x128xbf16>, vector<128x128xbf16>, vector<128x128xf32> -> vector<128x128xf32>
    %41 = vector.shape_cast %40 : vector<128x128xf32> to vector<4x32x128xf32>
    %42 = arith.truncf %41 : vector<4x32x128xf32> to vector<4x32x128xbf16>
    "tpu.trace_start"() <{level = 10 : i32, message = "bnm,bmh->bnh"}> : () -> ()
    %cst_16 = arith.constant dense<0.000000e+00> : vector<4x32x128xf32>
    %43 = tpu.matmul %29, %42, %cst_16 {dimension_numbers = #tpu.dot_dimension_numbers<[2], [1], [1], [2], [0, 0, 0, 1, 1, 2], [0], [0]>} : vector<4x32x32xbf16>, vector<4x32x128xbf16>, vector<4x32x128xf32> -> vector<4x32x128xf32>
    "tpu.trace_stop"() : () -> ()
    %44 = vector.extract_strided_slice %43 {offsets = [0, 0, 0], sizes = [4, 1, 128], strides = [1, 1, 1]} : vector<4x32x128xf32> to vector<4x1x128xf32>
    %45 = vector.shape_cast %44 : vector<4x1x128xf32> to vector<4x128xf32>
    %46 = vector.extract_strided_slice %43 {offsets = [0, 1, 0], sizes = [4, 1, 128], strides = [1, 1, 1]} : vector<4x32x128xf32> to vector<4x1x128xf32>
    %47 = vector.shape_cast %46 : vector<4x1x128xf32> to vector<4x128xf32>
    %48 = vector.extract_strided_slice %43 {offsets = [0, 2, 0], sizes = [4, 1, 128], strides = [1, 1, 1]} : vector<4x32x128xf32> to vector<4x1x128xf32>
    %49 = vector.shape_cast %48 : vector<4x1x128xf32> to vector<4x128xf32>
    %50 = vector.extract_strided_slice %43 {offsets = [0, 3, 0], sizes = [4, 1, 128], strides = [1, 1, 1]} : vector<4x32x128xf32> to vector<4x1x128xf32>
    %51 = vector.shape_cast %50 : vector<4x1x128xf32> to vector<4x128xf32>
    %52 = vector.extract_strided_slice %43 {offsets = [0, 4, 0], sizes = [4, 1, 128], strides = [1, 1, 1]} : vector<4x32x128xf32> to vector<4x1x128xf32>
    %53 = vector.shape_cast %52 : vector<4x1x128xf32> to vector<4x128xf32>
    %54 = vector.extract_strided_slice %43 {offsets = [0, 5, 0], sizes = [4, 1, 128], strides = [1, 1, 1]} : vector<4x32x128xf32> to vector<4x1x128xf32>
    %55 = vector.shape_cast %54 : vector<4x1x128xf32> to vector<4x128xf32>
    %56 = vector.extract_strided_slice %43 {offsets = [0, 6, 0], sizes = [4, 1, 128], strides = [1, 1, 1]} : vector<4x32x128xf32> to vector<4x1x128xf32>
    %57 = vector.shape_cast %56 : vector<4x1x128xf32> to vector<4x128xf32>
    %58 = vector.extract_strided_slice %43 {offsets = [0, 7, 0], sizes = [4, 1, 128], strides = [1, 1, 1]} : vector<4x32x128xf32> to vector<4x1x128xf32>
    %59 = vector.shape_cast %58 : vector<4x1x128xf32> to vector<4x128xf32>
    %60 = vector.extract_strided_slice %43 {offsets = [0, 8, 0], sizes = [4, 1, 128], strides = [1, 1, 1]} : vector<4x32x128xf32> to vector<4x1x128xf32>
    %61 = vector.shape_cast %60 : vector<4x1x128xf32> to vector<4x128xf32>
    %62 = vector.extract_strided_slice %43 {offsets = [0, 9, 0], sizes = [4, 1, 128], strides = [1, 1, 1]} : vector<4x32x128xf32> to vector<4x1x128xf32>
    %63 = vector.shape_cast %62 : vector<4x1x128xf32> to vector<4x128xf32>
    %64 = vector.extract_strided_slice %43 {offsets = [0, 10, 0], sizes = [4, 1, 128], strides = [1, 1, 1]} : vector<4x32x128xf32> to vector<4x1x128xf32>
    %65 = vector.shape_cast %64 : vector<4x1x128xf32> to vector<4x128xf32>
    %66 = vector.extract_strided_slice %43 {offsets = [0, 11, 0], sizes = [4, 1, 128], strides = [1, 1, 1]} : vector<4x32x128xf32> to vector<4x1x128xf32>
    %67 = vector.shape_cast %66 : vector<4x1x128xf32> to vector<4x128xf32>
    %68 = vector.extract_strided_slice %43 {offsets = [0, 12, 0], sizes = [4, 1, 128], strides = [1, 1, 1]} : vector<4x32x128xf32> to vector<4x1x128xf32>
    %69 = vector.shape_cast %68 : vector<4x1x128xf32> to vector<4x128xf32>
    %70 = vector.extract_strided_slice %43 {offsets = [0, 13, 0], sizes = [4, 1, 128], strides = [1, 1, 1]} : vector<4x32x128xf32> to vector<4x1x128xf32>
    %71 = vector.shape_cast %70 : vector<4x1x128xf32> to vector<4x128xf32>
    %72 = vector.extract_strided_slice %43 {offsets = [0, 14, 0], sizes = [4, 1, 128], strides = [1, 1, 1]} : vector<4x32x128xf32> to vector<4x1x128xf32>
    %73 = vector.shape_cast %72 : vector<4x1x128xf32> to vector<4x128xf32>
    %74 = vector.extract_strided_slice %43 {offsets = [0, 15, 0], sizes = [4, 1, 128], strides = [1, 1, 1]} : vector<4x32x128xf32> to vector<4x1x128xf32>
    %75 = vector.shape_cast %74 : vector<4x1x128xf32> to vector<4x128xf32>
    %76 = vector.extract_strided_slice %43 {offsets = [0, 16, 0], sizes = [4, 1, 128], strides = [1, 1, 1]} : vector<4x32x128xf32> to vector<4x1x128xf32>
    %77 = vector.shape_cast %76 : vector<4x1x128xf32> to vector<4x128xf32>
    %78 = vector.extract_strided_slice %43 {offsets = [0, 17, 0], sizes = [4, 1, 128], strides = [1, 1, 1]} : vector<4x32x128xf32> to vector<4x1x128xf32>
    %79 = vector.shape_cast %78 : vector<4x1x128xf32> to vector<4x128xf32>
    %80 = vector.extract_strided_slice %43 {offsets = [0, 18, 0], sizes = [4, 1, 128], strides = [1, 1, 1]} : vector<4x32x128xf32> to vector<4x1x128xf32>
    %81 = vector.shape_cast %80 : vector<4x1x128xf32> to vector<4x128xf32>
    %82 = vector.extract_strided_slice %43 {offsets = [0, 19, 0], sizes = [4, 1, 128], strides = [1, 1, 1]} : vector<4x32x128xf32> to vector<4x1x128xf32>
    %83 = vector.shape_cast %82 : vector<4x1x128xf32> to vector<4x128xf32>
    %84 = vector.extract_strided_slice %43 {offsets = [0, 20, 0], sizes = [4, 1, 128], strides = [1, 1, 1]} : vector<4x32x128xf32> to vector<4x1x128xf32>
    %85 = vector.shape_cast %84 : vector<4x1x128xf32> to vector<4x128xf32>
    %86 = vector.extract_strided_slice %43 {offsets = [0, 21, 0], sizes = [4, 1, 128], strides = [1, 1, 1]} : vector<4x32x128xf32> to vector<4x1x128xf32>
    %87 = vector.shape_cast %86 : vector<4x1x128xf32> to vector<4x128xf32>
    %88 = vector.extract_strided_slice %43 {offsets = [0, 22, 0], sizes = [4, 1, 128], strides = [1, 1, 1]} : vector<4x32x128xf32> to vector<4x1x128xf32>
    %89 = vector.shape_cast %88 : vector<4x1x128xf32> to vector<4x128xf32>
    %90 = vector.extract_strided_slice %43 {offsets = [0, 23, 0], sizes = [4, 1, 128], strides = [1, 1, 1]} : vector<4x32x128xf32> to vector<4x1x128xf32>
    %91 = vector.shape_cast %90 : vector<4x1x128xf32> to vector<4x128xf32>
    %92 = vector.extract_strided_slice %43 {offsets = [0, 24, 0], sizes = [4, 1, 128], strides = [1, 1, 1]} : vector<4x32x128xf32> to vector<4x1x128xf32>
    %93 = vector.shape_cast %92 : vector<4x1x128xf32> to vector<4x128xf32>
    %94 = vector.extract_strided_slice %43 {offsets = [0, 25, 0], sizes = [4, 1, 128], strides = [1, 1, 1]} : vector<4x32x128xf32> to vector<4x1x128xf32>
    %95 = vector.shape_cast %94 : vector<4x1x128xf32> to vector<4x128xf32>
    %96 = vector.extract_strided_slice %43 {offsets = [0, 26, 0], sizes = [4, 1, 128], strides = [1, 1, 1]} : vector<4x32x128xf32> to vector<4x1x128xf32>
    %97 = vector.shape_cast %96 : vector<4x1x128xf32> to vector<4x128xf32>
    %98 = vector.extract_strided_slice %43 {offsets = [0, 27, 0], sizes = [4, 1, 128], strides = [1, 1, 1]} : vector<4x32x128xf32> to vector<4x1x128xf32>
    %99 = vector.shape_cast %98 : vector<4x1x128xf32> to vector<4x128xf32>
    %100 = vector.extract_strided_slice %43 {offsets = [0, 28, 0], sizes = [4, 1, 128], strides = [1, 1, 1]} : vector<4x32x128xf32> to vector<4x1x128xf32>
    %101 = vector.shape_cast %100 : vector<4x1x128xf32> to vector<4x128xf32>
    %102 = vector.extract_strided_slice %43 {offsets = [0, 29, 0], sizes = [4, 1, 128], strides = [1, 1, 1]} : vector<4x32x128xf32> to vector<4x1x128xf32>
    %103 = vector.shape_cast %102 : vector<4x1x128xf32> to vector<4x128xf32>
    %104 = vector.extract_strided_slice %43 {offsets = [0, 30, 0], sizes = [4, 1, 128], strides = [1, 1, 1]} : vector<4x32x128xf32> to vector<4x1x128xf32>
    %105 = vector.shape_cast %104 : vector<4x1x128xf32> to vector<4x128xf32>
    %106 = vector.extract_strided_slice %43 {offsets = [0, 31, 0], sizes = [4, 1, 128], strides = [1, 1, 1]} : vector<4x32x128xf32> to vector<4x1x128xf32>
    %107 = vector.shape_cast %106 : vector<4x1x128xf32> to vector<4x128xf32>
    %108 = tpu.concatenate %45, %47, %49, %51, %53, %55, %57, %59, %61, %63, %65, %67, %69, %71, %73, %75 in 1 : vector<4x128xf32>, vector<4x128xf32>, vector<4x128xf32>, vector<4x128xf32>, vector<4x128xf32>, vector<4x128xf32>, vector<4x128xf32>, vector<4x128xf32>, vector<4x128xf32>, vector<4x128xf32>, vector<4x128xf32>, vector<4x128xf32>, vector<4x128xf32>, vector<4x128xf32>, vector<4x128xf32>, vector<4x128xf32> -> vector<4x2048xf32>
    %109 = tpu.concatenate %77, %79, %81, %83, %85, %87, %89, %91, %93, %95, %97, %99, %101, %103, %105, %107 in 1 : vector<4x128xf32>, vector<4x128xf32>, vector<4x128xf32>, vector<4x128xf32>, vector<4x128xf32>, vector<4x128xf32>, vector<4x128xf32>, vector<4x128xf32>, vector<4x128xf32>, vector<4x128xf32>, vector<4x128xf32>, vector<4x128xf32>, vector<4x128xf32>, vector<4x128xf32>, vector<4x128xf32>, vector<4x128xf32> -> vector<4x2048xf32>
    %110 = tpu.concatenate %108, %109 in 1 : vector<4x2048xf32>, vector<4x2048xf32> -> vector<4x4096xf32>
    %111 = arith.truncf %110 : vector<4x4096xf32> to vector<4x4096xbf16>
    %c0_17 = arith.constant 0 : index
    %c0_18 = arith.constant 0 : index
    %112 = vector.load %arg4[%c0_17, %c0_18] : memref<4096x512xbf16, #tpu.memory_space<vmem>>, vector<4096x512xbf16>
    %cst_19 = arith.constant dense<0.000000e+00> : vector<4x512xf32>
    %113 = tpu.matmul %111, %112, %cst_19 {dimension_numbers = #tpu.dot_dimension_numbers<[1], [0], [0], [1], [0, 0, 1, 1], [], []>} : vector<4x4096xbf16>, vector<4096x512xbf16>, vector<4x512xf32> -> vector<4x512xf32>
    %c0_20 = arith.constant 0 : index
    %c0_21 = arith.constant 0 : index
    %114 = vector.load %arg5[%c0_20, %c0_21] : memref<1x512xf32, #tpu.memory_space<vmem>>, vector<1x512xf32>
    %115 = vector.broadcast %114 : vector<1x512xf32> to vector<4x512xf32>
    %116 = arith.addf %113, %115 : vector<4x512xf32>
    %117 = arith.truncf %116 : vector<4x512xf32> to vector<4x512xbf16>
    %c0_22 = arith.constant 0 : index
    %c0_23 = arith.constant 0 : index
    %118 = vector.load %arg6[%c0_22, %c0_23] : memref<512x256xbf16, #tpu.memory_space<vmem>>, vector<512x256xbf16>
    %cst_24 = arith.constant dense<0.000000e+00> : vector<4x256xf32>
    %119 = tpu.matmul %117, %118, %cst_24 {dimension_numbers = #tpu.dot_dimension_numbers<[1], [0], [0], [1], [0, 0, 1, 1], [], []>} : vector<4x512xbf16>, vector<512x256xbf16>, vector<4x256xf32> -> vector<4x256xf32>
    %c0_25 = arith.constant 0 : index
    %c0_26 = arith.constant 0 : index
    %120 = vector.load %arg7[%c0_25, %c0_26] : memref<1x256xf32, #tpu.memory_space<vmem>>, vector<1x256xf32>
    %121 = vector.broadcast %120 : vector<1x256xf32> to vector<4x256xf32>
    %122 = arith.addf %119, %121 : vector<4x256xf32>
    %c0_27 = arith.constant 0 : index
    %c0_28 = arith.constant 0 : index
    %123 = vector.load %arg8[%c0_27, %c0_28] : memref<256x2xf32, #tpu.memory_space<vmem>>, vector<256x2xf32>
    %cst_29 = arith.constant dense<0.000000e+00> : vector<4x2xf32>
    %124 = tpu.matmul %122, %123, %cst_29 {dimension_numbers = #tpu.dot_dimension_numbers<[1], [0], [0], [1], [0, 0, 1, 1], [], []>} : vector<4x256xf32>, vector<256x2xf32>, vector<4x2xf32> -> vector<4x2xf32>
    %c0_30 = arith.constant 0 : index
    %c0_31 = arith.constant 0 : index
    %125 = vector.load %arg9[%c0_30, %c0_31] : memref<1x2xf32, #tpu.memory_space<vmem>>, vector<1x2xf32>
    %126 = vector.broadcast %125 : vector<1x2xf32> to vector<4x2xf32>
    %127 = arith.addf %124, %126 : vector<4x2xf32>
    %cst_32 = arith.constant dense<0xFF800000> : vector<4xf32>
    %128 = vector.multi_reduction <maximumf>, %127, %cst_32 [1] : vector<4x2xf32> to vector<4xf32>
    %129 = vector.shape_cast %128 : vector<4xf32> to vector<4x1xf32>
    %130 = vector.broadcast %129 : vector<4x1xf32> to vector<4x2xf32>
    %131 = arith.subf %127, %130 : vector<4x2xf32>
    %132 = math.exp %131 : vector<4x2xf32>
    %cst_33 = arith.constant dense<0.000000e+00> : vector<4xf32>
    %133 = vector.multi_reduction <add>, %132, %cst_33 [1] : vector<4x2xf32> to vector<4xf32>
    %134 = vector.shape_cast %133 : vector<4xf32> to vector<4x1xf32>
    %135 = vector.broadcast %134 : vector<4x1xf32> to vector<4x2xf32>
    %136 = arith.divf %132, %135 : vector<4x2xf32>
    %c0_34 = arith.constant 0 : index
    %c0_35 = arith.constant 0 : index
    %137 = vector.load %arg10[%c0_34, %c0_35] : memref<4x2xf32, #tpu.memory_space<vmem>>, vector<4x2xf32>
    tpu.vector_store %arg10[%c0_34, %c0_35], %136 {strides = array<i32>} : memref<4x2xf32, #tpu.memory_space<vmem>>, vector<4x2xf32>,
    return
  }
  func.func @transform_0(%arg0: i32) -> (i32, i32, i32) {
    %c0_i32 = arith.constant 0 : i32
    %c0_i32_0 = arith.constant 0 : i32
    %c0_i32_1 = arith.constant 0 : i32
    return %arg0, %c0_i32, %c0_i32_0 : i32, i32, i32
  }
  func.func @transform_1(%arg0: i32) -> (i32, i32) {
    %c0_i32 = arith.constant 0 : i32
    %c0_i32_0 = arith.constant 0 : i32
    %c0_i32_1 = arith.constant 0 : i32
    return %c0_i32, %c0_i32_0 : i32, i32
  }
  func.func @transform_2(%arg0: i32) -> (i32, i32) {
    %c0_i32 = arith.constant 0 : i32
    %c0_i32_0 = arith.constant 0 : i32
    %c0_i32_1 = arith.constant 0 : i32
    return %c0_i32, %c0_i32_0 : i32, i32
  }
  func.func @transform_3(%arg0: i32) -> (i32, i32) {
    %c0_i32 = arith.constant 0 : i32
    %c0_i32_0 = arith.constant 0 : i32
    %c0_i32_1 = arith.constant 0 : i32
    return %c0_i32, %c0_i32_0 : i32, i32
  }
  func.func @transform_4(%arg0: i32) -> (i32, i32) {
    %c0_i32 = arith.constant 0 : i32
    %c0_i32_0 = arith.constant 0 : i32
    %c0_i32_1 = arith.constant 0 : i32
    return %c0_i32, %c0_i32_0 : i32, i32
  }
  func.func @transform_5(%arg0: i32) -> (i32, i32) {
    %c0_i32 = arith.constant 0 : i32
    %c0_i32_0 = arith.constant 0 : i32
    %c0_i32_1 = arith.constant 0 : i32
    return %c0_i32, %c0_i32_0 : i32, i32
  }
  func.func @transform_6(%arg0: i32) -> (i32, i32) {
    %c0_i32 = arith.constant 0 : i32
    %c0_i32_0 = arith.constant 0 : i32
    %c0_i32_1 = arith.constant 0 : i32
    return %c0_i32, %c0_i32_0 : i32, i32
  }
  func.func @transform_7(%arg0: i32) -> (i32, i32) {
    %c0_i32 = arith.constant 0 : i32
    %c0_i32_0 = arith.constant 0 : i32
    %c0_i32_1 = arith.constant 0 : i32
    return %c0_i32, %c0_i32_0 : i32, i32
  }
  func.func @transform_8(%arg0: i32) -> (i32, i32) {
    %c0_i32 = arith.constant 0 : i32
    %c0_i32_0 = arith.constant 0 : i32
    %c0_i32_1 = arith.constant 0 : i32
    return %c0_i32, %c0_i32_0 : i32, i32
  }
  func.func @transform_9(%arg0: i32) -> (i32, i32) {
    %c0_i32 = arith.constant 0 : i32
    %c0_i32_0 = arith.constant 0 : i32
    return %arg0, %c0_i32 : i32, i32
  }
}

</mosaic_0001>

<llo_original>
// kernel: model_forward.1
$region0: #{model_forward.1}
  #allocation0 [shape = 'u32[]', space=smem, size = 0x4, offset = 0x4, fixed_abs, tag = 'smem constant byte address 0x4 - core index']
  #allocation1 [shape = 'u32[72,128]{1,0:T(1,128)}', space=vmem, size = 0x9000, scoped, tag = 'internal scratch']
  %s0 = inlined_call_operand.hbm [shape: f32[4,32,1000], index: 0, kind: input, shape index: {}]
  %s1 = inlined_call_operand.hbm [shape: bf16[1000,128], index: 1, kind: input, shape index: {}]
  %s2 = inlined_call_operand.hbm [shape: bf16[128,128], index: 2, kind: input, shape index: {}]
  %s3 = inlined_call_operand.hbm [shape: bf16[4096,512], index: 3, kind: input, shape index: {}]
  %s4 = inlined_call_operand.hbm [shape: f32[1,512], index: 4, kind: input, shape index: {}]
  %s5 = inlined_call_operand.hbm [shape: bf16[512,256], index: 5, kind: input, shape index: {}]
  %s6 = inlined_call_operand.hbm [shape: f32[1,256], index: 6, kind: input, shape index: {}]
  %s7 = inlined_call_operand.vmem [shape: f32[256,2], index: 7, kind: input, shape index: {}]
  %s8 = inlined_call_operand.hbm [shape: f32[1,2], index: 8, kind: input, shape index: {}]
  %s9 = inlined_call_operand.vmem [shape: f32[4,2], index: 9, kind: output, shape index: {}]
  %s10 = sld [smem:[#allocation0]]
  $region78: #{model_forward.1} parent=0
    _
  %s12 = ssub.s32 1, %s10
  %s13 = scalar_select 0, %s12, %s10
  $region1: #{model_forward.1} parent=0
    #allocation2 [shape = 'u8[524288]{0}', space=vmem, size = 0x80000, scoped, tag = 'input window, operand 0, single buffered']
    #allocation3 [shape = 's32[1]{0}', space=sflag, size = 0x4, scoped, tag = 'scoped memory for model_forward.1']
    #allocation4 [shape = 'u8[256000]{0}', space=vmem, size = 0x3e800, scoped, tag = 'input window, operand 1, single buffered']
    #allocation5 [shape = 's32[1]{0}', space=sflag, size = 0x4, scoped, tag = 'scoped memory for model_forward.1']
    #allocation6 [shape = 'u8[32768]{0}', space=vmem, size = 0x8000, scoped, tag = 'input window, operand 2, single buffered']
    #allocation7 [shape = 'u8[4194304]{0}', space=vmem, size = 0x400000, scoped, tag = 'input window, operand 3, single buffered']
    #allocation8 [shape = 's32[1]{0}', space=sflag, size = 0x4, scoped, tag = 'scoped memory for model_forward.1']
    #allocation9 [shape = 'u8[2048]{0}', space=vmem, size = 0x800, scoped, tag = 'input window, operand 4, single buffered']
    #allocation10 [shape = 'u8[262144]{0}', space=vmem, size = 0x40000, scoped, tag = 'input window, operand 5, single buffered']
    #allocation11 [shape = 's32[1]{0}', space=sflag, size = 0x4, scoped, tag = 'scoped memory for model_forward.1']
    #allocation12 [shape = 'u8[1024]{0}', space=vmem, size = 0x400, scoped, tag = 'input window, operand 6, single buffered']
    #allocation13 [shape = 'u8[512]{0}', space=vmem, size = 0x400, scoped, tag = 'input window, operand 8, single buffered']
    #allocation14 [shape = 's32[1]{0}', space=sflag, size = 0x4, scoped, tag = 'scoped memory for model_forward.1']
    %14 = vsyncpa [#allocation3], 0
    %15 = vsyncpa [#allocation5], 0
    %16 = vsyncpa [#allocation8], 0
    %17 = vsyncpa [#allocation11], 0
    %18 = vsyncpa [#allocation14], 0
    // Predicated region
    $region2: #{model_forward.1} parent=1 // pred_check
      _
    $region3: #{model_forward.1} parent=1 // pred_check_branch
      %20 = sbr.rel (0) target = $region5
    $region4: #{model_forward.1} parent=1 // pred_region
      %22 = vsyncadd [#allocation3], 0
      %s23 = sshll.u32 %s0, 4
      %s24 = int_to_ptr.hbm [resolvable:$true] %s23
      %s25 = sshll.u32 [#allocation2], 4
      %s26 = int_to_ptr.vmem [resolvable:$true] %s25
      %31 = dma.hbm_to_vmem [thread:$0]  %s24, 16384, %s26, [#allocation3], 1024, 1024, 64
    $region5: #{model_forward.1} parent=1 // pred_fallthru
      _
    // Predicated region
    $region6: #{model_forward.1} parent=1 // pred_check
      _
    $region7: #{model_forward.1} parent=1 // pred_check_branch
      %33 = sbr.rel (0) target = $region9
    $region8: #{model_forward.1} parent=1 // pred_region
      %35 = vsyncadd [#allocation5], 0
      %s36 = sshll.u32 %s1, 4
      %s37 = int_to_ptr.hbm [resolvable:$true] %s36
      %s38 = sshll.u32 [#allocation4], 4
      %s39 = int_to_ptr.vmem [resolvable:$true] %s38
      %44 = dma.hbm_to_vmem [thread:$0]  %s37, 8000, %s39, [#allocation5], 64, 64, 4
    $region9: #{model_forward.1} parent=1 // pred_fallthru
      _
    // Predicated region
    $region10: #{model_forward.1} parent=1 // pred_check
      _
    $region11: #{model_forward.1} parent=1 // pred_check_branch
      %46 = sbr.rel (0) target = $region13
    $region12: #{model_forward.1} parent=1 // pred_region
      %48 = vsyncadd [#allocation5], 0
      %s49 = sshll.u32 %s2, 4
      %s50 = int_to_ptr.hbm [resolvable:$true] %s49
      %s51 = sshll.u32 [#allocation6], 4
      %s52 = int_to_ptr.vmem [resolvable:$true] %s51
      %57 = dma.hbm_to_vmem [thread:$0]  %s50, 1024, %s52, [#allocation5], 64, 64, 4
    $region13: #{model_forward.1} parent=1 // pred_fallthru
      _
    // Predicated region
    $region14: #{model_forward.1} parent=1 // pred_check
      _
    $region15: #{model_forward.1} parent=1 // pred_check_branch
      %59 = sbr.rel (0) target = $region17
    $region16: #{model_forward.1} parent=1 // pred_region
      %61 = vsyncadd [#allocation8], 0
      %s62 = sshll.u32 %s3, 4
      %s63 = int_to_ptr.hbm [resolvable:$true] %s62
      %s64 = sshll.u32 [#allocation7], 4
      %s65 = int_to_ptr.vmem [resolvable:$true] %s64
      %70 = dma.hbm_to_vmem [thread:$0]  %s63, 131072, %s65, [#allocation8], 256, 256, 16
    $region17: #{model_forward.1} parent=1 // pred_fallthru
      _
    // Predicated region
    $region18: #{model_forward.1} parent=1 // pred_check
      _
    $region19: #{model_forward.1} parent=1 // pred_check_branch
      %72 = sbr.rel (0) target = $region21
    $region20: #{model_forward.1} parent=1 // pred_region
      %74 = vsyncadd [#allocation8], 0
      %s76 = sshll.u32 %s4, 4
      %s77 = int_to_ptr.hbm [resolvable:$true] %s76
      %s78 = sshll.u32 [#allocation9], 4
      %s79 = int_to_ptr.vmem [resolvable:$true] %s78
      %81 = dma.hbm_to_vmem [thread:$0]  %s77, 64, %s79, [#allocation8]
    $region21: #{model_forward.1} parent=1 // pred_fallthru
      _
    // Predicated region
    $region22: #{model_forward.1} parent=1 // pred_check
      _
    $region23: #{model_forward.1} parent=1 // pred_check_branch
      %83 = sbr.rel (0) target = $region25
    $region24: #{model_forward.1} parent=1 // pred_region
      %85 = vsyncadd [#allocation11], 0
      %s86 = sshll.u32 %s5, 4
      %s87 = int_to_ptr.hbm [resolvable:$true] %s86
      %s88 = sshll.u32 [#allocation10], 4
      %s89 = int_to_ptr.vmem [resolvable:$true] %s88
      %94 = dma.hbm_to_vmem [thread:$0]  %s87, 8192, %s89, [#allocation11], 128, 128, 8
    $region25: #{model_forward.1} parent=1 // pred_fallthru
      _
    // Predicated region
    $region26: #{model_forward.1} parent=1 // pred_check
      _
    $region27: #{model_forward.1} parent=1 // pred_check_branch
      %96 = sbr.rel (0) target = $region29
    $region28: #{model_forward.1} parent=1 // pred_region
      %98 = vsyncadd [#allocation11], 0
      %s100 = sshll.u32 %s6, 4
      %s101 = int_to_ptr.hbm [resolvable:$true] %s100
      %s102 = sshll.u32 [#allocation12], 4
      %s103 = int_to_ptr.vmem [resolvable:$true] %s102
      %105 = dma.hbm_to_vmem [thread:$0]  %s101, 32, %s103, [#allocation11]
    $region29: #{model_forward.1} parent=1 // pred_fallthru
      _
    // Predicated region
    $region30: #{model_forward.1} parent=1 // pred_check
      _
    $region31: #{model_forward.1} parent=1 // pred_check_branch
      %107 = sbr.rel (0) target = $region33
    $region32: #{model_forward.1} parent=1 // pred_region
      _
    $region33: #{model_forward.1} parent=1 // pred_fallthru
      _
    // Predicated region
    $region34: #{model_forward.1} parent=1 // pred_check
      _
    $region35: #{model_forward.1} parent=1 // pred_check_branch
      %109 = sbr.rel (0) target = $region37
    $region36: #{model_forward.1} parent=1 // pred_region
      %111 = vsyncadd [#allocation14], 0
      %s113 = sshll.u32 %s8, 4
      %s114 = int_to_ptr.hbm [resolvable:$true] %s113
      %s115 = sshll.u32 [#allocation13], 4
      %s116 = int_to_ptr.vmem [resolvable:$true] %s115
      %118 = dma.hbm_to_vmem [thread:$0]  %s114, 16, %s116, [#allocation14]
    $region37: #{model_forward.1} parent=1 // pred_fallthru
      _
    // Predicated region
    $region38: #{model_forward.1} parent=1 // pred_check
      _
    $region39: #{model_forward.1} parent=1 // pred_check_branch
      %120 = sbr.rel (0) target = $region41
    $region40: #{model_forward.1} parent=1 // pred_region
      %122 = dma.done [#allocation3], 16384
    $region41: #{model_forward.1} parent=1 // pred_fallthru
      _
    // Predicated region
    $region42: #{model_forward.1} parent=1 // pred_check
      _
    $region43: #{model_forward.1} parent=1 // pred_check_branch
      %124 = sbr.rel (0) target = $region45
    $region44: #{model_forward.1} parent=1 // pred_region
      %126 = dma.done [#allocation5], 8000
    $region45: #{model_forward.1} parent=1 // pred_fallthru
      _
    // Predicated region
    $region46: #{model_forward.1} parent=1 // pred_check
      _
    $region47: #{model_forward.1} parent=1 // pred_check_branch
      %128 = sbr.rel (0) target = $region49
    $region48: #{model_forward.1} parent=1 // pred_region
      %130 = dma.done [#allocation5], 1024
    $region49: #{model_forward.1} parent=1 // pred_fallthru
      _
    // Predicated region
    $region50: #{model_forward.1} parent=1 // pred_check
      _
    $region51: #{model_forward.1} parent=1 // pred_check_branch
      %132 = sbr.rel (0) target = $region53
    $region52: #{model_forward.1} parent=1 // pred_region
      %134 = dma.done [#allocation8], 131072
    $region53: #{model_forward.1} parent=1 // pred_fallthru
      _
    // Predicated region
    $region54: #{model_forward.1} parent=1 // pred_check
      _
    $region55: #{model_forward.1} parent=1 // pred_check_branch
      %136 = sbr.rel (0) target = $region57
    $region56: #{model_forward.1} parent=1 // pred_region
      %138 = dma.done [#allocation8], 64
    $region57: #{model_forward.1} parent=1 // pred_fallthru
      _
    // Predicated region
    $region58: #{model_forward.1} parent=1 // pred_check
      _
    $region59: #{model_forward.1} parent=1 // pred_check_branch
      %140 = sbr.rel (0) target = $region61
    $region60: #{model_forward.1} parent=1 // pred_region
      %142 = dma.done [#allocation11], 8192
    $region61: #{model_forward.1} parent=1 // pred_fallthru
      _
    // Predicated region
    $region62: #{model_forward.1} parent=1 // pred_check
      _
    $region63: #{model_forward.1} parent=1 // pred_check_branch
      %144 = sbr.rel (0) target = $region65
    $region64: #{model_forward.1} parent=1 // pred_region
      %146 = dma.done [#allocation11], 32
    $region65: #{model_forward.1} parent=1 // pred_fallthru
      _
    // Predicated region
    $region66: #{model_forward.1} parent=1 // pred_check
      _
    $region67: #{model_forward.1} parent=1 // pred_check_branch
      %148 = sbr.rel (0) target = $region69
    $region68: #{model_forward.1} parent=1 // pred_region
      %150 = dma.done [#allocation14], 16
    $region69: #{model_forward.1} parent=1 // pred_fallthru
      _
    %v152 = vld [vmem:[#allocation2] sm:$0xff]
    %v153 = vld [vmem:[#allocation2 + $0x8] sm:$0xff]
    %v154 = vld [vmem:[#allocation2 + $0x10] sm:$0xff]
    %v155 = vld [vmem:[#allocation2 + $0x18] sm:$0xff]
    %v156 = vld [vmem:[#allocation2 + $0x20] sm:$0xff]
    %v157 = vld [vmem:[#allocation2 + $0x28] sm:$0xff]
    %v158 = vld [vmem:[#allocation2 + $0x30] sm:$0xff]
    %v159 = vld [vmem:[#allocation2 + $0x38] sm:$0xff]
    %v160 = vld [vmem:[#allocation2 + $0x40] sm:$0xff]
    %v161 = vld [vmem:[#allocation2 + $0x48] sm:$0xff]
    %v162 = vld [vmem:[#allocation2 + $0x50] sm:$0xff]
    %v163 = vld [vmem:[#allocation2 + $0x58] sm:$0xff]
    %v164 = vld [vmem:[#allocation2 + $0x60] sm:$0xff]
    %v165 = vld [vmem:[#allocation2 + $0x68] sm:$0xff]
    %v166 = vld [vmem:[#allocation2 + $0x70] sm:$0xff]
    %v167 = vld [vmem:[#allocation2 + $0x78] sm:$0xff]
    %v168 = vld [vmem:[#allocation2 + $0x80] sm:$0xff]
    %v169 = vld [vmem:[#allocation2 + $0x88] sm:$0xff]
    %v170 = vld [vmem:[#allocation2 + $0x90] sm:$0xff]
    %v171 = vld [vmem:[#allocation2 + $0x98] sm:$0xff]
    %v172 = vld [vmem:[#allocation2 + $0xa0] sm:$0xff]
    %v173 = vld [vmem:[#allocation2 + $0xa8] sm:$0xff]
    %v174 = vld [vmem:[#allocation2 + $0xb0] sm:$0xff]
    %v175 = vld [vmem:[#allocation2 + $0xb8] sm:$0xff]
    %v176 = vld [vmem:[#allocation2 + $0xc0] sm:$0xff]
    %v177 = vld [vmem:[#allocation2 + $0xc8] sm:$0xff]
    %v178 = vld [vmem:[#allocation2 + $0xd0] sm:$0xff]
    %v179 = vld [vmem:[#allocation2 + $0xd8] sm:$0xff]
    %v180 = vld [vmem:[#allocation2 + $0xe0] sm:$0xff]
    %v181 = vld [vmem:[#allocation2 + $0xe8] sm:$0xff]
    %v182 = vld [vmem:[#allocation2 + $0xf0] sm:$0xff]
    %v183 = vld [vmem:[#allocation2 + $0xf8] sm:$0xff]
    %v184 = vld [vmem:[#allocation2 + $0x100] sm:$0xff]
    %v185 = vld [vmem:[#allocation2 + $0x108] sm:$0xff]
    %v186 = vld [vmem:[#allocation2 + $0x110] sm:$0xff]
    %v187 = vld [vmem:[#allocation2 + $0x118] sm:$0xff]
    %v188 = vld [vmem:[#allocation2 + $0x120] sm:$0xff]
    %v189 = vld [vmem:[#allocation2 + $0x128] sm:$0xff]
    %v190 = vld [vmem:[#allocation2 + $0x130] sm:$0xff]
    %v191 = vld [vmem:[#allocation2 + $0x138] sm:$0xff]
    %v192 = vld [vmem:[#allocation2 + $0x140] sm:$0xff]
    %v193 = vld [vmem:[#allocation2 + $0x148] sm:$0xff]
    %v194 = vld [vmem:[#allocation2 + $0x150] sm:$0xff]
    %v195 = vld [vmem:[#allocation2 + $0x158] sm:$0xff]
    %v196 = vld [vmem:[#allocation2 + $0x160] sm:$0xff]
    %v197 = vld [vmem:[#allocation2 + $0x168] sm:$0xff]
    %v198 = vld [vmem:[#allocation2 + $0x170] sm:$0xff]
    %v199 = vld [vmem:[#allocation2 + $0x178] sm:$0xff]
    %v200 = vld [vmem:[#allocation2 + $0x180] sm:$0xff]
    %v201 = vld [vmem:[#allocation2 + $0x188] sm:$0xff]
    %v202 = vld [vmem:[#allocation2 + $0x190] sm:$0xff]
    %v203 = vld [vmem:[#allocation2 + $0x198] sm:$0xff]
    %v204 = vld [vmem:[#allocation2 + $0x1a0] sm:$0xff]
    %v205 = vld [vmem:[#allocation2 + $0x1a8] sm:$0xff]
    %v206 = vld [vmem:[#allocation2 + $0x1b0] sm:$0xff]
    %v207 = vld [vmem:[#allocation2 + $0x1b8] sm:$0xff]
    %v208 = vld [vmem:[#allocation2 + $0x1c0] sm:$0xff]
    %v209 = vld [vmem:[#allocation2 + $0x1c8] sm:$0xff]
    %v210 = vld [vmem:[#allocation2 + $0x1d0] sm:$0xff]
    %v211 = vld [vmem:[#allocation2 + $0x1d8] sm:$0xff]
    %v212 = vld [vmem:[#allocation2 + $0x1e0] sm:$0xff]
    %v213 = vld [vmem:[#allocation2 + $0x1e8] sm:$0xff]
    %v214 = vld [vmem:[#allocation2 + $0x1f0] sm:$0xff]
    %v215 = vld [vmem:[#allocation2 + $0x1f8] sm:$0xff]
    %v216 = vld [vmem:[#allocation2 + $0x200] sm:$0xff]
    %v217 = vld [vmem:[#allocation2 + $0x208] sm:$0xff]
    %v218 = vld [vmem:[#allocation2 + $0x210] sm:$0xff]
    %v219 = vld [vmem:[#allocation2 + $0x218] sm:$0xff]
    %v220 = vld [vmem:[#allocation2 + $0x220] sm:$0xff]
    %v221 = vld [vmem:[#allocation2 + $0x228] sm:$0xff]
    %v222 = vld [vmem:[#allocation2 + $0x230] sm:$0xff]
    %v223 = vld [vmem:[#allocation2 + $0x238] sm:$0xff]
    %v224 = vld [vmem:[#allocation2 + $0x240] sm:$0xff]
    %v225 = vld [vmem:[#allocation2 + $0x248] sm:$0xff]
    %v226 = vld [vmem:[#allocation2 + $0x250] sm:$0xff]
    %v227 = vld [vmem:[#allocation2 + $0x258] sm:$0xff]
    %v228 = vld [vmem:[#allocation2 + $0x260] sm:$0xff]
    %v229 = vld [vmem:[#allocation2 + $0x268] sm:$0xff]
    %v230 = vld [vmem:[#allocation2 + $0x270] sm:$0xff]
    %v231 = vld [vmem:[#allocation2 + $0x278] sm:$0xff]
    %v232 = vld [vmem:[#allocation2 + $0x280] sm:$0xff]
    %v233 = vld [vmem:[#allocation2 + $0x288] sm:$0xff]
    %v234 = vld [vmem:[#allocation2 + $0x290] sm:$0xff]
    %v235 = vld [vmem:[#allocation2 + $0x298] sm:$0xff]
    %v236 = vld [vmem:[#allocation2 + $0x2a0] sm:$0xff]
    %v237 = vld [vmem:[#allocation2 + $0x2a8] sm:$0xff]
    %v238 = vld [vmem:[#allocation2 + $0x2b0] sm:$0xff]
    %v239 = vld [vmem:[#allocation2 + $0x2b8] sm:$0xff]
    %v240 = vld [vmem:[#allocation2 + $0x2c0] sm:$0xff]
    %v241 = vld [vmem:[#allocation2 + $0x2c8] sm:$0xff]
    %v242 = vld [vmem:[#allocation2 + $0x2d0] sm:$0xff]
    %v243 = vld [vmem:[#allocation2 + $0x2d8] sm:$0xff]
    %v244 = vld [vmem:[#allocation2 + $0x2e0] sm:$0xff]
    %v245 = vld [vmem:[#allocation2 + $0x2e8] sm:$0xff]
    %v246 = vld [vmem:[#allocation2 + $0x2f0] sm:$0xff]
    %v247 = vld [vmem:[#allocation2 + $0x2f8] sm:$0xff]
    %v248 = vld [vmem:[#allocation2 + $0x300] sm:$0xff]
    %v249 = vld [vmem:[#allocation2 + $0x308] sm:$0xff]
    %v250 = vld [vmem:[#allocation2 + $0x310] sm:$0xff]
    %v251 = vld [vmem:[#allocation2 + $0x318] sm:$0xff]
    %v252 = vld [vmem:[#allocation2 + $0x320] sm:$0xff]
    %v253 = vld [vmem:[#allocation2 + $0x328] sm:$0xff]
    %v254 = vld [vmem:[#allocation2 + $0x330] sm:$0xff]
    %v255 = vld [vmem:[#allocation2 + $0x338] sm:$0xff]
    %v256 = vld [vmem:[#allocation2 + $0x340] sm:$0xff]
    %v257 = vld [vmem:[#allocation2 + $0x348] sm:$0xff]
    %v258 = vld [vmem:[#allocation2 + $0x350] sm:$0xff]
    %v259 = vld [vmem:[#allocation2 + $0x358] sm:$0xff]
    %v260 = vld [vmem:[#allocation2 + $0x360] sm:$0xff]
    %v261 = vld [vmem:[#allocation2 + $0x368] sm:$0xff]
    %v262 = vld [vmem:[#allocation2 + $0x370] sm:$0xff]
    %v263 = vld [vmem:[#allocation2 + $0x378] sm:$0xff]
    %v264 = vld [vmem:[#allocation2 + $0x380] sm:$0xff]
    %v265 = vld [vmem:[#allocation2 + $0x388] sm:$0xff]
    %v266 = vld [vmem:[#allocation2 + $0x390] sm:$0xff]
    %v267 = vld [vmem:[#allocation2 + $0x398] sm:$0xff]
    %v268 = vld [vmem:[#allocation2 + $0x3a0] sm:$0xff]
    %v269 = vld [vmem:[#allocation2 + $0x3a8] sm:$0xff]
    %v270 = vld [vmem:[#allocation2 + $0x3b0] sm:$0xff]
    %v271 = vld [vmem:[#allocation2 + $0x3b8] sm:$0xff]
    %v272 = vld [vmem:[#allocation2 + $0x3c0] sm:$0xff]
    %v273 = vld [vmem:[#allocation2 + $0x3c8] sm:$0xff]
    %v274 = vld [vmem:[#allocation2 + $0x3d0] sm:$0xff]
    %v275 = vld [vmem:[#allocation2 + $0x3d8] sm:$0xff]
    %v276 = vld [vmem:[#allocation2 + $0x3e0] sm:$0xff]
    %v277 = vld [vmem:[#allocation2 + $0x3e8] sm:$0xff]
    %v278 = vld [vmem:[#allocation2 + $0x3f0] sm:$0xff]
    %v279 = vld [vmem:[#allocation2 + $0x3f8] sm:$0xff]
    %v280 = vadd.f32 %v152, %v153
    %v281 = vadd.f32 %v280, %v154
    %v282 = vadd.f32 %v281, %v155
    %v283 = vadd.f32 %v282, %v156
    %v284 = vadd.f32 %v283, %v157
    %v285 = vadd.f32 %v284, %v158
    %vm286 = vcmask 850944
    %v287 = vsel %vm286, %v159, 0.0
    %v288 = vadd.f32 %v285, %v287
    %289 = vadd.xlane.f32.xlu0 %v288
    %v290 = vpop.xlane.xlu0 %289
    %v291 = vadd.f32 %v160, %v161
    %v292 = vadd.f32 %v291, %v162
    %v293 = vadd.f32 %v292, %v163
    %v294 = vadd.f32 %v293, %v164
    %v295 = vadd.f32 %v294, %v165
    %v296 = vadd.f32 %v295, %v166
    %v297 = vsel %vm286, %v167, 0.0
    %v298 = vadd.f32 %v296, %v297
    %299 = vadd.xlane.f32.xlu0 %v298
    %v300 = vpop.xlane.xlu0 %299
    %v301 = vadd.f32 %v168, %v169
    %v302 = vadd.f32 %v301, %v170
    %v303 = vadd.f32 %v302, %v171
    %v304 = vadd.f32 %v303, %v172
    %v305 = vadd.f32 %v304, %v173
    %v306 = vadd.f32 %v305, %v174
    %v307 = vsel %vm286, %v175, 0.0
    %v308 = vadd.f32 %v306, %v307
    %309 = vadd.xlane.f32.xlu0 %v308
    %v310 = vpop.xlane.xlu0 %309
    %v311 = vadd.f32 %v176, %v177
    %v312 = vadd.f32 %v311, %v178
    %v313 = vadd.f32 %v312, %v179
    %v314 = vadd.f32 %v313, %v180
    %v315 = vadd.f32 %v314, %v181
    %v316 = vadd.f32 %v315, %v182
    %v317 = vsel %vm286, %v183, 0.0
    %v318 = vadd.f32 %v316, %v317
    %319 = vadd.xlane.f32.xlu0 %v318
    %v320 = vpop.xlane.xlu0 %319
    %v321 = vadd.f32 %v184, %v185
    %v322 = vadd.f32 %v321, %v186
    %v323 = vadd.f32 %v322, %v187
    %v324 = vadd.f32 %v323, %v188
    %v325 = vadd.f32 %v324, %v189
    %v326 = vadd.f32 %v325, %v190
    %v327 = vsel %vm286, %v191, 0.0
    %v328 = vadd.f32 %v326, %v327
    %329 = vadd.xlane.f32.xlu0 %v328
    %v330 = vpop.xlane.xlu0 %329
    %v331 = vadd.f32 %v192, %v193
    %v332 = vadd.f32 %v331, %v194
    %v333 = vadd.f32 %v332, %v195
    %v334 = vadd.f32 %v333, %v196
    %v335 = vadd.f32 %v334, %v197
    %v336 = vadd.f32 %v335, %v198
    %v337 = vsel %vm286, %v199, 0.0
    %v338 = vadd.f32 %v336, %v337
    %339 = vadd.xlane.f32.xlu0 %v338
    %v340 = vpop.xlane.xlu0 %339
    %v341 = vadd.f32 %v200, %v201
    %v342 = vadd.f32 %v341, %v202
    %v343 = vadd.f32 %v342, %v203
    %v344 = vadd.f32 %v343, %v204
    %v345 = vadd.f32 %v344, %v205
    %v346 = vadd.f32 %v345, %v206
    %v347 = vsel %vm286, %v207, 0.0
    %v348 = vadd.f32 %v346, %v347
    %349 = vadd.xlane.f32.xlu0 %v348
    %v350 = vpop.xlane.xlu0 %349
    %v351 = vadd.f32 %v208, %v209
    %v352 = vadd.f32 %v351, %v210
    %v353 = vadd.f32 %v352, %v211
    %v354 = vadd.f32 %v353, %v212
    %v355 = vadd.f32 %v354, %v213
    %v356 = vadd.f32 %v355, %v214
    %v357 = vsel %vm286, %v215, 0.0
    %v358 = vadd.f32 %v356, %v357
    %359 = vadd.xlane.f32.xlu0 %v358
    %v360 = vpop.xlane.xlu0 %359
    %v361 = vadd.f32 %v216, %v217
    %v362 = vadd.f32 %v361, %v218
    %v363 = vadd.f32 %v362, %v219
    %v364 = vadd.f32 %v363, %v220
    %v365 = vadd.f32 %v364, %v221
    %v366 = vadd.f32 %v365, %v222
    %v367 = vsel %vm286, %v223, 0.0
    %v368 = vadd.f32 %v366, %v367
    %369 = vadd.xlane.f32.xlu0 %v368
    %v370 = vpop.xlane.xlu0 %369
    %v371 = vadd.f32 %v224, %v225
    %v372 = vadd.f32 %v371, %v226
    %v373 = vadd.f32 %v372, %v227
    %v374 = vadd.f32 %v373, %v228
    %v375 = vadd.f32 %v374, %v229
    %v376 = vadd.f32 %v375, %v230
    %v377 = vsel %vm286, %v231, 0.0
    %v378 = vadd.f32 %v376, %v377
    %379 = vadd.xlane.f32.xlu0 %v378
    %v380 = vpop.xlane.xlu0 %379
    %v381 = vadd.f32 %v232, %v233
    %v382 = vadd.f32 %v381, %v234
    %v383 = vadd.f32 %v382, %v235
    %v384 = vadd.f32 %v383, %v236
    %v385 = vadd.f32 %v384, %v237
    %v386 = vadd.f32 %v385, %v238
    %v387 = vsel %vm286, %v239, 0.0
    %v388 = vadd.f32 %v386, %v387
    %389 = vadd.xlane.f32.xlu0 %v388
    %v390 = vpop.xlane.xlu0 %389
    %v391 = vadd.f32 %v240, %v241
    %v392 = vadd.f32 %v391, %v242
    %v393 = vadd.f32 %v392, %v243
    %v394 = vadd.f32 %v393, %v244
    %v395 = vadd.f32 %v394, %v245
    %v396 = vadd.f32 %v395, %v246
    %v397 = vsel %vm286, %v247, 0.0
    %v398 = vadd.f32 %v396, %v397
    %399 = vadd.xlane.f32.xlu0 %v398
    %v400 = vpop.xlane.xlu0 %399
    %v401 = vadd.f32 %v248, %v249
    %v402 = vadd.f32 %v401, %v250
    %v403 = vadd.f32 %v402, %v251
    %v404 = vadd.f32 %v403, %v252
    %v405 = vadd.f32 %v404, %v253
    %v406 = vadd.f32 %v405, %v254
    %v407 = vsel %vm286, %v255, 0.0
    %v408 = vadd.f32 %v406, %v407
    %409 = vadd.xlane.f32.xlu0 %v408
    %v410 = vpop.xlane.xlu0 %409
    %v411 = vadd.f32 %v256, %v257
    %v412 = vadd.f32 %v411, %v258
    %v413 = vadd.f32 %v412, %v259
    %v414 = vadd.f32 %v413, %v260
    %v415 = vadd.f32 %v414, %v261
    %v416 = vadd.f32 %v415, %v262
    %v417 = vsel %vm286, %v263, 0.0
    %v418 = vadd.f32 %v416, %v417
    %419 = vadd.xlane.f32.xlu0 %v418
    %v420 = vpop.xlane.xlu0 %419
    %v421 = vadd.f32 %v264, %v265
    %v422 = vadd.f32 %v421, %v266
    %v423 = vadd.f32 %v422, %v267
    %v424 = vadd.f32 %v423, %v268
    %v425 = vadd.f32 %v424, %v269
    %v426 = vadd.f32 %v425, %v270
    %v427 = vsel %vm286, %v271, 0.0
    %v428 = vadd.f32 %v426, %v427
    %429 = vadd.xlane.f32.xlu0 %v428
    %v430 = vpop.xlane.xlu0 %429
    %v431 = vadd.f32 %v272, %v273
    %v432 = vadd.f32 %v431, %v274
    %v433 = vadd.f32 %v432, %v275
    %v434 = vadd.f32 %v433, %v276
    %v435 = vadd.f32 %v434, %v277
    %v436 = vadd.f32 %v435, %v278
    %v437 = vsel %vm286, %v279, 0.0
    %v438 = vadd.f32 %v436, %v437
    %439 = vadd.xlane.f32.xlu0 %v438
    %v440 = vpop.xlane.xlu0 %439
    %v441 = vrcp.pop 1000.0
    %v442 = vmul.f32 1000.0, %v441
    %v443 = vsub.f32 1.0, %v442
    %v444 = vmul.f32 %v441, %v443
    %v445 = vadd.f32 %v441, %v444
    %vm446 = vweird.f32 %v441
    %v447 = vsel %vm446, %v441, %v445
    %v448 = vmul.f32 %v290, %v447
    %v449 = vmul.f32 %v300, %v447
    %v450 = vmul.f32 %v310, %v447
    %v451 = vmul.f32 %v320, %v447
    %v452 = vmul.f32 %v330, %v447
    %v453 = vmul.f32 %v340, %v447
    %v454 = vmul.f32 %v350, %v447
    %v455 = vmul.f32 %v360, %v447
    %v456 = vmul.f32 %v370, %v447
    %v457 = vmul.f32 %v380, %v447
    %v458 = vmul.f32 %v390, %v447
    %v459 = vmul.f32 %v400, %v447
    %v460 = vmul.f32 %v410, %v447
    %v461 = vmul.f32 %v420, %v447
    %v462 = vmul.f32 %v430, %v447
    %v463 = vmul.f32 %v440, %v447
    %v464 = vsub.f32 %v152, %v448
    %v465 = vsub.f32 %v153, %v448
    %v466 = vsub.f32 %v154, %v448
    %v467 = vsub.f32 %v155, %v448
    %v468 = vsub.f32 %v156, %v448
    %v469 = vsub.f32 %v157, %v448
    %v470 = vsub.f32 %v158, %v448
    %v471 = vsub.f32 %v159, %v448
    %v472 = vsub.f32 %v160, %v449
    %v473 = vsub.f32 %v161, %v449
    %v474 = vsub.f32 %v162, %v449
    %v475 = vsub.f32 %v163, %v449
    %v476 = vsub.f32 %v164, %v449
    %v477 = vsub.f32 %v165, %v449
    %v478 = vsub.f32 %v166, %v449
    %v479 = vsub.f32 %v167, %v449
    %v480 = vsub.f32 %v168, %v450
    %v481 = vsub.f32 %v169, %v450
    %v482 = vsub.f32 %v170, %v450
    %v483 = vsub.f32 %v171, %v450
    %v484 = vsub.f32 %v172, %v450
    %v485 = vsub.f32 %v173, %v450
    %v486 = vsub.f32 %v174, %v450
    %v487 = vsub.f32 %v175, %v450
    %v488 = vsub.f32 %v176, %v451
    %v489 = vsub.f32 %v177, %v451
    %v490 = vsub.f32 %v178, %v451
    %v491 = vsub.f32 %v179, %v451
    %v492 = vsub.f32 %v180, %v451
    %v493 = vsub.f32 %v181, %v451
    %v494 = vsub.f32 %v182, %v451
    %v495 = vsub.f32 %v183, %v451
    %v496 = vsub.f32 %v184, %v452
    %v497 = vsub.f32 %v185, %v452
    %v498 = vsub.f32 %v186, %v452
    %v499 = vsub.f32 %v187, %v452
    %v500 = vsub.f32 %v188, %v452
    %v501 = vsub.f32 %v189, %v452
    %v502 = vsub.f32 %v190, %v452
    %v503 = vsub.f32 %v191, %v452
    %v504 = vsub.f32 %v192, %v453
    %v505 = vsub.f32 %v193, %v453
    %v506 = vsub.f32 %v194, %v453
    %v507 = vsub.f32 %v195, %v453
    %v508 = vsub.f32 %v196, %v453
    %v509 = vsub.f32 %v197, %v453
    %v510 = vsub.f32 %v198, %v453
    %v511 = vsub.f32 %v199, %v453
    %v512 = vsub.f32 %v200, %v454
    %v513 = vsub.f32 %v201, %v454
    %v514 = vsub.f32 %v202, %v454
    %v515 = vsub.f32 %v203, %v454
    %v516 = vsub.f32 %v204, %v454
    %v517 = vsub.f32 %v205, %v454
    %v518 = vsub.f32 %v206, %v454
    %v519 = vsub.f32 %v207, %v454
    %v520 = vsub.f32 %v208, %v455
    %v521 = vsub.f32 %v209, %v455
    %v522 = vsub.f32 %v210, %v455
    %v523 = vsub.f32 %v211, %v455
    %v524 = vsub.f32 %v212, %v455
    %v525 = vsub.f32 %v213, %v455
    %v526 = vsub.f32 %v214, %v455
    %v527 = vsub.f32 %v215, %v455
    %v528 = vsub.f32 %v216, %v456
    %v529 = vsub.f32 %v217, %v456
    %v530 = vsub.f32 %v218, %v456
    %v531 = vsub.f32 %v219, %v456
    %v532 = vsub.f32 %v220, %v456
    %v533 = vsub.f32 %v221, %v456
    %v534 = vsub.f32 %v222, %v456
    %v535 = vsub.f32 %v223, %v456
    %v536 = vsub.f32 %v224, %v457
    %v537 = vsub.f32 %v225, %v457
    %v538 = vsub.f32 %v226, %v457
    %v539 = vsub.f32 %v227, %v457
    %v540 = vsub.f32 %v228, %v457
    %v541 = vsub.f32 %v229, %v457
    %v542 = vsub.f32 %v230, %v457
    %v543 = vsub.f32 %v231, %v457
    %v544 = vsub.f32 %v232, %v458
    %v545 = vsub.f32 %v233, %v458
    %v546 = vsub.f32 %v234, %v458
    %v547 = vsub.f32 %v235, %v458
    %v548 = vsub.f32 %v236, %v458
    %v549 = vsub.f32 %v237, %v458
    %v550 = vsub.f32 %v238, %v458
    %v551 = vsub.f32 %v239, %v458
    %v552 = vsub.f32 %v240, %v459
    %v553 = vsub.f32 %v241, %v459
    %v554 = vsub.f32 %v242, %v459
    %v555 = vsub.f32 %v243, %v459
    %v556 = vsub.f32 %v244, %v459
    %v557 = vsub.f32 %v245, %v459
    %v558 = vsub.f32 %v246, %v459
    %v559 = vsub.f32 %v247, %v459
    %v560 = vsub.f32 %v248, %v460
    %v561 = vsub.f32 %v249, %v460
    %v562 = vsub.f32 %v250, %v460
    %v563 = vsub.f32 %v251, %v460
    %v564 = vsub.f32 %v252, %v460
    %v565 = vsub.f32 %v253, %v460
    %v566 = vsub.f32 %v254, %v460
    %v567 = vsub.f32 %v255, %v460
    %v568 = vsub.f32 %v256, %v461
    %v569 = vsub.f32 %v257, %v461
    %v570 = vsub.f32 %v258, %v461
    %v571 = vsub.f32 %v259, %v461
    %v572 = vsub.f32 %v260, %v461
    %v573 = vsub.f32 %v261, %v461
    %v574 = vsub.f32 %v262, %v461
    %v575 = vsub.f32 %v263, %v461
    %v576 = vsub.f32 %v264, %v462
    %v577 = vsub.f32 %v265, %v462
    %v578 = vsub.f32 %v266, %v462
    %v579 = vsub.f32 %v267, %v462
    %v580 = vsub.f32 %v268, %v462
    %v581 = vsub.f32 %v269, %v462
    %v582 = vsub.f32 %v270, %v462
    %v583 = vsub.f32 %v271, %v462
    %v584 = vsub.f32 %v272, %v463
    %v585 = vsub.f32 %v273, %v463
    %v586 = vsub.f32 %v274, %v463
    %v587 = vsub.f32 %v275, %v463
    %v588 = vsub.f32 %v276, %v463
    %v589 = vsub.f32 %v277, %v463
    %v590 = vsub.f32 %v278, %v463
    %v591 = vsub.f32 %v279, %v463
    %v593 = vsel %vm286, %v471, 0
    %v596 = vsel %vm286, %v479, 0
    %v599 = vsel %vm286, %v487, 0
    %v602 = vsel %vm286, %v495, 0
    %604 = vmatpush.xpose.msra.mxu0 0.0
    %605 = vmatpush.xpose.msra.mxu0 0.0
    %606 = vmatpush.xpose.msra.mxu0 0.0
    %607 = vmatpush.xpose.msra.mxu0 0.0
    %608 = vmatpush.xpose.msra.mxu0 0.0
    %609 = vmatpush.xpose.msra.mxu0 0.0
    %610 = vmatpush.xpose.msra.mxu0 0.0
    %611 = vmatpush.xpose.msra.mxu0 0.0
    %612 = vmatpush.xpose.msra.mxu0 0.0
    %613 = vmatpush.xpose.msra.mxu0 0.0
    %614 = vmatpush.xpose.msra.mxu0 0.0
    %615 = vmatpush.xpose.msra.mxu0 0.0
    %616 = vmatpush.xpose.msra.mxu0 %v488
    %617 = vmatpush.xpose.msra.mxu0 %v480
    %618 = vmatpush.xpose.msra.mxu0 %v472
    %619 = vmatpush.xpose.msra.mxu0 %v464
    %620 = vmatmul.f32.gmra.mxu0 %v464
    %v621 = vpop.f32.mrf.mxu0
    %v622 = vadd.f32 0.0, %v621
    %623 = vmatmul.f32.gmra.mxu0 %v472
    %v624 = vpop.f32.mrf.mxu0
    %v625 = vadd.f32 0.0, %v624
    %626 = vmatmul.f32.gmra.mxu0 %v480
    %v627 = vpop.f32.mrf.mxu0
    %v628 = vadd.f32 0.0, %v627
    %629 = vmatmul.f32.gmra.mxu0 %v488
    %v630 = vpop.f32.mrf.mxu0
    %v631 = vadd.f32 0.0, %v630
    %632 = vdwg.mxu0
    %633 = vmatpush.xpose.msra.mxu0 0.0
    %634 = vmatpush.xpose.msra.mxu0 0.0
    %635 = vmatpush.xpose.msra.mxu0 0.0
    %636 = vmatpush.xpose.msra.mxu0 0.0
    %637 = vmatpush.xpose.msra.mxu0 0.0
    %638 = vmatpush.xpose.msra.mxu0 0.0
    %639 = vmatpush.xpose.msra.mxu0 0.0
    %640 = vmatpush.xpose.msra.mxu0 0.0
    %641 = vmatpush.xpose.msra.mxu0 0.0
    %642 = vmatpush.xpose.msra.mxu0 0.0
    %643 = vmatpush.xpose.msra.mxu0 0.0
    %644 = vmatpush.xpose.msra.mxu0 0.0
    %645 = vmatpush.xpose.msra.mxu0 %v489
    %646 = vmatpush.xpose.msra.mxu0 %v481
    %647 = vmatpush.xpose.msra.mxu0 %v473
    %648 = vmatpush.xpose.msra.mxu0 %v465
    %649 = vmatmul.f32.gmra.mxu0 %v465
    %v650 = vpop.f32.mrf.mxu0
    %v651 = vadd.f32 %v622, %v650
    %652 = vmatmul.f32.gmra.mxu0 %v473
    %v653 = vpop.f32.mrf.mxu0
    %v654 = vadd.f32 %v625, %v653
    %655 = vmatmul.f32.gmra.mxu0 %v481
    %v656 = vpop.f32.mrf.mxu0
    %v657 = vadd.f32 %v628, %v656
    %658 = vmatmul.f32.gmra.mxu0 %v489
    %v659 = vpop.f32.mrf.mxu0
    %v660 = vadd.f32 %v631, %v659
    %661 = vdwg.mxu0
    %662 = vmatpush.xpose.msra.mxu0 0.0
    %663 = vmatpush.xpose.msra.mxu0 0.0
    %664 = vmatpush.xpose.msra.mxu0 0.0
    %665 = vmatpush.xpose.msra.mxu0 0.0
    %666 = vmatpush.xpose.msra.mxu0 0.0
    %667 = vmatpush.xpose.msra.mxu0 0.0
    %668 = vmatpush.xpose.msra.mxu0 0.0
    %669 = vmatpush.xpose.msra.mxu0 0.0
    %670 = vmatpush.xpose.msra.mxu0 0.0
    %671 = vmatpush.xpose.msra.mxu0 0.0
    %672 = vmatpush.xpose.msra.mxu0 0.0
    %673 = vmatpush.xpose.msra.mxu0 0.0
    %674 = vmatpush.xpose.msra.mxu0 %v490
    %675 = vmatpush.xpose.msra.mxu0 %v482
    %676 = vmatpush.xpose.msra.mxu0 %v474
    %677 = vmatpush.xpose.msra.mxu0 %v466
    %678 = vmatmul.f32.gmra.mxu0 %v466
    %v679 = vpop.f32.mrf.mxu0
    %v680 = vadd.f32 %v651, %v679
    %681 = vmatmul.f32.gmra.mxu0 %v474
    %v682 = vpop.f32.mrf.mxu0
    %v683 = vadd.f32 %v654, %v682
    %684 = vmatmul.f32.gmra.mxu0 %v482
    %v685 = vpop.f32.mrf.mxu0
    %v686 = vadd.f32 %v657, %v685
    %687 = vmatmul.f32.gmra.mxu0 %v490
    %v688 = vpop.f32.mrf.mxu0
    %v689 = vadd.f32 %v660, %v688
    %690 = vdwg.mxu0
    %691 = vmatpush.xpose.msra.mxu0 0.0
    %692 = vmatpush.xpose.msra.mxu0 0.0
    %693 = vmatpush.xpose.msra.mxu0 0.0
    %694 = vmatpush.xpose.msra.mxu0 0.0
    %695 = vmatpush.xpose.msra.mxu0 0.0
    %696 = vmatpush.xpose.msra.mxu0 0.0
    %697 = vmatpush.xpose.msra.mxu0 0.0
    %698 = vmatpush.xpose.msra.mxu0 0.0
    %699 = vmatpush.xpose.msra.mxu0 0.0
    %700 = vmatpush.xpose.msra.mxu0 0.0
    %701 = vmatpush.xpose.msra.mxu0 0.0
    %702 = vmatpush.xpose.msra.mxu0 0.0
    %703 = vmatpush.xpose.msra.mxu0 %v491
    %704 = vmatpush.xpose.msra.mxu0 %v483
    %705 = vmatpush.xpose.msra.mxu0 %v475
    %706 = vmatpush.xpose.msra.mxu0 %v467
    %707 = vmatmul.f32.gmra.mxu0 %v467
    %v708 = vpop.f32.mrf.mxu0
    %v709 = vadd.f32 %v680, %v708
    %710 = vmatmul.f32.gmra.mxu0 %v475
    %v711 = vpop.f32.mrf.mxu0
    %v712 = vadd.f32 %v683, %v711
    %713 = vmatmul.f32.gmra.mxu0 %v483
    %v714 = vpop.f32.mrf.mxu0
    %v715 = vadd.f32 %v686, %v714
    %716 = vmatmul.f32.gmra.mxu0 %v491
    %v717 = vpop.f32.mrf.mxu0
    %v718 = vadd.f32 %v689, %v717
    %719 = vdwg.mxu0
    %720 = vmatpush.xpose.msra.mxu0 0.0
    %721 = vmatpush.xpose.msra.mxu0 0.0
    %722 = vmatpush.xpose.msra.mxu0 0.0
    %723 = vmatpush.xpose.msra.mxu0 0.0
    %724 = vmatpush.xpose.msra.mxu0 0.0
    %725 = vmatpush.xpose.msra.mxu0 0.0
    %726 = vmatpush.xpose.msra.mxu0 0.0
    %727 = vmatpush.xpose.msra.mxu0 0.0
    %728 = vmatpush.xpose.msra.mxu0 0.0
    %729 = vmatpush.xpose.msra.mxu0 0.0
    %730 = vmatpush.xpose.msra.mxu0 0.0
    %731 = vmatpush.xpose.msra.mxu0 0.0
    %732 = vmatpush.xpose.msra.mxu0 %v492
    %733 = vmatpush.xpose.msra.mxu0 %v484
    %734 = vmatpush.xpose.msra.mxu0 %v476
    %735 = vmatpush.xpose.msra.mxu0 %v468
    %736 = vmatmul.f32.gmra.mxu0 %v468
    %v737 = vpop.f32.mrf.mxu0
    %v738 = vadd.f32 %v709, %v737
    %739 = vmatmul.f32.gmra.mxu0 %v476
    %v740 = vpop.f32.mrf.mxu0
    %v741 = vadd.f32 %v712, %v740
    %742 = vmatmul.f32.gmra.mxu0 %v484
    %v743 = vpop.f32.mrf.mxu0
    %v744 = vadd.f32 %v715, %v743
    %745 = vmatmul.f32.gmra.mxu0 %v492
    %v746 = vpop.f32.mrf.mxu0
    %v747 = vadd.f32 %v718, %v746
    %748 = vdwg.mxu0
    %749 = vmatpush.xpose.msra.mxu0 0.0
    %750 = vmatpush.xpose.msra.mxu0 0.0
    %751 = vmatpush.xpose.msra.mxu0 0.0
    %752 = vmatpush.xpose.msra.mxu0 0.0
    %753 = vmatpush.xpose.msra.mxu0 0.0
    %754 = vmatpush.xpose.msra.mxu0 0.0
    %755 = vmatpush.xpose.msra.mxu0 0.0
    %756 = vmatpush.xpose.msra.mxu0 0.0
    %757 = vmatpush.xpose.msra.mxu0 0.0
    %758 = vmatpush.xpose.msra.mxu0 0.0
    %759 = vmatpush.xpose.msra.mxu0 0.0
    %760 = vmatpush.xpose.msra.mxu0 0.0
    %761 = vmatpush.xpose.msra.mxu0 %v493
    %762 = vmatpush.xpose.msra.mxu0 %v485
    %763 = vmatpush.xpose.msra.mxu0 %v477
    %764 = vmatpush.xpose.msra.mxu0 %v469
    %765 = vmatmul.f32.gmra.mxu0 %v469
    %v766 = vpop.f32.mrf.mxu0
    %v767 = vadd.f32 %v738, %v766
    %768 = vmatmul.f32.gmra.mxu0 %v477
    %v769 = vpop.f32.mrf.mxu0
    %v770 = vadd.f32 %v741, %v769
    %771 = vmatmul.f32.gmra.mxu0 %v485
    %v772 = vpop.f32.mrf.mxu0
    %v773 = vadd.f32 %v744, %v772
    %774 = vmatmul.f32.gmra.mxu0 %v493
    %v775 = vpop.f32.mrf.mxu0
    %v776 = vadd.f32 %v747, %v775
    %777 = vdwg.mxu0
    %778 = vmatpush.xpose.msra.mxu0 0.0
    %779 = vmatpush.xpose.msra.mxu0 0.0
    %780 = vmatpush.xpose.msra.mxu0 0.0
    %781 = vmatpush.xpose.msra.mxu0 0.0
    %782 = vmatpush.xpose.msra.mxu0 0.0
    %783 = vmatpush.xpose.msra.mxu0 0.0
    %784 = vmatpush.xpose.msra.mxu0 0.0
    %785 = vmatpush.xpose.msra.mxu0 0.0
    %786 = vmatpush.xpose.msra.mxu0 0.0
    %787 = vmatpush.xpose.msra.mxu0 0.0
    %788 = vmatpush.xpose.msra.mxu0 0.0
    %789 = vmatpush.xpose.msra.mxu0 0.0
    %790 = vmatpush.xpose.msra.mxu0 %v494
    %791 = vmatpush.xpose.msra.mxu0 %v486
    %792 = vmatpush.xpose.msra.mxu0 %v478
    %793 = vmatpush.xpose.msra.mxu0 %v470
    %794 = vmatmul.f32.gmra.mxu0 %v470
    %v795 = vpop.f32.mrf.mxu0
    %v796 = vadd.f32 %v767, %v795
    %797 = vmatmul.f32.gmra.mxu0 %v478
    %v798 = vpop.f32.mrf.mxu0
    %v799 = vadd.f32 %v770, %v798
    %800 = vmatmul.f32.gmra.mxu0 %v486
    %v801 = vpop.f32.mrf.mxu0
    %v802 = vadd.f32 %v773, %v801
    %803 = vmatmul.f32.gmra.mxu0 %v494
    %v804 = vpop.f32.mrf.mxu0
    %v805 = vadd.f32 %v776, %v804
    %806 = vdwg.mxu0
    %807 = vmatpush.xpose.msra.mxu0 0.0
    %808 = vmatpush.xpose.msra.mxu0 0.0
    %809 = vmatpush.xpose.msra.mxu0 0.0
    %810 = vmatpush.xpose.msra.mxu0 0.0
    %811 = vmatpush.xpose.msra.mxu0 0.0
    %812 = vmatpush.xpose.msra.mxu0 0.0
    %813 = vmatpush.xpose.msra.mxu0 0.0
    %814 = vmatpush.xpose.msra.mxu0 0.0
    %815 = vmatpush.xpose.msra.mxu0 0.0
    %816 = vmatpush.xpose.msra.mxu0 0.0
    %817 = vmatpush.xpose.msra.mxu0 0.0
    %818 = vmatpush.xpose.msra.mxu0 0.0
    %819 = vmatpush.xpose.msra.mxu0 %v602
    %820 = vmatpush.xpose.msra.mxu0 %v599
    %821 = vmatpush.xpose.msra.mxu0 %v596
    %822 = vmatpush.xpose.msra.mxu0 %v593
    %823 = vmatmul.f32.gmra.mxu0 %v593
    %v824 = vpop.f32.mrf.mxu0
    %v825 = vadd.f32 %v796, %v824
    %826 = vmatmul.f32.gmra.mxu0 %v596
    %v827 = vpop.f32.mrf.mxu0
    %v828 = vadd.f32 %v799, %v827
    %829 = vmatmul.f32.gmra.mxu0 %v599
    %v830 = vpop.f32.mrf.mxu0
    %v831 = vadd.f32 %v802, %v830
    %832 = vmatmul.f32.gmra.mxu0 %v602
    %v833 = vpop.f32.mrf.mxu0
    %v834 = vadd.f32 %v805, %v833
    %835 = vdwg.mxu0
    %v837 = vsel %vm286, %v503, 0
    %v840 = vsel %vm286, %v511, 0
    %v843 = vsel %vm286, %v519, 0
    %v846 = vsel %vm286, %v527, 0
    %848 = vmatpush.xpose.msra.mxu0 0.0
    %849 = vmatpush.xpose.msra.mxu0 0.0
    %850 = vmatpush.xpose.msra.mxu0 0.0
    %851 = vmatpush.xpose.msra.mxu0 0.0
    %852 = vmatpush.xpose.msra.mxu0 0.0
    %853 = vmatpush.xpose.msra.mxu0 0.0
    %854 = vmatpush.xpose.msra.mxu0 0.0
    %855 = vmatpush.xpose.msra.mxu0 0.0
    %856 = vmatpush.xpose.msra.mxu0 0.0
    %857 = vmatpush.xpose.msra.mxu0 0.0
    %858 = vmatpush.xpose.msra.mxu0 0.0
    %859 = vmatpush.xpose.msra.mxu0 0.0
    %860 = vmatpush.xpose.msra.mxu0 %v520
    %861 = vmatpush.xpose.msra.mxu0 %v512
    %862 = vmatpush.xpose.msra.mxu0 %v504
    %863 = vmatpush.xpose.msra.mxu0 %v496
    %864 = vmatmul.f32.gmra.mxu0 %v496
    %v865 = vpop.f32.mrf.mxu0
    %v866 = vadd.f32 0.0, %v865
    %867 = vmatmul.f32.gmra.mxu0 %v504
    %v868 = vpop.f32.mrf.mxu0
    %v869 = vadd.f32 0.0, %v868
    %870 = vmatmul.f32.gmra.mxu0 %v512
    %v871 = vpop.f32.mrf.mxu0
    %v872 = vadd.f32 0.0, %v871
    %873 = vmatmul.f32.gmra.mxu0 %v520
    %v874 = vpop.f32.mrf.mxu0
    %v875 = vadd.f32 0.0, %v874
    %876 = vdwg.mxu0
    %877 = vmatpush.xpose.msra.mxu0 0.0
    %878 = vmatpush.xpose.msra.mxu0 0.0
    %879 = vmatpush.xpose.msra.mxu0 0.0
    %880 = vmatpush.xpose.msra.mxu0 0.0
    %881 = vmatpush.xpose.msra.mxu0 0.0
    %882 = vmatpush.xpose.msra.mxu0 0.0
    %883 = vmatpush.xpose.msra.mxu0 0.0
    %884 = vmatpush.xpose.msra.mxu0 0.0
    %885 = vmatpush.xpose.msra.mxu0 0.0
    %886 = vmatpush.xpose.msra.mxu0 0.0
    %887 = vmatpush.xpose.msra.mxu0 0.0
    %888 = vmatpush.xpose.msra.mxu0 0.0
    %889 = vmatpush.xpose.msra.mxu0 %v521
    %890 = vmatpush.xpose.msra.mxu0 %v513
    %891 = vmatpush.xpose.msra.mxu0 %v505
    %892 = vmatpush.xpose.msra.mxu0 %v497
    %893 = vmatmul.f32.gmra.mxu0 %v497
    %v894 = vpop.f32.mrf.mxu0
    %v895 = vadd.f32 %v866, %v894
    %896 = vmatmul.f32.gmra.mxu0 %v505
    %v897 = vpop.f32.mrf.mxu0
    %v898 = vadd.f32 %v869, %v897
    %899 = vmatmul.f32.gmra.mxu0 %v513
    %v900 = vpop.f32.mrf.mxu0
    %v901 = vadd.f32 %v872, %v900
    %902 = vmatmul.f32.gmra.mxu0 %v521
    %v903 = vpop.f32.mrf.mxu0
    %v904 = vadd.f32 %v875, %v903
    %905 = vdwg.mxu0
    %906 = vmatpush.xpose.msra.mxu0 0.0
    %907 = vmatpush.xpose.msra.mxu0 0.0
    %908 = vmatpush.xpose.msra.mxu0 0.0
    %909 = vmatpush.xpose.msra.mxu0 0.0
    %910 = vmatpush.xpose.msra.mxu0 0.0
    %911 = vmatpush.xpose.msra.mxu0 0.0
    %912 = vmatpush.xpose.msra.mxu0 0.0
    %913 = vmatpush.xpose.msra.mxu0 0.0
    %914 = vmatpush.xpose.msra.mxu0 0.0
    %915 = vmatpush.xpose.msra.mxu0 0.0
    %916 = vmatpush.xpose.msra.mxu0 0.0
    %917 = vmatpush.xpose.msra.mxu0 0.0
    %918 = vmatpush.xpose.msra.mxu0 %v522
    %919 = vmatpush.xpose.msra.mxu0 %v514
    %920 = vmatpush.xpose.msra.mxu0 %v506
    %921 = vmatpush.xpose.msra.mxu0 %v498
    %922 = vmatmul.f32.gmra.mxu0 %v498
    %v923 = vpop.f32.mrf.mxu0
    %v924 = vadd.f32 %v895, %v923
    %925 = vmatmul.f32.gmra.mxu0 %v506
    %v926 = vpop.f32.mrf.mxu0
    %v927 = vadd.f32 %v898, %v926
    %928 = vmatmul.f32.gmra.mxu0 %v514
    %v929 = vpop.f32.mrf.mxu0
    %v930 = vadd.f32 %v901, %v929
    %931 = vmatmul.f32.gmra.mxu0 %v522
    %v932 = vpop.f32.mrf.mxu0
    %v933 = vadd.f32 %v904, %v932
    %934 = vdwg.mxu0
    %935 = vmatpush.xpose.msra.mxu0 0.0
    %936 = vmatpush.xpose.msra.mxu0 0.0
    %937 = vmatpush.xpose.msra.mxu0 0.0
    %938 = vmatpush.xpose.msra.mxu0 0.0
    %939 = vmatpush.xpose.msra.mxu0 0.0
    %940 = vmatpush.xpose.msra.mxu0 0.0
    %941 = vmatpush.xpose.msra.mxu0 0.0
    %942 = vmatpush.xpose.msra.mxu0 0.0
    %943 = vmatpush.xpose.msra.mxu0 0.0
    %944 = vmatpush.xpose.msra.mxu0 0.0
    %945 = vmatpush.xpose.msra.mxu0 0.0
    %946 = vmatpush.xpose.msra.mxu0 0.0
    %947 = vmatpush.xpose.msra.mxu0 %v523
    %948 = vmatpush.xpose.msra.mxu0 %v515
    %949 = vmatpush.xpose.msra.mxu0 %v507
    %950 = vmatpush.xpose.msra.mxu0 %v499
    %951 = vmatmul.f32.gmra.mxu0 %v499
    %v952 = vpop.f32.mrf.mxu0
    %v953 = vadd.f32 %v924, %v952
    %954 = vmatmul.f32.gmra.mxu0 %v507
    %v955 = vpop.f32.mrf.mxu0
    %v956 = vadd.f32 %v927, %v955
    %957 = vmatmul.f32.gmra.mxu0 %v515
    %v958 = vpop.f32.mrf.mxu0
    %v959 = vadd.f32 %v930, %v958
    %960 = vmatmul.f32.gmra.mxu0 %v523
    %v961 = vpop.f32.mrf.mxu0
    %v962 = vadd.f32 %v933, %v961
    %963 = vdwg.mxu0
    %964 = vmatpush.xpose.msra.mxu0 0.0
    %965 = vmatpush.xpose.msra.mxu0 0.0
    %966 = vmatpush.xpose.msra.mxu0 0.0
    %967 = vmatpush.xpose.msra.mxu0 0.0
    %968 = vmatpush.xpose.msra.mxu0 0.0
    %969 = vmatpush.xpose.msra.mxu0 0.0
    %970 = vmatpush.xpose.msra.mxu0 0.0
    %971 = vmatpush.xpose.msra.mxu0 0.0
    %972 = vmatpush.xpose.msra.mxu0 0.0
    %973 = vmatpush.xpose.msra.mxu0 0.0
    %974 = vmatpush.xpose.msra.mxu0 0.0
    %975 = vmatpush.xpose.msra.mxu0 0.0
    %976 = vmatpush.xpose.msra.mxu0 %v524
    %977 = vmatpush.xpose.msra.mxu0 %v516
    %978 = vmatpush.xpose.msra.mxu0 %v508
    %979 = vmatpush.xpose.msra.mxu0 %v500
    %980 = vmatmul.f32.gmra.mxu0 %v500
    %v981 = vpop.f32.mrf.mxu0
    %v982 = vadd.f32 %v953, %v981
    %983 = vmatmul.f32.gmra.mxu0 %v508
    %v984 = vpop.f32.mrf.mxu0
    %v985 = vadd.f32 %v956, %v984
    %986 = vmatmul.f32.gmra.mxu0 %v516
    %v987 = vpop.f32.mrf.mxu0
    %v988 = vadd.f32 %v959, %v987
    %989 = vmatmul.f32.gmra.mxu0 %v524
    %v990 = vpop.f32.mrf.mxu0
    %v991 = vadd.f32 %v962, %v990
    %992 = vdwg.mxu0
    %993 = vmatpush.xpose.msra.mxu0 0.0
    %994 = vmatpush.xpose.msra.mxu0 0.0
    %995 = vmatpush.xpose.msra.mxu0 0.0
    %996 = vmatpush.xpose.msra.mxu0 0.0
    %997 = vmatpush.xpose.msra.mxu0 0.0
    %998 = vmatpush.xpose.msra.mxu0 0.0
    %999 = vmatpush.xpose.msra.mxu0 0.0
    %1000 = vmatpush.xpose.msra.mxu0 0.0
    %1001 = vmatpush.xpose.msra.mxu0 0.0
    %1002 = vmatpush.xpose.msra.mxu0 0.0
    %1003 = vmatpush.xpose.msra.mxu0 0.0
    %1004 = vmatpush.xpose.msra.mxu0 0.0
    %1005 = vmatpush.xpose.msra.mxu0 %v525
    %1006 = vmatpush.xpose.msra.mxu0 %v517
    %1007 = vmatpush.xpose.msra.mxu0 %v509
    %1008 = vmatpush.xpose.msra.mxu0 %v501
    %1009 = vmatmul.f32.gmra.mxu0 %v501
    %v1010 = vpop.f32.mrf.mxu0
    %v1011 = vadd.f32 %v982, %v1010
    %1012 = vmatmul.f32.gmra.mxu0 %v509
    %v1013 = vpop.f32.mrf.mxu0
    %v1014 = vadd.f32 %v985, %v1013
    %1015 = vmatmul.f32.gmra.mxu0 %v517
    %v1016 = vpop.f32.mrf.mxu0
    %v1017 = vadd.f32 %v988, %v1016
    %1018 = vmatmul.f32.gmra.mxu0 %v525
    %v1019 = vpop.f32.mrf.mxu0
    %v1020 = vadd.f32 %v991, %v1019
    %1021 = vdwg.mxu0
    %1022 = vmatpush.xpose.msra.mxu0 0.0
    %1023 = vmatpush.xpose.msra.mxu0 0.0
    %1024 = vmatpush.xpose.msra.mxu0 0.0
    %1025 = vmatpush.xpose.msra.mxu0 0.0
    %1026 = vmatpush.xpose.msra.mxu0 0.0
    %1027 = vmatpush.xpose.msra.mxu0 0.0
    %1028 = vmatpush.xpose.msra.mxu0 0.0
    %1029 = vmatpush.xpose.msra.mxu0 0.0
    %1030 = vmatpush.xpose.msra.mxu0 0.0
    %1031 = vmatpush.xpose.msra.mxu0 0.0
    %1032 = vmatpush.xpose.msra.mxu0 0.0
    %1033 = vmatpush.xpose.msra.mxu0 0.0
    %1034 = vmatpush.xpose.msra.mxu0 %v526
    %1035 = vmatpush.xpose.msra.mxu0 %v518
    %1036 = vmatpush.xpose.msra.mxu0 %v510
    %1037 = vmatpush.xpose.msra.mxu0 %v502
    %1038 = vmatmul.f32.gmra.mxu0 %v502
    %v1039 = vpop.f32.mrf.mxu0
    %v1040 = vadd.f32 %v1011, %v1039
    %1041 = vmatmul.f32.gmra.mxu0 %v510
    %v1042 = vpop.f32.mrf.mxu0
    %v1043 = vadd.f32 %v1014, %v1042
    %1044 = vmatmul.f32.gmra.mxu0 %v518
    %v1045 = vpop.f32.mrf.mxu0
    %v1046 = vadd.f32 %v1017, %v1045
    %1047 = vmatmul.f32.gmra.mxu0 %v526
    %v1048 = vpop.f32.mrf.mxu0
    %v1049 = vadd.f32 %v1020, %v1048
    %1050 = vdwg.mxu0
    %1051 = vmatpush.xpose.msra.mxu0 0.0
    %1052 = vmatpush.xpose.msra.mxu0 0.0
    %1053 = vmatpush.xpose.msra.mxu0 0.0
    %1054 = vmatpush.xpose.msra.mxu0 0.0
    %1055 = vmatpush.xpose.msra.mxu0 0.0
    %1056 = vmatpush.xpose.msra.mxu0 0.0
    %1057 = vmatpush.xpose.msra.mxu0 0.0
    %1058 = vmatpush.xpose.msra.mxu0 0.0
    %1059 = vmatpush.xpose.msra.mxu0 0.0
    %1060 = vmatpush.xpose.msra.mxu0 0.0
    %1061 = vmatpush.xpose.msra.mxu0 0.0
    %1062 = vmatpush.xpose.msra.mxu0 0.0
    %1063 = vmatpush.xpose.msra.mxu0 %v846
    %1064 = vmatpush.xpose.msra.mxu0 %v843
    %1065 = vmatpush.xpose.msra.mxu0 %v840
    %1066 = vmatpush.xpose.msra.mxu0 %v837
    %1067 = vmatmul.f32.gmra.mxu0 %v837
    %v1068 = vpop.f32.mrf.mxu0
    %v1069 = vadd.f32 %v1040, %v1068
    %1070 = vmatmul.f32.gmra.mxu0 %v840
    %v1071 = vpop.f32.mrf.mxu0
    %v1072 = vadd.f32 %v1043, %v1071
    %1073 = vmatmul.f32.gmra.mxu0 %v843
    %v1074 = vpop.f32.mrf.mxu0
    %v1075 = vadd.f32 %v1046, %v1074
    %1076 = vmatmul.f32.gmra.mxu0 %v846
    %v1077 = vpop.f32.mrf.mxu0
    %v1078 = vadd.f32 %v1049, %v1077
    %1079 = vdwg.mxu0
    %v1081 = vsel %vm286, %v535, 0
    %v1084 = vsel %vm286, %v543, 0
    %v1087 = vsel %vm286, %v551, 0
    %v1090 = vsel %vm286, %v559, 0
    %1092 = vmatpush.xpose.msra.mxu0 0.0
    %1093 = vmatpush.xpose.msra.mxu0 0.0
    %1094 = vmatpush.xpose.msra.mxu0 0.0
    %1095 = vmatpush.xpose.msra.mxu0 0.0
    %1096 = vmatpush.xpose.msra.mxu0 0.0
    %1097 = vmatpush.xpose.msra.mxu0 0.0
    %1098 = vmatpush.xpose.msra.mxu0 0.0
    %1099 = vmatpush.xpose.msra.mxu0 0.0
    %1100 = vmatpush.xpose.msra.mxu0 0.0
    %1101 = vmatpush.xpose.msra.mxu0 0.0
    %1102 = vmatpush.xpose.msra.mxu0 0.0
    %1103 = vmatpush.xpose.msra.mxu0 0.0
    %1104 = vmatpush.xpose.msra.mxu0 %v552
    %1105 = vmatpush.xpose.msra.mxu0 %v544
    %1106 = vmatpush.xpose.msra.mxu0 %v536
    %1107 = vmatpush.xpose.msra.mxu0 %v528
    %1108 = vmatmul.f32.gmra.mxu0 %v528
    %v1109 = vpop.f32.mrf.mxu0
    %v1110 = vadd.f32 0.0, %v1109
    %1111 = vmatmul.f32.gmra.mxu0 %v536
    %v1112 = vpop.f32.mrf.mxu0
    %v1113 = vadd.f32 0.0, %v1112
    %1114 = vmatmul.f32.gmra.mxu0 %v544
    %v1115 = vpop.f32.mrf.mxu0
    %v1116 = vadd.f32 0.0, %v1115
    %1117 = vmatmul.f32.gmra.mxu0 %v552
    %v1118 = vpop.f32.mrf.mxu0
    %v1119 = vadd.f32 0.0, %v1118
    %1120 = vdwg.mxu0
    %1121 = vmatpush.xpose.msra.mxu0 0.0
    %1122 = vmatpush.xpose.msra.mxu0 0.0
    %1123 = vmatpush.xpose.msra.mxu0 0.0
    %1124 = vmatpush.xpose.msra.mxu0 0.0
    %1125 = vmatpush.xpose.msra.mxu0 0.0
    %1126 = vmatpush.xpose.msra.mxu0 0.0
    %1127 = vmatpush.xpose.msra.mxu0 0.0
    %1128 = vmatpush.xpose.msra.mxu0 0.0
    %1129 = vmatpush.xpose.msra.mxu0 0.0
    %1130 = vmatpush.xpose.msra.mxu0 0.0
    %1131 = vmatpush.xpose.msra.mxu0 0.0
    %1132 = vmatpush.xpose.msra.mxu0 0.0
    %1133 = vmatpush.xpose.msra.mxu0 %v553
    %1134 = vmatpush.xpose.msra.mxu0 %v545
    %1135 = vmatpush.xpose.msra.mxu0 %v537
    %1136 = vmatpush.xpose.msra.mxu0 %v529
    %1137 = vmatmul.f32.gmra.mxu0 %v529
    %v1138 = vpop.f32.mrf.mxu0
    %v1139 = vadd.f32 %v1110, %v1138
    %1140 = vmatmul.f32.gmra.mxu0 %v537
    %v1141 = vpop.f32.mrf.mxu0
    %v1142 = vadd.f32 %v1113, %v1141
    %1143 = vmatmul.f32.gmra.mxu0 %v545
    %v1144 = vpop.f32.mrf.mxu0
    %v1145 = vadd.f32 %v1116, %v1144
    %1146 = vmatmul.f32.gmra.mxu0 %v553
    %v1147 = vpop.f32.mrf.mxu0
    %v1148 = vadd.f32 %v1119, %v1147
    %1149 = vdwg.mxu0
    %1150 = vmatpush.xpose.msra.mxu0 0.0
    %1151 = vmatpush.xpose.msra.mxu0 0.0
    %1152 = vmatpush.xpose.msra.mxu0 0.0
    %1153 = vmatpush.xpose.msra.mxu0 0.0
    %1154 = vmatpush.xpose.msra.mxu0 0.0
    %1155 = vmatpush.xpose.msra.mxu0 0.0
    %1156 = vmatpush.xpose.msra.mxu0 0.0
    %1157 = vmatpush.xpose.msra.mxu0 0.0
    %1158 = vmatpush.xpose.msra.mxu0 0.0
    %1159 = vmatpush.xpose.msra.mxu0 0.0
    %1160 = vmatpush.xpose.msra.mxu0 0.0
    %1161 = vmatpush.xpose.msra.mxu0 0.0
    %1162 = vmatpush.xpose.msra.mxu0 %v554
    %1163 = vmatpush.xpose.msra.mxu0 %v546
    %1164 = vmatpush.xpose.msra.mxu0 %v538
    %1165 = vmatpush.xpose.msra.mxu0 %v530
    %1166 = vmatmul.f32.gmra.mxu0 %v530
    %v1167 = vpop.f32.mrf.mxu0
    %v1168 = vadd.f32 %v1139, %v1167
    %1169 = vmatmul.f32.gmra.mxu0 %v538
    %v1170 = vpop.f32.mrf.mxu0
    %v1171 = vadd.f32 %v1142, %v1170
    %1172 = vmatmul.f32.gmra.mxu0 %v546
    %v1173 = vpop.f32.mrf.mxu0
    %v1174 = vadd.f32 %v1145, %v1173
    %1175 = vmatmul.f32.gmra.mxu0 %v554
    %v1176 = vpop.f32.mrf.mxu0
    %v1177 = vadd.f32 %v1148, %v1176
    %1178 = vdwg.mxu0
    %1179 = vmatpush.xpose.msra.mxu0 0.0
    %1180 = vmatpush.xpose.msra.mxu0 0.0
    %1181 = vmatpush.xpose.msra.mxu0 0.0
    %1182 = vmatpush.xpose.msra.mxu0 0.0
    %1183 = vmatpush.xpose.msra.mxu0 0.0
    %1184 = vmatpush.xpose.msra.mxu0 0.0
    %1185 = vmatpush.xpose.msra.mxu0 0.0
    %1186 = vmatpush.xpose.msra.mxu0 0.0
    %1187 = vmatpush.xpose.msra.mxu0 0.0
    %1188 = vmatpush.xpose.msra.mxu0 0.0
    %1189 = vmatpush.xpose.msra.mxu0 0.0
    %1190 = vmatpush.xpose.msra.mxu0 0.0
    %1191 = vmatpush.xpose.msra.mxu0 %v555
    %1192 = vmatpush.xpose.msra.mxu0 %v547
    %1193 = vmatpush.xpose.msra.mxu0 %v539
    %1194 = vmatpush.xpose.msra.mxu0 %v531
    %1195 = vmatmul.f32.gmra.mxu0 %v531
    %v1196 = vpop.f32.mrf.mxu0
    %v1197 = vadd.f32 %v1168, %v1196
    %1198 = vmatmul.f32.gmra.mxu0 %v539
    %v1199 = vpop.f32.mrf.mxu0
    %v1200 = vadd.f32 %v1171, %v1199
    %1201 = vmatmul.f32.gmra.mxu0 %v547
    %v1202 = vpop.f32.mrf.mxu0
    %v1203 = vadd.f32 %v1174, %v1202
    %1204 = vmatmul.f32.gmra.mxu0 %v555
    %v1205 = vpop.f32.mrf.mxu0
    %v1206 = vadd.f32 %v1177, %v1205
    %1207 = vdwg.mxu0
    %1208 = vmatpush.xpose.msra.mxu0 0.0
    %1209 = vmatpush.xpose.msra.mxu0 0.0
    %1210 = vmatpush.xpose.msra.mxu0 0.0
    %1211 = vmatpush.xpose.msra.mxu0 0.0
    %1212 = vmatpush.xpose.msra.mxu0 0.0
    %1213 = vmatpush.xpose.msra.mxu0 0.0
    %1214 = vmatpush.xpose.msra.mxu0 0.0
    %1215 = vmatpush.xpose.msra.mxu0 0.0
    %1216 = vmatpush.xpose.msra.mxu0 0.0
    %1217 = vmatpush.xpose.msra.mxu0 0.0
    %1218 = vmatpush.xpose.msra.mxu0 0.0
    %1219 = vmatpush.xpose.msra.mxu0 0.0
    %1220 = vmatpush.xpose.msra.mxu0 %v556
    %1221 = vmatpush.xpose.msra.mxu0 %v548
    %1222 = vmatpush.xpose.msra.mxu0 %v540
    %1223 = vmatpush.xpose.msra.mxu0 %v532
    %1224 = vmatmul.f32.gmra.mxu0 %v532
    %v1225 = vpop.f32.mrf.mxu0
    %v1226 = vadd.f32 %v1197, %v1225
    %1227 = vmatmul.f32.gmra.mxu0 %v540
    %v1228 = vpop.f32.mrf.mxu0
    %v1229 = vadd.f32 %v1200, %v1228
    %1230 = vmatmul.f32.gmra.mxu0 %v548
    %v1231 = vpop.f32.mrf.mxu0
    %v1232 = vadd.f32 %v1203, %v1231
    %1233 = vmatmul.f32.gmra.mxu0 %v556
    %v1234 = vpop.f32.mrf.mxu0
    %v1235 = vadd.f32 %v1206, %v1234
    %1236 = vdwg.mxu0
    %1237 = vmatpush.xpose.msra.mxu0 0.0
    %1238 = vmatpush.xpose.msra.mxu0 0.0
    %1239 = vmatpush.xpose.msra.mxu0 0.0
    %1240 = vmatpush.xpose.msra.mxu0 0.0
    %1241 = vmatpush.xpose.msra.mxu0 0.0
    %1242 = vmatpush.xpose.msra.mxu0 0.0
    %1243 = vmatpush.xpose.msra.mxu0 0.0
    %1244 = vmatpush.xpose.msra.mxu0 0.0
    %1245 = vmatpush.xpose.msra.mxu0 0.0
    %1246 = vmatpush.xpose.msra.mxu0 0.0
    %1247 = vmatpush.xpose.msra.mxu0 0.0
    %1248 = vmatpush.xpose.msra.mxu0 0.0
    %1249 = vmatpush.xpose.msra.mxu0 %v557
    %1250 = vmatpush.xpose.msra.mxu0 %v549
    %1251 = vmatpush.xpose.msra.mxu0 %v541
    %1252 = vmatpush.xpose.msra.mxu0 %v533
    %1253 = vmatmul.f32.gmra.mxu0 %v533
    %v1254 = vpop.f32.mrf.mxu0
    %v1255 = vadd.f32 %v1226, %v1254
    %1256 = vmatmul.f32.gmra.mxu0 %v541
    %v1257 = vpop.f32.mrf.mxu0
    %v1258 = vadd.f32 %v1229, %v1257
    %1259 = vmatmul.f32.gmra.mxu0 %v549
    %v1260 = vpop.f32.mrf.mxu0
    %v1261 = vadd.f32 %v1232, %v1260
    %1262 = vmatmul.f32.gmra.mxu0 %v557
    %v1263 = vpop.f32.mrf.mxu0
    %v1264 = vadd.f32 %v1235, %v1263
    %1265 = vdwg.mxu0
    %1266 = vmatpush.xpose.msra.mxu0 0.0
    %1267 = vmatpush.xpose.msra.mxu0 0.0
    %1268 = vmatpush.xpose.msra.mxu0 0.0
    %1269 = vmatpush.xpose.msra.mxu0 0.0
    %1270 = vmatpush.xpose.msra.mxu0 0.0
    %1271 = vmatpush.xpose.msra.mxu0 0.0
    %1272 = vmatpush.xpose.msra.mxu0 0.0
    %1273 = vmatpush.xpose.msra.mxu0 0.0
    %1274 = vmatpush.xpose.msra.mxu0 0.0
    %1275 = vmatpush.xpose.msra.mxu0 0.0
    %1276 = vmatpush.xpose.msra.mxu0 0.0
    %1277 = vmatpush.xpose.msra.mxu0 0.0
    %1278 = vmatpush.xpose.msra.mxu0 %v558
    %1279 = vmatpush.xpose.msra.mxu0 %v550
    %1280 = vmatpush.xpose.msra.mxu0 %v542
    %1281 = vmatpush.xpose.msra.mxu0 %v534
    %1282 = vmatmul.f32.gmra.mxu0 %v534
    %v1283 = vpop.f32.mrf.mxu0
    %v1284 = vadd.f32 %v1255, %v1283
    %1285 = vmatmul.f32.gmra.mxu0 %v542
    %v1286 = vpop.f32.mrf.mxu0
    %v1287 = vadd.f32 %v1258, %v1286
    %1288 = vmatmul.f32.gmra.mxu0 %v550
    %v1289 = vpop.f32.mrf.mxu0
    %v1290 = vadd.f32 %v1261, %v1289
    %1291 = vmatmul.f32.gmra.mxu0 %v558
    %v1292 = vpop.f32.mrf.mxu0
    %v1293 = vadd.f32 %v1264, %v1292
    %1294 = vdwg.mxu0
    %1295 = vmatpush.xpose.msra.mxu0 0.0
    %1296 = vmatpush.xpose.msra.mxu0 0.0
    %1297 = vmatpush.xpose.msra.mxu0 0.0
    %1298 = vmatpush.xpose.msra.mxu0 0.0
    %1299 = vmatpush.xpose.msra.mxu0 0.0
    %1300 = vmatpush.xpose.msra.mxu0 0.0
    %1301 = vmatpush.xpose.msra.mxu0 0.0
    %1302 = vmatpush.xpose.msra.mxu0 0.0
    %1303 = vmatpush.xpose.msra.mxu0 0.0
    %1304 = vmatpush.xpose.msra.mxu0 0.0
    %1305 = vmatpush.xpose.msra.mxu0 0.0
    %1306 = vmatpush.xpose.msra.mxu0 0.0
    %1307 = vmatpush.xpose.msra.mxu0 %v1090
    %1308 = vmatpush.xpose.msra.mxu0 %v1087
    %1309 = vmatpush.xpose.msra.mxu0 %v1084
    %1310 = vmatpush.xpose.msra.mxu0 %v1081
    %1311 = vmatmul.f32.gmra.mxu0 %v1081
    %v1312 = vpop.f32.mrf.mxu0
    %v1313 = vadd.f32 %v1284, %v1312
    %1314 = vmatmul.f32.gmra.mxu0 %v1084
    %v1315 = vpop.f32.mrf.mxu0
    %v1316 = vadd.f32 %v1287, %v1315
    %1317 = vmatmul.f32.gmra.mxu0 %v1087
    %v1318 = vpop.f32.mrf.mxu0
    %v1319 = vadd.f32 %v1290, %v1318
    %1320 = vmatmul.f32.gmra.mxu0 %v1090
    %v1321 = vpop.f32.mrf.mxu0
    %v1322 = vadd.f32 %v1293, %v1321
    %1323 = vdwg.mxu0
    %v1325 = vsel %vm286, %v567, 0
    %v1328 = vsel %vm286, %v575, 0
    %v1331 = vsel %vm286, %v583, 0
    %v1334 = vsel %vm286, %v591, 0
    %1336 = vmatpush.xpose.msra.mxu0 0.0
    %1337 = vmatpush.xpose.msra.mxu0 0.0
    %1338 = vmatpush.xpose.msra.mxu0 0.0
    %1339 = vmatpush.xpose.msra.mxu0 0.0
    %1340 = vmatpush.xpose.msra.mxu0 0.0
    %1341 = vmatpush.xpose.msra.mxu0 0.0
    %1342 = vmatpush.xpose.msra.mxu0 0.0
    %1343 = vmatpush.xpose.msra.mxu0 0.0
    %1344 = vmatpush.xpose.msra.mxu0 0.0
    %1345 = vmatpush.xpose.msra.mxu0 0.0
    %1346 = vmatpush.xpose.msra.mxu0 0.0
    %1347 = vmatpush.xpose.msra.mxu0 0.0
    %1348 = vmatpush.xpose.msra.mxu0 %v584
    %1349 = vmatpush.xpose.msra.mxu0 %v576
    %1350 = vmatpush.xpose.msra.mxu0 %v568
    %1351 = vmatpush.xpose.msra.mxu0 %v560
    %1352 = vmatmul.f32.gmra.mxu0 %v560
    %v1353 = vpop.f32.mrf.mxu0
    %v1354 = vadd.f32 0.0, %v1353
    %1355 = vmatmul.f32.gmra.mxu0 %v568
    %v1356 = vpop.f32.mrf.mxu0
    %v1357 = vadd.f32 0.0, %v1356
    %1358 = vmatmul.f32.gmra.mxu0 %v576
    %v1359 = vpop.f32.mrf.mxu0
    %v1360 = vadd.f32 0.0, %v1359
    %1361 = vmatmul.f32.gmra.mxu0 %v584
    %v1362 = vpop.f32.mrf.mxu0
    %v1363 = vadd.f32 0.0, %v1362
    %1364 = vdwg.mxu0
    %1365 = vmatpush.xpose.msra.mxu0 0.0
    %1366 = vmatpush.xpose.msra.mxu0 0.0
    %1367 = vmatpush.xpose.msra.mxu0 0.0
    %1368 = vmatpush.xpose.msra.mxu0 0.0
    %1369 = vmatpush.xpose.msra.mxu0 0.0
    %1370 = vmatpush.xpose.msra.mxu0 0.0
    %1371 = vmatpush.xpose.msra.mxu0 0.0
    %1372 = vmatpush.xpose.msra.mxu0 0.0
    %1373 = vmatpush.xpose.msra.mxu0 0.0
    %1374 = vmatpush.xpose.msra.mxu0 0.0
    %1375 = vmatpush.xpose.msra.mxu0 0.0
    %1376 = vmatpush.xpose.msra.mxu0 0.0
    %1377 = vmatpush.xpose.msra.mxu0 %v585
    %1378 = vmatpush.xpose.msra.mxu0 %v577
    %1379 = vmatpush.xpose.msra.mxu0 %v569
    %1380 = vmatpush.xpose.msra.mxu0 %v561
    %1381 = vmatmul.f32.gmra.mxu0 %v561
    %v1382 = vpop.f32.mrf.mxu0
    %v1383 = vadd.f32 %v1354, %v1382
    %1384 = vmatmul.f32.gmra.mxu0 %v569
    %v1385 = vpop.f32.mrf.mxu0
    %v1386 = vadd.f32 %v1357, %v1385
    %1387 = vmatmul.f32.gmra.mxu0 %v577
    %v1388 = vpop.f32.mrf.mxu0
    %v1389 = vadd.f32 %v1360, %v1388
    %1390 = vmatmul.f32.gmra.mxu0 %v585
    %v1391 = vpop.f32.mrf.mxu0
    %v1392 = vadd.f32 %v1363, %v1391
    %1393 = vdwg.mxu0
    %1394 = vmatpush.xpose.msra.mxu0 0.0
    %1395 = vmatpush.xpose.msra.mxu0 0.0
    %1396 = vmatpush.xpose.msra.mxu0 0.0
    %1397 = vmatpush.xpose.msra.mxu0 0.0
    %1398 = vmatpush.xpose.msra.mxu0 0.0
    %1399 = vmatpush.xpose.msra.mxu0 0.0
    %1400 = vmatpush.xpose.msra.mxu0 0.0
    %1401 = vmatpush.xpose.msra.mxu0 0.0
    %1402 = vmatpush.xpose.msra.mxu0 0.0
    %1403 = vmatpush.xpose.msra.mxu0 0.0
    %1404 = vmatpush.xpose.msra.mxu0 0.0
    %1405 = vmatpush.xpose.msra.mxu0 0.0
    %1406 = vmatpush.xpose.msra.mxu0 %v586
    %1407 = vmatpush.xpose.msra.mxu0 %v578
    %1408 = vmatpush.xpose.msra.mxu0 %v570
    %1409 = vmatpush.xpose.msra.mxu0 %v562
    %1410 = vmatmul.f32.gmra.mxu0 %v562
    %v1411 = vpop.f32.mrf.mxu0
    %v1412 = vadd.f32 %v1383, %v1411
    %1413 = vmatmul.f32.gmra.mxu0 %v570
    %v1414 = vpop.f32.mrf.mxu0
    %v1415 = vadd.f32 %v1386, %v1414
    %1416 = vmatmul.f32.gmra.mxu0 %v578
    %v1417 = vpop.f32.mrf.mxu0
    %v1418 = vadd.f32 %v1389, %v1417
    %1419 = vmatmul.f32.gmra.mxu0 %v586
    %v1420 = vpop.f32.mrf.mxu0
    %v1421 = vadd.f32 %v1392, %v1420
    %1422 = vdwg.mxu0
    %1423 = vmatpush.xpose.msra.mxu0 0.0
    %1424 = vmatpush.xpose.msra.mxu0 0.0
    %1425 = vmatpush.xpose.msra.mxu0 0.0
    %1426 = vmatpush.xpose.msra.mxu0 0.0
    %1427 = vmatpush.xpose.msra.mxu0 0.0
    %1428 = vmatpush.xpose.msra.mxu0 0.0
    %1429 = vmatpush.xpose.msra.mxu0 0.0
    %1430 = vmatpush.xpose.msra.mxu0 0.0
    %1431 = vmatpush.xpose.msra.mxu0 0.0
    %1432 = vmatpush.xpose.msra.mxu0 0.0
    %1433 = vmatpush.xpose.msra.mxu0 0.0
    %1434 = vmatpush.xpose.msra.mxu0 0.0
    %1435 = vmatpush.xpose.msra.mxu0 %v587
    %1436 = vmatpush.xpose.msra.mxu0 %v579
    %1437 = vmatpush.xpose.msra.mxu0 %v571
    %1438 = vmatpush.xpose.msra.mxu0 %v563
    %1439 = vmatmul.f32.gmra.mxu0 %v563
    %v1440 = vpop.f32.mrf.mxu0
    %v1441 = vadd.f32 %v1412, %v1440
    %1442 = vmatmul.f32.gmra.mxu0 %v571
    %v1443 = vpop.f32.mrf.mxu0
    %v1444 = vadd.f32 %v1415, %v1443
    %1445 = vmatmul.f32.gmra.mxu0 %v579
    %v1446 = vpop.f32.mrf.mxu0
    %v1447 = vadd.f32 %v1418, %v1446
    %1448 = vmatmul.f32.gmra.mxu0 %v587
    %v1449 = vpop.f32.mrf.mxu0
    %v1450 = vadd.f32 %v1421, %v1449
    %1451 = vdwg.mxu0
    %1452 = vmatpush.xpose.msra.mxu0 0.0
    %1453 = vmatpush.xpose.msra.mxu0 0.0
    %1454 = vmatpush.xpose.msra.mxu0 0.0
    %1455 = vmatpush.xpose.msra.mxu0 0.0
    %1456 = vmatpush.xpose.msra.mxu0 0.0
    %1457 = vmatpush.xpose.msra.mxu0 0.0
    %1458 = vmatpush.xpose.msra.mxu0 0.0
    %1459 = vmatpush.xpose.msra.mxu0 0.0
    %1460 = vmatpush.xpose.msra.mxu0 0.0
    %1461 = vmatpush.xpose.msra.mxu0 0.0
    %1462 = vmatpush.xpose.msra.mxu0 0.0
    %1463 = vmatpush.xpose.msra.mxu0 0.0
    %1464 = vmatpush.xpose.msra.mxu0 %v588
    %1465 = vmatpush.xpose.msra.mxu0 %v580
    %1466 = vmatpush.xpose.msra.mxu0 %v572
    %1467 = vmatpush.xpose.msra.mxu0 %v564
    %1468 = vmatmul.f32.gmra.mxu0 %v564
    %v1469 = vpop.f32.mrf.mxu0
    %v1470 = vadd.f32 %v1441, %v1469
    %1471 = vmatmul.f32.gmra.mxu0 %v572
    %v1472 = vpop.f32.mrf.mxu0
    %v1473 = vadd.f32 %v1444, %v1472
    %1474 = vmatmul.f32.gmra.mxu0 %v580
    %v1475 = vpop.f32.mrf.mxu0
    %v1476 = vadd.f32 %v1447, %v1475
    %1477 = vmatmul.f32.gmra.mxu0 %v588
    %v1478 = vpop.f32.mrf.mxu0
    %v1479 = vadd.f32 %v1450, %v1478
    %1480 = vdwg.mxu0
    %1481 = vmatpush.xpose.msra.mxu0 0.0
    %1482 = vmatpush.xpose.msra.mxu0 0.0
    %1483 = vmatpush.xpose.msra.mxu0 0.0
    %1484 = vmatpush.xpose.msra.mxu0 0.0
    %1485 = vmatpush.xpose.msra.mxu0 0.0
    %1486 = vmatpush.xpose.msra.mxu0 0.0
    %1487 = vmatpush.xpose.msra.mxu0 0.0
    %1488 = vmatpush.xpose.msra.mxu0 0.0
    %1489 = vmatpush.xpose.msra.mxu0 0.0
    %1490 = vmatpush.xpose.msra.mxu0 0.0
    %1491 = vmatpush.xpose.msra.mxu0 0.0
    %1492 = vmatpush.xpose.msra.mxu0 0.0
    %1493 = vmatpush.xpose.msra.mxu0 %v589
    %1494 = vmatpush.xpose.msra.mxu0 %v581
    %1495 = vmatpush.xpose.msra.mxu0 %v573
    %1496 = vmatpush.xpose.msra.mxu0 %v565
    %1497 = vmatmul.f32.gmra.mxu0 %v565
    %v1498 = vpop.f32.mrf.mxu0
    %v1499 = vadd.f32 %v1470, %v1498
    %1500 = vmatmul.f32.gmra.mxu0 %v573
    %v1501 = vpop.f32.mrf.mxu0
    %v1502 = vadd.f32 %v1473, %v1501
    %1503 = vmatmul.f32.gmra.mxu0 %v581
    %v1504 = vpop.f32.mrf.mxu0
    %v1505 = vadd.f32 %v1476, %v1504
    %1506 = vmatmul.f32.gmra.mxu0 %v589
    %v1507 = vpop.f32.mrf.mxu0
    %v1508 = vadd.f32 %v1479, %v1507
    %1509 = vdwg.mxu0
    %1510 = vmatpush.xpose.msra.mxu0 0.0
    %1511 = vmatpush.xpose.msra.mxu0 0.0
    %1512 = vmatpush.xpose.msra.mxu0 0.0
    %1513 = vmatpush.xpose.msra.mxu0 0.0
    %1514 = vmatpush.xpose.msra.mxu0 0.0
    %1515 = vmatpush.xpose.msra.mxu0 0.0
    %1516 = vmatpush.xpose.msra.mxu0 0.0
    %1517 = vmatpush.xpose.msra.mxu0 0.0
    %1518 = vmatpush.xpose.msra.mxu0 0.0
    %1519 = vmatpush.xpose.msra.mxu0 0.0
    %1520 = vmatpush.xpose.msra.mxu0 0.0
    %1521 = vmatpush.xpose.msra.mxu0 0.0
    %1522 = vmatpush.xpose.msra.mxu0 %v590
    %1523 = vmatpush.xpose.msra.mxu0 %v582
    %1524 = vmatpush.xpose.msra.mxu0 %v574
    %1525 = vmatpush.xpose.msra.mxu0 %v566
    %1526 = vmatmul.f32.gmra.mxu0 %v566
    %v1527 = vpop.f32.mrf.mxu0
    %v1528 = vadd.f32 %v1499, %v1527
    %1529 = vmatmul.f32.gmra.mxu0 %v574
    %v1530 = vpop.f32.mrf.mxu0
    %v1531 = vadd.f32 %v1502, %v1530
    %1532 = vmatmul.f32.gmra.mxu0 %v582
    %v1533 = vpop.f32.mrf.mxu0
    %v1534 = vadd.f32 %v1505, %v1533
    %1535 = vmatmul.f32.gmra.mxu0 %v590
    %v1536 = vpop.f32.mrf.mxu0
    %v1537 = vadd.f32 %v1508, %v1536
    %1538 = vdwg.mxu0
    %1539 = vmatpush.xpose.msra.mxu0 0.0
    %1540 = vmatpush.xpose.msra.mxu0 0.0
    %1541 = vmatpush.xpose.msra.mxu0 0.0
    %1542 = vmatpush.xpose.msra.mxu0 0.0
    %1543 = vmatpush.xpose.msra.mxu0 0.0
    %1544 = vmatpush.xpose.msra.mxu0 0.0
    %1545 = vmatpush.xpose.msra.mxu0 0.0
    %1546 = vmatpush.xpose.msra.mxu0 0.0
    %1547 = vmatpush.xpose.msra.mxu0 0.0
    %1548 = vmatpush.xpose.msra.mxu0 0.0
    %1549 = vmatpush.xpose.msra.mxu0 0.0
    %1550 = vmatpush.xpose.msra.mxu0 0.0
    %1551 = vmatpush.xpose.msra.mxu0 %v1334
    %1552 = vmatpush.xpose.msra.mxu0 %v1331
    %1553 = vmatpush.xpose.msra.mxu0 %v1328
    %1554 = vmatpush.xpose.msra.mxu0 %v1325
    %1555 = vmatmul.f32.gmra.mxu0 %v1325
    %v1556 = vpop.f32.mrf.mxu0
    %v1557 = vadd.f32 %v1528, %v1556
    %1558 = vmatmul.f32.gmra.mxu0 %v1328
    %v1559 = vpop.f32.mrf.mxu0
    %v1560 = vadd.f32 %v1531, %v1559
    %1561 = vmatmul.f32.gmra.mxu0 %v1331
    %v1562 = vpop.f32.mrf.mxu0
    %v1563 = vadd.f32 %v1534, %v1562
    %1564 = vmatmul.f32.gmra.mxu0 %v1334
    %v1565 = vpop.f32.mrf.mxu0
    %v1566 = vadd.f32 %v1537, %v1565
    %1567 = vdwg.mxu0
    %v1568 = vlaneseq
    %v1569 = vshrl.u32 %v1568, 7
    %v1570 = vadd.s32 %v1569, 8
    %v1571 = vadd.s32 %v1569, 16
    %v1572 = vadd.s32 %v1569, 24
    %v1573 = vlaneseq
    %v1574 = vand.u32 %v1573, 127
    %vm1575 = vcmp.eq.s32.totalorder %v1569, %v1574
    %vm1576 = vcmp.eq.s32.totalorder %v1570, %v1574
    %vm1577 = vcmp.eq.s32.totalorder %v1571, %v1574
    %vm1578 = vcmp.eq.s32.totalorder %v1572, %v1574
    %v1579 = vsel %vm1575, 1, 0
    %v1580 = vsel %vm1576, 1, 0
    %v1581 = vsel %vm1577, 1, 0
    %v1582 = vsel %vm1578, 1, 0
    %vm1583 = vcmp.eq.s32.totalorder %v1579, 1
    %vm1584 = vcmp.eq.s32.totalorder %v1580, 1
    %vm1585 = vcmp.eq.s32.totalorder %v1581, 1
    %vm1586 = vcmp.eq.s32.totalorder %v1582, 1
    %v1587 = vsel %vm1583, %v825, 0.0
    %v1588 = vsel %vm1584, %v828, 0.0
    %v1589 = vsel %vm1585, %v831, 0.0
    %v1590 = vsel %vm1586, %v834, 0.0
    %v1591 = vsel %vm1583, %v1069, 0.0
    %v1592 = vsel %vm1584, %v1072, 0.0
    %v1593 = vsel %vm1585, %v1075, 0.0
    %v1594 = vsel %vm1586, %v1078, 0.0
    %v1595 = vsel %vm1583, %v1313, 0.0
    %v1596 = vsel %vm1584, %v1316, 0.0
    %v1597 = vsel %vm1585, %v1319, 0.0
    %v1598 = vsel %vm1586, %v1322, 0.0
    %v1599 = vsel %vm1583, %v1557, 0.0
    %v1600 = vsel %vm1584, %v1560, 0.0
    %v1601 = vsel %vm1585, %v1563, 0.0
    %v1602 = vsel %vm1586, %v1566, 0.0
    %vm1603 = vcmask 261120
    %v1604 = vsel %vm1603, %v1587, 0.0
    %1605 = vadd.xlane.f32.xlu0 %v1604
    %v1606 = vpop.xlane.xlu0 %1605
    %v1607 = vsel %vm1603, %v1588, 0.0
    %1608 = vadd.xlane.f32.xlu0 %v1607
    %v1609 = vpop.xlane.xlu0 %1608
    %v1610 = vsel %vm1603, %v1589, 0.0
    %1611 = vadd.xlane.f32.xlu0 %v1610
    %v1612 = vpop.xlane.xlu0 %1611
    %v1613 = vsel %vm1603, %v1590, 0.0
    %1614 = vadd.xlane.f32.xlu0 %v1613
    %v1615 = vpop.xlane.xlu0 %1614
    %v1616 = vsel %vm1603, %v1591, 0.0
    %1617 = vadd.xlane.f32.xlu0 %v1616
    %v1618 = vpop.xlane.xlu0 %1617
    %v1619 = vsel %vm1603, %v1592, 0.0
    %1620 = vadd.xlane.f32.xlu0 %v1619
    %v1621 = vpop.xlane.xlu0 %1620
    %v1622 = vsel %vm1603, %v1593, 0.0
    %1623 = vadd.xlane.f32.xlu0 %v1622
    %v1624 = vpop.xlane.xlu0 %1623
    %v1625 = vsel %vm1603, %v1594, 0.0
    %1626 = vadd.xlane.f32.xlu0 %v1625
    %v1627 = vpop.xlane.xlu0 %1626
    %v1628 = vsel %vm1603, %v1595, 0.0
    %1629 = vadd.xlane.f32.xlu0 %v1628
    %v1630 = vpop.xlane.xlu0 %1629
    %v1631 = vsel %vm1603, %v1596, 0.0
    %1632 = vadd.xlane.f32.xlu0 %v1631
    %v1633 = vpop.xlane.xlu0 %1632
    %v1634 = vsel %vm1603, %v1597, 0.0
    %1635 = vadd.xlane.f32.xlu0 %v1634
    %v1636 = vpop.xlane.xlu0 %1635
    %v1637 = vsel %vm1603, %v1598, 0.0
    %1638 = vadd.xlane.f32.xlu0 %v1637
    %v1639 = vpop.xlane.xlu0 %1638
    %v1640 = vsel %vm1603, %v1599, 0.0
    %1641 = vadd.xlane.f32.xlu0 %v1640
    %v1642 = vpop.xlane.xlu0 %1641
    %v1643 = vsel %vm1603, %v1600, 0.0
    %1644 = vadd.xlane.f32.xlu0 %v1643
    %v1645 = vpop.xlane.xlu0 %1644
    %v1646 = vsel %vm1603, %v1601, 0.0
    %1647 = vadd.xlane.f32.xlu0 %v1646
    %v1648 = vpop.xlane.xlu0 %1647
    %v1649 = vsel %vm1603, %v1602, 0.0
    %1650 = vadd.xlane.f32.xlu0 %v1649
    %v1651 = vpop.xlane.xlu0 %1650
    %v1652 = vrsqrt.pop %v1606
    %v1653 = vmul.f32 %v1652, %v1606
    %v1654 = vmul.f32 %v1653, %v1652
    %v1655 = vmul.f32 0.5, %v1654
    %v1656 = vsub.f32 1.5, %v1655
    %v1657 = vmul.f32 %v1652, %v1656
    %vm1658 = vweird.f32 %v1606
    %vm1659 = vweird.f32 %v1652
    %vm1660 = vmor %vm1658, %vm1659
    %v1661 = vsel %vm1660, %v1652, %v1657
    %v1662 = vrsqrt.pop %v1609
    %v1663 = vmul.f32 %v1662, %v1609
    %v1664 = vmul.f32 %v1663, %v1662
    %v1665 = vmul.f32 0.5, %v1664
    %v1666 = vsub.f32 1.5, %v1665
    %v1667 = vmul.f32 %v1662, %v1666
    %vm1668 = vweird.f32 %v1609
    %vm1669 = vweird.f32 %v1662
    %vm1670 = vmor %vm1668, %vm1669
    %v1671 = vsel %vm1670, %v1662, %v1667
    %v1672 = vrsqrt.pop %v1612
    %v1673 = vmul.f32 %v1672, %v1612
    %v1674 = vmul.f32 %v1673, %v1672
    %v1675 = vmul.f32 0.5, %v1674
    %v1676 = vsub.f32 1.5, %v1675
    %v1677 = vmul.f32 %v1672, %v1676
    %vm1678 = vweird.f32 %v1612
    %vm1679 = vweird.f32 %v1672
    %vm1680 = vmor %vm1678, %vm1679
    %v1681 = vsel %vm1680, %v1672, %v1677
    %v1682 = vrsqrt.pop %v1615
    %v1683 = vmul.f32 %v1682, %v1615
    %v1684 = vmul.f32 %v1683, %v1682
    %v1685 = vmul.f32 0.5, %v1684
    %v1686 = vsub.f32 1.5, %v1685
    %v1687 = vmul.f32 %v1682, %v1686
    %vm1688 = vweird.f32 %v1615
    %vm1689 = vweird.f32 %v1682
    %vm1690 = vmor %vm1688, %vm1689
    %v1691 = vsel %vm1690, %v1682, %v1687
    %v1692 = vrsqrt.pop %v1618
    %v1693 = vmul.f32 %v1692, %v1618
    %v1694 = vmul.f32 %v1693, %v1692
    %v1695 = vmul.f32 0.5, %v1694
    %v1696 = vsub.f32 1.5, %v1695
    %v1697 = vmul.f32 %v1692, %v1696
    %vm1698 = vweird.f32 %v1618
    %vm1699 = vweird.f32 %v1692
    %vm1700 = vmor %vm1698, %vm1699
    %v1701 = vsel %vm1700, %v1692, %v1697
    %v1702 = vrsqrt.pop %v1621
    %v1703 = vmul.f32 %v1702, %v1621
    %v1704 = vmul.f32 %v1703, %v1702
    %v1705 = vmul.f32 0.5, %v1704
    %v1706 = vsub.f32 1.5, %v1705
    %v1707 = vmul.f32 %v1702, %v1706
    %vm1708 = vweird.f32 %v1621
    %vm1709 = vweird.f32 %v1702
    %vm1710 = vmor %vm1708, %vm1709
    %v1711 = vsel %vm1710, %v1702, %v1707
    %v1712 = vrsqrt.pop %v1624
    %v1713 = vmul.f32 %v1712, %v1624
    %v1714 = vmul.f32 %v1713, %v1712
    %v1715 = vmul.f32 0.5, %v1714
    %v1716 = vsub.f32 1.5, %v1715
    %v1717 = vmul.f32 %v1712, %v1716
    %vm1718 = vweird.f32 %v1624
    %vm1719 = vweird.f32 %v1712
    %vm1720 = vmor %vm1718, %vm1719
    %v1721 = vsel %vm1720, %v1712, %v1717
    %v1722 = vrsqrt.pop %v1627
    %v1723 = vmul.f32 %v1722, %v1627
    %v1724 = vmul.f32 %v1723, %v1722
    %v1725 = vmul.f32 0.5, %v1724
    %v1726 = vsub.f32 1.5, %v1725
    %v1727 = vmul.f32 %v1722, %v1726
    %vm1728 = vweird.f32 %v1627
    %vm1729 = vweird.f32 %v1722
    %vm1730 = vmor %vm1728, %vm1729
    %v1731 = vsel %vm1730, %v1722, %v1727
    %v1732 = vrsqrt.pop %v1630
    %v1733 = vmul.f32 %v1732, %v1630
    %v1734 = vmul.f32 %v1733, %v1732
    %v1735 = vmul.f32 0.5, %v1734
    %v1736 = vsub.f32 1.5, %v1735
    %v1737 = vmul.f32 %v1732, %v1736
    %vm1738 = vweird.f32 %v1630
    %vm1739 = vweird.f32 %v1732
    %vm1740 = vmor %vm1738, %vm1739
    %v1741 = vsel %vm1740, %v1732, %v1737
    %v1742 = vrsqrt.pop %v1633
    %v1743 = vmul.f32 %v1742, %v1633
    %v1744 = vmul.f32 %v1743, %v1742
    %v1745 = vmul.f32 0.5, %v1744
    %v1746 = vsub.f32 1.5, %v1745
    %v1747 = vmul.f32 %v1742, %v1746
    %vm1748 = vweird.f32 %v1633
    %vm1749 = vweird.f32 %v1742
    %vm1750 = vmor %vm1748, %vm1749
    %v1751 = vsel %vm1750, %v1742, %v1747
    %v1752 = vrsqrt.pop %v1636
    %v1753 = vmul.f32 %v1752, %v1636
    %v1754 = vmul.f32 %v1753, %v1752
    %v1755 = vmul.f32 0.5, %v1754
    %v1756 = vsub.f32 1.5, %v1755
    %v1757 = vmul.f32 %v1752, %v1756
    %vm1758 = vweird.f32 %v1636
    %vm1759 = vweird.f32 %v1752
    %vm1760 = vmor %vm1758, %vm1759
    %v1761 = vsel %vm1760, %v1752, %v1757
    %v1762 = vrsqrt.pop %v1639
    %v1763 = vmul.f32 %v1762, %v1639
    %v1764 = vmul.f32 %v1763, %v1762
    %v1765 = vmul.f32 0.5, %v1764
    %v1766 = vsub.f32 1.5, %v1765
    %v1767 = vmul.f32 %v1762, %v1766
    %vm1768 = vweird.f32 %v1639
    %vm1769 = vweird.f32 %v1762
    %vm1770 = vmor %vm1768, %vm1769
    %v1771 = vsel %vm1770, %v1762, %v1767
    %v1772 = vrsqrt.pop %v1642
    %v1773 = vmul.f32 %v1772, %v1642
    %v1774 = vmul.f32 %v1773, %v1772
    %v1775 = vmul.f32 0.5, %v1774
    %v1776 = vsub.f32 1.5, %v1775
    %v1777 = vmul.f32 %v1772, %v1776
    %vm1778 = vweird.f32 %v1642
    %vm1779 = vweird.f32 %v1772
    %vm1780 = vmor %vm1778, %vm1779
    %v1781 = vsel %vm1780, %v1772, %v1777
    %v1782 = vrsqrt.pop %v1645
    %v1783 = vmul.f32 %v1782, %v1645
    %v1784 = vmul.f32 %v1783, %v1782
    %v1785 = vmul.f32 0.5, %v1784
    %v1786 = vsub.f32 1.5, %v1785
    %v1787 = vmul.f32 %v1782, %v1786
    %vm1788 = vweird.f32 %v1645
    %vm1789 = vweird.f32 %v1782
    %vm1790 = vmor %vm1788, %vm1789
    %v1791 = vsel %vm1790, %v1782, %v1787
    %v1792 = vrsqrt.pop %v1648
    %v1793 = vmul.f32 %v1792, %v1648
    %v1794 = vmul.f32 %v1793, %v1792
    %v1795 = vmul.f32 0.5, %v1794
    %v1796 = vsub.f32 1.5, %v1795
    %v1797 = vmul.f32 %v1792, %v1796
    %vm1798 = vweird.f32 %v1648
    %vm1799 = vweird.f32 %v1792
    %vm1800 = vmor %vm1798, %vm1799
    %v1801 = vsel %vm1800, %v1792, %v1797
    %v1802 = vrsqrt.pop %v1651
    %v1803 = vmul.f32 %v1802, %v1651
    %v1804 = vmul.f32 %v1803, %v1802
    %v1805 = vmul.f32 0.5, %v1804
    %v1806 = vsub.f32 1.5, %v1805
    %v1807 = vmul.f32 %v1802, %v1806
    %vm1808 = vweird.f32 %v1651
    %vm1809 = vweird.f32 %v1802
    %vm1810 = vmor %vm1808, %vm1809
    %v1811 = vsel %vm1810, %v1802, %v1807
    %v1812 = vadd.f32 %v1604, %v1607
    %v1813 = vadd.f32 %v1812, %v1610
    %v1814 = vadd.f32 %v1813, %v1613
    %v1815 = vrot.slane %v1814, 4
    %v1816 = vadd.f32 %v1814, %v1815
    %v1817 = vrot.slane %v1816, 2
    %v1818 = vadd.f32 %v1816, %v1817
    %v1819 = vrot.slane %v1818, 1
    %v1820 = vadd.f32 %v1818, %v1819
    %v1821 = vadd.f32 %v1616, %v1619
    %v1822 = vadd.f32 %v1821, %v1622
    %v1823 = vadd.f32 %v1822, %v1625
    %v1824 = vrot.slane %v1823, 4
    %v1825 = vadd.f32 %v1823, %v1824
    %v1826 = vrot.slane %v1825, 2
    %v1827 = vadd.f32 %v1825, %v1826
    %v1828 = vrot.slane %v1827, 1
    %v1829 = vadd.f32 %v1827, %v1828
    %v1830 = vadd.f32 %v1628, %v1631
    %v1831 = vadd.f32 %v1830, %v1634
    %v1832 = vadd.f32 %v1831, %v1637
    %v1833 = vrot.slane %v1832, 4
    %v1834 = vadd.f32 %v1832, %v1833
    %v1835 = vrot.slane %v1834, 2
    %v1836 = vadd.f32 %v1834, %v1835
    %v1837 = vrot.slane %v1836, 1
    %v1838 = vadd.f32 %v1836, %v1837
    %v1839 = vadd.f32 %v1640, %v1643
    %v1840 = vadd.f32 %v1839, %v1646
    %v1841 = vadd.f32 %v1840, %v1649
    %v1842 = vrot.slane %v1841, 4
    %v1843 = vadd.f32 %v1841, %v1842
    %v1844 = vrot.slane %v1843, 2
    %v1845 = vadd.f32 %v1843, %v1844
    %v1846 = vrot.slane %v1845, 1
    %v1847 = vadd.f32 %v1845, %v1846
    %v1848 = vrsqrt.pop %v1820
    %v1849 = vmul.f32 %v1848, %v1820
    %v1850 = vmul.f32 %v1849, %v1848
    %v1851 = vmul.f32 0.5, %v1850
    %v1852 = vsub.f32 1.5, %v1851
    %v1853 = vmul.f32 %v1848, %v1852
    %vm1854 = vweird.f32 %v1820
    %vm1855 = vweird.f32 %v1848
    %vm1856 = vmor %vm1854, %vm1855
    %v1857 = vsel %vm1856, %v1848, %v1853
    %v1858 = vrsqrt.pop %v1829
    %v1859 = vmul.f32 %v1858, %v1829
    %v1860 = vmul.f32 %v1859, %v1858
    %v1861 = vmul.f32 0.5, %v1860
    %v1862 = vsub.f32 1.5, %v1861
    %v1863 = vmul.f32 %v1858, %v1862
    %vm1864 = vweird.f32 %v1829
    %vm1865 = vweird.f32 %v1858
    %vm1866 = vmor %vm1864, %vm1865
    %v1867 = vsel %vm1866, %v1858, %v1863
    %v1868 = vrsqrt.pop %v1838
    %v1869 = vmul.f32 %v1868, %v1838
    %v1870 = vmul.f32 %v1869, %v1868
    %v1871 = vmul.f32 0.5, %v1870
    %v1872 = vsub.f32 1.5, %v1871
    %v1873 = vmul.f32 %v1868, %v1872
    %vm1874 = vweird.f32 %v1838
    %vm1875 = vweird.f32 %v1868
    %vm1876 = vmor %vm1874, %vm1875
    %v1877 = vsel %vm1876, %v1868, %v1873
    %v1878 = vrsqrt.pop %v1847
    %v1879 = vmul.f32 %v1878, %v1847
    %v1880 = vmul.f32 %v1879, %v1878
    %v1881 = vmul.f32 0.5, %v1880
    %v1882 = vsub.f32 1.5, %v1881
    %v1883 = vmul.f32 %v1878, %v1882
    %vm1884 = vweird.f32 %v1847
    %vm1885 = vweird.f32 %v1878
    %vm1886 = vmor %vm1884, %vm1885
    %v1887 = vsel %vm1886, %v1878, %v1883
    %v1888 = vmul.f32 %v825, %v1661
    %v1889 = vmul.f32 %v828, %v1671
    %v1890 = vmul.f32 %v831, %v1681
    %v1891 = vmul.f32 %v834, %v1691
    %v1892 = vmul.f32 %v1069, %v1701
    %v1893 = vmul.f32 %v1072, %v1711
    %v1894 = vmul.f32 %v1075, %v1721
    %v1895 = vmul.f32 %v1078, %v1731
    %v1896 = vmul.f32 %v1313, %v1741
    %v1897 = vmul.f32 %v1316, %v1751
    %v1898 = vmul.f32 %v1319, %v1761
    %v1899 = vmul.f32 %v1322, %v1771
    %v1900 = vmul.f32 %v1557, %v1781
    %v1901 = vmul.f32 %v1560, %v1791
    %v1902 = vmul.f32 %v1563, %v1801
    %v1903 = vmul.f32 %v1566, %v1811
    %v1904 = vmul.f32 %v1888, %v1857
    %v1905 = vmul.f32 %v1889, %v1857
    %v1906 = vmul.f32 %v1890, %v1857
    %v1907 = vmul.f32 %v1891, %v1857
    %v1908 = vmul.f32 %v1892, %v1867
    %v1909 = vmul.f32 %v1893, %v1867
    %v1910 = vmul.f32 %v1894, %v1867
    %v1911 = vmul.f32 %v1895, %v1867
    %v1912 = vmul.f32 %v1896, %v1877
    %v1913 = vmul.f32 %v1897, %v1877
    %v1914 = vmul.f32 %v1898, %v1877
    %v1915 = vmul.f32 %v1899, %v1877
    %v1916 = vmul.f32 %v1900, %v1887
    %v1917 = vmul.f32 %v1901, %v1887
    %v1918 = vmul.f32 %v1902, %v1887
    %v1919 = vmul.f32 %v1903, %v1887
    %v1920 = vmax.f32 %v1904, -1.0
    %v1921 = vmax.f32 %v1905, -1.0
    %v1922 = vmax.f32 %v1906, -1.0
    %v1923 = vmax.f32 %v1907, -1.0
    %v1924 = vmax.f32 %v1908, -1.0
    %v1925 = vmax.f32 %v1909, -1.0
    %v1926 = vmax.f32 %v1910, -1.0
    %v1927 = vmax.f32 %v1911, -1.0
    %v1928 = vmax.f32 %v1912, -1.0
    %v1929 = vmax.f32 %v1913, -1.0
    %v1930 = vmax.f32 %v1914, -1.0
    %v1931 = vmax.f32 %v1915, -1.0
    %v1932 = vmax.f32 %v1916, -1.0
    %v1933 = vmax.f32 %v1917, -1.0
    %v1934 = vmax.f32 %v1918, -1.0
    %v1935 = vmax.f32 %v1919, -1.0
    %v1936 = vmin.f32 %v1920, 1.0
    %v1937 = vmin.f32 %v1921, 1.0
    %v1938 = vmin.f32 %v1922, 1.0
    %v1939 = vmin.f32 %v1923, 1.0
    %v1940 = vmin.f32 %v1924, 1.0
    %v1941 = vmin.f32 %v1925, 1.0
    %v1942 = vmin.f32 %v1926, 1.0
    %v1943 = vmin.f32 %v1927, 1.0
    %v1944 = vmin.f32 %v1928, 1.0
    %v1945 = vmin.f32 %v1929, 1.0
    %v1946 = vmin.f32 %v1930, 1.0
    %v1947 = vmin.f32 %v1931, 1.0
    %v1948 = vmin.f32 %v1932, 1.0
    %v1949 = vmin.f32 %v1933, 1.0
    %v1950 = vmin.f32 %v1934, 1.0
    %v1951 = vmin.f32 %v1935, 1.0
    %v1952 = vpack.c.bf16 %v1936, %v1936
    %v1953 = vpack.c.bf16 %v1937, %v1937
    %v1954 = vpack.c.bf16 %v1938, %v1938
    %v1955 = vpack.c.bf16 %v1939, %v1939
    %v1956 = vpack.c.bf16 %v1940, %v1940
    %v1957 = vpack.c.bf16 %v1941, %v1941
    %v1958 = vpack.c.bf16 %v1942, %v1942
    %v1959 = vpack.c.bf16 %v1943, %v1943
    %v1960 = vpack.c.bf16 %v1944, %v1944
    %v1961 = vpack.c.bf16 %v1945, %v1945
    %v1962 = vpack.c.bf16 %v1946, %v1946
    %v1963 = vpack.c.bf16 %v1947, %v1947
    %v1964 = vpack.c.bf16 %v1948, %v1948
    %v1965 = vpack.c.bf16 %v1949, %v1949
    %v1966 = vpack.c.bf16 %v1950, %v1950
    %v1967 = vpack.c.bf16 %v1951, %v1951
    %v1968 = vpack.c.bf16 %v160, %v152
    %v1969 = vpack.c.bf16 %v161, %v153
    %v1970 = vpack.c.bf16 %v162, %v154
    %v1971 = vpack.c.bf16 %v163, %v155
    %v1972 = vpack.c.bf16 %v164, %v156
    %v1973 = vpack.c.bf16 %v165, %v157
    %v1974 = vpack.c.bf16 %v166, %v158
    %v1975 = vpack.c.bf16 %v167, %v159
    %v1976 = vpack.c.bf16 %v176, %v168
    %v1977 = vpack.c.bf16 %v177, %v169
    %v1978 = vpack.c.bf16 %v178, %v170
    %v1979 = vpack.c.bf16 %v179, %v171
    %v1980 = vpack.c.bf16 %v180, %v172
    %v1981 = vpack.c.bf16 %v181, %v173
    %v1982 = vpack.c.bf16 %v182, %v174
    %v1983 = vpack.c.bf16 %v183, %v175
    %v1984 = vpack.c.bf16 %v192, %v184
    %v1985 = vpack.c.bf16 %v193, %v185
    %v1986 = vpack.c.bf16 %v194, %v186
    %v1987 = vpack.c.bf16 %v195, %v187
    %v1988 = vpack.c.bf16 %v196, %v188
    %v1989 = vpack.c.bf16 %v197, %v189
    %v1990 = vpack.c.bf16 %v198, %v190
    %v1991 = vpack.c.bf16 %v199, %v191
    %v1992 = vpack.c.bf16 %v208, %v200
    %v1993 = vpack.c.bf16 %v209, %v201
    %v1994 = vpack.c.bf16 %v210, %v202
    %v1995 = vpack.c.bf16 %v211, %v203
    %v1996 = vpack.c.bf16 %v212, %v204
    %v1997 = vpack.c.bf16 %v213, %v205
    %v1998 = vpack.c.bf16 %v214, %v206
    %v1999 = vpack.c.bf16 %v215, %v207
    %v2000 = vpack.c.bf16 %v224, %v216
    %v2001 = vpack.c.bf16 %v225, %v217
    %v2002 = vpack.c.bf16 %v226, %v218
    %v2003 = vpack.c.bf16 %v227, %v219
    %v2004 = vpack.c.bf16 %v228, %v220
    %v2005 = vpack.c.bf16 %v229, %v221
    %v2006 = vpack.c.bf16 %v230, %v222
    %v2007 = vpack.c.bf16 %v231, %v223
    %v2008 = vpack.c.bf16 %v240, %v232
    %v2009 = vpack.c.bf16 %v241, %v233
    %v2010 = vpack.c.bf16 %v242, %v234
    %v2011 = vpack.c.bf16 %v243, %v235
    %v2012 = vpack.c.bf16 %v244, %v236
    %v2013 = vpack.c.bf16 %v245, %v237
    %v2014 = vpack.c.bf16 %v246, %v238
    %v2015 = vpack.c.bf16 %v247, %v239
    %v2016 = vpack.c.bf16 %v256, %v248
    %v2017 = vpack.c.bf16 %v257, %v249
    %v2018 = vpack.c.bf16 %v258, %v250
    %v2019 = vpack.c.bf16 %v259, %v251
    %v2020 = vpack.c.bf16 %v260, %v252
    %v2021 = vpack.c.bf16 %v261, %v253
    %v2022 = vpack.c.bf16 %v262, %v254
    %v2023 = vpack.c.bf16 %v263, %v255
    %v2024 = vpack.c.bf16 %v272, %v264
    %v2025 = vpack.c.bf16 %v273, %v265
    %v2026 = vpack.c.bf16 %v274, %v266
    %v2027 = vpack.c.bf16 %v275, %v267
    %v2028 = vpack.c.bf16 %v276, %v268
    %v2029 = vpack.c.bf16 %v277, %v269
    %v2030 = vpack.c.bf16 %v278, %v270
    %v2031 = vpack.c.bf16 %v279, %v271
    %v2032 = vld [vmem:[#allocation4] sm:$0xf]
    %v2033 = vld [vmem:[#allocation4 + $0x4] sm:$0xf]
    %v2034 = vld [vmem:[#allocation4 + $0x8] sm:$0xf]
    %v2035 = vld [vmem:[#allocation4 + $0xc] sm:$0xf]
    %v2036 = vld [vmem:[#allocation4 + $0x10] sm:$0xf]
    %v2037 = vld [vmem:[#allocation4 + $0x14] sm:$0xf]
    %v2038 = vld [vmem:[#allocation4 + $0x18] sm:$0xf]
    %v2039 = vld [vmem:[#allocation4 + $0x1c] sm:$0xf]
    %v2040 = vld [vmem:[#allocation4 + $0x20] sm:$0xf]
    %v2041 = vld [vmem:[#allocation4 + $0x24] sm:$0xf]
    %v2042 = vld [vmem:[#allocation4 + $0x28] sm:$0xf]
    %v2043 = vld [vmem:[#allocation4 + $0x2c] sm:$0xf]
    %v2044 = vld [vmem:[#allocation4 + $0x30] sm:$0xf]
    %v2045 = vld [vmem:[#allocation4 + $0x34] sm:$0xf]
    %v2046 = vld [vmem:[#allocation4 + $0x38] sm:$0xf]
    %v2047 = vld [vmem:[#allocation4 + $0x3c] sm:$0xf]
    %v2048 = vld [vmem:[#allocation4 + $0x40] sm:$0xf]
    %v2049 = vld [vmem:[#allocation4 + $0x44] sm:$0xf]
    %v2050 = vld [vmem:[#allocation4 + $0x48] sm:$0xf]
    %v2051 = vld [vmem:[#allocation4 + $0x4c] sm:$0xf]
    %v2052 = vld [vmem:[#allocation4 + $0x50] sm:$0xf]
    %v2053 = vld [vmem:[#allocation4 + $0x54] sm:$0xf]
    %v2054 = vld [vmem:[#allocation4 + $0x58] sm:$0xf]
    %v2055 = vld [vmem:[#allocation4 + $0x5c] sm:$0xf]
    %v2056 = vld [vmem:[#allocation4 + $0x60] sm:$0xf]
    %v2057 = vld [vmem:[#allocation4 + $0x64] sm:$0xf]
    %v2058 = vld [vmem:[#allocation4 + $0x68] sm:$0xf]
    %v2059 = vld [vmem:[#allocation4 + $0x6c] sm:$0xf]
    %v2060 = vld [vmem:[#allocation4 + $0x70] sm:$0xf]
    %v2061 = vld [vmem:[#allocation4 + $0x74] sm:$0xf]
    %v2062 = vld [vmem:[#allocation4 + $0x78] sm:$0xf]
    %v2063 = vld [vmem:[#allocation4 + $0x7c] sm:$0xf]
    %v2064 = vld [vmem:[#allocation4 + $0x80] sm:$0xf]
    %v2065 = vld [vmem:[#allocation4 + $0x84] sm:$0xf]
    %v2066 = vld [vmem:[#allocation4 + $0x88] sm:$0xf]
    %v2067 = vld [vmem:[#allocation4 + $0x8c] sm:$0xf]
    %v2068 = vld [vmem:[#allocation4 + $0x90] sm:$0xf]
    %v2069 = vld [vmem:[#allocation4 + $0x94] sm:$0xf]
    %v2070 = vld [vmem:[#allocation4 + $0x98] sm:$0xf]
    %v2071 = vld [vmem:[#allocation4 + $0x9c] sm:$0xf]
    %v2072 = vld [vmem:[#allocation4 + $0xa0] sm:$0xf]
    %v2073 = vld [vmem:[#allocation4 + $0xa4] sm:$0xf]
    %v2074 = vld [vmem:[#allocation4 + $0xa8] sm:$0xf]
    %v2075 = vld [vmem:[#allocation4 + $0xac] sm:$0xf]
    %v2076 = vld [vmem:[#allocation4 + $0xb0] sm:$0xf]
    %v2077 = vld [vmem:[#allocation4 + $0xb4] sm:$0xf]
    %v2078 = vld [vmem:[#allocation4 + $0xb8] sm:$0xf]
    %v2079 = vld [vmem:[#allocation4 + $0xbc] sm:$0xf]
    %v2080 = vld [vmem:[#allocation4 + $0xc0] sm:$0xf]
    %v2081 = vld [vmem:[#allocation4 + $0xc4] sm:$0xf]
    %v2082 = vld [vmem:[#allocation4 + $0xc8] sm:$0xf]
    %v2083 = vld [vmem:[#allocation4 + $0xcc] sm:$0xf]
    %v2084 = vld [vmem:[#allocation4 + $0xd0] sm:$0xf]
    %v2085 = vld [vmem:[#allocation4 + $0xd4] sm:$0xf]
    %v2086 = vld [vmem:[#allocation4 + $0xd8] sm:$0xf]
    %v2087 = vld [vmem:[#allocation4 + $0xdc] sm:$0xf]
    %v2088 = vld [vmem:[#allocation4 + $0xe0] sm:$0xf]
    %v2089 = vld [vmem:[#allocation4 + $0xe4] sm:$0xf]
    %v2090 = vld [vmem:[#allocation4 + $0xe8] sm:$0xf]
    %v2091 = vld [vmem:[#allocation4 + $0xec] sm:$0xf]
    %v2092 = vld [vmem:[#allocation4 + $0xf0] sm:$0xf]
    %v2093 = vld [vmem:[#allocation4 + $0xf4] sm:$0xf]
    %v2094 = vld [vmem:[#allocation4 + $0xf8] sm:$0xf]
    %v2095 = vld [vmem:[#allocation4 + $0xfc] sm:$0xf]
    %v2096 = vld [vmem:[#allocation4 + $0x100] sm:$0xf]
    %v2097 = vld [vmem:[#allocation4 + $0x104] sm:$0xf]
    %v2098 = vld [vmem:[#allocation4 + $0x108] sm:$0xf]
    %v2099 = vld [vmem:[#allocation4 + $0x10c] sm:$0xf]
    %v2100 = vld [vmem:[#allocation4 + $0x110] sm:$0xf]
    %v2101 = vld [vmem:[#allocation4 + $0x114] sm:$0xf]
    %v2102 = vld [vmem:[#allocation4 + $0x118] sm:$0xf]
    %v2103 = vld [vmem:[#allocation4 + $0x11c] sm:$0xf]
    %v2104 = vld [vmem:[#allocation4 + $0x120] sm:$0xf]
    %v2105 = vld [vmem:[#allocation4 + $0x124] sm:$0xf]
    %v2106 = vld [vmem:[#allocation4 + $0x128] sm:$0xf]
    %v2107 = vld [vmem:[#allocation4 + $0x12c] sm:$0xf]
    %v2108 = vld [vmem:[#allocation4 + $0x130] sm:$0xf]
    %v2109 = vld [vmem:[#allocation4 + $0x134] sm:$0xf]
    %v2110 = vld [vmem:[#allocation4 + $0x138] sm:$0xf]
    %v2111 = vld [vmem:[#allocation4 + $0x13c] sm:$0xf]
    %v2112 = vld [vmem:[#allocation4 + $0x140] sm:$0xf]
    %v2113 = vld [vmem:[#allocation4 + $0x144] sm:$0xf]
    %v2114 = vld [vmem:[#allocation4 + $0x148] sm:$0xf]
    %v2115 = vld [vmem:[#allocation4 + $0x14c] sm:$0xf]
    %v2116 = vld [vmem:[#allocation4 + $0x150] sm:$0xf]
    %v2117 = vld [vmem:[#allocation4 + $0x154] sm:$0xf]
    %v2118 = vld [vmem:[#allocation4 + $0x158] sm:$0xf]
    %v2119 = vld [vmem:[#allocation4 + $0x15c] sm:$0xf]
    %v2120 = vld [vmem:[#allocation4 + $0x160] sm:$0xf]
    %v2121 = vld [vmem:[#allocation4 + $0x164] sm:$0xf]
    %v2122 = vld [vmem:[#allocation4 + $0x168] sm:$0xf]
    %v2123 = vld [vmem:[#allocation4 + $0x16c] sm:$0xf]
    %v2124 = vld [vmem:[#allocation4 + $0x170] sm:$0xf]
    %v2125 = vld [vmem:[#allocation4 + $0x174] sm:$0xf]
    %v2126 = vld [vmem:[#allocation4 + $0x178] sm:$0xf]
    %v2127 = vld [vmem:[#allocation4 + $0x17c] sm:$0xf]
    %v2128 = vld [vmem:[#allocation4 + $0x180] sm:$0xf]
    %v2129 = vld [vmem:[#allocation4 + $0x184] sm:$0xf]
    %v2130 = vld [vmem:[#allocation4 + $0x188] sm:$0xf]
    %v2131 = vld [vmem:[#allocation4 + $0x18c] sm:$0xf]
    %v2132 = vld [vmem:[#allocation4 + $0x190] sm:$0xf]
    %v2133 = vld [vmem:[#allocation4 + $0x194] sm:$0xf]
    %v2134 = vld [vmem:[#allocation4 + $0x198] sm:$0xf]
    %v2135 = vld [vmem:[#allocation4 + $0x19c] sm:$0xf]
    %v2136 = vld [vmem:[#allocation4 + $0x1a0] sm:$0xf]
    %v2137 = vld [vmem:[#allocation4 + $0x1a4] sm:$0xf]
    %v2138 = vld [vmem:[#allocation4 + $0x1a8] sm:$0xf]
    %v2139 = vld [vmem:[#allocation4 + $0x1ac] sm:$0xf]
    %v2140 = vld [vmem:[#allocation4 + $0x1b0] sm:$0xf]
    %v2141 = vld [vmem:[#allocation4 + $0x1b4] sm:$0xf]
    %v2142 = vld [vmem:[#allocation4 + $0x1b8] sm:$0xf]
    %v2143 = vld [vmem:[#allocation4 + $0x1bc] sm:$0xf]
    %v2144 = vld [vmem:[#allocation4 + $0x1c0] sm:$0xf]
    %v2145 = vld [vmem:[#allocation4 + $0x1c4] sm:$0xf]
    %v2146 = vld [vmem:[#allocation4 + $0x1c8] sm:$0xf]
    %v2147 = vld [vmem:[#allocation4 + $0x1cc] sm:$0xf]
    %v2148 = vld [vmem:[#allocation4 + $0x1d0] sm:$0xf]
    %v2149 = vld [vmem:[#allocation4 + $0x1d4] sm:$0xf]
    %v2150 = vld [vmem:[#allocation4 + $0x1d8] sm:$0xf]
    %v2151 = vld [vmem:[#allocation4 + $0x1dc] sm:$0xf]
    %v2152 = vld [vmem:[#allocation4 + $0x1e0] sm:$0xf]
    %v2153 = vld [vmem:[#allocation4 + $0x1e4] sm:$0xf]
    %v2154 = vld [vmem:[#allocation4 + $0x1e8] sm:$0xf]
    %v2155 = vld [vmem:[#allocation4 + $0x1ec] sm:$0xf]
    %v2156 = vld [vmem:[#allocation4 + $0x1f0] sm:$0xf]
    %v2282 = vunpack.c.l.b16 %v2032
    %v2283 = vunpack.c.l.b16 %v2033
    %v2284 = vunpack.c.l.b16 %v2034
    %v2285 = vunpack.c.l.b16 %v2035
    %v2286 = vunpack.c.l.b16 %v2036
    %v2287 = vunpack.c.l.b16 %v2037
    %v2288 = vunpack.c.l.b16 %v2038
    %v2289 = vunpack.c.l.b16 %v2039
    %v2290 = vunpack.c.l.b16 %v2040
    %v2291 = vunpack.c.l.b16 %v2041
    %v2292 = vunpack.c.l.b16 %v2042
    %v2293 = vunpack.c.l.b16 %v2043
    %v2294 = vunpack.c.l.b16 %v2044
    %v2295 = vunpack.c.l.b16 %v2045
    %v2296 = vunpack.c.l.b16 %v2046
    %v2297 = vunpack.c.l.b16 %v2047
    %v2298 = vunpack.c.l.b16 %v2048
    %v2299 = vunpack.c.l.b16 %v2049
    %v2300 = vunpack.c.l.b16 %v2050
    %v2301 = vunpack.c.l.b16 %v2051
    %v2302 = vunpack.c.l.b16 %v2052
    %v2303 = vunpack.c.l.b16 %v2053
    %v2304 = vunpack.c.l.b16 %v2054
    %v2305 = vunpack.c.l.b16 %v2055
    %v2306 = vunpack.c.l.b16 %v2056
    %v2307 = vunpack.c.l.b16 %v2057
    %v2308 = vunpack.c.l.b16 %v2058
    %v2309 = vunpack.c.l.b16 %v2059
    %v2310 = vunpack.c.l.b16 %v2060
    %v2311 = vunpack.c.l.b16 %v2061
    %v2312 = vunpack.c.l.b16 %v2062
    %v2313 = vunpack.c.l.b16 %v2063
    %v2314 = vunpack.c.l.b16 %v2064
    %v2315 = vunpack.c.l.b16 %v2065
    %v2316 = vunpack.c.l.b16 %v2066
    %v2317 = vunpack.c.l.b16 %v2067
    %v2318 = vunpack.c.l.b16 %v2068
    %v2319 = vunpack.c.l.b16 %v2069
    %v2320 = vunpack.c.l.b16 %v2070
    %v2321 = vunpack.c.l.b16 %v2071
    %v2322 = vunpack.c.l.b16 %v2072
    %v2323 = vunpack.c.l.b16 %v2073
    %v2324 = vunpack.c.l.b16 %v2074
    %v2325 = vunpack.c.l.b16 %v2075
    %v2326 = vunpack.c.l.b16 %v2076
    %v2327 = vunpack.c.l.b16 %v2077
    %v2328 = vunpack.c.l.b16 %v2078
    %v2329 = vunpack.c.l.b16 %v2079
    %v2330 = vunpack.c.l.b16 %v2080
    %v2331 = vunpack.c.l.b16 %v2081
    %v2332 = vunpack.c.l.b16 %v2082
    %v2333 = vunpack.c.l.b16 %v2083
    %v2334 = vunpack.c.l.b16 %v2084
    %v2335 = vunpack.c.l.b16 %v2085
    %v2336 = vunpack.c.l.b16 %v2086
    %v2337 = vunpack.c.l.b16 %v2087
    %v2338 = vunpack.c.l.b16 %v2088
    %v2339 = vunpack.c.l.b16 %v2089
    %v2340 = vunpack.c.l.b16 %v2090
    %v2341 = vunpack.c.l.b16 %v2091
    %v2342 = vunpack.c.l.b16 %v2092
    %v2343 = vunpack.c.l.b16 %v2093
    %v2344 = vunpack.c.l.b16 %v2094
    %v2345 = vunpack.c.l.b16 %v2095
    %v2346 = vunpack.c.l.b16 %v2096
    %v2347 = vunpack.c.l.b16 %v2097
    %v2348 = vunpack.c.l.b16 %v2098
    %v2349 = vunpack.c.l.b16 %v2099
    %v2350 = vunpack.c.l.b16 %v2100
    %v2351 = vunpack.c.l.b16 %v2101
    %v2352 = vunpack.c.l.b16 %v2102
    %v2353 = vunpack.c.l.b16 %v2103
    %v2354 = vunpack.c.l.b16 %v2104
    %v2355 = vunpack.c.l.b16 %v2105
    %v2356 = vunpack.c.l.b16 %v2106
    %v2357 = vunpack.c.l.b16 %v2107
    %v2358 = vunpack.c.l.b16 %v2108
    %v2359 = vunpack.c.l.b16 %v2109
    %v2360 = vunpack.c.l.b16 %v2110
    %v2361 = vunpack.c.l.b16 %v2111
    %v2362 = vunpack.c.l.b16 %v2112
    %v2363 = vunpack.c.l.b16 %v2113
    %v2364 = vunpack.c.l.b16 %v2114
    %v2365 = vunpack.c.l.b16 %v2115
    %v2366 = vunpack.c.l.b16 %v2116
    %v2367 = vunpack.c.l.b16 %v2117
    %v2368 = vunpack.c.l.b16 %v2118
    %v2369 = vunpack.c.l.b16 %v2119
    %v2370 = vunpack.c.l.b16 %v2120
    %v2371 = vunpack.c.l.b16 %v2121
    %v2372 = vunpack.c.l.b16 %v2122
    %v2373 = vunpack.c.l.b16 %v2123
    %v2374 = vunpack.c.l.b16 %v2124
    %v2375 = vunpack.c.l.b16 %v2125
    %v2376 = vunpack.c.l.b16 %v2126
    %v2377 = vunpack.c.l.b16 %v2127
    %v2378 = vunpack.c.l.b16 %v2128
    %v2379 = vunpack.c.l.b16 %v2129
    %v2380 = vunpack.c.l.b16 %v2130
    %v2381 = vunpack.c.l.b16 %v2131
    %v2382 = vunpack.c.l.b16 %v2132
    %v2383 = vunpack.c.l.b16 %v2133
    %v2384 = vunpack.c.l.b16 %v2134
    %v2385 = vunpack.c.l.b16 %v2135
    %v2386 = vunpack.c.l.b16 %v2136
    %v2387 = vunpack.c.l.b16 %v2137
    %v2388 = vunpack.c.l.b16 %v2138
    %v2389 = vunpack.c.l.b16 %v2139
    %v2390 = vunpack.c.l.b16 %v2140
    %v2391 = vunpack.c.l.b16 %v2141
    %v2392 = vunpack.c.l.b16 %v2142
    %v2393 = vunpack.c.l.b16 %v2143
    %v2394 = vunpack.c.l.b16 %v2144
    %v2395 = vunpack.c.l.b16 %v2145
    %v2396 = vunpack.c.l.b16 %v2146
    %v2397 = vunpack.c.l.b16 %v2147
    %v2398 = vunpack.c.l.b16 %v2148
    %v2399 = vunpack.c.l.b16 %v2149
    %v2400 = vunpack.c.l.b16 %v2150
    %v2401 = vunpack.c.l.b16 %v2151
    %v2402 = vunpack.c.l.b16 %v2152
    %v2403 = vunpack.c.l.b16 %v2153
    %v2404 = vunpack.c.l.b16 %v2154
    %v2405 = vunpack.c.l.b16 %v2155
    %v2406 = vunpack.c.l.b16 %v2156
    %v2407 = vpack.c.b16 %v2283, %v2282
    %v2408 = vpack.c.b16 %v2285, %v2284
    %v2409 = vpack.c.b16 %v2287, %v2286
    %v2410 = vpack.c.b16 %v2289, %v2288
    %v2411 = vpack.c.b16 %v2291, %v2290
    %v2412 = vpack.c.b16 %v2293, %v2292
    %v2413 = vpack.c.b16 %v2295, %v2294
    %v2414 = vpack.c.b16 %v2297, %v2296
    %v2415 = vpack.c.b16 %v2299, %v2298
    %v2416 = vpack.c.b16 %v2301, %v2300
    %v2417 = vpack.c.b16 %v2303, %v2302
    %v2418 = vpack.c.b16 %v2305, %v2304
    %v2419 = vpack.c.b16 %v2307, %v2306
    %v2420 = vpack.c.b16 %v2309, %v2308
    %v2421 = vpack.c.b16 %v2311, %v2310
    %v2422 = vpack.c.b16 %v2313, %v2312
    %v2423 = vpack.c.b16 %v2315, %v2314
    %v2424 = vpack.c.b16 %v2317, %v2316
    %v2425 = vpack.c.b16 %v2319, %v2318
    %v2426 = vpack.c.b16 %v2321, %v2320
    %v2427 = vpack.c.b16 %v2323, %v2322
    %v2428 = vpack.c.b16 %v2325, %v2324
    %v2429 = vpack.c.b16 %v2327, %v2326
    %v2430 = vpack.c.b16 %v2329, %v2328
    %v2431 = vpack.c.b16 %v2331, %v2330
    %v2432 = vpack.c.b16 %v2333, %v2332
    %v2433 = vpack.c.b16 %v2335, %v2334
    %v2434 = vpack.c.b16 %v2337, %v2336
    %v2435 = vpack.c.b16 %v2339, %v2338
    %v2436 = vpack.c.b16 %v2341, %v2340
    %v2437 = vpack.c.b16 %v2343, %v2342
    %v2438 = vpack.c.b16 %v2345, %v2344
    %v2439 = vpack.c.b16 %v2347, %v2346
    %v2440 = vpack.c.b16 %v2349, %v2348
    %v2441 = vpack.c.b16 %v2351, %v2350
    %v2442 = vpack.c.b16 %v2353, %v2352
    %v2443 = vpack.c.b16 %v2355, %v2354
    %v2444 = vpack.c.b16 %v2357, %v2356
    %v2445 = vpack.c.b16 %v2359, %v2358
    %v2446 = vpack.c.b16 %v2361, %v2360
    %v2447 = vpack.c.b16 %v2363, %v2362
    %v2448 = vpack.c.b16 %v2365, %v2364
    %v2449 = vpack.c.b16 %v2367, %v2366
    %v2450 = vpack.c.b16 %v2369, %v2368
    %v2451 = vpack.c.b16 %v2371, %v2370
    %v2452 = vpack.c.b16 %v2373, %v2372
    %v2453 = vpack.c.b16 %v2375, %v2374
    %v2454 = vpack.c.b16 %v2377, %v2376
    %v2455 = vpack.c.b16 %v2379, %v2378
    %v2456 = vpack.c.b16 %v2381, %v2380
    %v2457 = vpack.c.b16 %v2383, %v2382
    %v2458 = vpack.c.b16 %v2385, %v2384
    %v2459 = vpack.c.b16 %v2387, %v2386
    %v2460 = vpack.c.b16 %v2389, %v2388
    %v2461 = vpack.c.b16 %v2391, %v2390
    %v2462 = vpack.c.b16 %v2393, %v2392
    %v2463 = vpack.c.b16 %v2395, %v2394
    %v2464 = vpack.c.b16 %v2397, %v2396
    %v2465 = vpack.c.b16 %v2399, %v2398
    %v2466 = vpack.c.b16 %v2401, %v2400
    %v2467 = vpack.c.b16 %v2403, %v2402
    %v2468 = vpack.c.b16 %v2405, %v2404
    %v2469 = vpack.c.b16 %v2406, %v2406
    %v2533 = vsel %vm286, %v1975, 0
    %v2536 = vsel %vm286, %v1983, 0
    %v2539 = vsel %vm286, %v1991, 0
    %v2542 = vsel %vm286, %v1999, 0
    %v2545 = vsel %vm286, %v2007, 0
    %v2548 = vsel %vm286, %v2015, 0
    %v2551 = vsel %vm286, %v2023, 0
    %v2554 = vsel %vm286, %v2031, 0
    %vm2556 = vcmask 1043456
    %v2558 = vsel %vm2556, %v2469, 0
    %2560 = vmatpush.bf16.msra.mxu0 %v2414
    %2561 = vmatpush.bf16.msra.mxu0 %v2413
    %2562 = vmatpush.bf16.msra.mxu0 %v2412
    %2563 = vmatpush.bf16.msra.mxu0 %v2411
    %2564 = vmatpush.bf16.msra.mxu0 %v2410
    %2565 = vmatpush.bf16.msra.mxu0 %v2409
    %2566 = vmatpush.bf16.msra.mxu0 %v2408
    %2567 = vmatpush.bf16.msra.mxu0 %v2407
    %2568 = vmatmul.bf16.gmra.mxu0 %v1968
    %v2569 = vpop.f32.mrf.mxu0
    %v2570 = vadd.f32 0.0, %v2569
    %v2571 = vpop.f32.mrf.mxu0
    %v2572 = vadd.f32 0.0, %v2571
    %2573 = vmatmul.bf16.gmra.mxu0 %v1976
    %v2574 = vpop.f32.mrf.mxu0
    %v2575 = vadd.f32 0.0, %v2574
    %v2576 = vpop.f32.mrf.mxu0
    %v2577 = vadd.f32 0.0, %v2576
    %2578 = vmatmul.bf16.gmra.mxu0 %v1984
    %v2579 = vpop.f32.mrf.mxu0
    %v2580 = vadd.f32 0.0, %v2579
    %v2581 = vpop.f32.mrf.mxu0
    %v2582 = vadd.f32 0.0, %v2581
    %2583 = vmatmul.bf16.gmra.mxu0 %v1992
    %v2584 = vpop.f32.mrf.mxu0
    %v2585 = vadd.f32 0.0, %v2584
    %v2586 = vpop.f32.mrf.mxu0
    %v2587 = vadd.f32 0.0, %v2586
    %2588 = vmatmul.bf16.gmra.mxu0 %v2000
    %v2589 = vpop.f32.mrf.mxu0
    %v2590 = vadd.f32 0.0, %v2589
    %v2591 = vpop.f32.mrf.mxu0
    %v2592 = vadd.f32 0.0, %v2591
    %2593 = vmatmul.bf16.gmra.mxu0 %v2008
    %v2594 = vpop.f32.mrf.mxu0
    %v2595 = vadd.f32 0.0, %v2594
    %v2596 = vpop.f32.mrf.mxu0
    %v2597 = vadd.f32 0.0, %v2596
    %2598 = vmatmul.bf16.gmra.mxu0 %v2016
    %v2599 = vpop.f32.mrf.mxu0
    %v2600 = vadd.f32 0.0, %v2599
    %v2601 = vpop.f32.mrf.mxu0
    %v2602 = vadd.f32 0.0, %v2601
    %2603 = vmatmul.bf16.gmra.mxu0 %v2024
    %v2604 = vpop.f32.mrf.mxu0
    %v2605 = vadd.f32 0.0, %v2604
    %v2606 = vpop.f32.mrf.mxu0
    %v2607 = vadd.f32 0.0, %v2606
    %2608 = vdwg.mxu0
    %2609 = vmatpush.bf16.msra.mxu0 %v2422
    %2610 = vmatpush.bf16.msra.mxu0 %v2421
    %2611 = vmatpush.bf16.msra.mxu0 %v2420
    %2612 = vmatpush.bf16.msra.mxu0 %v2419
    %2613 = vmatpush.bf16.msra.mxu0 %v2418
    %2614 = vmatpush.bf16.msra.mxu0 %v2417
    %2615 = vmatpush.bf16.msra.mxu0 %v2416
    %2616 = vmatpush.bf16.msra.mxu0 %v2415
    %2617 = vmatmul.bf16.gmra.mxu0 %v1969
    %v2618 = vpop.f32.mrf.mxu0
    %v2619 = vadd.f32 %v2570, %v2618
    %v2620 = vpop.f32.mrf.mxu0
    %v2621 = vadd.f32 %v2572, %v2620
    %2622 = vmatmul.bf16.gmra.mxu0 %v1977
    %v2623 = vpop.f32.mrf.mxu0
    %v2624 = vadd.f32 %v2575, %v2623
    %v2625 = vpop.f32.mrf.mxu0
    %v2626 = vadd.f32 %v2577, %v2625
    %2627 = vmatmul.bf16.gmra.mxu0 %v1985
    %v2628 = vpop.f32.mrf.mxu0
    %v2629 = vadd.f32 %v2580, %v2628
    %v2630 = vpop.f32.mrf.mxu0
    %v2631 = vadd.f32 %v2582, %v2630
    %2632 = vmatmul.bf16.gmra.mxu0 %v1993
    %v2633 = vpop.f32.mrf.mxu0
    %v2634 = vadd.f32 %v2585, %v2633
    %v2635 = vpop.f32.mrf.mxu0
    %v2636 = vadd.f32 %v2587, %v2635
    %2637 = vmatmul.bf16.gmra.mxu0 %v2001
    %v2638 = vpop.f32.mrf.mxu0
    %v2639 = vadd.f32 %v2590, %v2638
    %v2640 = vpop.f32.mrf.mxu0
    %v2641 = vadd.f32 %v2592, %v2640
    %2642 = vmatmul.bf16.gmra.mxu0 %v2009
    %v2643 = vpop.f32.mrf.mxu0
    %v2644 = vadd.f32 %v2595, %v2643
    %v2645 = vpop.f32.mrf.mxu0
    %v2646 = vadd.f32 %v2597, %v2645
    %2647 = vmatmul.bf16.gmra.mxu0 %v2017
    %v2648 = vpop.f32.mrf.mxu0
    %v2649 = vadd.f32 %v2600, %v2648
    %v2650 = vpop.f32.mrf.mxu0
    %v2651 = vadd.f32 %v2602, %v2650
    %2652 = vmatmul.bf16.gmra.mxu0 %v2025
    %v2653 = vpop.f32.mrf.mxu0
    %v2654 = vadd.f32 %v2605, %v2653
    %v2655 = vpop.f32.mrf.mxu0
    %v2656 = vadd.f32 %v2607, %v2655
    %2657 = vdwg.mxu0
    %2658 = vmatpush.bf16.msra.mxu0 %v2430
    %2659 = vmatpush.bf16.msra.mxu0 %v2429
    %2660 = vmatpush.bf16.msra.mxu0 %v2428
    %2661 = vmatpush.bf16.msra.mxu0 %v2427
    %2662 = vmatpush.bf16.msra.mxu0 %v2426
    %2663 = vmatpush.bf16.msra.mxu0 %v2425
    %2664 = vmatpush.bf16.msra.mxu0 %v2424
    %2665 = vmatpush.bf16.msra.mxu0 %v2423
    %2666 = vmatmul.bf16.gmra.mxu0 %v1970
    %v2667 = vpop.f32.mrf.mxu0
    %v2668 = vadd.f32 %v2619, %v2667
    %v2669 = vpop.f32.mrf.mxu0
    %v2670 = vadd.f32 %v2621, %v2669
    %2671 = vmatmul.bf16.gmra.mxu0 %v1978
    %v2672 = vpop.f32.mrf.mxu0
    %v2673 = vadd.f32 %v2624, %v2672
    %v2674 = vpop.f32.mrf.mxu0
    %v2675 = vadd.f32 %v2626, %v2674
    %2676 = vmatmul.bf16.gmra.mxu0 %v1986
    %v2677 = vpop.f32.mrf.mxu0
    %v2678 = vadd.f32 %v2629, %v2677
    %v2679 = vpop.f32.mrf.mxu0
    %v2680 = vadd.f32 %v2631, %v2679
    %2681 = vmatmul.bf16.gmra.mxu0 %v1994
    %v2682 = vpop.f32.mrf.mxu0
    %v2683 = vadd.f32 %v2634, %v2682
    %v2684 = vpop.f32.mrf.mxu0
    %v2685 = vadd.f32 %v2636, %v2684
    %2686 = vmatmul.bf16.gmra.mxu0 %v2002
    %v2687 = vpop.f32.mrf.mxu0
    %v2688 = vadd.f32 %v2639, %v2687
    %v2689 = vpop.f32.mrf.mxu0
    %v2690 = vadd.f32 %v2641, %v2689
    %2691 = vmatmul.bf16.gmra.mxu0 %v2010
    %v2692 = vpop.f32.mrf.mxu0
    %v2693 = vadd.f32 %v2644, %v2692
    %v2694 = vpop.f32.mrf.mxu0
    %v2695 = vadd.f32 %v2646, %v2694
    %2696 = vmatmul.bf16.gmra.mxu0 %v2018
    %v2697 = vpop.f32.mrf.mxu0
    %v2698 = vadd.f32 %v2649, %v2697
    %v2699 = vpop.f32.mrf.mxu0
    %v2700 = vadd.f32 %v2651, %v2699
    %2701 = vmatmul.bf16.gmra.mxu0 %v2026
    %v2702 = vpop.f32.mrf.mxu0
    %v2703 = vadd.f32 %v2654, %v2702
    %v2704 = vpop.f32.mrf.mxu0
    %v2705 = vadd.f32 %v2656, %v2704
    %2706 = vdwg.mxu0
    %2707 = vmatpush.bf16.msra.mxu0 %v2438
    %2708 = vmatpush.bf16.msra.mxu0 %v2437
    %2709 = vmatpush.bf16.msra.mxu0 %v2436
    %2710 = vmatpush.bf16.msra.mxu0 %v2435
    %2711 = vmatpush.bf16.msra.mxu0 %v2434
    %2712 = vmatpush.bf16.msra.mxu0 %v2433
    %2713 = vmatpush.bf16.msra.mxu0 %v2432
    %2714 = vmatpush.bf16.msra.mxu0 %v2431
    %2715 = vmatmul.bf16.gmra.mxu0 %v1971
    %v2716 = vpop.f32.mrf.mxu0
    %v2717 = vadd.f32 %v2668, %v2716
    %v2718 = vpop.f32.mrf.mxu0
    %v2719 = vadd.f32 %v2670, %v2718
    %2720 = vmatmul.bf16.gmra.mxu0 %v1979
    %v2721 = vpop.f32.mrf.mxu0
    %v2722 = vadd.f32 %v2673, %v2721
    %v2723 = vpop.f32.mrf.mxu0
    %v2724 = vadd.f32 %v2675, %v2723
    %2725 = vmatmul.bf16.gmra.mxu0 %v1987
    %v2726 = vpop.f32.mrf.mxu0
    %v2727 = vadd.f32 %v2678, %v2726
    %v2728 = vpop.f32.mrf.mxu0
    %v2729 = vadd.f32 %v2680, %v2728
    %2730 = vmatmul.bf16.gmra.mxu0 %v1995
    %v2731 = vpop.f32.mrf.mxu0
    %v2732 = vadd.f32 %v2683, %v2731
    %v2733 = vpop.f32.mrf.mxu0
    %v2734 = vadd.f32 %v2685, %v2733
    %2735 = vmatmul.bf16.gmra.mxu0 %v2003
    %v2736 = vpop.f32.mrf.mxu0
    %v2737 = vadd.f32 %v2688, %v2736
    %v2738 = vpop.f32.mrf.mxu0
    %v2739 = vadd.f32 %v2690, %v2738
    %2740 = vmatmul.bf16.gmra.mxu0 %v2011
    %v2741 = vpop.f32.mrf.mxu0
    %v2742 = vadd.f32 %v2693, %v2741
    %v2743 = vpop.f32.mrf.mxu0
    %v2744 = vadd.f32 %v2695, %v2743
    %2745 = vmatmul.bf16.gmra.mxu0 %v2019
    %v2746 = vpop.f32.mrf.mxu0
    %v2747 = vadd.f32 %v2698, %v2746
    %v2748 = vpop.f32.mrf.mxu0
    %v2749 = vadd.f32 %v2700, %v2748
    %2750 = vmatmul.bf16.gmra.mxu0 %v2027
    %v2751 = vpop.f32.mrf.mxu0
    %v2752 = vadd.f32 %v2703, %v2751
    %v2753 = vpop.f32.mrf.mxu0
    %v2754 = vadd.f32 %v2705, %v2753
    %2755 = vdwg.mxu0
    %2756 = vmatpush.bf16.msra.mxu0 %v2446
    %2757 = vmatpush.bf16.msra.mxu0 %v2445
    %2758 = vmatpush.bf16.msra.mxu0 %v2444
    %2759 = vmatpush.bf16.msra.mxu0 %v2443
    %2760 = vmatpush.bf16.msra.mxu0 %v2442
    %2761 = vmatpush.bf16.msra.mxu0 %v2441
    %2762 = vmatpush.bf16.msra.mxu0 %v2440
    %2763 = vmatpush.bf16.msra.mxu0 %v2439
    %2764 = vmatmul.bf16.gmra.mxu0 %v1972
    %v2765 = vpop.f32.mrf.mxu0
    %v2766 = vadd.f32 %v2717, %v2765
    %v2767 = vpop.f32.mrf.mxu0
    %v2768 = vadd.f32 %v2719, %v2767
    %2769 = vmatmul.bf16.gmra.mxu0 %v1980
    %v2770 = vpop.f32.mrf.mxu0
    %v2771 = vadd.f32 %v2722, %v2770
    %v2772 = vpop.f32.mrf.mxu0
    %v2773 = vadd.f32 %v2724, %v2772
    %2774 = vmatmul.bf16.gmra.mxu0 %v1988
    %v2775 = vpop.f32.mrf.mxu0
    %v2776 = vadd.f32 %v2727, %v2775
    %v2777 = vpop.f32.mrf.mxu0
    %v2778 = vadd.f32 %v2729, %v2777
    %2779 = vmatmul.bf16.gmra.mxu0 %v1996
    %v2780 = vpop.f32.mrf.mxu0
    %v2781 = vadd.f32 %v2732, %v2780
    %v2782 = vpop.f32.mrf.mxu0
    %v2783 = vadd.f32 %v2734, %v2782
    %2784 = vmatmul.bf16.gmra.mxu0 %v2004
    %v2785 = vpop.f32.mrf.mxu0
    %v2786 = vadd.f32 %v2737, %v2785
    %v2787 = vpop.f32.mrf.mxu0
    %v2788 = vadd.f32 %v2739, %v2787
    %2789 = vmatmul.bf16.gmra.mxu0 %v2012
    %v2790 = vpop.f32.mrf.mxu0
    %v2791 = vadd.f32 %v2742, %v2790
    %v2792 = vpop.f32.mrf.mxu0
    %v2793 = vadd.f32 %v2744, %v2792
    %2794 = vmatmul.bf16.gmra.mxu0 %v2020
    %v2795 = vpop.f32.mrf.mxu0
    %v2796 = vadd.f32 %v2747, %v2795
    %v2797 = vpop.f32.mrf.mxu0
    %v2798 = vadd.f32 %v2749, %v2797
    %2799 = vmatmul.bf16.gmra.mxu0 %v2028
    %v2800 = vpop.f32.mrf.mxu0
    %v2801 = vadd.f32 %v2752, %v2800
    %v2802 = vpop.f32.mrf.mxu0
    %v2803 = vadd.f32 %v2754, %v2802
    %2804 = vdwg.mxu0
    %2805 = vmatpush.bf16.msra.mxu0 %v2454
    %2806 = vmatpush.bf16.msra.mxu0 %v2453
    %2807 = vmatpush.bf16.msra.mxu0 %v2452
    %2808 = vmatpush.bf16.msra.mxu0 %v2451
    %2809 = vmatpush.bf16.msra.mxu0 %v2450
    %2810 = vmatpush.bf16.msra.mxu0 %v2449
    %2811 = vmatpush.bf16.msra.mxu0 %v2448
    %2812 = vmatpush.bf16.msra.mxu0 %v2447
    %2813 = vmatmul.bf16.gmra.mxu0 %v1973
    %v2814 = vpop.f32.mrf.mxu0
    %v2815 = vadd.f32 %v2766, %v2814
    %v2816 = vpop.f32.mrf.mxu0
    %v2817 = vadd.f32 %v2768, %v2816
    %2818 = vmatmul.bf16.gmra.mxu0 %v1981
    %v2819 = vpop.f32.mrf.mxu0
    %v2820 = vadd.f32 %v2771, %v2819
    %v2821 = vpop.f32.mrf.mxu0
    %v2822 = vadd.f32 %v2773, %v2821
    %2823 = vmatmul.bf16.gmra.mxu0 %v1989
    %v2824 = vpop.f32.mrf.mxu0
    %v2825 = vadd.f32 %v2776, %v2824
    %v2826 = vpop.f32.mrf.mxu0
    %v2827 = vadd.f32 %v2778, %v2826
    %2828 = vmatmul.bf16.gmra.mxu0 %v1997
    %v2829 = vpop.f32.mrf.mxu0
    %v2830 = vadd.f32 %v2781, %v2829
    %v2831 = vpop.f32.mrf.mxu0
    %v2832 = vadd.f32 %v2783, %v2831
    %2833 = vmatmul.bf16.gmra.mxu0 %v2005
    %v2834 = vpop.f32.mrf.mxu0
    %v2835 = vadd.f32 %v2786, %v2834
    %v2836 = vpop.f32.mrf.mxu0
    %v2837 = vadd.f32 %v2788, %v2836
    %2838 = vmatmul.bf16.gmra.mxu0 %v2013
    %v2839 = vpop.f32.mrf.mxu0
    %v2840 = vadd.f32 %v2791, %v2839
    %v2841 = vpop.f32.mrf.mxu0
    %v2842 = vadd.f32 %v2793, %v2841
    %2843 = vmatmul.bf16.gmra.mxu0 %v2021
    %v2844 = vpop.f32.mrf.mxu0
    %v2845 = vadd.f32 %v2796, %v2844
    %v2846 = vpop.f32.mrf.mxu0
    %v2847 = vadd.f32 %v2798, %v2846
    %2848 = vmatmul.bf16.gmra.mxu0 %v2029
    %v2849 = vpop.f32.mrf.mxu0
    %v2850 = vadd.f32 %v2801, %v2849
    %v2851 = vpop.f32.mrf.mxu0
    %v2852 = vadd.f32 %v2803, %v2851
    %2853 = vdwg.mxu0
    %2854 = vmatpush.bf16.msra.mxu0 %v2462
    %2855 = vmatpush.bf16.msra.mxu0 %v2461
    %2856 = vmatpush.bf16.msra.mxu0 %v2460
    %2857 = vmatpush.bf16.msra.mxu0 %v2459
    %2858 = vmatpush.bf16.msra.mxu0 %v2458
    %2859 = vmatpush.bf16.msra.mxu0 %v2457
    %2860 = vmatpush.bf16.msra.mxu0 %v2456
    %2861 = vmatpush.bf16.msra.mxu0 %v2455
    %2862 = vmatmul.bf16.gmra.mxu0 %v1974
    %v2863 = vpop.f32.mrf.mxu0
    %v2864 = vadd.f32 %v2815, %v2863
    %v2865 = vpop.f32.mrf.mxu0
    %v2866 = vadd.f32 %v2817, %v2865
    %2867 = vmatmul.bf16.gmra.mxu0 %v1982
    %v2868 = vpop.f32.mrf.mxu0
    %v2869 = vadd.f32 %v2820, %v2868
    %v2870 = vpop.f32.mrf.mxu0
    %v2871 = vadd.f32 %v2822, %v2870
    %2872 = vmatmul.bf16.gmra.mxu0 %v1990
    %v2873 = vpop.f32.mrf.mxu0
    %v2874 = vadd.f32 %v2825, %v2873
    %v2875 = vpop.f32.mrf.mxu0
    %v2876 = vadd.f32 %v2827, %v2875
    %2877 = vmatmul.bf16.gmra.mxu0 %v1998
    %v2878 = vpop.f32.mrf.mxu0
    %v2879 = vadd.f32 %v2830, %v2878
    %v2880 = vpop.f32.mrf.mxu0
    %v2881 = vadd.f32 %v2832, %v2880
    %2882 = vmatmul.bf16.gmra.mxu0 %v2006
    %v2883 = vpop.f32.mrf.mxu0
    %v2884 = vadd.f32 %v2835, %v2883
    %v2885 = vpop.f32.mrf.mxu0
    %v2886 = vadd.f32 %v2837, %v2885
    %2887 = vmatmul.bf16.gmra.mxu0 %v2014
    %v2888 = vpop.f32.mrf.mxu0
    %v2889 = vadd.f32 %v2840, %v2888
    %v2890 = vpop.f32.mrf.mxu0
    %v2891 = vadd.f32 %v2842, %v2890
    %2892 = vmatmul.bf16.gmra.mxu0 %v2022
    %v2893 = vpop.f32.mrf.mxu0
    %v2894 = vadd.f32 %v2845, %v2893
    %v2895 = vpop.f32.mrf.mxu0
    %v2896 = vadd.f32 %v2847, %v2895
    %2897 = vmatmul.bf16.gmra.mxu0 %v2030
    %v2898 = vpop.f32.mrf.mxu0
    %v2899 = vadd.f32 %v2850, %v2898
    %v2900 = vpop.f32.mrf.mxu0
    %v2901 = vadd.f32 %v2852, %v2900
    %2902 = vdwg.mxu0
    %2903 = vmatpush.bf16.msra.mxu0 0
    %2904 = vmatpush.bf16.msra.mxu0 %v2558
    %2905 = vmatpush.bf16.msra.mxu0 %v2468
    %2906 = vmatpush.bf16.msra.mxu0 %v2467
    %2907 = vmatpush.bf16.msra.mxu0 %v2466
    %2908 = vmatpush.bf16.msra.mxu0 %v2465
    %2909 = vmatpush.bf16.msra.mxu0 %v2464
    %2910 = vmatpush.bf16.msra.mxu0 %v2463
    %2911 = vmatmul.bf16.gmra.mxu0 %v2533
    %v2912 = vpop.f32.mrf.mxu0
    %v2913 = vadd.f32 %v2864, %v2912
    %v2914 = vpop.f32.mrf.mxu0
    %v2915 = vadd.f32 %v2866, %v2914
    %2916 = vmatmul.bf16.gmra.mxu0 %v2536
    %v2917 = vpop.f32.mrf.mxu0
    %v2918 = vadd.f32 %v2869, %v2917
    %v2919 = vpop.f32.mrf.mxu0
    %v2920 = vadd.f32 %v2871, %v2919
    %2921 = vmatmul.bf16.gmra.mxu0 %v2539
    %v2922 = vpop.f32.mrf.mxu0
    %v2923 = vadd.f32 %v2874, %v2922
    %v2924 = vpop.f32.mrf.mxu0
    %v2925 = vadd.f32 %v2876, %v2924
    %2926 = vmatmul.bf16.gmra.mxu0 %v2542
    %v2927 = vpop.f32.mrf.mxu0
    %v2928 = vadd.f32 %v2879, %v2927
    %v2929 = vpop.f32.mrf.mxu0
    %v2930 = vadd.f32 %v2881, %v2929
    %2931 = vmatmul.bf16.gmra.mxu0 %v2545
    %v2932 = vpop.f32.mrf.mxu0
    %v2933 = vadd.f32 %v2884, %v2932
    %v2934 = vpop.f32.mrf.mxu0
    %v2935 = vadd.f32 %v2886, %v2934
    %2936 = vmatmul.bf16.gmra.mxu0 %v2548
    %v2937 = vpop.f32.mrf.mxu0
    %v2938 = vadd.f32 %v2889, %v2937
    %v2939 = vpop.f32.mrf.mxu0
    %v2940 = vadd.f32 %v2891, %v2939
    %2941 = vmatmul.bf16.gmra.mxu0 %v2551
    %v2942 = vpop.f32.mrf.mxu0
    %v2943 = vadd.f32 %v2894, %v2942
    %v2944 = vpop.f32.mrf.mxu0
    %v2945 = vadd.f32 %v2896, %v2944
    %2946 = vmatmul.bf16.gmra.mxu0 %v2554
    %v2947 = vpop.f32.mrf.mxu0
    %v2948 = vadd.f32 %v2899, %v2947
    %v2949 = vpop.f32.mrf.mxu0
    %v2950 = vadd.f32 %v2901, %v2949
    %2951 = vdwg.mxu0
    %v2952 = vpack.c.bf16 %v2913, %v2913
    %v2953 = vpack.c.bf16 %v2915, %v2915
    %v2954 = vpack.c.bf16 %v2918, %v2918
    %v2955 = vpack.c.bf16 %v2920, %v2920
    %v2956 = vpack.c.bf16 %v2923, %v2923
    %v2957 = vpack.c.bf16 %v2925, %v2925
    %v2958 = vpack.c.bf16 %v2928, %v2928
    %v2959 = vpack.c.bf16 %v2930, %v2930
    %v2960 = vpack.c.bf16 %v2933, %v2933
    %v2961 = vpack.c.bf16 %v2935, %v2935
    %v2962 = vpack.c.bf16 %v2938, %v2938
    %v2963 = vpack.c.bf16 %v2940, %v2940
    %v2964 = vpack.c.bf16 %v2943, %v2943
    %v2965 = vpack.c.bf16 %v2945, %v2945
    %v2966 = vpack.c.bf16 %v2948, %v2948
    %v2967 = vpack.c.bf16 %v2950, %v2950
    %v2972 = vunpack.c.l.b16 %v1952
    %v2973 = vunpack.c.l.b16 %v1953
    %v2974 = vunpack.c.l.b16 %v1954
    %v2975 = vunpack.c.l.b16 %v1955
    %v2976 = vpack.c.b16 %v2973, %v2972
    %v2977 = vpack.c.b16 %v2975, %v2974
    %v2982 = vunpack.c.l.b16 %v2952
    %v2983 = vunpack.c.l.b16 %v2953
    %v2984 = vunpack.c.l.b16 %v2954
    %v2985 = vunpack.c.l.b16 %v2955
    %v2986 = vpack.c.b16 %v2983, %v2982
    %v2987 = vpack.c.b16 %v2985, %v2984
    %v2991 = vsel %vm1603, %v2976, 0
    %v2994 = vsel %vm1603, %v2977, 0
    %2996 = vmatpush.bf16.msra.mxu0 0
    %2997 = vmatpush.bf16.msra.mxu0 0
    %2998 = vmatpush.bf16.msra.mxu0 0
    %2999 = vmatpush.bf16.msra.mxu0 0
    %3000 = vmatpush.bf16.msra.mxu0 0
    %3001 = vmatpush.bf16.msra.mxu0 0
    %3002 = vmatpush.bf16.msra.mxu0 %v2987
    %3003 = vmatpush.bf16.msra.mxu0 %v2986
    %3004 = vmatmul.bf16.gmra.mxu0 %v2991
    %v3005 = vpop.f32.mrf.mxu0
    %v3006 = vadd.f32 0.0, %v3005
    %v3007 = vpop.f32.mrf.mxu0
    %v3008 = vadd.f32 0.0, %v3007
    %3009 = vmatmul.bf16.gmra.mxu0 %v2994
    %v3010 = vpop.f32.mrf.mxu0
    %v3011 = vadd.f32 0.0, %v3010
    %v3012 = vpop.f32.mrf.mxu0
    %v3013 = vadd.f32 0.0, %v3012
    %3014 = vdwg.mxu0
    %v3019 = vunpack.c.l.b16 %v1956
    %v3020 = vunpack.c.l.b16 %v1957
    %v3021 = vunpack.c.l.b16 %v1958
    %v3022 = vunpack.c.l.b16 %v1959
    %v3023 = vpack.c.b16 %v3020, %v3019
    %v3024 = vpack.c.b16 %v3022, %v3021
    %v3029 = vunpack.c.l.b16 %v2956
    %v3030 = vunpack.c.l.b16 %v2957
    %v3031 = vunpack.c.l.b16 %v2958
    %v3032 = vunpack.c.l.b16 %v2959
    %v3033 = vpack.c.b16 %v3030, %v3029
    %v3034 = vpack.c.b16 %v3032, %v3031
    %v3038 = vsel %vm1603, %v3023, 0
    %v3041 = vsel %vm1603, %v3024, 0
    %3043 = vmatpush.bf16.msra.mxu0 0
    %3044 = vmatpush.bf16.msra.mxu0 0
    %3045 = vmatpush.bf16.msra.mxu0 0
    %3046 = vmatpush.bf16.msra.mxu0 0
    %3047 = vmatpush.bf16.msra.mxu0 0
    %3048 = vmatpush.bf16.msra.mxu0 0
    %3049 = vmatpush.bf16.msra.mxu0 %v3034
    %3050 = vmatpush.bf16.msra.mxu0 %v3033
    %3051 = vmatmul.bf16.gmra.mxu0 %v3038
    %v3052 = vpop.f32.mrf.mxu0
    %v3053 = vadd.f32 0.0, %v3052
    %v3054 = vpop.f32.mrf.mxu0
    %v3055 = vadd.f32 0.0, %v3054
    %3056 = vmatmul.bf16.gmra.mxu0 %v3041
    %v3057 = vpop.f32.mrf.mxu0
    %v3058 = vadd.f32 0.0, %v3057
    %v3059 = vpop.f32.mrf.mxu0
    %v3060 = vadd.f32 0.0, %v3059
    %3061 = vdwg.mxu0
    %v3066 = vunpack.c.l.b16 %v1960
    %v3067 = vunpack.c.l.b16 %v1961
    %v3068 = vunpack.c.l.b16 %v1962
    %v3069 = vunpack.c.l.b16 %v1963
    %v3070 = vpack.c.b16 %v3067, %v3066
    %v3071 = vpack.c.b16 %v3069, %v3068
    %v3076 = vunpack.c.l.b16 %v2960
    %v3077 = vunpack.c.l.b16 %v2961
    %v3078 = vunpack.c.l.b16 %v2962
    %v3079 = vunpack.c.l.b16 %v2963
    %v3080 = vpack.c.b16 %v3077, %v3076
    %v3081 = vpack.c.b16 %v3079, %v3078
    %v3085 = vsel %vm1603, %v3070, 0
    %v3088 = vsel %vm1603, %v3071, 0
    %3090 = vmatpush.bf16.msra.mxu0 0
    %3091 = vmatpush.bf16.msra.mxu0 0
    %3092 = vmatpush.bf16.msra.mxu0 0
    %3093 = vmatpush.bf16.msra.mxu0 0
    %3094 = vmatpush.bf16.msra.mxu0 0
    %3095 = vmatpush.bf16.msra.mxu0 0
    %3096 = vmatpush.bf16.msra.mxu0 %v3081
    %3097 = vmatpush.bf16.msra.mxu0 %v3080
    %3098 = vmatmul.bf16.gmra.mxu0 %v3085
    %v3099 = vpop.f32.mrf.mxu0
    %v3100 = vadd.f32 0.0, %v3099
    %v3101 = vpop.f32.mrf.mxu0
    %v3102 = vadd.f32 0.0, %v3101
    %3103 = vmatmul.bf16.gmra.mxu0 %v3088
    %v3104 = vpop.f32.mrf.mxu0
    %v3105 = vadd.f32 0.0, %v3104
    %v3106 = vpop.f32.mrf.mxu0
    %v3107 = vadd.f32 0.0, %v3106
    %3108 = vdwg.mxu0
    %v3113 = vunpack.c.l.b16 %v1964
    %v3114 = vunpack.c.l.b16 %v1965
    %v3115 = vunpack.c.l.b16 %v1966
    %v3116 = vunpack.c.l.b16 %v1967
    %v3117 = vpack.c.b16 %v3114, %v3113
    %v3118 = vpack.c.b16 %v3116, %v3115
    %v3123 = vunpack.c.l.b16 %v2964
    %v3124 = vunpack.c.l.b16 %v2965
    %v3125 = vunpack.c.l.b16 %v2966
    %v3126 = vunpack.c.l.b16 %v2967
    %v3127 = vpack.c.b16 %v3124, %v3123
    %v3128 = vpack.c.b16 %v3126, %v3125
    %v3132 = vsel %vm1603, %v3117, 0
    %v3135 = vsel %vm1603, %v3118, 0
    %3137 = vmatpush.bf16.msra.mxu0 0
    %3138 = vmatpush.bf16.msra.mxu0 0
    %3139 = vmatpush.bf16.msra.mxu0 0
    %3140 = vmatpush.bf16.msra.mxu0 0
    %3141 = vmatpush.bf16.msra.mxu0 0
    %3142 = vmatpush.bf16.msra.mxu0 0
    %3143 = vmatpush.bf16.msra.mxu0 %v3128
    %3144 = vmatpush.bf16.msra.mxu0 %v3127
    %3145 = vmatmul.bf16.gmra.mxu0 %v3132
    %v3146 = vpop.f32.mrf.mxu0
    %v3147 = vadd.f32 0.0, %v3146
    %v3148 = vpop.f32.mrf.mxu0
    %v3149 = vadd.f32 0.0, %v3148
    %3150 = vmatmul.bf16.gmra.mxu0 %v3135
    %v3151 = vpop.f32.mrf.mxu0
    %v3152 = vadd.f32 0.0, %v3151
    %v3153 = vpop.f32.mrf.mxu0
    %v3154 = vadd.f32 0.0, %v3153
    %3155 = vdwg.mxu0
    %v3156 = vpack.c.bf16 %v3008, %v3006
    %v3157 = vpack.c.bf16 %v3013, %v3011
    %v3158 = vpack.c.bf16 %v3055, %v3053
    %v3159 = vpack.c.bf16 %v3060, %v3058
    %v3160 = vpack.c.bf16 %v3102, %v3100
    %v3161 = vpack.c.bf16 %v3107, %v3105
    %v3162 = vpack.c.bf16 %v3149, %v3147
    %v3163 = vpack.c.bf16 %v3154, %v3152
    %v3164 = vld [vmem:[#allocation6] sm:$0xf]
    %v3165 = vld [vmem:[#allocation6 + $0x4] sm:$0xf]
    %v3166 = vld [vmem:[#allocation6 + $0x8] sm:$0xf]
    %v3167 = vld [vmem:[#allocation6 + $0xc] sm:$0xf]
    %v3168 = vld [vmem:[#allocation6 + $0x10] sm:$0xf]
    %v3169 = vld [vmem:[#allocation6 + $0x14] sm:$0xf]
    %v3170 = vld [vmem:[#allocation6 + $0x18] sm:$0xf]
    %v3171 = vld [vmem:[#allocation6 + $0x1c] sm:$0xf]
    %v3172 = vld [vmem:[#allocation6 + $0x20] sm:$0xf]
    %v3173 = vld [vmem:[#allocation6 + $0x24] sm:$0xf]
    %v3174 = vld [vmem:[#allocation6 + $0x28] sm:$0xf]
    %v3175 = vld [vmem:[#allocation6 + $0x2c] sm:$0xf]
    %v3176 = vld [vmem:[#allocation6 + $0x30] sm:$0xf]
    %v3177 = vld [vmem:[#allocation6 + $0x34] sm:$0xf]
    %v3178 = vld [vmem:[#allocation6 + $0x38] sm:$0xf]
    %v3179 = vld [vmem:[#allocation6 + $0x3c] sm:$0xf]
    %v3196 = vunpack.c.l.b16 %v3164
    %v3197 = vunpack.c.l.b16 %v3165
    %v3198 = vunpack.c.l.b16 %v3166
    %v3199 = vunpack.c.l.b16 %v3167
    %v3200 = vunpack.c.l.b16 %v3168
    %v3201 = vunpack.c.l.b16 %v3169
    %v3202 = vunpack.c.l.b16 %v3170
    %v3203 = vunpack.c.l.b16 %v3171
    %v3204 = vunpack.c.l.b16 %v3172
    %v3205 = vunpack.c.l.b16 %v3173
    %v3206 = vunpack.c.l.b16 %v3174
    %v3207 = vunpack.c.l.b16 %v3175
    %v3208 = vunpack.c.l.b16 %v3176
    %v3209 = vunpack.c.l.b16 %v3177
    %v3210 = vunpack.c.l.b16 %v3178
    %v3211 = vunpack.c.l.b16 %v3179
    %v3212 = vpack.c.b16 %v3197, %v3196
    %v3213 = vpack.c.b16 %v3199, %v3198
    %v3214 = vpack.c.b16 %v3201, %v3200
    %v3215 = vpack.c.b16 %v3203, %v3202
    %v3216 = vpack.c.b16 %v3205, %v3204
    %v3217 = vpack.c.b16 %v3207, %v3206
    %v3218 = vpack.c.b16 %v3209, %v3208
    %v3219 = vpack.c.b16 %v3211, %v3210
    %3228 = vmatpush.bf16.msra.mxu0 %v3219
    %3229 = vmatpush.bf16.msra.mxu0 %v3218
    %3230 = vmatpush.bf16.msra.mxu0 %v3217
    %3231 = vmatpush.bf16.msra.mxu0 %v3216
    %3232 = vmatpush.bf16.msra.mxu0 %v3215
    %3233 = vmatpush.bf16.msra.mxu0 %v3214
    %3234 = vmatpush.bf16.msra.mxu0 %v3213
    %3235 = vmatpush.bf16.msra.mxu0 %v3212
    %3236 = vmatmul.bf16.gmra.mxu0 %v3156
    %v3237 = vpop.f32.mrf.mxu0
    %v3238 = vadd.f32 0.0, %v3237
    %v3239 = vpop.f32.mrf.mxu0
    %v3240 = vadd.f32 0.0, %v3239
    %3241 = vmatmul.bf16.gmra.mxu0 %v3157
    %v3242 = vpop.f32.mrf.mxu0
    %v3243 = vadd.f32 0.0, %v3242
    %v3244 = vpop.f32.mrf.mxu0
    %v3245 = vadd.f32 0.0, %v3244
    %3246 = vmatmul.bf16.gmra.mxu0 %v3158
    %v3247 = vpop.f32.mrf.mxu0
    %v3248 = vadd.f32 0.0, %v3247
    %v3249 = vpop.f32.mrf.mxu0
    %v3250 = vadd.f32 0.0, %v3249
    %3251 = vmatmul.bf16.gmra.mxu0 %v3159
    %v3252 = vpop.f32.mrf.mxu0
    %v3253 = vadd.f32 0.0, %v3252
    %v3254 = vpop.f32.mrf.mxu0
    %v3255 = vadd.f32 0.0, %v3254
    %3256 = vmatmul.bf16.gmra.mxu0 %v3160
    %v3257 = vpop.f32.mrf.mxu0
    %v3258 = vadd.f32 0.0, %v3257
    %v3259 = vpop.f32.mrf.mxu0
    %v3260 = vadd.f32 0.0, %v3259
    %3261 = vmatmul.bf16.gmra.mxu0 %v3161
    %v3262 = vpop.f32.mrf.mxu0
    %v3263 = vadd.f32 0.0, %v3262
    %v3264 = vpop.f32.mrf.mxu0
    %v3265 = vadd.f32 0.0, %v3264
    %3266 = vmatmul.bf16.gmra.mxu0 %v3162
    %v3267 = vpop.f32.mrf.mxu0
    %v3268 = vadd.f32 0.0, %v3267
    %v3269 = vpop.f32.mrf.mxu0
    %v3270 = vadd.f32 0.0, %v3269
    %3271 = vmatmul.bf16.gmra.mxu0 %v3163
    %v3272 = vpop.f32.mrf.mxu0
    %v3273 = vadd.f32 0.0, %v3272
    %v3274 = vpop.f32.mrf.mxu0
    %v3275 = vadd.f32 0.0, %v3274
    %3276 = vdwg.mxu0
    %v3277 = vpack.c.bf16 %v3238, %v3238
    %v3278 = vpack.c.bf16 %v3240, %v3240
    %v3279 = vpack.c.bf16 %v3243, %v3243
    %v3280 = vpack.c.bf16 %v3245, %v3245
    %v3281 = vpack.c.bf16 %v3248, %v3248
    %v3282 = vpack.c.bf16 %v3250, %v3250
    %v3283 = vpack.c.bf16 %v3253, %v3253
    %v3284 = vpack.c.bf16 %v3255, %v3255
    %v3285 = vpack.c.bf16 %v3258, %v3258
    %v3286 = vpack.c.bf16 %v3260, %v3260
    %v3287 = vpack.c.bf16 %v3263, %v3263
    %v3288 = vpack.c.bf16 %v3265, %v3265
    %v3289 = vpack.c.bf16 %v3268, %v3268
    %v3290 = vpack.c.bf16 %v3270, %v3270
    %v3291 = vpack.c.bf16 %v3273, %v3273
    %v3292 = vpack.c.bf16 %v3275, %v3275
    %v3297 = vunpack.c.l.b16 %v3277
    %v3298 = vunpack.c.l.b16 %v3278
    %v3299 = vunpack.c.l.b16 %v3279
    %v3300 = vunpack.c.l.b16 %v3280
    %v3301 = vpack.c.b16 %v3298, %v3297
    %v3302 = vpack.c.b16 %v3300, %v3299
    %3305 = vmatpush.bf16.msra.mxu0 0
    %3306 = vmatpush.bf16.msra.mxu0 0
    %3307 = vmatpush.bf16.msra.mxu0 0
    %3308 = vmatpush.bf16.msra.mxu0 0
    %3309 = vmatpush.bf16.msra.mxu0 0
    %3310 = vmatpush.bf16.msra.mxu0 0
    %3311 = vmatpush.bf16.msra.mxu0 %v3302
    %3312 = vmatpush.bf16.msra.mxu0 %v3301
    %3313 = vmatmul.bf16.gmra.mxu0 %v2991
    %v3314 = vpop.f32.mrf.mxu0
    %v3315 = vadd.f32 0.0, %v3314
    %v3316 = vpop.f32.mrf.mxu0
    %v3317 = vadd.f32 0.0, %v3316
    %3318 = vmatmul.bf16.gmra.mxu0 %v2994
    %v3319 = vpop.f32.mrf.mxu0
    %v3320 = vadd.f32 0.0, %v3319
    %v3321 = vpop.f32.mrf.mxu0
    %v3322 = vadd.f32 0.0, %v3321
    %3323 = vdwg.mxu0
    %v3328 = vunpack.c.l.b16 %v3281
    %v3329 = vunpack.c.l.b16 %v3282
    %v3330 = vunpack.c.l.b16 %v3283
    %v3331 = vunpack.c.l.b16 %v3284
    %v3332 = vpack.c.b16 %v3329, %v3328
    %v3333 = vpack.c.b16 %v3331, %v3330
    %3336 = vmatpush.bf16.msra.mxu0 0
    %3337 = vmatpush.bf16.msra.mxu0 0
    %3338 = vmatpush.bf16.msra.mxu0 0
    %3339 = vmatpush.bf16.msra.mxu0 0
    %3340 = vmatpush.bf16.msra.mxu0 0
    %3341 = vmatpush.bf16.msra.mxu0 0
    %3342 = vmatpush.bf16.msra.mxu0 %v3333
    %3343 = vmatpush.bf16.msra.mxu0 %v3332
    %3344 = vmatmul.bf16.gmra.mxu0 %v3038
    %v3345 = vpop.f32.mrf.mxu0
    %v3346 = vadd.f32 0.0, %v3345
    %v3347 = vpop.f32.mrf.mxu0
    %v3348 = vadd.f32 0.0, %v3347
    %3349 = vmatmul.bf16.gmra.mxu0 %v3041
    %v3350 = vpop.f32.mrf.mxu0
    %v3351 = vadd.f32 0.0, %v3350
    %v3352 = vpop.f32.mrf.mxu0
    %v3353 = vadd.f32 0.0, %v3352
    %3354 = vdwg.mxu0
    %v3359 = vunpack.c.l.b16 %v3285
    %v3360 = vunpack.c.l.b16 %v3286
    %v3361 = vunpack.c.l.b16 %v3287
    %v3362 = vunpack.c.l.b16 %v3288
    %v3363 = vpack.c.b16 %v3360, %v3359
    %v3364 = vpack.c.b16 %v3362, %v3361
    %3367 = vmatpush.bf16.msra.mxu0 0
    %3368 = vmatpush.bf16.msra.mxu0 0
    %3369 = vmatpush.bf16.msra.mxu0 0
    %3370 = vmatpush.bf16.msra.mxu0 0
    %3371 = vmatpush.bf16.msra.mxu0 0
    %3372 = vmatpush.bf16.msra.mxu0 0
    %3373 = vmatpush.bf16.msra.mxu0 %v3364
    %3374 = vmatpush.bf16.msra.mxu0 %v3363
    %3375 = vmatmul.bf16.gmra.mxu0 %v3085
    %v3376 = vpop.f32.mrf.mxu0
    %v3377 = vadd.f32 0.0, %v3376
    %v3378 = vpop.f32.mrf.mxu0
    %v3379 = vadd.f32 0.0, %v3378
    %3380 = vmatmul.bf16.gmra.mxu0 %v3088
    %v3381 = vpop.f32.mrf.mxu0
    %v3382 = vadd.f32 0.0, %v3381
    %v3383 = vpop.f32.mrf.mxu0
    %v3384 = vadd.f32 0.0, %v3383
    %3385 = vdwg.mxu0
    %v3390 = vunpack.c.l.b16 %v3289
    %v3391 = vunpack.c.l.b16 %v3290
    %v3392 = vunpack.c.l.b16 %v3291
    %v3393 = vunpack.c.l.b16 %v3292
    %v3394 = vpack.c.b16 %v3391, %v3390
    %v3395 = vpack.c.b16 %v3393, %v3392
    %3398 = vmatpush.bf16.msra.mxu0 0
    %3399 = vmatpush.bf16.msra.mxu0 0
    %3400 = vmatpush.bf16.msra.mxu0 0
    %3401 = vmatpush.bf16.msra.mxu0 0
    %3402 = vmatpush.bf16.msra.mxu0 0
    %3403 = vmatpush.bf16.msra.mxu0 0
    %3404 = vmatpush.bf16.msra.mxu0 %v3395
    %3405 = vmatpush.bf16.msra.mxu0 %v3394
    %3406 = vmatmul.bf16.gmra.mxu0 %v3132
    %v3407 = vpop.f32.mrf.mxu0
    %v3408 = vadd.f32 0.0, %v3407
    %v3409 = vpop.f32.mrf.mxu0
    %v3410 = vadd.f32 0.0, %v3409
    %3411 = vmatmul.bf16.gmra.mxu0 %v3135
    %v3412 = vpop.f32.mrf.mxu0
    %v3413 = vadd.f32 0.0, %v3412
    %v3414 = vpop.f32.mrf.mxu0
    %v3415 = vadd.f32 0.0, %v3414
    %3416 = vdwg.mxu0
    %v3421 = vrot.slane %v3346, 7
    %vm3422 = vcmask 1041409
    %v3423 = vsel %vm3422, %v3421, %v3315
    %v3424 = vrot.slane %v3377, 6
    %vm3425 = vcmask 1042434
    %v3426 = vsel %vm3425, %v3424, %v3423
    %v3427 = vrot.slane %v3408, 5
    %vm3428 = vcmask 1043459
    %v3429 = vsel %vm3428, %v3427, %v3426
    %v3431 = vrot.slane %v3315, 1
    %v3432 = vsel %vm3422, %v3346, %v3431
    %v3433 = vrot.slane %v3377, 7
    %v3434 = vsel %vm3425, %v3433, %v3432
    %v3435 = vrot.slane %v3408, 6
    %v3436 = vsel %vm3428, %v3435, %v3434
    %v3438 = vrot.slane %v3315, 2
    %v3439 = vrot.slane %v3346, 1
    %v3440 = vsel %vm3422, %v3439, %v3438
    %v3441 = vsel %vm3425, %v3377, %v3440
    %v3442 = vrot.slane %v3408, 7
    %v3443 = vsel %vm3428, %v3442, %v3441
    %v3445 = vrot.slane %v3315, 3
    %v3446 = vrot.slane %v3346, 2
    %v3447 = vsel %vm3422, %v3446, %v3445
    %v3448 = vrot.slane %v3377, 1
    %v3449 = vsel %vm3425, %v3448, %v3447
    %v3450 = vsel %vm3428, %v3408, %v3449
    %v3452 = vrot.slane %v3315, 4
    %v3453 = vrot.slane %v3346, 3
    %v3454 = vsel %vm3422, %v3453, %v3452
    %v3455 = vrot.slane %v3377, 2
    %v3456 = vsel %vm3425, %v3455, %v3454
    %v3457 = vrot.slane %v3408, 1
    %v3458 = vsel %vm3428, %v3457, %v3456
    %v3460 = vrot.slane %v3315, 5
    %v3461 = vrot.slane %v3346, 4
    %v3462 = vsel %vm3422, %v3461, %v3460
    %v3463 = vrot.slane %v3377, 3
    %v3464 = vsel %vm3425, %v3463, %v3462
    %v3465 = vrot.slane %v3408, 2
    %v3466 = vsel %vm3428, %v3465, %v3464
    %v3468 = vrot.slane %v3315, 6
    %v3469 = vrot.slane %v3346, 5
    %v3470 = vsel %vm3422, %v3469, %v3468
    %v3471 = vrot.slane %v3377, 4
    %v3472 = vsel %vm3425, %v3471, %v3470
    %v3473 = vrot.slane %v3408, 3
    %v3474 = vsel %vm3428, %v3473, %v3472
    %v3476 = vrot.slane %v3315, 7
    %v3477 = vrot.slane %v3346, 6
    %v3478 = vsel %vm3422, %v3477, %v3476
    %v3479 = vrot.slane %v3377, 5
    %v3480 = vsel %vm3425, %v3479, %v3478
    %v3481 = vrot.slane %v3408, 4
    %v3482 = vsel %vm3428, %v3481, %v3480
    %v3488 = vrot.slane %v3348, 7
    %v3489 = vsel %vm3422, %v3488, %v3317
    %v3490 = vrot.slane %v3379, 6
    %v3491 = vsel %vm3425, %v3490, %v3489
    %v3492 = vrot.slane %v3410, 5
    %v3493 = vsel %vm3428, %v3492, %v3491
    %v3495 = vrot.slane %v3317, 1
    %v3496 = vsel %vm3422, %v3348, %v3495
    %v3497 = vrot.slane %v3379, 7
    %v3498 = vsel %vm3425, %v3497, %v3496
    %v3499 = vrot.slane %v3410, 6
    %v3500 = vsel %vm3428, %v3499, %v3498
    %v3502 = vrot.slane %v3317, 2
    %v3503 = vrot.slane %v3348, 1
    %v3504 = vsel %vm3422, %v3503, %v3502
    %v3505 = vsel %vm3425, %v3379, %v3504
    %v3506 = vrot.slane %v3410, 7
    %v3507 = vsel %vm3428, %v3506, %v3505
    %v3509 = vrot.slane %v3317, 3
    %v3510 = vrot.slane %v3348, 2
    %v3511 = vsel %vm3422, %v3510, %v3509
    %v3512 = vrot.slane %v3379, 1
    %v3513 = vsel %vm3425, %v3512, %v3511
    %v3514 = vsel %vm3428, %v3410, %v3513
    %v3516 = vrot.slane %v3317, 4
    %v3517 = vrot.slane %v3348, 3
    %v3518 = vsel %vm3422, %v3517, %v3516
    %v3519 = vrot.slane %v3379, 2
    %v3520 = vsel %vm3425, %v3519, %v3518
    %v3521 = vrot.slane %v3410, 1
    %v3522 = vsel %vm3428, %v3521, %v3520
    %v3524 = vrot.slane %v3317, 5
    %v3525 = vrot.slane %v3348, 4
    %v3526 = vsel %vm3422, %v3525, %v3524
    %v3527 = vrot.slane %v3379, 3
    %v3528 = vsel %vm3425, %v3527, %v3526
    %v3529 = vrot.slane %v3410, 2
    %v3530 = vsel %vm3428, %v3529, %v3528
    %v3532 = vrot.slane %v3317, 6
    %v3533 = vrot.slane %v3348, 5
    %v3534 = vsel %vm3422, %v3533, %v3532
    %v3535 = vrot.slane %v3379, 4
    %v3536 = vsel %vm3425, %v3535, %v3534
    %v3537 = vrot.slane %v3410, 3
    %v3538 = vsel %vm3428, %v3537, %v3536
    %v3540 = vrot.slane %v3317, 7
    %v3541 = vrot.slane %v3348, 6
    %v3542 = vsel %vm3422, %v3541, %v3540
    %v3543 = vrot.slane %v3379, 5
    %v3544 = vsel %vm3425, %v3543, %v3542
    %v3545 = vrot.slane %v3410, 4
    %v3546 = vsel %vm3428, %v3545, %v3544
    %v3552 = vrot.slane %v3351, 7
    %v3553 = vsel %vm3422, %v3552, %v3320
    %v3554 = vrot.slane %v3382, 6
    %v3555 = vsel %vm3425, %v3554, %v3553
    %v3556 = vrot.slane %v3413, 5
    %v3557 = vsel %vm3428, %v3556, %v3555
    %v3559 = vrot.slane %v3320, 1
    %v3560 = vsel %vm3422, %v3351, %v3559
    %v3561 = vrot.slane %v3382, 7
    %v3562 = vsel %vm3425, %v3561, %v3560
    %v3563 = vrot.slane %v3413, 6
    %v3564 = vsel %vm3428, %v3563, %v3562
    %v3566 = vrot.slane %v3320, 2
    %v3567 = vrot.slane %v3351, 1
    %v3568 = vsel %vm3422, %v3567, %v3566
    %v3569 = vsel %vm3425, %v3382, %v3568
    %v3570 = vrot.slane %v3413, 7
    %v3571 = vsel %vm3428, %v3570, %v3569
    %v3573 = vrot.slane %v3320, 3
    %v3574 = vrot.slane %v3351, 2
    %v3575 = vsel %vm3422, %v3574, %v3573
    %v3576 = vrot.slane %v3382, 1
    %v3577 = vsel %vm3425, %v3576, %v3575
    %v3578 = vsel %vm3428, %v3413, %v3577
    %v3580 = vrot.slane %v3320, 4
    %v3581 = vrot.slane %v3351, 3
    %v3582 = vsel %vm3422, %v3581, %v3580
    %v3583 = vrot.slane %v3382, 2
    %v3584 = vsel %vm3425, %v3583, %v3582
    %v3585 = vrot.slane %v3413, 1
    %v3586 = vsel %vm3428, %v3585, %v3584
    %v3588 = vrot.slane %v3320, 5
    %v3589 = vrot.slane %v3351, 4
    %v3590 = vsel %vm3422, %v3589, %v3588
    %v3591 = vrot.slane %v3382, 3
    %v3592 = vsel %vm3425, %v3591, %v3590
    %v3593 = vrot.slane %v3413, 2
    %v3594 = vsel %vm3428, %v3593, %v3592
    %v3596 = vrot.slane %v3320, 6
    %v3597 = vrot.slane %v3351, 5
    %v3598 = vsel %vm3422, %v3597, %v3596
    %v3599 = vrot.slane %v3382, 4
    %v3600 = vsel %vm3425, %v3599, %v3598
    %v3601 = vrot.slane %v3413, 3
    %v3602 = vsel %vm3428, %v3601, %v3600
    %v3604 = vrot.slane %v3320, 7
    %v3605 = vrot.slane %v3351, 6
    %v3606 = vsel %vm3422, %v3605, %v3604
    %v3607 = vrot.slane %v3382, 5
    %v3608 = vsel %vm3425, %v3607, %v3606
    %v3609 = vrot.slane %v3413, 4
    %v3610 = vsel %vm3428, %v3609, %v3608
    %v3616 = vrot.slane %v3353, 7
    %v3617 = vsel %vm3422, %v3616, %v3322
    %v3618 = vrot.slane %v3384, 6
    %v3619 = vsel %vm3425, %v3618, %v3617
    %v3620 = vrot.slane %v3415, 5
    %v3621 = vsel %vm3428, %v3620, %v3619
    %v3623 = vrot.slane %v3322, 1
    %v3624 = vsel %vm3422, %v3353, %v3623
    %v3625 = vrot.slane %v3384, 7
    %v3626 = vsel %vm3425, %v3625, %v3624
    %v3627 = vrot.slane %v3415, 6
    %v3628 = vsel %vm3428, %v3627, %v3626
    %v3630 = vrot.slane %v3322, 2
    %v3631 = vrot.slane %v3353, 1
    %v3632 = vsel %vm3422, %v3631, %v3630
    %v3633 = vsel %vm3425, %v3384, %v3632
    %v3634 = vrot.slane %v3415, 7
    %v3635 = vsel %vm3428, %v3634, %v3633
    %v3637 = vrot.slane %v3322, 3
    %v3638 = vrot.slane %v3353, 2
    %v3639 = vsel %vm3422, %v3638, %v3637
    %v3640 = vrot.slane %v3384, 1
    %v3641 = vsel %vm3425, %v3640, %v3639
    %v3642 = vsel %vm3428, %v3415, %v3641
    %v3644 = vrot.slane %v3322, 4
    %v3645 = vrot.slane %v3353, 3
    %v3646 = vsel %vm3422, %v3645, %v3644
    %v3647 = vrot.slane %v3384, 2
    %v3648 = vsel %vm3425, %v3647, %v3646
    %v3649 = vrot.slane %v3415, 1
    %v3650 = vsel %vm3428, %v3649, %v3648
    %v3652 = vrot.slane %v3322, 5
    %v3653 = vrot.slane %v3353, 4
    %v3654 = vsel %vm3422, %v3653, %v3652
    %v3655 = vrot.slane %v3384, 3
    %v3656 = vsel %vm3425, %v3655, %v3654
    %v3657 = vrot.slane %v3415, 2
    %v3658 = vsel %vm3428, %v3657, %v3656
    %v3660 = vrot.slane %v3322, 6
    %v3661 = vrot.slane %v3353, 5
    %v3662 = vsel %vm3422, %v3661, %v3660
    %v3663 = vrot.slane %v3384, 4
    %v3664 = vsel %vm3425, %v3663, %v3662
    %v3665 = vrot.slane %v3415, 3
    %v3666 = vsel %vm3428, %v3665, %v3664
    %v3668 = vrot.slane %v3322, 7
    %v3669 = vrot.slane %v3353, 6
    %v3670 = vsel %vm3422, %v3669, %v3668
    %v3671 = vrot.slane %v3384, 5
    %v3672 = vsel %vm3425, %v3671, %v3670
    %v3673 = vrot.slane %v3415, 4
    %v3674 = vsel %vm3428, %v3673, %v3672
    %v3676 = vpack.c.bf16 %v3429, %v3429
    %v3677 = vpack.c.bf16 %v3436, %v3436
    %v3678 = vpack.c.bf16 %v3443, %v3443
    %v3679 = vpack.c.bf16 %v3450, %v3450
    %v3680 = vpack.c.bf16 %v3458, %v3458
    %v3681 = vpack.c.bf16 %v3466, %v3466
    %v3682 = vpack.c.bf16 %v3474, %v3474
    %v3683 = vpack.c.bf16 %v3482, %v3482
    %v3684 = vpack.c.bf16 %v3493, %v3493
    %v3685 = vpack.c.bf16 %v3500, %v3500
    %v3686 = vpack.c.bf16 %v3507, %v3507
    %v3687 = vpack.c.bf16 %v3514, %v3514
    %v3688 = vpack.c.bf16 %v3522, %v3522
    %v3689 = vpack.c.bf16 %v3530, %v3530
    %v3690 = vpack.c.bf16 %v3538, %v3538
    %v3691 = vpack.c.bf16 %v3546, %v3546
    %v3692 = vpack.c.bf16 %v3557, %v3557
    %v3693 = vpack.c.bf16 %v3564, %v3564
    %v3694 = vpack.c.bf16 %v3571, %v3571
    %v3695 = vpack.c.bf16 %v3578, %v3578
    %v3696 = vpack.c.bf16 %v3586, %v3586
    %v3697 = vpack.c.bf16 %v3594, %v3594
    %v3698 = vpack.c.bf16 %v3602, %v3602
    %v3699 = vpack.c.bf16 %v3610, %v3610
    %v3700 = vpack.c.bf16 %v3621, %v3621
    %v3701 = vpack.c.bf16 %v3628, %v3628
    %v3702 = vpack.c.bf16 %v3635, %v3635
    %v3703 = vpack.c.bf16 %v3642, %v3642
    %v3704 = vpack.c.bf16 %v3650, %v3650
    %v3705 = vpack.c.bf16 %v3658, %v3658
    %v3706 = vpack.c.bf16 %v3666, %v3666
    %v3707 = vpack.c.bf16 %v3674, %v3674
    %v3708 = vld [vmem:[#allocation7] sm:$0xff]
    %v3709 = vld [vmem:[#allocation7 + $0x8] sm:$0xff]
    %v3710 = vld [vmem:[#allocation7 + $0x10] sm:$0xff]
    %v3711 = vld [vmem:[#allocation7 + $0x18] sm:$0xff]
    %v3712 = vld [vmem:[#allocation7 + $0x20] sm:$0xff]
    %v3713 = vld [vmem:[#allocation7 + $0x28] sm:$0xff]
    %v3714 = vld [vmem:[#allocation7 + $0x30] sm:$0xff]
    %v3715 = vld [vmem:[#allocation7 + $0x38] sm:$0xff]
    %v3716 = vld [vmem:[#allocation7 + $0x40] sm:$0xff]
    %v3717 = vld [vmem:[#allocation7 + $0x48] sm:$0xff]
    %v3718 = vld [vmem:[#allocation7 + $0x50] sm:$0xff]
    %v3719 = vld [vmem:[#allocation7 + $0x58] sm:$0xff]
    %v3720 = vld [vmem:[#allocation7 + $0x60] sm:$0xff]
    %v3721 = vld [vmem:[#allocation7 + $0x68] sm:$0xff]
    %v3722 = vld [vmem:[#allocation7 + $0x70] sm:$0xff]
    %v3723 = vld [vmem:[#allocation7 + $0x78] sm:$0xff]
    %v3724 = vld [vmem:[#allocation7 + $0x80] sm:$0xff]
    %v3725 = vld [vmem:[#allocation7 + $0x88] sm:$0xff]
    %v3726 = vld [vmem:[#allocation7 + $0x90] sm:$0xff]
    %v3727 = vld [vmem:[#allocation7 + $0x98] sm:$0xff]
    %v3728 = vld [vmem:[#allocation7 + $0xa0] sm:$0xff]
    %v3729 = vld [vmem:[#allocation7 + $0xa8] sm:$0xff]
    %v3730 = vld [vmem:[#allocation7 + $0xb0] sm:$0xff]
    %v3731 = vld [vmem:[#allocation7 + $0xb8] sm:$0xff]
    %v3732 = vld [vmem:[#allocation7 + $0xc0] sm:$0xff]
    %v3733 = vld [vmem:[#allocation7 + $0xc8] sm:$0xff]
    %v3734 = vld [vmem:[#allocation7 + $0xd0] sm:$0xff]
    %v3735 = vld [vmem:[#allocation7 + $0xd8] sm:$0xff]
    %v3736 = vld [vmem:[#allocation7 + $0xe0] sm:$0xff]
    %v3737 = vld [vmem:[#allocation7 + $0xe8] sm:$0xff]
    %v3738 = vld [vmem:[#allocation7 + $0xf0] sm:$0xff]
    %v3739 = vld [vmem:[#allocation7 + $0xf8] sm:$0xff]
    %v3740 = vld [vmem:[#allocation7 + $0x100] sm:$0xff]
    %v3741 = vld [vmem:[#allocation7 + $0x108] sm:$0xff]
    %v3742 = vld [vmem:[#allocation7 + $0x110] sm:$0xff]
    %v3743 = vld [vmem:[#allocation7 + $0x118] sm:$0xff]
    %v3744 = vld [vmem:[#allocation7 + $0x120] sm:$0xff]
    %v3745 = vld [vmem:[#allocation7 + $0x128] sm:$0xff]
    %v3746 = vld [vmem:[#allocation7 + $0x130] sm:$0xff]
    %v3747 = vld [vmem:[#allocation7 + $0x138] sm:$0xff]
    %v3748 = vld [vmem:[#allocation7 + $0x140] sm:$0xff]
    %v3749 = vld [vmem:[#allocation7 + $0x148] sm:$0xff]
    %v3750 = vld [vmem:[#allocation7 + $0x150] sm:$0xff]
    %v3751 = vld [vmem:[#allocation7 + $0x158] sm:$0xff]
    %v3752 = vld [vmem:[#allocation7 + $0x160] sm:$0xff]
    %v3753 = vld [vmem:[#allocation7 + $0x168] sm:$0xff]
    %v3754 = vld [vmem:[#allocation7 + $0x170] sm:$0xff]
    %v3755 = vld [vmem:[#allocation7 + $0x178] sm:$0xff]
    %v3756 = vld [vmem:[#allocation7 + $0x180] sm:$0xff]
    %v3757 = vld [vmem:[#allocation7 + $0x188] sm:$0xff]
    %v3758 = vld [vmem:[#allocation7 + $0x190] sm:$0xff]
    %v3759 = vld [vmem:[#allocation7 + $0x198] sm:$0xff]
    %v3760 = vld [vmem:[#allocation7 + $0x1a0] sm:$0xff]
    %v3761 = vld [vmem:[#allocation7 + $0x1a8] sm:$0xff]
    %v3762 = vld [vmem:[#allocation7 + $0x1b0] sm:$0xff]
    %v3763 = vld [vmem:[#allocation7 + $0x1b8] sm:$0xff]
    %v3764 = vld [vmem:[#allocation7 + $0x1c0] sm:$0xff]
    %v3765 = vld [vmem:[#allocation7 + $0x1c8] sm:$0xff]
    %v3766 = vld [vmem:[#allocation7 + $0x1d0] sm:$0xff]
    %v3767 = vld [vmem:[#allocation7 + $0x1d8] sm:$0xff]
    %v3768 = vld [vmem:[#allocation7 + $0x1e0] sm:$0xff]
    %v3769 = vld [vmem:[#allocation7 + $0x1e8] sm:$0xff]
    %v3770 = vld [vmem:[#allocation7 + $0x1f0] sm:$0xff]
    %v3771 = vld [vmem:[#allocation7 + $0x1f8] sm:$0xff]
    %v3772 = vld [vmem:[#allocation7 + $0x200] sm:$0xff]
    %v3773 = vld [vmem:[#allocation7 + $0x208] sm:$0xff]
    %v3774 = vld [vmem:[#allocation7 + $0x210] sm:$0xff]
    %v3775 = vld [vmem:[#allocation7 + $0x218] sm:$0xff]
    %v3776 = vld [vmem:[#allocation7 + $0x220] sm:$0xff]
    %v3777 = vld [vmem:[#allocation7 + $0x228] sm:$0xff]
    %v3778 = vld [vmem:[#allocation7 + $0x230] sm:$0xff]
    %v3779 = vld [vmem:[#allocation7 + $0x238] sm:$0xff]
    %v3780 = vld [vmem:[#allocation7 + $0x240] sm:$0xff]
    %v3781 = vld [vmem:[#allocation7 + $0x248] sm:$0xff]
    %v3782 = vld [vmem:[#allocation7 + $0x250] sm:$0xff]
    %v3783 = vld [vmem:[#allocation7 + $0x258] sm:$0xff]
    %v3784 = vld [vmem:[#allocation7 + $0x260] sm:$0xff]
    %v3785 = vld [vmem:[#allocation7 + $0x268] sm:$0xff]
    %v3786 = vld [vmem:[#allocation7 + $0x270] sm:$0xff]
    %v3787 = vld [vmem:[#allocation7 + $0x278] sm:$0xff]
    %v3788 = vld [vmem:[#allocation7 + $0x280] sm:$0xff]
    %v3789 = vld [vmem:[#allocation7 + $0x288] sm:$0xff]
    %v3790 = vld [vmem:[#allocation7 + $0x290] sm:$0xff]
    %v3791 = vld [vmem:[#allocation7 + $0x298] sm:$0xff]
    %v3792 = vld [vmem:[#allocation7 + $0x2a0] sm:$0xff]
    %v3793 = vld [vmem:[#allocation7 + $0x2a8] sm:$0xff]
    %v3794 = vld [vmem:[#allocation7 + $0x2b0] sm:$0xff]
    %v3795 = vld [vmem:[#allocation7 + $0x2b8] sm:$0xff]
    %v3796 = vld [vmem:[#allocation7 + $0x2c0] sm:$0xff]
    %v3797 = vld [vmem:[#allocation7 + $0x2c8] sm:$0xff]
    %v3798 = vld [vmem:[#allocation7 + $0x2d0] sm:$0xff]
    %v3799 = vld [vmem:[#allocation7 + $0x2d8] sm:$0xff]
    %v3800 = vld [vmem:[#allocation7 + $0x2e0] sm:$0xff]
    %v3801 = vld [vmem:[#allocation7 + $0x2e8] sm:$0xff]
    %v3802 = vld [vmem:[#allocation7 + $0x2f0] sm:$0xff]
    %v3803 = vld [vmem:[#allocation7 + $0x2f8] sm:$0xff]
    %v3804 = vld [vmem:[#allocation7 + $0x300] sm:$0xff]
    %v3805 = vld [vmem:[#allocation7 + $0x308] sm:$0xff]
    %v3806 = vld [vmem:[#allocation7 + $0x310] sm:$0xff]
    %v3807 = vld [vmem:[#allocation7 + $0x318] sm:$0xff]
    %v3808 = vld [vmem:[#allocation7 + $0x320] sm:$0xff]
    %v3809 = vld [vmem:[#allocation7 + $0x328] sm:$0xff]
    %v3810 = vld [vmem:[#allocation7 + $0x330] sm:$0xff]
    %v3811 = vld [vmem:[#allocation7 + $0x338] sm:$0xff]
    %v3812 = vld [vmem:[#allocation7 + $0x340] sm:$0xff]
    %v3813 = vld [vmem:[#allocation7 + $0x348] sm:$0xff]
    %v3814 = vld [vmem:[#allocation7 + $0x350] sm:$0xff]
    %v3815 = vld [vmem:[#allocation7 + $0x358] sm:$0xff]
    %v3816 = vld [vmem:[#allocation7 + $0x360] sm:$0xff]
    %v3817 = vld [vmem:[#allocation7 + $0x368] sm:$0xff]
    %v3818 = vld [vmem:[#allocation7 + $0x370] sm:$0xff]
    %v3819 = vld [vmem:[#allocation7 + $0x378] sm:$0xff]
    %v3820 = vld [vmem:[#allocation7 + $0x380] sm:$0xff]
    %v3821 = vld [vmem:[#allocation7 + $0x388] sm:$0xff]
    %v3822 = vld [vmem:[#allocation7 + $0x390] sm:$0xff]
    %v3823 = vld [vmem:[#allocation7 + $0x398] sm:$0xff]
    %v3824 = vld [vmem:[#allocation7 + $0x3a0] sm:$0xff]
    %v3825 = vld [vmem:[#allocation7 + $0x3a8] sm:$0xff]
    %v3826 = vld [vmem:[#allocation7 + $0x3b0] sm:$0xff]
    %v3827 = vld [vmem:[#allocation7 + $0x3b8] sm:$0xff]
    %v3828 = vld [vmem:[#allocation7 + $0x3c0] sm:$0xff]
    %v3829 = vld [vmem:[#allocation7 + $0x3c8] sm:$0xff]
    %v3830 = vld [vmem:[#allocation7 + $0x3d0] sm:$0xff]
    %v3831 = vld [vmem:[#allocation7 + $0x3d8] sm:$0xff]
    %v3832 = vld [vmem:[#allocation7 + $0x3e0] sm:$0xff]
    %v3833 = vld [vmem:[#allocation7 + $0x3e8] sm:$0xff]
    %v3834 = vld [vmem:[#allocation7 + $0x3f0] sm:$0xff]
    %v3835 = vld [vmem:[#allocation7 + $0x3f8] sm:$0xff]
    %v3836 = vld [vmem:[#allocation7 + $0x400] sm:$0xff]
    %v3837 = vld [vmem:[#allocation7 + $0x408] sm:$0xff]
    %v3838 = vld [vmem:[#allocation7 + $0x410] sm:$0xff]
    %v3839 = vld [vmem:[#allocation7 + $0x418] sm:$0xff]
    %v3840 = vld [vmem:[#allocation7 + $0x420] sm:$0xff]
    %v3841 = vld [vmem:[#allocation7 + $0x428] sm:$0xff]
    %v3842 = vld [vmem:[#allocation7 + $0x430] sm:$0xff]
    %v3843 = vld [vmem:[#allocation7 + $0x438] sm:$0xff]
    %v3844 = vld [vmem:[#allocation7 + $0x440] sm:$0xff]
    %v3845 = vld [vmem:[#allocation7 + $0x448] sm:$0xff]
    %v3846 = vld [vmem:[#allocation7 + $0x450] sm:$0xff]
    %v3847 = vld [vmem:[#allocation7 + $0x458] sm:$0xff]
    %v3848 = vld [vmem:[#allocation7 + $0x460] sm:$0xff]
    %v3849 = vld [vmem:[#allocation7 + $0x468] sm:$0xff]
    %v3850 = vld [vmem:[#allocation7 + $0x470] sm:$0xff]
    %v3851 = vld [vmem:[#allocation7 + $0x478] sm:$0xff]
    %v3852 = vld [vmem:[#allocation7 + $0x480] sm:$0xff]
    %v3853 = vld [vmem:[#allocation7 + $0x488] sm:$0xff]
    %v3854 = vld [vmem:[#allocation7 + $0x490] sm:$0xff]
    %v3855 = vld [vmem:[#allocation7 + $0x498] sm:$0xff]
    %v3856 = vld [vmem:[#allocation7 + $0x4a0] sm:$0xff]
    %v3857 = vld [vmem:[#allocation7 + $0x4a8] sm:$0xff]
    %v3858 = vld [vmem:[#allocation7 + $0x4b0] sm:$0xff]
    %v3859 = vld [vmem:[#allocation7 + $0x4b8] sm:$0xff]
    %v3860 = vld [vmem:[#allocation7 + $0x4c0] sm:$0xff]
    %v3861 = vld [vmem:[#allocation7 + $0x4c8] sm:$0xff]
    %v3862 = vld [vmem:[#allocation7 + $0x4d0] sm:$0xff]
    %v3863 = vld [vmem:[#allocation7 + $0x4d8] sm:$0xff]
    %v3864 = vld [vmem:[#allocation7 + $0x4e0] sm:$0xff]
    %v3865 = vld [vmem:[#allocation7 + $0x4e8] sm:$0xff]
    %v3866 = vld [vmem:[#allocation7 + $0x4f0] sm:$0xff]
    %v3867 = vld [vmem:[#allocation7 + $0x4f8] sm:$0xff]
    %v3868 = vld [vmem:[#allocation7 + $0x500] sm:$0xff]
    %v3869 = vld [vmem:[#allocation7 + $0x508] sm:$0xff]
    %v3870 = vld [vmem:[#allocation7 + $0x510] sm:$0xff]
    %v3871 = vld [vmem:[#allocation7 + $0x518] sm:$0xff]
    %v3872 = vld [vmem:[#allocation7 + $0x520] sm:$0xff]
    %v3873 = vld [vmem:[#allocation7 + $0x528] sm:$0xff]
    %v3874 = vld [vmem:[#allocation7 + $0x530] sm:$0xff]
    %v3875 = vld [vmem:[#allocation7 + $0x538] sm:$0xff]
    %v3876 = vld [vmem:[#allocation7 + $0x540] sm:$0xff]
    %v3877 = vld [vmem:[#allocation7 + $0x548] sm:$0xff]
    %v3878 = vld [vmem:[#allocation7 + $0x550] sm:$0xff]
    %v3879 = vld [vmem:[#allocation7 + $0x558] sm:$0xff]
    %v3880 = vld [vmem:[#allocation7 + $0x560] sm:$0xff]
    %v3881 = vld [vmem:[#allocation7 + $0x568] sm:$0xff]
    %v3882 = vld [vmem:[#allocation7 + $0x570] sm:$0xff]
    %v3883 = vld [vmem:[#allocation7 + $0x578] sm:$0xff]
    %v3884 = vld [vmem:[#allocation7 + $0x580] sm:$0xff]
    %v3885 = vld [vmem:[#allocation7 + $0x588] sm:$0xff]
    %v3886 = vld [vmem:[#allocation7 + $0x590] sm:$0xff]
    %v3887 = vld [vmem:[#allocation7 + $0x598] sm:$0xff]
    %v3888 = vld [vmem:[#allocation7 + $0x5a0] sm:$0xff]
    %v3889 = vld [vmem:[#allocation7 + $0x5a8] sm:$0xff]
    %v3890 = vld [vmem:[#allocation7 + $0x5b0] sm:$0xff]
    %v3891 = vld [vmem:[#allocation7 + $0x5b8] sm:$0xff]
    %v3892 = vld [vmem:[#allocation7 + $0x5c0] sm:$0xff]
    %v3893 = vld [vmem:[#allocation7 + $0x5c8] sm:$0xff]
    %v3894 = vld [vmem:[#allocation7 + $0x5d0] sm:$0xff]
    %v3895 = vld [vmem:[#allocation7 + $0x5d8] sm:$0xff]
    %v3896 = vld [vmem:[#allocation7 + $0x5e0] sm:$0xff]
    %v3897 = vld [vmem:[#allocation7 + $0x5e8] sm:$0xff]
    %v3898 = vld [vmem:[#allocation7 + $0x5f0] sm:$0xff]
    %v3899 = vld [vmem:[#allocation7 + $0x5f8] sm:$0xff]
    %v3900 = vld [vmem:[#allocation7 + $0x600] sm:$0xff]
    %v3901 = vld [vmem:[#allocation7 + $0x608] sm:$0xff]
    %v3902 = vld [vmem:[#allocation7 + $0x610] sm:$0xff]
    %v3903 = vld [vmem:[#allocation7 + $0x618] sm:$0xff]
    %v3904 = vld [vmem:[#allocation7 + $0x620] sm:$0xff]
    %v3905 = vld [vmem:[#allocation7 + $0x628] sm:$0xff]
    %v3906 = vld [vmem:[#allocation7 + $0x630] sm:$0xff]
    %v3907 = vld [vmem:[#allocation7 + $0x638] sm:$0xff]
    %v3908 = vld [vmem:[#allocation7 + $0x640] sm:$0xff]
    %v3909 = vld [vmem:[#allocation7 + $0x648] sm:$0xff]
    %v3910 = vld [vmem:[#allocation7 + $0x650] sm:$0xff]
    %v3911 = vld [vmem:[#allocation7 + $0x658] sm:$0xff]
    %v3912 = vld [vmem:[#allocation7 + $0x660] sm:$0xff]
    %v3913 = vld [vmem:[#allocation7 + $0x668] sm:$0xff]
    %v3914 = vld [vmem:[#allocation7 + $0x670] sm:$0xff]
    %v3915 = vld [vmem:[#allocation7 + $0x678] sm:$0xff]
    %v3916 = vld [vmem:[#allocation7 + $0x680] sm:$0xff]
    %v3917 = vld [vmem:[#allocation7 + $0x688] sm:$0xff]
    %v3918 = vld [vmem:[#allocation7 + $0x690] sm:$0xff]
    %v3919 = vld [vmem:[#allocation7 + $0x698] sm:$0xff]
    %v3920 = vld [vmem:[#allocation7 + $0x6a0] sm:$0xff]
    %v3921 = vld [vmem:[#allocation7 + $0x6a8] sm:$0xff]
    %v3922 = vld [vmem:[#allocation7 + $0x6b0] sm:$0xff]
    %v3923 = vld [vmem:[#allocation7 + $0x6b8] sm:$0xff]
    %v3924 = vld [vmem:[#allocation7 + $0x6c0] sm:$0xff]
    %v3925 = vld [vmem:[#allocation7 + $0x6c8] sm:$0xff]
    %v3926 = vld [vmem:[#allocation7 + $0x6d0] sm:$0xff]
    %v3927 = vld [vmem:[#allocation7 + $0x6d8] sm:$0xff]
    %v3928 = vld [vmem:[#allocation7 + $0x6e0] sm:$0xff]
    %v3929 = vld [vmem:[#allocation7 + $0x6e8] sm:$0xff]
    %v3930 = vld [vmem:[#allocation7 + $0x6f0] sm:$0xff]
    %v3931 = vld [vmem:[#allocation7 + $0x6f8] sm:$0xff]
    %v3932 = vld [vmem:[#allocation7 + $0x700] sm:$0xff]
    %v3933 = vld [vmem:[#allocation7 + $0x708] sm:$0xff]
    %v3934 = vld [vmem:[#allocation7 + $0x710] sm:$0xff]
    %v3935 = vld [vmem:[#allocation7 + $0x718] sm:$0xff]
    %v3936 = vld [vmem:[#allocation7 + $0x720] sm:$0xff]
    %v3937 = vld [vmem:[#allocation7 + $0x728] sm:$0xff]
    %v3938 = vld [vmem:[#allocation7 + $0x730] sm:$0xff]
    %v3939 = vld [vmem:[#allocation7 + $0x738] sm:$0xff]
    %v3940 = vld [vmem:[#allocation7 + $0x740] sm:$0xff]
    %v3941 = vld [vmem:[#allocation7 + $0x748] sm:$0xff]
    %v3942 = vld [vmem:[#allocation7 + $0x750] sm:$0xff]
    %v3943 = vld [vmem:[#allocation7 + $0x758] sm:$0xff]
    %v3944 = vld [vmem:[#allocation7 + $0x760] sm:$0xff]
    %v3945 = vld [vmem:[#allocation7 + $0x768] sm:$0xff]
    %v3946 = vld [vmem:[#allocation7 + $0x770] sm:$0xff]
    %v3947 = vld [vmem:[#allocation7 + $0x778] sm:$0xff]
    %v3948 = vld [vmem:[#allocation7 + $0x780] sm:$0xff]
    %v3949 = vld [vmem:[#allocation7 + $0x788] sm:$0xff]
    %v3950 = vld [vmem:[#allocation7 + $0x790] sm:$0xff]
    %v3951 = vld [vmem:[#allocation7 + $0x798] sm:$0xff]
    %v3952 = vld [vmem:[#allocation7 + $0x7a0] sm:$0xff]
    %v3953 = vld [vmem:[#allocation7 + $0x7a8] sm:$0xff]
    %v3954 = vld [vmem:[#allocation7 + $0x7b0] sm:$0xff]
    %v3955 = vld [vmem:[#allocation7 + $0x7b8] sm:$0xff]
    %v3956 = vld [vmem:[#allocation7 + $0x7c0] sm:$0xff]
    %v3957 = vld [vmem:[#allocation7 + $0x7c8] sm:$0xff]
    %v3958 = vld [vmem:[#allocation7 + $0x7d0] sm:$0xff]
    %v3959 = vld [vmem:[#allocation7 + $0x7d8] sm:$0xff]
    %v3960 = vld [vmem:[#allocation7 + $0x7e0] sm:$0xff]
    %v3961 = vld [vmem:[#allocation7 + $0x7e8] sm:$0xff]
    %v3962 = vld [vmem:[#allocation7 + $0x7f0] sm:$0xff]
    %v3963 = vld [vmem:[#allocation7 + $0x7f8] sm:$0xff]
    %v3964 = vld [vmem:[#allocation7 + $0x800] sm:$0xff]
    %v3965 = vld [vmem:[#allocation7 + $0x808] sm:$0xff]
    %v3966 = vld [vmem:[#allocation7 + $0x810] sm:$0xff]
    %v3967 = vld [vmem:[#allocation7 + $0x818] sm:$0xff]
    %v3968 = vld [vmem:[#allocation7 + $0x820] sm:$0xff]
    %v3969 = vld [vmem:[#allocation7 + $0x828] sm:$0xff]
    %v3970 = vld [vmem:[#allocation7 + $0x830] sm:$0xff]
    %v3971 = vld [vmem:[#allocation7 + $0x838] sm:$0xff]
    %v3972 = vld [vmem:[#allocation7 + $0x840] sm:$0xff]
    %v3973 = vld [vmem:[#allocation7 + $0x848] sm:$0xff]
    %v3974 = vld [vmem:[#allocation7 + $0x850] sm:$0xff]
    %v3975 = vld [vmem:[#allocation7 + $0x858] sm:$0xff]
    %v3976 = vld [vmem:[#allocation7 + $0x860] sm:$0xff]
    %v3977 = vld [vmem:[#allocation7 + $0x868] sm:$0xff]
    %v3978 = vld [vmem:[#allocation7 + $0x870] sm:$0xff]
    %v3979 = vld [vmem:[#allocation7 + $0x878] sm:$0xff]
    %v3980 = vld [vmem:[#allocation7 + $0x880] sm:$0xff]
    %v3981 = vld [vmem:[#allocation7 + $0x888] sm:$0xff]
    %v3982 = vld [vmem:[#allocation7 + $0x890] sm:$0xff]
    %v3983 = vld [vmem:[#allocation7 + $0x898] sm:$0xff]
    %v3984 = vld [vmem:[#allocation7 + $0x8a0] sm:$0xff]
    %v3985 = vld [vmem:[#allocation7 + $0x8a8] sm:$0xff]
    %v3986 = vld [vmem:[#allocation7 + $0x8b0] sm:$0xff]
    %v3987 = vld [vmem:[#allocation7 + $0x8b8] sm:$0xff]
    %v3988 = vld [vmem:[#allocation7 + $0x8c0] sm:$0xff]
    %v3989 = vld [vmem:[#allocation7 + $0x8c8] sm:$0xff]
    %v3990 = vld [vmem:[#allocation7 + $0x8d0] sm:$0xff]
    %v3991 = vld [vmem:[#allocation7 + $0x8d8] sm:$0xff]
    %v3992 = vld [vmem:[#allocation7 + $0x8e0] sm:$0xff]
    %v3993 = vld [vmem:[#allocation7 + $0x8e8] sm:$0xff]
    %v3994 = vld [vmem:[#allocation7 + $0x8f0] sm:$0xff]
    %v3995 = vld [vmem:[#allocation7 + $0x8f8] sm:$0xff]
    %v3996 = vld [vmem:[#allocation7 + $0x900] sm:$0xff]
    %v3997 = vld [vmem:[#allocation7 + $0x908] sm:$0xff]
    %v3998 = vld [vmem:[#allocation7 + $0x910] sm:$0xff]
    %v3999 = vld [vmem:[#allocation7 + $0x918] sm:$0xff]
    %v4000 = vld [vmem:[#allocation7 + $0x920] sm:$0xff]
    %v4001 = vld [vmem:[#allocation7 + $0x928] sm:$0xff]
    %v4002 = vld [vmem:[#allocation7 + $0x930] sm:$0xff]
    %v4003 = vld [vmem:[#allocation7 + $0x938] sm:$0xff]
    %v4004 = vld [vmem:[#allocation7 + $0x940] sm:$0xff]
    %v4005 = vld [vmem:[#allocation7 + $0x948] sm:$0xff]
    %v4006 = vld [vmem:[#allocation7 + $0x950] sm:$0xff]
    %v4007 = vld [vmem:[#allocation7 + $0x958] sm:$0xff]
    %v4008 = vld [vmem:[#allocation7 + $0x960] sm:$0xff]
    %v4009 = vld [vmem:[#allocation7 + $0x968] sm:$0xff]
    %v4010 = vld [vmem:[#allocation7 + $0x970] sm:$0xff]
    %v4011 = vld [vmem:[#allocation7 + $0x978] sm:$0xff]
    %v4012 = vld [vmem:[#allocation7 + $0x980] sm:$0xff]
    %v4013 = vld [vmem:[#allocation7 + $0x988] sm:$0xff]
    %v4014 = vld [vmem:[#allocation7 + $0x990] sm:$0xff]
    %v4015 = vld [vmem:[#allocation7 + $0x998] sm:$0xff]
    %v4016 = vld [vmem:[#allocation7 + $0x9a0] sm:$0xff]
    %v4017 = vld [vmem:[#allocation7 + $0x9a8] sm:$0xff]
    %v4018 = vld [vmem:[#allocation7 + $0x9b0] sm:$0xff]
    %v4019 = vld [vmem:[#allocation7 + $0x9b8] sm:$0xff]
    %v4020 = vld [vmem:[#allocation7 + $0x9c0] sm:$0xff]
    %v4021 = vld [vmem:[#allocation7 + $0x9c8] sm:$0xff]
    %v4022 = vld [vmem:[#allocation7 + $0x9d0] sm:$0xff]
    %v4023 = vld [vmem:[#allocation7 + $0x9d8] sm:$0xff]
    %v4024 = vld [vmem:[#allocation7 + $0x9e0] sm:$0xff]
    %v4025 = vld [vmem:[#allocation7 + $0x9e8] sm:$0xff]
    %v4026 = vld [vmem:[#allocation7 + $0x9f0] sm:$0xff]
    %v4027 = vld [vmem:[#allocation7 + $0x9f8] sm:$0xff]
    %v4028 = vld [vmem:[#allocation7 + $0xa00] sm:$0xff]
    %v4029 = vld [vmem:[#allocation7 + $0xa08] sm:$0xff]
    %v4030 = vld [vmem:[#allocation7 + $0xa10] sm:$0xff]
    %v4031 = vld [vmem:[#allocation7 + $0xa18] sm:$0xff]
    %v4032 = vld [vmem:[#allocation7 + $0xa20] sm:$0xff]
    %v4033 = vld [vmem:[#allocation7 + $0xa28] sm:$0xff]
    %v4034 = vld [vmem:[#allocation7 + $0xa30] sm:$0xff]
    %v4035 = vld [vmem:[#allocation7 + $0xa38] sm:$0xff]
    %v4036 = vld [vmem:[#allocation7 + $0xa40] sm:$0xff]
    %v4037 = vld [vmem:[#allocation7 + $0xa48] sm:$0xff]
    %v4038 = vld [vmem:[#allocation7 + $0xa50] sm:$0xff]
    %v4039 = vld [vmem:[#allocation7 + $0xa58] sm:$0xff]
    %v4040 = vld [vmem:[#allocation7 + $0xa60] sm:$0xff]
    %v4041 = vld [vmem:[#allocation7 + $0xa68] sm:$0xff]
    %v4042 = vld [vmem:[#allocation7 + $0xa70] sm:$0xff]
    %v4043 = vld [vmem:[#allocation7 + $0xa78] sm:$0xff]
    %v4044 = vld [vmem:[#allocation7 + $0xa80] sm:$0xff]
    %v4045 = vld [vmem:[#allocation7 + $0xa88] sm:$0xff]
    %v4046 = vld [vmem:[#allocation7 + $0xa90] sm:$0xff]
    %v4047 = vld [vmem:[#allocation7 + $0xa98] sm:$0xff]
    %v4048 = vld [vmem:[#allocation7 + $0xaa0] sm:$0xff]
    %v4049 = vld [vmem:[#allocation7 + $0xaa8] sm:$0xff]
    %v4050 = vld [vmem:[#allocation7 + $0xab0] sm:$0xff]
    %v4051 = vld [vmem:[#allocation7 + $0xab8] sm:$0xff]
    %v4052 = vld [vmem:[#allocation7 + $0xac0] sm:$0xff]
    %v4053 = vld [vmem:[#allocation7 + $0xac8] sm:$0xff]
    %v4054 = vld [vmem:[#allocation7 + $0xad0] sm:$0xff]
    %v4055 = vld [vmem:[#allocation7 + $0xad8] sm:$0xff]
    %v4056 = vld [vmem:[#allocation7 + $0xae0] sm:$0xff]
    %v4057 = vld [vmem:[#allocation7 + $0xae8] sm:$0xff]
    %v4058 = vld [vmem:[#allocation7 + $0xaf0] sm:$0xff]
    %v4059 = vld [vmem:[#allocation7 + $0xaf8] sm:$0xff]
    %v4060 = vld [vmem:[#allocation7 + $0xb00] sm:$0xff]
    %v4061 = vld [vmem:[#allocation7 + $0xb08] sm:$0xff]
    %v4062 = vld [vmem:[#allocation7 + $0xb10] sm:$0xff]
    %v4063 = vld [vmem:[#allocation7 + $0xb18] sm:$0xff]
    %v4064 = vld [vmem:[#allocation7 + $0xb20] sm:$0xff]
    %v4065 = vld [vmem:[#allocation7 + $0xb28] sm:$0xff]
    %v4066 = vld [vmem:[#allocation7 + $0xb30] sm:$0xff]
    %v4067 = vld [vmem:[#allocation7 + $0xb38] sm:$0xff]
    %v4068 = vld [vmem:[#allocation7 + $0xb40] sm:$0xff]
    %v4069 = vld [vmem:[#allocation7 + $0xb48] sm:$0xff]
    %v4070 = vld [vmem:[#allocation7 + $0xb50] sm:$0xff]
    %v4071 = vld [vmem:[#allocation7 + $0xb58] sm:$0xff]
    %v4072 = vld [vmem:[#allocation7 + $0xb60] sm:$0xff]
    %v4073 = vld [vmem:[#allocation7 + $0xb68] sm:$0xff]
    %v4074 = vld [vmem:[#allocation7 + $0xb70] sm:$0xff]
    %v4075 = vld [vmem:[#allocation7 + $0xb78] sm:$0xff]
    %v4076 = vld [vmem:[#allocation7 + $0xb80] sm:$0xff]
    %v4077 = vld [vmem:[#allocation7 + $0xb88] sm:$0xff]
    %v4078 = vld [vmem:[#allocation7 + $0xb90] sm:$0xff]
    %v4079 = vld [vmem:[#allocation7 + $0xb98] sm:$0xff]
    %v4080 = vld [vmem:[#allocation7 + $0xba0] sm:$0xff]
    %v4081 = vld [vmem:[#allocation7 + $0xba8] sm:$0xff]
    %v4082 = vld [vmem:[#allocation7 + $0xbb0] sm:$0xff]
    %v4083 = vld [vmem:[#allocation7 + $0xbb8] sm:$0xff]
    %v4084 = vld [vmem:[#allocation7 + $0xbc0] sm:$0xff]
    %v4085 = vld [vmem:[#allocation7 + $0xbc8] sm:$0xff]
    %v4086 = vld [vmem:[#allocation7 + $0xbd0] sm:$0xff]
    %v4087 = vld [vmem:[#allocation7 + $0xbd8] sm:$0xff]
    %v4088 = vld [vmem:[#allocation7 + $0xbe0] sm:$0xff]
    %v4089 = vld [vmem:[#allocation7 + $0xbe8] sm:$0xff]
    %v4090 = vld [vmem:[#allocation7 + $0xbf0] sm:$0xff]
    %v4091 = vld [vmem:[#allocation7 + $0xbf8] sm:$0xff]
    %v4092 = vld [vmem:[#allocation7 + $0xc00] sm:$0xff]
    %v4093 = vld [vmem:[#allocation7 + $0xc08] sm:$0xff]
    %v4094 = vld [vmem:[#allocation7 + $0xc10] sm:$0xff]
    %v4095 = vld [vmem:[#allocation7 + $0xc18] sm:$0xff]
    %v4096 = vld [vmem:[#allocation7 + $0xc20] sm:$0xff]
    %v4097 = vld [vmem:[#allocation7 + $0xc28] sm:$0xff]
    %v4098 = vld [vmem:[#allocation7 + $0xc30] sm:$0xff]
    %v4099 = vld [vmem:[#allocation7 + $0xc38] sm:$0xff]
    %v4100 = vld [vmem:[#allocation7 + $0xc40] sm:$0xff]
    %v4101 = vld [vmem:[#allocation7 + $0xc48] sm:$0xff]
    %v4102 = vld [vmem:[#allocation7 + $0xc50] sm:$0xff]
    %v4103 = vld [vmem:[#allocation7 + $0xc58] sm:$0xff]
    %v4104 = vld [vmem:[#allocation7 + $0xc60] sm:$0xff]
    %v4105 = vld [vmem:[#allocation7 + $0xc68] sm:$0xff]
    %v4106 = vld [vmem:[#allocation7 + $0xc70] sm:$0xff]
    %v4107 = vld [vmem:[#allocation7 + $0xc78] sm:$0xff]
    %v4108 = vld [vmem:[#allocation7 + $0xc80] sm:$0xff]
    %v4109 = vld [vmem:[#allocation7 + $0xc88] sm:$0xff]
    %v4110 = vld [vmem:[#allocation7 + $0xc90] sm:$0xff]
    %v4111 = vld [vmem:[#allocation7 + $0xc98] sm:$0xff]
    %v4112 = vld [vmem:[#allocation7 + $0xca0] sm:$0xff]
    %v4113 = vld [vmem:[#allocation7 + $0xca8] sm:$0xff]
    %v4114 = vld [vmem:[#allocation7 + $0xcb0] sm:$0xff]
    %v4115 = vld [vmem:[#allocation7 + $0xcb8] sm:$0xff]
    %v4116 = vld [vmem:[#allocation7 + $0xcc0] sm:$0xff]
    %v4117 = vld [vmem:[#allocation7 + $0xcc8] sm:$0xff]
    %v4118 = vld [vmem:[#allocation7 + $0xcd0] sm:$0xff]
    %v4119 = vld [vmem:[#allocation7 + $0xcd8] sm:$0xff]
    %v4120 = vld [vmem:[#allocation7 + $0xce0] sm:$0xff]
    %v4121 = vld [vmem:[#allocation7 + $0xce8] sm:$0xff]
    %v4122 = vld [vmem:[#allocation7 + $0xcf0] sm:$0xff]
    %v4123 = vld [vmem:[#allocation7 + $0xcf8] sm:$0xff]
    %v4124 = vld [vmem:[#allocation7 + $0xd00] sm:$0xff]
    %v4125 = vld [vmem:[#allocation7 + $0xd08] sm:$0xff]
    %v4126 = vld [vmem:[#allocation7 + $0xd10] sm:$0xff]
    %v4127 = vld [vmem:[#allocation7 + $0xd18] sm:$0xff]
    %v4128 = vld [vmem:[#allocation7 + $0xd20] sm:$0xff]
    %v4129 = vld [vmem:[#allocation7 + $0xd28] sm:$0xff]
    %v4130 = vld [vmem:[#allocation7 + $0xd30] sm:$0xff]
    %v4131 = vld [vmem:[#allocation7 + $0xd38] sm:$0xff]
    %v4132 = vld [vmem:[#allocation7 + $0xd40] sm:$0xff]
    %v4133 = vld [vmem:[#allocation7 + $0xd48] sm:$0xff]
    %v4134 = vld [vmem:[#allocation7 + $0xd50] sm:$0xff]
    %v4135 = vld [vmem:[#allocation7 + $0xd58] sm:$0xff]
    %v4136 = vld [vmem:[#allocation7 + $0xd60] sm:$0xff]
    %v4137 = vld [vmem:[#allocation7 + $0xd68] sm:$0xff]
    %v4138 = vld [vmem:[#allocation7 + $0xd70] sm:$0xff]
    %v4139 = vld [vmem:[#allocation7 + $0xd78] sm:$0xff]
    %v4140 = vld [vmem:[#allocation7 + $0xd80] sm:$0xff]
    %v4141 = vld [vmem:[#allocation7 + $0xd88] sm:$0xff]
    %v4142 = vld [vmem:[#allocation7 + $0xd90] sm:$0xff]
    %v4143 = vld [vmem:[#allocation7 + $0xd98] sm:$0xff]
    %v4144 = vld [vmem:[#allocation7 + $0xda0] sm:$0xff]
    %v4145 = vld [vmem:[#allocation7 + $0xda8] sm:$0xff]
    %v4146 = vld [vmem:[#allocation7 + $0xdb0] sm:$0xff]
    %v4147 = vld [vmem:[#allocation7 + $0xdb8] sm:$0xff]
    %v4148 = vld [vmem:[#allocation7 + $0xdc0] sm:$0xff]
    %v4149 = vld [vmem:[#allocation7 + $0xdc8] sm:$0xff]
    %v4150 = vld [vmem:[#allocation7 + $0xdd0] sm:$0xff]
    %v4151 = vld [vmem:[#allocation7 + $0xdd8] sm:$0xff]
    %v4152 = vld [vmem:[#allocation7 + $0xde0] sm:$0xff]
    %v4153 = vld [vmem:[#allocation7 + $0xde8] sm:$0xff]
    %v4154 = vld [vmem:[#allocation7 + $0xdf0] sm:$0xff]
    %v4155 = vld [vmem:[#allocation7 + $0xdf8] sm:$0xff]
    %v4156 = vld [vmem:[#allocation7 + $0xe00] sm:$0xff]
    %v4157 = vld [vmem:[#allocation7 + $0xe08] sm:$0xff]
    %v4158 = vld [vmem:[#allocation7 + $0xe10] sm:$0xff]
    %v4159 = vld [vmem:[#allocation7 + $0xe18] sm:$0xff]
    %v4160 = vld [vmem:[#allocation7 + $0xe20] sm:$0xff]
    %v4161 = vld [vmem:[#allocation7 + $0xe28] sm:$0xff]
    %v4162 = vld [vmem:[#allocation7 + $0xe30] sm:$0xff]
    %v4163 = vld [vmem:[#allocation7 + $0xe38] sm:$0xff]
    %v4164 = vld [vmem:[#allocation7 + $0xe40] sm:$0xff]
    %v4165 = vld [vmem:[#allocation7 + $0xe48] sm:$0xff]
    %v4166 = vld [vmem:[#allocation7 + $0xe50] sm:$0xff]
    %v4167 = vld [vmem:[#allocation7 + $0xe58] sm:$0xff]
    %v4168 = vld [vmem:[#allocation7 + $0xe60] sm:$0xff]
    %v4169 = vld [vmem:[#allocation7 + $0xe68] sm:$0xff]
    %v4170 = vld [vmem:[#allocation7 + $0xe70] sm:$0xff]
    %v4171 = vld [vmem:[#allocation7 + $0xe78] sm:$0xff]
    %v4172 = vld [vmem:[#allocation7 + $0xe80] sm:$0xff]
    %v4173 = vld [vmem:[#allocation7 + $0xe88] sm:$0xff]
    %v4174 = vld [vmem:[#allocation7 + $0xe90] sm:$0xff]
    %v4175 = vld [vmem:[#allocation7 + $0xe98] sm:$0xff]
    %v4176 = vld [vmem:[#allocation7 + $0xea0] sm:$0xff]
    %v4177 = vld [vmem:[#allocation7 + $0xea8] sm:$0xff]
    %v4178 = vld [vmem:[#allocation7 + $0xeb0] sm:$0xff]
    %v4179 = vld [vmem:[#allocation7 + $0xeb8] sm:$0xff]
    %v4180 = vld [vmem:[#allocation7 + $0xec0] sm:$0xff]
    %v4181 = vld [vmem:[#allocation7 + $0xec8] sm:$0xff]
    %v4182 = vld [vmem:[#allocation7 + $0xed0] sm:$0xff]
    %v4183 = vld [vmem:[#allocation7 + $0xed8] sm:$0xff]
    %v4184 = vld [vmem:[#allocation7 + $0xee0] sm:$0xff]
    %v4185 = vld [vmem:[#allocation7 + $0xee8] sm:$0xff]
    %v4186 = vld [vmem:[#allocation7 + $0xef0] sm:$0xff]
    %v4187 = vld [vmem:[#allocation7 + $0xef8] sm:$0xff]
    %v4188 = vld [vmem:[#allocation7 + $0xf00] sm:$0xff]
    %v4189 = vld [vmem:[#allocation7 + $0xf08] sm:$0xff]
    %v4190 = vld [vmem:[#allocation7 + $0xf10] sm:$0xff]
    %v4191 = vld [vmem:[#allocation7 + $0xf18] sm:$0xff]
    %v4192 = vld [vmem:[#allocation7 + $0xf20] sm:$0xff]
    %v4193 = vld [vmem:[#allocation7 + $0xf28] sm:$0xff]
    %v4194 = vld [vmem:[#allocation7 + $0xf30] sm:$0xff]
    %v4195 = vld [vmem:[#allocation7 + $0xf38] sm:$0xff]
    %v4196 = vld [vmem:[#allocation7 + $0xf40] sm:$0xff]
    %v4197 = vld [vmem:[#allocation7 + $0xf48] sm:$0xff]
    %v4198 = vld [vmem:[#allocation7 + $0xf50] sm:$0xff]
    %v4199 = vld [vmem:[#allocation7 + $0xf58] sm:$0xff]
    %v4200 = vld [vmem:[#allocation7 + $0xf60] sm:$0xff]
    %v4201 = vld [vmem:[#allocation7 + $0xf68] sm:$0xff]
    %v4202 = vld [vmem:[#allocation7 + $0xf70] sm:$0xff]
    %v4203 = vld [vmem:[#allocation7 + $0xf78] sm:$0xff]
    %v4204 = vld [vmem:[#allocation7 + $0xf80] sm:$0xff]
    %v4205 = vld [vmem:[#allocation7 + $0xf88] sm:$0xff]
    %v4206 = vld [vmem:[#allocation7 + $0xf90] sm:$0xff]
    %v4207 = vld [vmem:[#allocation7 + $0xf98] sm:$0xff]
    %v4208 = vld [vmem:[#allocation7 + $0xfa0] sm:$0xff]
    %v4209 = vld [vmem:[#allocation7 + $0xfa8] sm:$0xff]
    %v4210 = vld [vmem:[#allocation7 + $0xfb0] sm:$0xff]
    %v4211 = vld [vmem:[#allocation7 + $0xfb8] sm:$0xff]
    %v4212 = vld [vmem:[#allocation7 + $0xfc0] sm:$0xff]
    %v4213 = vld [vmem:[#allocation7 + $0xfc8] sm:$0xff]
    %v4214 = vld [vmem:[#allocation7 + $0xfd0] sm:$0xff]
    %v4215 = vld [vmem:[#allocation7 + $0xfd8] sm:$0xff]
    %v4216 = vld [vmem:[#allocation7 + $0xfe0] sm:$0xff]
    %v4217 = vld [vmem:[#allocation7 + $0xfe8] sm:$0xff]
    %v4218 = vld [vmem:[#allocation7 + $0xff0] sm:$0xff]
    %v4219 = vld [vmem:[#allocation7 + $0xff8] sm:$0xff]
    %v4220 = vld [vmem:[#allocation7 + $0x1000] sm:$0xff]
    %v4221 = vld [vmem:[#allocation7 + $0x1008] sm:$0xff]
    %v4222 = vld [vmem:[#allocation7 + $0x1010] sm:$0xff]
    %v4223 = vld [vmem:[#allocation7 + $0x1018] sm:$0xff]
    %v4224 = vld [vmem:[#allocation7 + $0x1020] sm:$0xff]
    %v4225 = vld [vmem:[#allocation7 + $0x1028] sm:$0xff]
    %v4226 = vld [vmem:[#allocation7 + $0x1030] sm:$0xff]
    %v4227 = vld [vmem:[#allocation7 + $0x1038] sm:$0xff]
    %v4228 = vld [vmem:[#allocation7 + $0x1040] sm:$0xff]
    %v4229 = vld [vmem:[#allocation7 + $0x1048] sm:$0xff]
    %v4230 = vld [vmem:[#allocation7 + $0x1050] sm:$0xff]
    %v4231 = vld [vmem:[#allocation7 + $0x1058] sm:$0xff]
    %v4232 = vld [vmem:[#allocation7 + $0x1060] sm:$0xff]
    %v4233 = vld [vmem:[#allocation7 + $0x1068] sm:$0xff]
    %v4234 = vld [vmem:[#allocation7 + $0x1070] sm:$0xff]
    %v4235 = vld [vmem:[#allocation7 + $0x1078] sm:$0xff]
    %v4236 = vld [vmem:[#allocation7 + $0x1080] sm:$0xff]
    %v4237 = vld [vmem:[#allocation7 + $0x1088] sm:$0xff]
    %v4238 = vld [vmem:[#allocation7 + $0x1090] sm:$0xff]
    %v4239 = vld [vmem:[#allocation7 + $0x1098] sm:$0xff]
    %v4240 = vld [vmem:[#allocation7 + $0x10a0] sm:$0xff]
    %v4241 = vld [vmem:[#allocation7 + $0x10a8] sm:$0xff]
    %v4242 = vld [vmem:[#allocation7 + $0x10b0] sm:$0xff]
    %v4243 = vld [vmem:[#allocation7 + $0x10b8] sm:$0xff]
    %v4244 = vld [vmem:[#allocation7 + $0x10c0] sm:$0xff]
    %v4245 = vld [vmem:[#allocation7 + $0x10c8] sm:$0xff]
    %v4246 = vld [vmem:[#allocation7 + $0x10d0] sm:$0xff]
    %v4247 = vld [vmem:[#allocation7 + $0x10d8] sm:$0xff]
    %v4248 = vld [vmem:[#allocation7 + $0x10e0] sm:$0xff]
    %v4249 = vld [vmem:[#allocation7 + $0x10e8] sm:$0xff]
    %v4250 = vld [vmem:[#allocation7 + $0x10f0] sm:$0xff]
    %v4251 = vld [vmem:[#allocation7 + $0x10f8] sm:$0xff]
    %v4252 = vld [vmem:[#allocation7 + $0x1100] sm:$0xff]
    %v4253 = vld [vmem:[#allocation7 + $0x1108] sm:$0xff]
    %v4254 = vld [vmem:[#allocation7 + $0x1110] sm:$0xff]
    %v4255 = vld [vmem:[#allocation7 + $0x1118] sm:$0xff]
    %v4256 = vld [vmem:[#allocation7 + $0x1120] sm:$0xff]
    %v4257 = vld [vmem:[#allocation7 + $0x1128] sm:$0xff]
    %v4258 = vld [vmem:[#allocation7 + $0x1130] sm:$0xff]
    %v4259 = vld [vmem:[#allocation7 + $0x1138] sm:$0xff]
    %v4260 = vld [vmem:[#allocation7 + $0x1140] sm:$0xff]
    %v4261 = vld [vmem:[#allocation7 + $0x1148] sm:$0xff]
    %v4262 = vld [vmem:[#allocation7 + $0x1150] sm:$0xff]
    %v4263 = vld [vmem:[#allocation7 + $0x1158] sm:$0xff]
    %v4264 = vld [vmem:[#allocation7 + $0x1160] sm:$0xff]
    %v4265 = vld [vmem:[#allocation7 + $0x1168] sm:$0xff]
    %v4266 = vld [vmem:[#allocation7 + $0x1170] sm:$0xff]
    %v4267 = vld [vmem:[#allocation7 + $0x1178] sm:$0xff]
    %v4268 = vld [vmem:[#allocation7 + $0x1180] sm:$0xff]
    %v4269 = vld [vmem:[#allocation7 + $0x1188] sm:$0xff]
    %v4270 = vld [vmem:[#allocation7 + $0x1190] sm:$0xff]
    %v4271 = vld [vmem:[#allocation7 + $0x1198] sm:$0xff]
    %v4272 = vld [vmem:[#allocation7 + $0x11a0] sm:$0xff]
    %v4273 = vld [vmem:[#allocation7 + $0x11a8] sm:$0xff]
    %v4274 = vld [vmem:[#allocation7 + $0x11b0] sm:$0xff]
    %v4275 = vld [vmem:[#allocation7 + $0x11b8] sm:$0xff]
    %v4276 = vld [vmem:[#allocation7 + $0x11c0] sm:$0xff]
    %v4277 = vld [vmem:[#allocation7 + $0x11c8] sm:$0xff]
    %v4278 = vld [vmem:[#allocation7 + $0x11d0] sm:$0xff]
    %v4279 = vld [vmem:[#allocation7 + $0x11d8] sm:$0xff]
    %v4280 = vld [vmem:[#allocation7 + $0x11e0] sm:$0xff]
    %v4281 = vld [vmem:[#allocation7 + $0x11e8] sm:$0xff]
    %v4282 = vld [vmem:[#allocation7 + $0x11f0] sm:$0xff]
    %v4283 = vld [vmem:[#allocation7 + $0x11f8] sm:$0xff]
    %v4284 = vld [vmem:[#allocation7 + $0x1200] sm:$0xff]
    %v4285 = vld [vmem:[#allocation7 + $0x1208] sm:$0xff]
    %v4286 = vld [vmem:[#allocation7 + $0x1210] sm:$0xff]
    %v4287 = vld [vmem:[#allocation7 + $0x1218] sm:$0xff]
    %v4288 = vld [vmem:[#allocation7 + $0x1220] sm:$0xff]
    %v4289 = vld [vmem:[#allocation7 + $0x1228] sm:$0xff]
    %v4290 = vld [vmem:[#allocation7 + $0x1230] sm:$0xff]
    %v4291 = vld [vmem:[#allocation7 + $0x1238] sm:$0xff]
    %v4292 = vld [vmem:[#allocation7 + $0x1240] sm:$0xff]
    %v4293 = vld [vmem:[#allocation7 + $0x1248] sm:$0xff]
    %v4294 = vld [vmem:[#allocation7 + $0x1250] sm:$0xff]
    %v4295 = vld [vmem:[#allocation7 + $0x1258] sm:$0xff]
    %v4296 = vld [vmem:[#allocation7 + $0x1260] sm:$0xff]
    %v4297 = vld [vmem:[#allocation7 + $0x1268] sm:$0xff]
    %v4298 = vld [vmem:[#allocation7 + $0x1270] sm:$0xff]
    %v4299 = vld [vmem:[#allocation7 + $0x1278] sm:$0xff]
    %v4300 = vld [vmem:[#allocation7 + $0x1280] sm:$0xff]
    %v4301 = vld [vmem:[#allocation7 + $0x1288] sm:$0xff]
    %v4302 = vld [vmem:[#allocation7 + $0x1290] sm:$0xff]
    %v4303 = vld [vmem:[#allocation7 + $0x1298] sm:$0xff]
    %v4304 = vld [vmem:[#allocation7 + $0x12a0] sm:$0xff]
    %v4305 = vld [vmem:[#allocation7 + $0x12a8] sm:$0xff]
    %v4306 = vld [vmem:[#allocation7 + $0x12b0] sm:$0xff]
    %v4307 = vld [vmem:[#allocation7 + $0x12b8] sm:$0xff]
    %v4308 = vld [vmem:[#allocation7 + $0x12c0] sm:$0xff]
    %v4309 = vld [vmem:[#allocation7 + $0x12c8] sm:$0xff]
    %v4310 = vld [vmem:[#allocation7 + $0x12d0] sm:$0xff]
    %v4311 = vld [vmem:[#allocation7 + $0x12d8] sm:$0xff]
    %v4312 = vld [vmem:[#allocation7 + $0x12e0] sm:$0xff]
    %v4313 = vld [vmem:[#allocation7 + $0x12e8] sm:$0xff]
    %v4314 = vld [vmem:[#allocation7 + $0x12f0] sm:$0xff]
    %v4315 = vld [vmem:[#allocation7 + $0x12f8] sm:$0xff]
    %v4316 = vld [vmem:[#allocation7 + $0x1300] sm:$0xff]
    %v4317 = vld [vmem:[#allocation7 + $0x1308] sm:$0xff]
    %v4318 = vld [vmem:[#allocation7 + $0x1310] sm:$0xff]
    %v4319 = vld [vmem:[#allocation7 + $0x1318] sm:$0xff]
    %v4320 = vld [vmem:[#allocation7 + $0x1320] sm:$0xff]
    %v4321 = vld [vmem:[#allocation7 + $0x1328] sm:$0xff]
    %v4322 = vld [vmem:[#allocation7 + $0x1330] sm:$0xff]
    %v4323 = vld [vmem:[#allocation7 + $0x1338] sm:$0xff]
    %v4324 = vld [vmem:[#allocation7 + $0x1340] sm:$0xff]
    %v4325 = vld [vmem:[#allocation7 + $0x1348] sm:$0xff]
    %v4326 = vld [vmem:[#allocation7 + $0x1350] sm:$0xff]
    %v4327 = vld [vmem:[#allocation7 + $0x1358] sm:$0xff]
    %v4328 = vld [vmem:[#allocation7 + $0x1360] sm:$0xff]
    %v4329 = vld [vmem:[#allocation7 + $0x1368] sm:$0xff]
    %v4330 = vld [vmem:[#allocation7 + $0x1370] sm:$0xff]
    %v4331 = vld [vmem:[#allocation7 + $0x1378] sm:$0xff]
    %v4332 = vld [vmem:[#allocation7 + $0x1380] sm:$0xff]
    %v4333 = vld [vmem:[#allocation7 + $0x1388] sm:$0xff]
    %v4334 = vld [vmem:[#allocation7 + $0x1390] sm:$0xff]
    %v4335 = vld [vmem:[#allocation7 + $0x1398] sm:$0xff]
    %v4336 = vld [vmem:[#allocation7 + $0x13a0] sm:$0xff]
    %v4337 = vld [vmem:[#allocation7 + $0x13a8] sm:$0xff]
    %v4338 = vld [vmem:[#allocation7 + $0x13b0] sm:$0xff]
    %v4339 = vld [vmem:[#allocation7 + $0x13b8] sm:$0xff]
    %v4340 = vld [vmem:[#allocation7 + $0x13c0] sm:$0xff]
    %v4341 = vld [vmem:[#allocation7 + $0x13c8] sm:$0xff]
    %v4342 = vld [vmem:[#allocation7 + $0x13d0] sm:$0xff]
    %v4343 = vld [vmem:[#allocation7 + $0x13d8] sm:$0xff]
    %v4344 = vld [vmem:[#allocation7 + $0x13e0] sm:$0xff]
    %v4345 = vld [vmem:[#allocation7 + $0x13e8] sm:$0xff]
    %v4346 = vld [vmem:[#allocation7 + $0x13f0] sm:$0xff]
    %v4347 = vld [vmem:[#allocation7 + $0x13f8] sm:$0xff]
    %v4348 = vld [vmem:[#allocation7 + $0x1400] sm:$0xff]
    %v4349 = vld [vmem:[#allocation7 + $0x1408] sm:$0xff]
    %v4350 = vld [vmem:[#allocation7 + $0x1410] sm:$0xff]
    %v4351 = vld [vmem:[#allocation7 + $0x1418] sm:$0xff]
    %v4352 = vld [vmem:[#allocation7 + $0x1420] sm:$0xff]
    %v4353 = vld [vmem:[#allocation7 + $0x1428] sm:$0xff]
    %v4354 = vld [vmem:[#allocation7 + $0x1430] sm:$0xff]
    %v4355 = vld [vmem:[#allocation7 + $0x1438] sm:$0xff]
    %v4356 = vld [vmem:[#allocation7 + $0x1440] sm:$0xff]
    %v4357 = vld [vmem:[#allocation7 + $0x1448] sm:$0xff]
    %v4358 = vld [vmem:[#allocation7 + $0x1450] sm:$0xff]
    %v4359 = vld [vmem:[#allocation7 + $0x1458] sm:$0xff]
    %v4360 = vld [vmem:[#allocation7 + $0x1460] sm:$0xff]
    %v4361 = vld [vmem:[#allocation7 + $0x1468] sm:$0xff]
    %v4362 = vld [vmem:[#allocation7 + $0x1470] sm:$0xff]
    %v4363 = vld [vmem:[#allocation7 + $0x1478] sm:$0xff]
    %v4364 = vld [vmem:[#allocation7 + $0x1480] sm:$0xff]
    %v4365 = vld [vmem:[#allocation7 + $0x1488] sm:$0xff]
    %v4366 = vld [vmem:[#allocation7 + $0x1490] sm:$0xff]
    %v4367 = vld [vmem:[#allocation7 + $0x1498] sm:$0xff]
    %v4368 = vld [vmem:[#allocation7 + $0x14a0] sm:$0xff]
    %v4369 = vld [vmem:[#allocation7 + $0x14a8] sm:$0xff]
    %v4370 = vld [vmem:[#allocation7 + $0x14b0] sm:$0xff]
    %v4371 = vld [vmem:[#allocation7 + $0x14b8] sm:$0xff]
    %v4372 = vld [vmem:[#allocation7 + $0x14c0] sm:$0xff]
    %v4373 = vld [vmem:[#allocation7 + $0x14c8] sm:$0xff]
    %v4374 = vld [vmem:[#allocation7 + $0x14d0] sm:$0xff]
    %v4375 = vld [vmem:[#allocation7 + $0x14d8] sm:$0xff]
    %v4376 = vld [vmem:[#allocation7 + $0x14e0] sm:$0xff]
    %v4377 = vld [vmem:[#allocation7 + $0x14e8] sm:$0xff]
    %v4378 = vld [vmem:[#allocation7 + $0x14f0] sm:$0xff]
    %v4379 = vld [vmem:[#allocation7 + $0x14f8] sm:$0xff]
    %v4380 = vld [vmem:[#allocation7 + $0x1500] sm:$0xff]
    %v4381 = vld [vmem:[#allocation7 + $0x1508] sm:$0xff]
    %v4382 = vld [vmem:[#allocation7 + $0x1510] sm:$0xff]
    %v4383 = vld [vmem:[#allocation7 + $0x1518] sm:$0xff]
    %v4384 = vld [vmem:[#allocation7 + $0x1520] sm:$0xff]
    %v4385 = vld [vmem:[#allocation7 + $0x1528] sm:$0xff]
    %v4386 = vld [vmem:[#allocation7 + $0x1530] sm:$0xff]
    %v4387 = vld [vmem:[#allocation7 + $0x1538] sm:$0xff]
    %v4388 = vld [vmem:[#allocation7 + $0x1540] sm:$0xff]
    %v4389 = vld [vmem:[#allocation7 + $0x1548] sm:$0xff]
    %v4390 = vld [vmem:[#allocation7 + $0x1550] sm:$0xff]
    %v4391 = vld [vmem:[#allocation7 + $0x1558] sm:$0xff]
    %v4392 = vld [vmem:[#allocation7 + $0x1560] sm:$0xff]
    %v4393 = vld [vmem:[#allocation7 + $0x1568] sm:$0xff]
    %v4394 = vld [vmem:[#allocation7 + $0x1570] sm:$0xff]
    %v4395 = vld [vmem:[#allocation7 + $0x1578] sm:$0xff]
    %v4396 = vld [vmem:[#allocation7 + $0x1580] sm:$0xff]
    %v4397 = vld [vmem:[#allocation7 + $0x1588] sm:$0xff]
    %v4398 = vld [vmem:[#allocation7 + $0x1590] sm:$0xff]
    %v4399 = vld [vmem:[#allocation7 + $0x1598] sm:$0xff]
    %v4400 = vld [vmem:[#allocation7 + $0x15a0] sm:$0xff]
    %v4401 = vld [vmem:[#allocation7 + $0x15a8] sm:$0xff]
    %v4402 = vld [vmem:[#allocation7 + $0x15b0] sm:$0xff]
    %v4403 = vld [vmem:[#allocation7 + $0x15b8] sm:$0xff]
    %v4404 = vld [vmem:[#allocation7 + $0x15c0] sm:$0xff]
    %v4405 = vld [vmem:[#allocation7 + $0x15c8] sm:$0xff]
    %v4406 = vld [vmem:[#allocation7 + $0x15d0] sm:$0xff]
    %v4407 = vld [vmem:[#allocation7 + $0x15d8] sm:$0xff]
    %v4408 = vld [vmem:[#allocation7 + $0x15e0] sm:$0xff]
    %v4409 = vld [vmem:[#allocation7 + $0x15e8] sm:$0xff]
    %v4410 = vld [vmem:[#allocation7 + $0x15f0] sm:$0xff]
    %v4411 = vld [vmem:[#allocation7 + $0x15f8] sm:$0xff]
    %v4412 = vld [vmem:[#allocation7 + $0x1600] sm:$0xff]
    %v4413 = vld [vmem:[#allocation7 + $0x1608] sm:$0xff]
    %v4414 = vld [vmem:[#allocation7 + $0x1610] sm:$0xff]
    %v4415 = vld [vmem:[#allocation7 + $0x1618] sm:$0xff]
    %v4416 = vld [vmem:[#allocation7 + $0x1620] sm:$0xff]
    %v4417 = vld [vmem:[#allocation7 + $0x1628] sm:$0xff]
    %v4418 = vld [vmem:[#allocation7 + $0x1630] sm:$0xff]
    %v4419 = vld [vmem:[#allocation7 + $0x1638] sm:$0xff]
    %v4420 = vld [vmem:[#allocation7 + $0x1640] sm:$0xff]
    %v4421 = vld [vmem:[#allocation7 + $0x1648] sm:$0xff]
    %v4422 = vld [vmem:[#allocation7 + $0x1650] sm:$0xff]
    %v4423 = vld [vmem:[#allocation7 + $0x1658] sm:$0xff]
    %v4424 = vld [vmem:[#allocation7 + $0x1660] sm:$0xff]
    %v4425 = vld [vmem:[#allocation7 + $0x1668] sm:$0xff]
    %v4426 = vld [vmem:[#allocation7 + $0x1670] sm:$0xff]
    %v4427 = vld [vmem:[#allocation7 + $0x1678] sm:$0xff]
    %v4428 = vld [vmem:[#allocation7 + $0x1680] sm:$0xff]
    %v4429 = vld [vmem:[#allocation7 + $0x1688] sm:$0xff]
    %v4430 = vld [vmem:[#allocation7 + $0x1690] sm:$0xff]
    %v4431 = vld [vmem:[#allocation7 + $0x1698] sm:$0xff]
    %v4432 = vld [vmem:[#allocation7 + $0x16a0] sm:$0xff]
    %v4433 = vld [vmem:[#allocation7 + $0x16a8] sm:$0xff]
    %v4434 = vld [vmem:[#allocation7 + $0x16b0] sm:$0xff]
    %v4435 = vld [vmem:[#allocation7 + $0x16b8] sm:$0xff]
    %v4436 = vld [vmem:[#allocation7 + $0x16c0] sm:$0xff]
    %v4437 = vld [vmem:[#allocation7 + $0x16c8] sm:$0xff]
    %v4438 = vld [vmem:[#allocation7 + $0x16d0] sm:$0xff]
    %v4439 = vld [vmem:[#allocation7 + $0x16d8] sm:$0xff]
    %v4440 = vld [vmem:[#allocation7 + $0x16e0] sm:$0xff]
    %v4441 = vld [vmem:[#allocation7 + $0x16e8] sm:$0xff]
    %v4442 = vld [vmem:[#allocation7 + $0x16f0] sm:$0xff]
    %v4443 = vld [vmem:[#allocation7 + $0x16f8] sm:$0xff]
    %v4444 = vld [vmem:[#allocation7 + $0x1700] sm:$0xff]
    %v4445 = vld [vmem:[#allocation7 + $0x1708] sm:$0xff]
    %v4446 = vld [vmem:[#allocation7 + $0x1710] sm:$0xff]
    %v4447 = vld [vmem:[#allocation7 + $0x1718] sm:$0xff]
    %v4448 = vld [vmem:[#allocation7 + $0x1720] sm:$0xff]
    %v4449 = vld [vmem:[#allocation7 + $0x1728] sm:$0xff]
    %v4450 = vld [vmem:[#allocation7 + $0x1730] sm:$0xff]
    %v4451 = vld [vmem:[#allocation7 + $0x1738] sm:$0xff]
    %v4452 = vld [vmem:[#allocation7 + $0x1740] sm:$0xff]
    %v4453 = vld [vmem:[#allocation7 + $0x1748] sm:$0xff]
    %v4454 = vld [vmem:[#allocation7 + $0x1750] sm:$0xff]
    %v4455 = vld [vmem:[#allocation7 + $0x1758] sm:$0xff]
    %v4456 = vld [vmem:[#allocation7 + $0x1760] sm:$0xff]
    %v4457 = vld [vmem:[#allocation7 + $0x1768] sm:$0xff]
    %v4458 = vld [vmem:[#allocation7 + $0x1770] sm:$0xff]
    %v4459 = vld [vmem:[#allocation7 + $0x1778] sm:$0xff]
    %v4460 = vld [vmem:[#allocation7 + $0x1780] sm:$0xff]
    %v4461 = vld [vmem:[#allocation7 + $0x1788] sm:$0xff]
    %v4462 = vld [vmem:[#allocation7 + $0x1790] sm:$0xff]
    %v4463 = vld [vmem:[#allocation7 + $0x1798] sm:$0xff]
    %v4464 = vld [vmem:[#allocation7 + $0x17a0] sm:$0xff]
    %v4465 = vld [vmem:[#allocation7 + $0x17a8] sm:$0xff]
    %v4466 = vld [vmem:[#allocation7 + $0x17b0] sm:$0xff]
    %v4467 = vld [vmem:[#allocation7 + $0x17b8] sm:$0xff]
    %v4468 = vld [vmem:[#allocation7 + $0x17c0] sm:$0xff]
    %v4469 = vld [vmem:[#allocation7 + $0x17c8] sm:$0xff]
    %v4470 = vld [vmem:[#allocation7 + $0x17d0] sm:$0xff]
    %v4471 = vld [vmem:[#allocation7 + $0x17d8] sm:$0xff]
    %v4472 = vld [vmem:[#allocation7 + $0x17e0] sm:$0xff]
    %v4473 = vld [vmem:[#allocation7 + $0x17e8] sm:$0xff]
    %v4474 = vld [vmem:[#allocation7 + $0x17f0] sm:$0xff]
    %v4475 = vld [vmem:[#allocation7 + $0x17f8] sm:$0xff]
    %v4476 = vld [vmem:[#allocation7 + $0x1800] sm:$0xff]
    %v4477 = vld [vmem:[#allocation7 + $0x1808] sm:$0xff]
    %v4478 = vld [vmem:[#allocation7 + $0x1810] sm:$0xff]
    %v4479 = vld [vmem:[#allocation7 + $0x1818] sm:$0xff]
    %v4480 = vld [vmem:[#allocation7 + $0x1820] sm:$0xff]
    %v4481 = vld [vmem:[#allocation7 + $0x1828] sm:$0xff]
    %v4482 = vld [vmem:[#allocation7 + $0x1830] sm:$0xff]
    %v4483 = vld [vmem:[#allocation7 + $0x1838] sm:$0xff]
    %v4484 = vld [vmem:[#allocation7 + $0x1840] sm:$0xff]
    %v4485 = vld [vmem:[#allocation7 + $0x1848] sm:$0xff]
    %v4486 = vld [vmem:[#allocation7 + $0x1850] sm:$0xff]
    %v4487 = vld [vmem:[#allocation7 + $0x1858] sm:$0xff]
    %v4488 = vld [vmem:[#allocation7 + $0x1860] sm:$0xff]
    %v4489 = vld [vmem:[#allocation7 + $0x1868] sm:$0xff]
    %v4490 = vld [vmem:[#allocation7 + $0x1870] sm:$0xff]
    %v4491 = vld [vmem:[#allocation7 + $0x1878] sm:$0xff]
    %v4492 = vld [vmem:[#allocation7 + $0x1880] sm:$0xff]
    %v4493 = vld [vmem:[#allocation7 + $0x1888] sm:$0xff]
    %v4494 = vld [vmem:[#allocation7 + $0x1890] sm:$0xff]
    %v4495 = vld [vmem:[#allocation7 + $0x1898] sm:$0xff]
    %v4496 = vld [vmem:[#allocation7 + $0x18a0] sm:$0xff]
    %v4497 = vld [vmem:[#allocation7 + $0x18a8] sm:$0xff]
    %v4498 = vld [vmem:[#allocation7 + $0x18b0] sm:$0xff]
    %v4499 = vld [vmem:[#allocation7 + $0x18b8] sm:$0xff]
    %v4500 = vld [vmem:[#allocation7 + $0x18c0] sm:$0xff]
    %v4501 = vld [vmem:[#allocation7 + $0x18c8] sm:$0xff]
    %v4502 = vld [vmem:[#allocation7 + $0x18d0] sm:$0xff]
    %v4503 = vld [vmem:[#allocation7 + $0x18d8] sm:$0xff]
    %v4504 = vld [vmem:[#allocation7 + $0x18e0] sm:$0xff]
    %v4505 = vld [vmem:[#allocation7 + $0x18e8] sm:$0xff]
    %v4506 = vld [vmem:[#allocation7 + $0x18f0] sm:$0xff]
    %v4507 = vld [vmem:[#allocation7 + $0x18f8] sm:$0xff]
    %v4508 = vld [vmem:[#allocation7 + $0x1900] sm:$0xff]
    %v4509 = vld [vmem:[#allocation7 + $0x1908] sm:$0xff]
    %v4510 = vld [vmem:[#allocation7 + $0x1910] sm:$0xff]
    %v4511 = vld [vmem:[#allocation7 + $0x1918] sm:$0xff]
    %v4512 = vld [vmem:[#allocation7 + $0x1920] sm:$0xff]
    %v4513 = vld [vmem:[#allocation7 + $0x1928] sm:$0xff]
    %v4514 = vld [vmem:[#allocation7 + $0x1930] sm:$0xff]
    %v4515 = vld [vmem:[#allocation7 + $0x1938] sm:$0xff]
    %v4516 = vld [vmem:[#allocation7 + $0x1940] sm:$0xff]
    %v4517 = vld [vmem:[#allocation7 + $0x1948] sm:$0xff]
    %v4518 = vld [vmem:[#allocation7 + $0x1950] sm:$0xff]
    %v4519 = vld [vmem:[#allocation7 + $0x1958] sm:$0xff]
    %v4520 = vld [vmem:[#allocation7 + $0x1960] sm:$0xff]
    %v4521 = vld [vmem:[#allocation7 + $0x1968] sm:$0xff]
    %v4522 = vld [vmem:[#allocation7 + $0x1970] sm:$0xff]
    %v4523 = vld [vmem:[#allocation7 + $0x1978] sm:$0xff]
    %v4524 = vld [vmem:[#allocation7 + $0x1980] sm:$0xff]
    %v4525 = vld [vmem:[#allocation7 + $0x1988] sm:$0xff]
    %v4526 = vld [vmem:[#allocation7 + $0x1990] sm:$0xff]
    %v4527 = vld [vmem:[#allocation7 + $0x1998] sm:$0xff]
    %v4528 = vld [vmem:[#allocation7 + $0x19a0] sm:$0xff]
    %v4529 = vld [vmem:[#allocation7 + $0x19a8] sm:$0xff]
    %v4530 = vld [vmem:[#allocation7 + $0x19b0] sm:$0xff]
    %v4531 = vld [vmem:[#allocation7 + $0x19b8] sm:$0xff]
    %v4532 = vld [vmem:[#allocation7 + $0x19c0] sm:$0xff]
    %v4533 = vld [vmem:[#allocation7 + $0x19c8] sm:$0xff]
    %v4534 = vld [vmem:[#allocation7 + $0x19d0] sm:$0xff]
    %v4535 = vld [vmem:[#allocation7 + $0x19d8] sm:$0xff]
    %v4536 = vld [vmem:[#allocation7 + $0x19e0] sm:$0xff]
    %v4537 = vld [vmem:[#allocation7 + $0x19e8] sm:$0xff]
    %v4538 = vld [vmem:[#allocation7 + $0x19f0] sm:$0xff]
    %v4539 = vld [vmem:[#allocation7 + $0x19f8] sm:$0xff]
    %v4540 = vld [vmem:[#allocation7 + $0x1a00] sm:$0xff]
    %v4541 = vld [vmem:[#allocation7 + $0x1a08] sm:$0xff]
    %v4542 = vld [vmem:[#allocation7 + $0x1a10] sm:$0xff]
    %v4543 = vld [vmem:[#allocation7 + $0x1a18] sm:$0xff]
    %v4544 = vld [vmem:[#allocation7 + $0x1a20] sm:$0xff]
    %v4545 = vld [vmem:[#allocation7 + $0x1a28] sm:$0xff]
    %v4546 = vld [vmem:[#allocation7 + $0x1a30] sm:$0xff]
    %v4547 = vld [vmem:[#allocation7 + $0x1a38] sm:$0xff]
    %v4548 = vld [vmem:[#allocation7 + $0x1a40] sm:$0xff]
    %v4549 = vld [vmem:[#allocation7 + $0x1a48] sm:$0xff]
    %v4550 = vld [vmem:[#allocation7 + $0x1a50] sm:$0xff]
    %v4551 = vld [vmem:[#allocation7 + $0x1a58] sm:$0xff]
    %v4552 = vld [vmem:[#allocation7 + $0x1a60] sm:$0xff]
    %v4553 = vld [vmem:[#allocation7 + $0x1a68] sm:$0xff]
    %v4554 = vld [vmem:[#allocation7 + $0x1a70] sm:$0xff]
    %v4555 = vld [vmem:[#allocation7 + $0x1a78] sm:$0xff]
    %v4556 = vld [vmem:[#allocation7 + $0x1a80] sm:$0xff]
    %v4557 = vld [vmem:[#allocation7 + $0x1a88] sm:$0xff]
    %v4558 = vld [vmem:[#allocation7 + $0x1a90] sm:$0xff]
    %v4559 = vld [vmem:[#allocation7 + $0x1a98] sm:$0xff]
    %v4560 = vld [vmem:[#allocation7 + $0x1aa0] sm:$0xff]
    %v4561 = vld [vmem:[#allocation7 + $0x1aa8] sm:$0xff]
    %v4562 = vld [vmem:[#allocation7 + $0x1ab0] sm:$0xff]
    %v4563 = vld [vmem:[#allocation7 + $0x1ab8] sm:$0xff]
    %v4564 = vld [vmem:[#allocation7 + $0x1ac0] sm:$0xff]
    %v4565 = vld [vmem:[#allocation7 + $0x1ac8] sm:$0xff]
    %v4566 = vld [vmem:[#allocation7 + $0x1ad0] sm:$0xff]
    %v4567 = vld [vmem:[#allocation7 + $0x1ad8] sm:$0xff]
    %v4568 = vld [vmem:[#allocation7 + $0x1ae0] sm:$0xff]
    %v4569 = vld [vmem:[#allocation7 + $0x1ae8] sm:$0xff]
    %v4570 = vld [vmem:[#allocation7 + $0x1af0] sm:$0xff]
    %v4571 = vld [vmem:[#allocation7 + $0x1af8] sm:$0xff]
    %v4572 = vld [vmem:[#allocation7 + $0x1b00] sm:$0xff]
    %v4573 = vld [vmem:[#allocation7 + $0x1b08] sm:$0xff]
    %v4574 = vld [vmem:[#allocation7 + $0x1b10] sm:$0xff]
    %v4575 = vld [vmem:[#allocation7 + $0x1b18] sm:$0xff]
    %v4576 = vld [vmem:[#allocation7 + $0x1b20] sm:$0xff]
    %v4577 = vld [vmem:[#allocation7 + $0x1b28] sm:$0xff]
    %v4578 = vld [vmem:[#allocation7 + $0x1b30] sm:$0xff]
    %v4579 = vld [vmem:[#allocation7 + $0x1b38] sm:$0xff]
    %v4580 = vld [vmem:[#allocation7 + $0x1b40] sm:$0xff]
    %v4581 = vld [vmem:[#allocation7 + $0x1b48] sm:$0xff]
    %v4582 = vld [vmem:[#allocation7 + $0x1b50] sm:$0xff]
    %v4583 = vld [vmem:[#allocation7 + $0x1b58] sm:$0xff]
    %v4584 = vld [vmem:[#allocation7 + $0x1b60] sm:$0xff]
    %v4585 = vld [vmem:[#allocation7 + $0x1b68] sm:$0xff]
    %v4586 = vld [vmem:[#allocation7 + $0x1b70] sm:$0xff]
    %v4587 = vld [vmem:[#allocation7 + $0x1b78] sm:$0xff]
    %v4588 = vld [vmem:[#allocation7 + $0x1b80] sm:$0xff]
    %v4589 = vld [vmem:[#allocation7 + $0x1b88] sm:$0xff]
    %v4590 = vld [vmem:[#allocation7 + $0x1b90] sm:$0xff]
    %v4591 = vld [vmem:[#allocation7 + $0x1b98] sm:$0xff]
    %v4592 = vld [vmem:[#allocation7 + $0x1ba0] sm:$0xff]
    %v4593 = vld [vmem:[#allocation7 + $0x1ba8] sm:$0xff]
    %v4594 = vld [vmem:[#allocation7 + $0x1bb0] sm:$0xff]
    %v4595 = vld [vmem:[#allocation7 + $0x1bb8] sm:$0xff]
    %v4596 = vld [vmem:[#allocation7 + $0x1bc0] sm:$0xff]
    %v4597 = vld [vmem:[#allocation7 + $0x1bc8] sm:$0xff]
    %v4598 = vld [vmem:[#allocation7 + $0x1bd0] sm:$0xff]
    %v4599 = vld [vmem:[#allocation7 + $0x1bd8] sm:$0xff]
    %v4600 = vld [vmem:[#allocation7 + $0x1be0] sm:$0xff]
    %v4601 = vld [vmem:[#allocation7 + $0x1be8] sm:$0xff]
    %v4602 = vld [vmem:[#allocation7 + $0x1bf0] sm:$0xff]
    %v4603 = vld [vmem:[#allocation7 + $0x1bf8] sm:$0xff]
    %v4604 = vld [vmem:[#allocation7 + $0x1c00] sm:$0xff]
    %v4605 = vld [vmem:[#allocation7 + $0x1c08] sm:$0xff]
    %v4606 = vld [vmem:[#allocation7 + $0x1c10] sm:$0xff]
    %v4607 = vld [vmem:[#allocation7 + $0x1c18] sm:$0xff]
    %v4608 = vld [vmem:[#allocation7 + $0x1c20] sm:$0xff]
    %v4609 = vld [vmem:[#allocation7 + $0x1c28] sm:$0xff]
    %v4610 = vld [vmem:[#allocation7 + $0x1c30] sm:$0xff]
    %v4611 = vld [vmem:[#allocation7 + $0x1c38] sm:$0xff]
    %v4612 = vld [vmem:[#allocation7 + $0x1c40] sm:$0xff]
    %v4613 = vld [vmem:[#allocation7 + $0x1c48] sm:$0xff]
    %v4614 = vld [vmem:[#allocation7 + $0x1c50] sm:$0xff]
    %v4615 = vld [vmem:[#allocation7 + $0x1c58] sm:$0xff]
    %v4616 = vld [vmem:[#allocation7 + $0x1c60] sm:$0xff]
    %v4617 = vld [vmem:[#allocation7 + $0x1c68] sm:$0xff]
    %v4618 = vld [vmem:[#allocation7 + $0x1c70] sm:$0xff]
    %v4619 = vld [vmem:[#allocation7 + $0x1c78] sm:$0xff]
    %v4620 = vld [vmem:[#allocation7 + $0x1c80] sm:$0xff]
    %v4621 = vld [vmem:[#allocation7 + $0x1c88] sm:$0xff]
    %v4622 = vld [vmem:[#allocation7 + $0x1c90] sm:$0xff]
    %v4623 = vld [vmem:[#allocation7 + $0x1c98] sm:$0xff]
    %v4624 = vld [vmem:[#allocation7 + $0x1ca0] sm:$0xff]
    %v4625 = vld [vmem:[#allocation7 + $0x1ca8] sm:$0xff]
    %v4626 = vld [vmem:[#allocation7 + $0x1cb0] sm:$0xff]
    %v4627 = vld [vmem:[#allocation7 + $0x1cb8] sm:$0xff]
    %v4628 = vld [vmem:[#allocation7 + $0x1cc0] sm:$0xff]
    %v4629 = vld [vmem:[#allocation7 + $0x1cc8] sm:$0xff]
    %v4630 = vld [vmem:[#allocation7 + $0x1cd0] sm:$0xff]
    %v4631 = vld [vmem:[#allocation7 + $0x1cd8] sm:$0xff]
    %v4632 = vld [vmem:[#allocation7 + $0x1ce0] sm:$0xff]
    %v4633 = vld [vmem:[#allocation7 + $0x1ce8] sm:$0xff]
    %v4634 = vld [vmem:[#allocation7 + $0x1cf0] sm:$0xff]
    %v4635 = vld [vmem:[#allocation7 + $0x1cf8] sm:$0xff]
    %v4636 = vld [vmem:[#allocation7 + $0x1d00] sm:$0xff]
    %v4637 = vld [vmem:[#allocation7 + $0x1d08] sm:$0xff]
    %v4638 = vld [vmem:[#allocation7 + $0x1d10] sm:$0xff]
    %v4639 = vld [vmem:[#allocation7 + $0x1d18] sm:$0xff]
    %v4640 = vld [vmem:[#allocation7 + $0x1d20] sm:$0xff]
    %v4641 = vld [vmem:[#allocation7 + $0x1d28] sm:$0xff]
    %v4642 = vld [vmem:[#allocation7 + $0x1d30] sm:$0xff]
    %v4643 = vld [vmem:[#allocation7 + $0x1d38] sm:$0xff]
    %v4644 = vld [vmem:[#allocation7 + $0x1d40] sm:$0xff]
    %v4645 = vld [vmem:[#allocation7 + $0x1d48] sm:$0xff]
    %v4646 = vld [vmem:[#allocation7 + $0x1d50] sm:$0xff]
    %v4647 = vld [vmem:[#allocation7 + $0x1d58] sm:$0xff]
    %v4648 = vld [vmem:[#allocation7 + $0x1d60] sm:$0xff]
    %v4649 = vld [vmem:[#allocation7 + $0x1d68] sm:$0xff]
    %v4650 = vld [vmem:[#allocation7 + $0x1d70] sm:$0xff]
    %v4651 = vld [vmem:[#allocation7 + $0x1d78] sm:$0xff]
    %v4652 = vld [vmem:[#allocation7 + $0x1d80] sm:$0xff]
    %v4653 = vld [vmem:[#allocation7 + $0x1d88] sm:$0xff]
    %v4654 = vld [vmem:[#allocation7 + $0x1d90] sm:$0xff]
    %v4655 = vld [vmem:[#allocation7 + $0x1d98] sm:$0xff]
    %v4656 = vld [vmem:[#allocation7 + $0x1da0] sm:$0xff]
    %v4657 = vld [vmem:[#allocation7 + $0x1da8] sm:$0xff]
    %v4658 = vld [vmem:[#allocation7 + $0x1db0] sm:$0xff]
    %v4659 = vld [vmem:[#allocation7 + $0x1db8] sm:$0xff]
    %v4660 = vld [vmem:[#allocation7 + $0x1dc0] sm:$0xff]
    %v4661 = vld [vmem:[#allocation7 + $0x1dc8] sm:$0xff]
    %v4662 = vld [vmem:[#allocation7 + $0x1dd0] sm:$0xff]
    %v4663 = vld [vmem:[#allocation7 + $0x1dd8] sm:$0xff]
    %v4664 = vld [vmem:[#allocation7 + $0x1de0] sm:$0xff]
    %v4665 = vld [vmem:[#allocation7 + $0x1de8] sm:$0xff]
    %v4666 = vld [vmem:[#allocation7 + $0x1df0] sm:$0xff]
    %v4667 = vld [vmem:[#allocation7 + $0x1df8] sm:$0xff]
    %v4668 = vld [vmem:[#allocation7 + $0x1e00] sm:$0xff]
    %v4669 = vld [vmem:[#allocation7 + $0x1e08] sm:$0xff]
    %v4670 = vld [vmem:[#allocation7 + $0x1e10] sm:$0xff]
    %v4671 = vld [vmem:[#allocation7 + $0x1e18] sm:$0xff]
    %v4672 = vld [vmem:[#allocation7 + $0x1e20] sm:$0xff]
    %v4673 = vld [vmem:[#allocation7 + $0x1e28] sm:$0xff]
    %v4674 = vld [vmem:[#allocation7 + $0x1e30] sm:$0xff]
    %v4675 = vld [vmem:[#allocation7 + $0x1e38] sm:$0xff]
    %v4676 = vld [vmem:[#allocation7 + $0x1e40] sm:$0xff]
    %v4677 = vld [vmem:[#allocation7 + $0x1e48] sm:$0xff]
    %v4678 = vld [vmem:[#allocation7 + $0x1e50] sm:$0xff]
    %v4679 = vld [vmem:[#allocation7 + $0x1e58] sm:$0xff]
    %v4680 = vld [vmem:[#allocation7 + $0x1e60] sm:$0xff]
    %v4681 = vld [vmem:[#allocation7 + $0x1e68] sm:$0xff]
    %v4682 = vld [vmem:[#allocation7 + $0x1e70] sm:$0xff]
    %v4683 = vld [vmem:[#allocation7 + $0x1e78] sm:$0xff]
    %v4684 = vld [vmem:[#allocation7 + $0x1e80] sm:$0xff]
    %v4685 = vld [vmem:[#allocation7 + $0x1e88] sm:$0xff]
    %v4686 = vld [vmem:[#allocation7 + $0x1e90] sm:$0xff]
    %v4687 = vld [vmem:[#allocation7 + $0x1e98] sm:$0xff]
    %v4688 = vld [vmem:[#allocation7 + $0x1ea0] sm:$0xff]
    %v4689 = vld [vmem:[#allocation7 + $0x1ea8] sm:$0xff]
    %v4690 = vld [vmem:[#allocation7 + $0x1eb0] sm:$0xff]
    %v4691 = vld [vmem:[#allocation7 + $0x1eb8] sm:$0xff]
    %v4692 = vld [vmem:[#allocation7 + $0x1ec0] sm:$0xff]
    %v4693 = vld [vmem:[#allocation7 + $0x1ec8] sm:$0xff]
    %v4694 = vld [vmem:[#allocation7 + $0x1ed0] sm:$0xff]
    %v4695 = vld [vmem:[#allocation7 + $0x1ed8] sm:$0xff]
    %v4696 = vld [vmem:[#allocation7 + $0x1ee0] sm:$0xff]
    %v4697 = vld [vmem:[#allocation7 + $0x1ee8] sm:$0xff]
    %v4698 = vld [vmem:[#allocation7 + $0x1ef0] sm:$0xff]
    %v4699 = vld [vmem:[#allocation7 + $0x1ef8] sm:$0xff]
    %v4700 = vld [vmem:[#allocation7 + $0x1f00] sm:$0xff]
    %v4701 = vld [vmem:[#allocation7 + $0x1f08] sm:$0xff]
    %v4702 = vld [vmem:[#allocation7 + $0x1f10] sm:$0xff]
    %v4703 = vld [vmem:[#allocation7 + $0x1f18] sm:$0xff]
    %v4704 = vld [vmem:[#allocation7 + $0x1f20] sm:$0xff]
    %v4705 = vld [vmem:[#allocation7 + $0x1f28] sm:$0xff]
    %v4706 = vld [vmem:[#allocation7 + $0x1f30] sm:$0xff]
    %v4707 = vld [vmem:[#allocation7 + $0x1f38] sm:$0xff]
    %v4708 = vld [vmem:[#allocation7 + $0x1f40] sm:$0xff]
    %v4709 = vld [vmem:[#allocation7 + $0x1f48] sm:$0xff]
    %v4710 = vld [vmem:[#allocation7 + $0x1f50] sm:$0xff]
    %v4711 = vld [vmem:[#allocation7 + $0x1f58] sm:$0xff]
    %v4712 = vld [vmem:[#allocation7 + $0x1f60] sm:$0xff]
    %v4713 = vld [vmem:[#allocation7 + $0x1f68] sm:$0xff]
    %v4714 = vld [vmem:[#allocation7 + $0x1f70] sm:$0xff]
    %v4715 = vld [vmem:[#allocation7 + $0x1f78] sm:$0xff]
    %v4716 = vld [vmem:[#allocation7 + $0x1f80] sm:$0xff]
    %v4717 = vld [vmem:[#allocation7 + $0x1f88] sm:$0xff]
    %v4718 = vld [vmem:[#allocation7 + $0x1f90] sm:$0xff]
    %v4719 = vld [vmem:[#allocation7 + $0x1f98] sm:$0xff]
    %v4720 = vld [vmem:[#allocation7 + $0x1fa0] sm:$0xff]
    %v4721 = vld [vmem:[#allocation7 + $0x1fa8] sm:$0xff]
    %v4722 = vld [vmem:[#allocation7 + $0x1fb0] sm:$0xff]
    %v4723 = vld [vmem:[#allocation7 + $0x1fb8] sm:$0xff]
    %v4724 = vld [vmem:[#allocation7 + $0x1fc0] sm:$0xff]
    %v4725 = vld [vmem:[#allocation7 + $0x1fc8] sm:$0xff]
    %v4726 = vld [vmem:[#allocation7 + $0x1fd0] sm:$0xff]
    %v4727 = vld [vmem:[#allocation7 + $0x1fd8] sm:$0xff]
    %v4728 = vld [vmem:[#allocation7 + $0x1fe0] sm:$0xff]
    %v4729 = vld [vmem:[#allocation7 + $0x1fe8] sm:$0xff]
    %v4730 = vld [vmem:[#allocation7 + $0x1ff0] sm:$0xff]
    %v4731 = vld [vmem:[#allocation7 + $0x1ff8] sm:$0xff]
    %v4732 = vld [vmem:[#allocation9] sm:$0xf]
    %v4734 = vperm.slane %v4732, 0
    %v4735 = vperm.slane %v4732, 1
    %v4736 = vperm.slane %v4732, 2
    %v4737 = vperm.slane %v4732, 3
    %v5766 = vunpack.c.l.b16 %v3708
    %v5767 = vunpack.c.h.b16 %v3708
    %v5768 = vunpack.c.l.b16 %v3709
    %v5769 = vunpack.c.h.b16 %v3709
    %v5770 = vunpack.c.l.b16 %v3710
    %v5771 = vunpack.c.h.b16 %v3710
    %v5772 = vunpack.c.l.b16 %v3711
    %v5773 = vunpack.c.h.b16 %v3711
    %v5774 = vunpack.c.l.b16 %v3712
    %v5775 = vunpack.c.h.b16 %v3712
    %v5776 = vunpack.c.l.b16 %v3713
    %v5777 = vunpack.c.h.b16 %v3713
    %v5778 = vunpack.c.l.b16 %v3714
    %v5779 = vunpack.c.h.b16 %v3714
    %v5780 = vunpack.c.l.b16 %v3715
    %v5781 = vunpack.c.h.b16 %v3715
    %v5782 = vunpack.c.l.b16 %v3716
    %v5783 = vunpack.c.h.b16 %v3716
    %v5784 = vunpack.c.l.b16 %v3717
    %v5785 = vunpack.c.h.b16 %v3717
    %v5786 = vunpack.c.l.b16 %v3718
    %v5787 = vunpack.c.h.b16 %v3718
    %v5788 = vunpack.c.l.b16 %v3719
    %v5789 = vunpack.c.h.b16 %v3719
    %v5790 = vunpack.c.l.b16 %v3720
    %v5791 = vunpack.c.h.b16 %v3720
    %v5792 = vunpack.c.l.b16 %v3721
    %v5793 = vunpack.c.h.b16 %v3721
    %v5794 = vunpack.c.l.b16 %v3722
    %v5795 = vunpack.c.h.b16 %v3722
    %v5796 = vunpack.c.l.b16 %v3723
    %v5797 = vunpack.c.h.b16 %v3723
    %v5798 = vunpack.c.l.b16 %v3724
    %v5799 = vunpack.c.h.b16 %v3724
    %v5800 = vunpack.c.l.b16 %v3725
    %v5801 = vunpack.c.h.b16 %v3725
    %v5802 = vunpack.c.l.b16 %v3726
    %v5803 = vunpack.c.h.b16 %v3726
    %v5804 = vunpack.c.l.b16 %v3727
    %v5805 = vunpack.c.h.b16 %v3727
    %v5806 = vunpack.c.l.b16 %v3728
    %v5807 = vunpack.c.h.b16 %v3728
    %v5808 = vunpack.c.l.b16 %v3729
    %v5809 = vunpack.c.h.b16 %v3729
    %v5810 = vunpack.c.l.b16 %v3730
    %v5811 = vunpack.c.h.b16 %v3730
    %v5812 = vunpack.c.l.b16 %v3731
    %v5813 = vunpack.c.h.b16 %v3731
    %v5814 = vunpack.c.l.b16 %v3732
    %v5815 = vunpack.c.h.b16 %v3732
    %v5816 = vunpack.c.l.b16 %v3733
    %v5817 = vunpack.c.h.b16 %v3733
    %v5818 = vunpack.c.l.b16 %v3734
    %v5819 = vunpack.c.h.b16 %v3734
    %v5820 = vunpack.c.l.b16 %v3735
    %v5821 = vunpack.c.h.b16 %v3735
    %v5822 = vunpack.c.l.b16 %v3736
    %v5823 = vunpack.c.h.b16 %v3736
    %v5824 = vunpack.c.l.b16 %v3737
    %v5825 = vunpack.c.h.b16 %v3737
    %v5826 = vunpack.c.l.b16 %v3738
    %v5827 = vunpack.c.h.b16 %v3738
    %v5828 = vunpack.c.l.b16 %v3739
    %v5829 = vunpack.c.h.b16 %v3739
    %v5830 = vunpack.c.l.b16 %v3740
    %v5831 = vunpack.c.h.b16 %v3740
    %v5832 = vunpack.c.l.b16 %v3741
    %v5833 = vunpack.c.h.b16 %v3741
    %v5834 = vunpack.c.l.b16 %v3742
    %v5835 = vunpack.c.h.b16 %v3742
    %v5836 = vunpack.c.l.b16 %v3743
    %v5837 = vunpack.c.h.b16 %v3743
    %v5838 = vunpack.c.l.b16 %v3744
    %v5839 = vunpack.c.h.b16 %v3744
    %v5840 = vunpack.c.l.b16 %v3745
    %v5841 = vunpack.c.h.b16 %v3745
    %v5842 = vunpack.c.l.b16 %v3746
    %v5843 = vunpack.c.h.b16 %v3746
    %v5844 = vunpack.c.l.b16 %v3747
    %v5845 = vunpack.c.h.b16 %v3747
    %v5846 = vunpack.c.l.b16 %v3748
    %v5847 = vunpack.c.h.b16 %v3748
    %v5848 = vunpack.c.l.b16 %v3749
    %v5849 = vunpack.c.h.b16 %v3749
    %v5850 = vunpack.c.l.b16 %v3750
    %v5851 = vunpack.c.h.b16 %v3750
    %v5852 = vunpack.c.l.b16 %v3751
    %v5853 = vunpack.c.h.b16 %v3751
    %v5854 = vunpack.c.l.b16 %v3752
    %v5855 = vunpack.c.h.b16 %v3752
    %v5856 = vunpack.c.l.b16 %v3753
    %v5857 = vunpack.c.h.b16 %v3753
    %v5858 = vunpack.c.l.b16 %v3754
    %v5859 = vunpack.c.h.b16 %v3754
    %v5860 = vunpack.c.l.b16 %v3755
    %v5861 = vunpack.c.h.b16 %v3755
    %v5862 = vunpack.c.l.b16 %v3756
    %v5863 = vunpack.c.h.b16 %v3756
    %v5864 = vunpack.c.l.b16 %v3757
    %v5865 = vunpack.c.h.b16 %v3757
    %v5866 = vunpack.c.l.b16 %v3758
    %v5867 = vunpack.c.h.b16 %v3758
    %v5868 = vunpack.c.l.b16 %v3759
    %v5869 = vunpack.c.h.b16 %v3759
    %v5870 = vunpack.c.l.b16 %v3760
    %v5871 = vunpack.c.h.b16 %v3760
    %v5872 = vunpack.c.l.b16 %v3761
    %v5873 = vunpack.c.h.b16 %v3761
    %v5874 = vunpack.c.l.b16 %v3762
    %v5875 = vunpack.c.h.b16 %v3762
    %v5876 = vunpack.c.l.b16 %v3763
    %v5877 = vunpack.c.h.b16 %v3763
    %v5878 = vunpack.c.l.b16 %v3764
    %v5879 = vunpack.c.h.b16 %v3764
    %v5880 = vunpack.c.l.b16 %v3765
    %v5881 = vunpack.c.h.b16 %v3765
    %v5882 = vunpack.c.l.b16 %v3766
    %v5883 = vunpack.c.h.b16 %v3766
    %v5884 = vunpack.c.l.b16 %v3767
    %v5885 = vunpack.c.h.b16 %v3767
    %v5886 = vunpack.c.l.b16 %v3768
    %v5887 = vunpack.c.h.b16 %v3768
    %v5888 = vunpack.c.l.b16 %v3769
    %v5889 = vunpack.c.h.b16 %v3769
    %v5890 = vunpack.c.l.b16 %v3770
    %v5891 = vunpack.c.h.b16 %v3770
    %v5892 = vunpack.c.l.b16 %v3771
    %v5893 = vunpack.c.h.b16 %v3771
    %v5894 = vunpack.c.l.b16 %v3772
    %v5895 = vunpack.c.h.b16 %v3772
    %v5896 = vunpack.c.l.b16 %v3773
    %v5897 = vunpack.c.h.b16 %v3773
    %v5898 = vunpack.c.l.b16 %v3774
    %v5899 = vunpack.c.h.b16 %v3774
    %v5900 = vunpack.c.l.b16 %v3775
    %v5901 = vunpack.c.h.b16 %v3775
    %v5902 = vunpack.c.l.b16 %v3776
    %v5903 = vunpack.c.h.b16 %v3776
    %v5904 = vunpack.c.l.b16 %v3777
    %v5905 = vunpack.c.h.b16 %v3777
    %v5906 = vunpack.c.l.b16 %v3778
    %v5907 = vunpack.c.h.b16 %v3778
    %v5908 = vunpack.c.l.b16 %v3779
    %v5909 = vunpack.c.h.b16 %v3779
    %v5910 = vunpack.c.l.b16 %v3780
    %v5911 = vunpack.c.h.b16 %v3780
    %v5912 = vunpack.c.l.b16 %v3781
    %v5913 = vunpack.c.h.b16 %v3781
    %v5914 = vunpack.c.l.b16 %v3782
    %v5915 = vunpack.c.h.b16 %v3782
    %v5916 = vunpack.c.l.b16 %v3783
    %v5917 = vunpack.c.h.b16 %v3783
    %v5918 = vunpack.c.l.b16 %v3784
    %v5919 = vunpack.c.h.b16 %v3784
    %v5920 = vunpack.c.l.b16 %v3785
    %v5921 = vunpack.c.h.b16 %v3785
    %v5922 = vunpack.c.l.b16 %v3786
    %v5923 = vunpack.c.h.b16 %v3786
    %v5924 = vunpack.c.l.b16 %v3787
    %v5925 = vunpack.c.h.b16 %v3787
    %v5926 = vunpack.c.l.b16 %v3788
    %v5927 = vunpack.c.h.b16 %v3788
    %v5928 = vunpack.c.l.b16 %v3789
    %v5929 = vunpack.c.h.b16 %v3789
    %v5930 = vunpack.c.l.b16 %v3790
    %v5931 = vunpack.c.h.b16 %v3790
    %v5932 = vunpack.c.l.b16 %v3791
    %v5933 = vunpack.c.h.b16 %v3791
    %v5934 = vunpack.c.l.b16 %v3792
    %v5935 = vunpack.c.h.b16 %v3792
    %v5936 = vunpack.c.l.b16 %v3793
    %v5937 = vunpack.c.h.b16 %v3793
    %v5938 = vunpack.c.l.b16 %v3794
    %v5939 = vunpack.c.h.b16 %v3794
    %v5940 = vunpack.c.l.b16 %v3795
    %v5941 = vunpack.c.h.b16 %v3795
    %v5942 = vunpack.c.l.b16 %v3796
    %v5943 = vunpack.c.h.b16 %v3796
    %v5944 = vunpack.c.l.b16 %v3797
    %v5945 = vunpack.c.h.b16 %v3797
    %v5946 = vunpack.c.l.b16 %v3798
    %v5947 = vunpack.c.h.b16 %v3798
    %v5948 = vunpack.c.l.b16 %v3799
    %v5949 = vunpack.c.h.b16 %v3799
    %v5950 = vunpack.c.l.b16 %v3800
    %v5951 = vunpack.c.h.b16 %v3800
    %v5952 = vunpack.c.l.b16 %v3801
    %v5953 = vunpack.c.h.b16 %v3801
    %v5954 = vunpack.c.l.b16 %v3802
    %v5955 = vunpack.c.h.b16 %v3802
    %v5956 = vunpack.c.l.b16 %v3803
    %v5957 = vunpack.c.h.b16 %v3803
    %v5958 = vunpack.c.l.b16 %v3804
    %v5959 = vunpack.c.h.b16 %v3804
    %v5960 = vunpack.c.l.b16 %v3805
    %v5961 = vunpack.c.h.b16 %v3805
    %v5962 = vunpack.c.l.b16 %v3806
    %v5963 = vunpack.c.h.b16 %v3806
    %v5964 = vunpack.c.l.b16 %v3807
    %v5965 = vunpack.c.h.b16 %v3807
    %v5966 = vunpack.c.l.b16 %v3808
    %v5967 = vunpack.c.h.b16 %v3808
    %v5968 = vunpack.c.l.b16 %v3809
    %v5969 = vunpack.c.h.b16 %v3809
    %v5970 = vunpack.c.l.b16 %v3810
    %v5971 = vunpack.c.h.b16 %v3810
    %v5972 = vunpack.c.l.b16 %v3811
    %v5973 = vunpack.c.h.b16 %v3811
    %v5974 = vunpack.c.l.b16 %v3812
    %v5975 = vunpack.c.h.b16 %v3812
    %v5976 = vunpack.c.l.b16 %v3813
    %v5977 = vunpack.c.h.b16 %v3813
    %v5978 = vunpack.c.l.b16 %v3814
    %v5979 = vunpack.c.h.b16 %v3814
    %v5980 = vunpack.c.l.b16 %v3815
    %v5981 = vunpack.c.h.b16 %v3815
    %v5982 = vunpack.c.l.b16 %v3816
    %v5983 = vunpack.c.h.b16 %v3816
    %v5984 = vunpack.c.l.b16 %v3817
    %v5985 = vunpack.c.h.b16 %v3817
    %v5986 = vunpack.c.l.b16 %v3818
    %v5987 = vunpack.c.h.b16 %v3818
    %v5988 = vunpack.c.l.b16 %v3819
    %v5989 = vunpack.c.h.b16 %v3819
    %v5990 = vunpack.c.l.b16 %v3820
    %v5991 = vunpack.c.h.b16 %v3820
    %v5992 = vunpack.c.l.b16 %v3821
    %v5993 = vunpack.c.h.b16 %v3821
    %v5994 = vunpack.c.l.b16 %v3822
    %v5995 = vunpack.c.h.b16 %v3822
    %v5996 = vunpack.c.l.b16 %v3823
    %v5997 = vunpack.c.h.b16 %v3823
    %v5998 = vunpack.c.l.b16 %v3824
    %v5999 = vunpack.c.h.b16 %v3824
    %v6000 = vunpack.c.l.b16 %v3825
    %v6001 = vunpack.c.h.b16 %v3825
    %v6002 = vunpack.c.l.b16 %v3826
    %v6003 = vunpack.c.h.b16 %v3826
    %v6004 = vunpack.c.l.b16 %v3827
    %v6005 = vunpack.c.h.b16 %v3827
    %v6006 = vunpack.c.l.b16 %v3828
    %v6007 = vunpack.c.h.b16 %v3828
    %v6008 = vunpack.c.l.b16 %v3829
    %v6009 = vunpack.c.h.b16 %v3829
    %v6010 = vunpack.c.l.b16 %v3830
    %v6011 = vunpack.c.h.b16 %v3830
    %v6012 = vunpack.c.l.b16 %v3831
    %v6013 = vunpack.c.h.b16 %v3831
    %v6014 = vunpack.c.l.b16 %v3832
    %v6015 = vunpack.c.h.b16 %v3832
    %v6016 = vunpack.c.l.b16 %v3833
    %v6017 = vunpack.c.h.b16 %v3833
    %v6018 = vunpack.c.l.b16 %v3834
    %v6019 = vunpack.c.h.b16 %v3834
    %v6020 = vunpack.c.l.b16 %v3835
    %v6021 = vunpack.c.h.b16 %v3835
    %v6022 = vunpack.c.l.b16 %v3836
    %v6023 = vunpack.c.h.b16 %v3836
    %v6024 = vunpack.c.l.b16 %v3837
    %v6025 = vunpack.c.h.b16 %v3837
    %v6026 = vunpack.c.l.b16 %v3838
    %v6027 = vunpack.c.h.b16 %v3838
    %v6028 = vunpack.c.l.b16 %v3839
    %v6029 = vunpack.c.h.b16 %v3839
    %v6030 = vunpack.c.l.b16 %v3840
    %v6031 = vunpack.c.h.b16 %v3840
    %v6032 = vunpack.c.l.b16 %v3841
    %v6033 = vunpack.c.h.b16 %v3841
    %v6034 = vunpack.c.l.b16 %v3842
    %v6035 = vunpack.c.h.b16 %v3842
    %v6036 = vunpack.c.l.b16 %v3843
    %v6037 = vunpack.c.h.b16 %v3843
    %v6038 = vunpack.c.l.b16 %v3844
    %v6039 = vunpack.c.h.b16 %v3844
    %v6040 = vunpack.c.l.b16 %v3845
    %v6041 = vunpack.c.h.b16 %v3845
    %v6042 = vunpack.c.l.b16 %v3846
    %v6043 = vunpack.c.h.b16 %v3846
    %v6044 = vunpack.c.l.b16 %v3847
    %v6045 = vunpack.c.h.b16 %v3847
    %v6046 = vunpack.c.l.b16 %v3848
    %v6047 = vunpack.c.h.b16 %v3848
    %v6048 = vunpack.c.l.b16 %v3849
    %v6049 = vunpack.c.h.b16 %v3849
    %v6050 = vunpack.c.l.b16 %v3850
    %v6051 = vunpack.c.h.b16 %v3850
    %v6052 = vunpack.c.l.b16 %v3851
    %v6053 = vunpack.c.h.b16 %v3851
    %v6054 = vunpack.c.l.b16 %v3852
    %v6055 = vunpack.c.h.b16 %v3852
    %v6056 = vunpack.c.l.b16 %v3853
    %v6057 = vunpack.c.h.b16 %v3853
    %v6058 = vunpack.c.l.b16 %v3854
    %v6059 = vunpack.c.h.b16 %v3854
    %v6060 = vunpack.c.l.b16 %v3855
    %v6061 = vunpack.c.h.b16 %v3855
    %v6062 = vunpack.c.l.b16 %v3856
    %v6063 = vunpack.c.h.b16 %v3856
    %v6064 = vunpack.c.l.b16 %v3857
    %v6065 = vunpack.c.h.b16 %v3857
    %v6066 = vunpack.c.l.b16 %v3858
    %v6067 = vunpack.c.h.b16 %v3858
    %v6068 = vunpack.c.l.b16 %v3859
    %v6069 = vunpack.c.h.b16 %v3859
    %v6070 = vunpack.c.l.b16 %v3860
    %v6071 = vunpack.c.h.b16 %v3860
    %v6072 = vunpack.c.l.b16 %v3861
    %v6073 = vunpack.c.h.b16 %v3861
    %v6074 = vunpack.c.l.b16 %v3862
    %v6075 = vunpack.c.h.b16 %v3862
    %v6076 = vunpack.c.l.b16 %v3863
    %v6077 = vunpack.c.h.b16 %v3863
    %v6078 = vunpack.c.l.b16 %v3864
    %v6079 = vunpack.c.h.b16 %v3864
    %v6080 = vunpack.c.l.b16 %v3865
    %v6081 = vunpack.c.h.b16 %v3865
    %v6082 = vunpack.c.l.b16 %v3866
    %v6083 = vunpack.c.h.b16 %v3866
    %v6084 = vunpack.c.l.b16 %v3867
    %v6085 = vunpack.c.h.b16 %v3867
    %v6086 = vunpack.c.l.b16 %v3868
    %v6087 = vunpack.c.h.b16 %v3868
    %v6088 = vunpack.c.l.b16 %v3869
    %v6089 = vunpack.c.h.b16 %v3869
    %v6090 = vunpack.c.l.b16 %v3870
    %v6091 = vunpack.c.h.b16 %v3870
    %v6092 = vunpack.c.l.b16 %v3871
    %v6093 = vunpack.c.h.b16 %v3871
    %v6094 = vunpack.c.l.b16 %v3872
    %v6095 = vunpack.c.h.b16 %v3872
    %v6096 = vunpack.c.l.b16 %v3873
    %v6097 = vunpack.c.h.b16 %v3873
    %v6098 = vunpack.c.l.b16 %v3874
    %v6099 = vunpack.c.h.b16 %v3874
    %v6100 = vunpack.c.l.b16 %v3875
    %v6101 = vunpack.c.h.b16 %v3875
    %v6102 = vunpack.c.l.b16 %v3876
    %v6103 = vunpack.c.h.b16 %v3876
    %v6104 = vunpack.c.l.b16 %v3877
    %v6105 = vunpack.c.h.b16 %v3877
    %v6106 = vunpack.c.l.b16 %v3878
    %v6107 = vunpack.c.h.b16 %v3878
    %v6108 = vunpack.c.l.b16 %v3879
    %v6109 = vunpack.c.h.b16 %v3879
    %v6110 = vunpack.c.l.b16 %v3880
    %v6111 = vunpack.c.h.b16 %v3880
    %v6112 = vunpack.c.l.b16 %v3881
    %v6113 = vunpack.c.h.b16 %v3881
    %v6114 = vunpack.c.l.b16 %v3882
    %v6115 = vunpack.c.h.b16 %v3882
    %v6116 = vunpack.c.l.b16 %v3883
    %v6117 = vunpack.c.h.b16 %v3883
    %v6118 = vunpack.c.l.b16 %v3884
    %v6119 = vunpack.c.h.b16 %v3884
    %v6120 = vunpack.c.l.b16 %v3885
    %v6121 = vunpack.c.h.b16 %v3885
    %v6122 = vunpack.c.l.b16 %v3886
    %v6123 = vunpack.c.h.b16 %v3886
    %v6124 = vunpack.c.l.b16 %v3887
    %v6125 = vunpack.c.h.b16 %v3887
    %v6126 = vunpack.c.l.b16 %v3888
    %v6127 = vunpack.c.h.b16 %v3888
    %v6128 = vunpack.c.l.b16 %v3889
    %v6129 = vunpack.c.h.b16 %v3889
    %v6130 = vunpack.c.l.b16 %v3890
    %v6131 = vunpack.c.h.b16 %v3890
    %v6132 = vunpack.c.l.b16 %v3891
    %v6133 = vunpack.c.h.b16 %v3891
    %v6134 = vunpack.c.l.b16 %v3892
    %v6135 = vunpack.c.h.b16 %v3892
    %v6136 = vunpack.c.l.b16 %v3893
    %v6137 = vunpack.c.h.b16 %v3893
    %v6138 = vunpack.c.l.b16 %v3894
    %v6139 = vunpack.c.h.b16 %v3894
    %v6140 = vunpack.c.l.b16 %v3895
    %v6141 = vunpack.c.h.b16 %v3895
    %v6142 = vunpack.c.l.b16 %v3896
    %v6143 = vunpack.c.h.b16 %v3896
    %v6144 = vunpack.c.l.b16 %v3897
    %v6145 = vunpack.c.h.b16 %v3897
    %v6146 = vunpack.c.l.b16 %v3898
    %v6147 = vunpack.c.h.b16 %v3898
    %v6148 = vunpack.c.l.b16 %v3899
    %v6149 = vunpack.c.h.b16 %v3899
    %v6150 = vunpack.c.l.b16 %v3900
    %v6151 = vunpack.c.h.b16 %v3900
    %v6152 = vunpack.c.l.b16 %v3901
    %v6153 = vunpack.c.h.b16 %v3901
    %v6154 = vunpack.c.l.b16 %v3902
    %v6155 = vunpack.c.h.b16 %v3902
    %v6156 = vunpack.c.l.b16 %v3903
    %v6157 = vunpack.c.h.b16 %v3903
    %v6158 = vunpack.c.l.b16 %v3904
    %v6159 = vunpack.c.h.b16 %v3904
    %v6160 = vunpack.c.l.b16 %v3905
    %v6161 = vunpack.c.h.b16 %v3905
    %v6162 = vunpack.c.l.b16 %v3906
    %v6163 = vunpack.c.h.b16 %v3906
    %v6164 = vunpack.c.l.b16 %v3907
    %v6165 = vunpack.c.h.b16 %v3907
    %v6166 = vunpack.c.l.b16 %v3908
    %v6167 = vunpack.c.h.b16 %v3908
    %v6168 = vunpack.c.l.b16 %v3909
    %v6169 = vunpack.c.h.b16 %v3909
    %v6170 = vunpack.c.l.b16 %v3910
    %v6171 = vunpack.c.h.b16 %v3910
    %v6172 = vunpack.c.l.b16 %v3911
    %v6173 = vunpack.c.h.b16 %v3911
    %v6174 = vunpack.c.l.b16 %v3912
    %v6175 = vunpack.c.h.b16 %v3912
    %v6176 = vunpack.c.l.b16 %v3913
    %v6177 = vunpack.c.h.b16 %v3913
    %v6178 = vunpack.c.l.b16 %v3914
    %v6179 = vunpack.c.h.b16 %v3914
    %v6180 = vunpack.c.l.b16 %v3915
    %v6181 = vunpack.c.h.b16 %v3915
    %v6182 = vunpack.c.l.b16 %v3916
    %v6183 = vunpack.c.h.b16 %v3916
    %v6184 = vunpack.c.l.b16 %v3917
    %v6185 = vunpack.c.h.b16 %v3917
    %v6186 = vunpack.c.l.b16 %v3918
    %v6187 = vunpack.c.h.b16 %v3918
    %v6188 = vunpack.c.l.b16 %v3919
    %v6189 = vunpack.c.h.b16 %v3919
    %v6190 = vunpack.c.l.b16 %v3920
    %v6191 = vunpack.c.h.b16 %v3920
    %v6192 = vunpack.c.l.b16 %v3921
    %v6193 = vunpack.c.h.b16 %v3921
    %v6194 = vunpack.c.l.b16 %v3922
    %v6195 = vunpack.c.h.b16 %v3922
    %v6196 = vunpack.c.l.b16 %v3923
    %v6197 = vunpack.c.h.b16 %v3923
    %v6198 = vunpack.c.l.b16 %v3924
    %v6199 = vunpack.c.h.b16 %v3924
    %v6200 = vunpack.c.l.b16 %v3925
    %v6201 = vunpack.c.h.b16 %v3925
    %v6202 = vunpack.c.l.b16 %v3926
    %v6203 = vunpack.c.h.b16 %v3926
    %v6204 = vunpack.c.l.b16 %v3927
    %v6205 = vunpack.c.h.b16 %v3927
    %v6206 = vunpack.c.l.b16 %v3928
    %v6207 = vunpack.c.h.b16 %v3928
    %v6208 = vunpack.c.l.b16 %v3929
    %v6209 = vunpack.c.h.b16 %v3929
    %v6210 = vunpack.c.l.b16 %v3930
    %v6211 = vunpack.c.h.b16 %v3930
    %v6212 = vunpack.c.l.b16 %v3931
    %v6213 = vunpack.c.h.b16 %v3931
    %v6214 = vunpack.c.l.b16 %v3932
    %v6215 = vunpack.c.h.b16 %v3932
    %v6216 = vunpack.c.l.b16 %v3933
    %v6217 = vunpack.c.h.b16 %v3933
    %v6218 = vunpack.c.l.b16 %v3934
    %v6219 = vunpack.c.h.b16 %v3934
    %v6220 = vunpack.c.l.b16 %v3935
    %v6221 = vunpack.c.h.b16 %v3935
    %v6222 = vunpack.c.l.b16 %v3936
    %v6223 = vunpack.c.h.b16 %v3936
    %v6224 = vunpack.c.l.b16 %v3937
    %v6225 = vunpack.c.h.b16 %v3937
    %v6226 = vunpack.c.l.b16 %v3938
    %v6227 = vunpack.c.h.b16 %v3938
    %v6228 = vunpack.c.l.b16 %v3939
    %v6229 = vunpack.c.h.b16 %v3939
    %v6230 = vunpack.c.l.b16 %v3940
    %v6231 = vunpack.c.h.b16 %v3940
    %v6232 = vunpack.c.l.b16 %v3941
    %v6233 = vunpack.c.h.b16 %v3941
    %v6234 = vunpack.c.l.b16 %v3942
    %v6235 = vunpack.c.h.b16 %v3942
    %v6236 = vunpack.c.l.b16 %v3943
    %v6237 = vunpack.c.h.b16 %v3943
    %v6238 = vunpack.c.l.b16 %v3944
    %v6239 = vunpack.c.h.b16 %v3944
    %v6240 = vunpack.c.l.b16 %v3945
    %v6241 = vunpack.c.h.b16 %v3945
    %v6242 = vunpack.c.l.b16 %v3946
    %v6243 = vunpack.c.h.b16 %v3946
    %v6244 = vunpack.c.l.b16 %v3947
    %v6245 = vunpack.c.h.b16 %v3947
    %v6246 = vunpack.c.l.b16 %v3948
    %v6247 = vunpack.c.h.b16 %v3948
    %v6248 = vunpack.c.l.b16 %v3949
    %v6249 = vunpack.c.h.b16 %v3949
    %v6250 = vunpack.c.l.b16 %v3950
    %v6251 = vunpack.c.h.b16 %v3950
    %v6252 = vunpack.c.l.b16 %v3951
    %v6253 = vunpack.c.h.b16 %v3951
    %v6254 = vunpack.c.l.b16 %v3952
    %v6255 = vunpack.c.h.b16 %v3952
    %v6256 = vunpack.c.l.b16 %v3953
    %v6257 = vunpack.c.h.b16 %v3953
    %v6258 = vunpack.c.l.b16 %v3954
    %v6259 = vunpack.c.h.b16 %v3954
    %v6260 = vunpack.c.l.b16 %v3955
    %v6261 = vunpack.c.h.b16 %v3955
    %v6262 = vunpack.c.l.b16 %v3956
    %v6263 = vunpack.c.h.b16 %v3956
    %v6264 = vunpack.c.l.b16 %v3957
    %v6265 = vunpack.c.h.b16 %v3957
    %v6266 = vunpack.c.l.b16 %v3958
    %v6267 = vunpack.c.h.b16 %v3958
    %v6268 = vunpack.c.l.b16 %v3959
    %v6269 = vunpack.c.h.b16 %v3959
    %v6270 = vunpack.c.l.b16 %v3960
    %v6271 = vunpack.c.h.b16 %v3960
    %v6272 = vunpack.c.l.b16 %v3961
    %v6273 = vunpack.c.h.b16 %v3961
    %v6274 = vunpack.c.l.b16 %v3962
    %v6275 = vunpack.c.h.b16 %v3962
    %v6276 = vunpack.c.l.b16 %v3963
    %v6277 = vunpack.c.h.b16 %v3963
    %v6278 = vunpack.c.l.b16 %v3964
    %v6279 = vunpack.c.h.b16 %v3964
    %v6280 = vunpack.c.l.b16 %v3965
    %v6281 = vunpack.c.h.b16 %v3965
    %v6282 = vunpack.c.l.b16 %v3966
    %v6283 = vunpack.c.h.b16 %v3966
    %v6284 = vunpack.c.l.b16 %v3967
    %v6285 = vunpack.c.h.b16 %v3967
    %v6286 = vunpack.c.l.b16 %v3968
    %v6287 = vunpack.c.h.b16 %v3968
    %v6288 = vunpack.c.l.b16 %v3969
    %v6289 = vunpack.c.h.b16 %v3969
    %v6290 = vunpack.c.l.b16 %v3970
    %v6291 = vunpack.c.h.b16 %v3970
    %v6292 = vunpack.c.l.b16 %v3971
    %v6293 = vunpack.c.h.b16 %v3971
    %v6294 = vunpack.c.l.b16 %v3972
    %v6295 = vunpack.c.h.b16 %v3972
    %v6296 = vunpack.c.l.b16 %v3973
    %v6297 = vunpack.c.h.b16 %v3973
    %v6298 = vunpack.c.l.b16 %v3974
    %v6299 = vunpack.c.h.b16 %v3974
    %v6300 = vunpack.c.l.b16 %v3975
    %v6301 = vunpack.c.h.b16 %v3975
    %v6302 = vunpack.c.l.b16 %v3976
    %v6303 = vunpack.c.h.b16 %v3976
    %v6304 = vunpack.c.l.b16 %v3977
    %v6305 = vunpack.c.h.b16 %v3977
    %v6306 = vunpack.c.l.b16 %v3978
    %v6307 = vunpack.c.h.b16 %v3978
    %v6308 = vunpack.c.l.b16 %v3979
    %v6309 = vunpack.c.h.b16 %v3979
    %v6310 = vunpack.c.l.b16 %v3980
    %v6311 = vunpack.c.h.b16 %v3980
    %v6312 = vunpack.c.l.b16 %v3981
    %v6313 = vunpack.c.h.b16 %v3981
    %v6314 = vunpack.c.l.b16 %v3982
    %v6315 = vunpack.c.h.b16 %v3982
    %v6316 = vunpack.c.l.b16 %v3983
    %v6317 = vunpack.c.h.b16 %v3983
    %v6318 = vunpack.c.l.b16 %v3984
    %v6319 = vunpack.c.h.b16 %v3984
    %v6320 = vunpack.c.l.b16 %v3985
    %v6321 = vunpack.c.h.b16 %v3985
    %v6322 = vunpack.c.l.b16 %v3986
    %v6323 = vunpack.c.h.b16 %v3986
    %v6324 = vunpack.c.l.b16 %v3987
    %v6325 = vunpack.c.h.b16 %v3987
    %v6326 = vunpack.c.l.b16 %v3988
    %v6327 = vunpack.c.h.b16 %v3988
    %v6328 = vunpack.c.l.b16 %v3989
    %v6329 = vunpack.c.h.b16 %v3989
    %v6330 = vunpack.c.l.b16 %v3990
    %v6331 = vunpack.c.h.b16 %v3990
    %v6332 = vunpack.c.l.b16 %v3991
    %v6333 = vunpack.c.h.b16 %v3991
    %v6334 = vunpack.c.l.b16 %v3992
    %v6335 = vunpack.c.h.b16 %v3992
    %v6336 = vunpack.c.l.b16 %v3993
    %v6337 = vunpack.c.h.b16 %v3993
    %v6338 = vunpack.c.l.b16 %v3994
    %v6339 = vunpack.c.h.b16 %v3994
    %v6340 = vunpack.c.l.b16 %v3995
    %v6341 = vunpack.c.h.b16 %v3995
    %v6342 = vunpack.c.l.b16 %v3996
    %v6343 = vunpack.c.h.b16 %v3996
    %v6344 = vunpack.c.l.b16 %v3997
    %v6345 = vunpack.c.h.b16 %v3997
    %v6346 = vunpack.c.l.b16 %v3998
    %v6347 = vunpack.c.h.b16 %v3998
    %v6348 = vunpack.c.l.b16 %v3999
    %v6349 = vunpack.c.h.b16 %v3999
    %v6350 = vunpack.c.l.b16 %v4000
    %v6351 = vunpack.c.h.b16 %v4000
    %v6352 = vunpack.c.l.b16 %v4001
    %v6353 = vunpack.c.h.b16 %v4001
    %v6354 = vunpack.c.l.b16 %v4002
    %v6355 = vunpack.c.h.b16 %v4002
    %v6356 = vunpack.c.l.b16 %v4003
    %v6357 = vunpack.c.h.b16 %v4003
    %v6358 = vunpack.c.l.b16 %v4004
    %v6359 = vunpack.c.h.b16 %v4004
    %v6360 = vunpack.c.l.b16 %v4005
    %v6361 = vunpack.c.h.b16 %v4005
    %v6362 = vunpack.c.l.b16 %v4006
    %v6363 = vunpack.c.h.b16 %v4006
    %v6364 = vunpack.c.l.b16 %v4007
    %v6365 = vunpack.c.h.b16 %v4007
    %v6366 = vunpack.c.l.b16 %v4008
    %v6367 = vunpack.c.h.b16 %v4008
    %v6368 = vunpack.c.l.b16 %v4009
    %v6369 = vunpack.c.h.b16 %v4009
    %v6370 = vunpack.c.l.b16 %v4010
    %v6371 = vunpack.c.h.b16 %v4010
    %v6372 = vunpack.c.l.b16 %v4011
    %v6373 = vunpack.c.h.b16 %v4011
    %v6374 = vunpack.c.l.b16 %v4012
    %v6375 = vunpack.c.h.b16 %v4012
    %v6376 = vunpack.c.l.b16 %v4013
    %v6377 = vunpack.c.h.b16 %v4013
    %v6378 = vunpack.c.l.b16 %v4014
    %v6379 = vunpack.c.h.b16 %v4014
    %v6380 = vunpack.c.l.b16 %v4015
    %v6381 = vunpack.c.h.b16 %v4015
    %v6382 = vunpack.c.l.b16 %v4016
    %v6383 = vunpack.c.h.b16 %v4016
    %v6384 = vunpack.c.l.b16 %v4017
    %v6385 = vunpack.c.h.b16 %v4017
    %v6386 = vunpack.c.l.b16 %v4018
    %v6387 = vunpack.c.h.b16 %v4018
    %v6388 = vunpack.c.l.b16 %v4019
    %v6389 = vunpack.c.h.b16 %v4019
    %v6390 = vunpack.c.l.b16 %v4020
    %v6391 = vunpack.c.h.b16 %v4020
    %v6392 = vunpack.c.l.b16 %v4021
    %v6393 = vunpack.c.h.b16 %v4021
    %v6394 = vunpack.c.l.b16 %v4022
    %v6395 = vunpack.c.h.b16 %v4022
    %v6396 = vunpack.c.l.b16 %v4023
    %v6397 = vunpack.c.h.b16 %v4023
    %v6398 = vunpack.c.l.b16 %v4024
    %v6399 = vunpack.c.h.b16 %v4024
    %v6400 = vunpack.c.l.b16 %v4025
    %v6401 = vunpack.c.h.b16 %v4025
    %v6402 = vunpack.c.l.b16 %v4026
    %v6403 = vunpack.c.h.b16 %v4026
    %v6404 = vunpack.c.l.b16 %v4027
    %v6405 = vunpack.c.h.b16 %v4027
    %v6406 = vunpack.c.l.b16 %v4028
    %v6407 = vunpack.c.h.b16 %v4028
    %v6408 = vunpack.c.l.b16 %v4029
    %v6409 = vunpack.c.h.b16 %v4029
    %v6410 = vunpack.c.l.b16 %v4030
    %v6411 = vunpack.c.h.b16 %v4030
    %v6412 = vunpack.c.l.b16 %v4031
    %v6413 = vunpack.c.h.b16 %v4031
    %v6414 = vunpack.c.l.b16 %v4032
    %v6415 = vunpack.c.h.b16 %v4032
    %v6416 = vunpack.c.l.b16 %v4033
    %v6417 = vunpack.c.h.b16 %v4033
    %v6418 = vunpack.c.l.b16 %v4034
    %v6419 = vunpack.c.h.b16 %v4034
    %v6420 = vunpack.c.l.b16 %v4035
    %v6421 = vunpack.c.h.b16 %v4035
    %v6422 = vunpack.c.l.b16 %v4036
    %v6423 = vunpack.c.h.b16 %v4036
    %v6424 = vunpack.c.l.b16 %v4037
    %v6425 = vunpack.c.h.b16 %v4037
    %v6426 = vunpack.c.l.b16 %v4038
    %v6427 = vunpack.c.h.b16 %v4038
    %v6428 = vunpack.c.l.b16 %v4039
    %v6429 = vunpack.c.h.b16 %v4039
    %v6430 = vunpack.c.l.b16 %v4040
    %v6431 = vunpack.c.h.b16 %v4040
    %v6432 = vunpack.c.l.b16 %v4041
    %v6433 = vunpack.c.h.b16 %v4041
    %v6434 = vunpack.c.l.b16 %v4042
    %v6435 = vunpack.c.h.b16 %v4042
    %v6436 = vunpack.c.l.b16 %v4043
    %v6437 = vunpack.c.h.b16 %v4043
    %v6438 = vunpack.c.l.b16 %v4044
    %v6439 = vunpack.c.h.b16 %v4044
    %v6440 = vunpack.c.l.b16 %v4045
    %v6441 = vunpack.c.h.b16 %v4045
    %v6442 = vunpack.c.l.b16 %v4046
    %v6443 = vunpack.c.h.b16 %v4046
    %v6444 = vunpack.c.l.b16 %v4047
    %v6445 = vunpack.c.h.b16 %v4047
    %v6446 = vunpack.c.l.b16 %v4048
    %v6447 = vunpack.c.h.b16 %v4048
    %v6448 = vunpack.c.l.b16 %v4049
    %v6449 = vunpack.c.h.b16 %v4049
    %v6450 = vunpack.c.l.b16 %v4050
    %v6451 = vunpack.c.h.b16 %v4050
    %v6452 = vunpack.c.l.b16 %v4051
    %v6453 = vunpack.c.h.b16 %v4051
    %v6454 = vunpack.c.l.b16 %v4052
    %v6455 = vunpack.c.h.b16 %v4052
    %v6456 = vunpack.c.l.b16 %v4053
    %v6457 = vunpack.c.h.b16 %v4053
    %v6458 = vunpack.c.l.b16 %v4054
    %v6459 = vunpack.c.h.b16 %v4054
    %v6460 = vunpack.c.l.b16 %v4055
    %v6461 = vunpack.c.h.b16 %v4055
    %v6462 = vunpack.c.l.b16 %v4056
    %v6463 = vunpack.c.h.b16 %v4056
    %v6464 = vunpack.c.l.b16 %v4057
    %v6465 = vunpack.c.h.b16 %v4057
    %v6466 = vunpack.c.l.b16 %v4058
    %v6467 = vunpack.c.h.b16 %v4058
    %v6468 = vunpack.c.l.b16 %v4059
    %v6469 = vunpack.c.h.b16 %v4059
    %v6470 = vunpack.c.l.b16 %v4060
    %v6471 = vunpack.c.h.b16 %v4060
    %v6472 = vunpack.c.l.b16 %v4061
    %v6473 = vunpack.c.h.b16 %v4061
    %v6474 = vunpack.c.l.b16 %v4062
    %v6475 = vunpack.c.h.b16 %v4062
    %v6476 = vunpack.c.l.b16 %v4063
    %v6477 = vunpack.c.h.b16 %v4063
    %v6478 = vunpack.c.l.b16 %v4064
    %v6479 = vunpack.c.h.b16 %v4064
    %v6480 = vunpack.c.l.b16 %v4065
    %v6481 = vunpack.c.h.b16 %v4065
    %v6482 = vunpack.c.l.b16 %v4066
    %v6483 = vunpack.c.h.b16 %v4066
    %v6484 = vunpack.c.l.b16 %v4067
    %v6485 = vunpack.c.h.b16 %v4067
    %v6486 = vunpack.c.l.b16 %v4068
    %v6487 = vunpack.c.h.b16 %v4068
    %v6488 = vunpack.c.l.b16 %v4069
    %v6489 = vunpack.c.h.b16 %v4069
    %v6490 = vunpack.c.l.b16 %v4070
    %v6491 = vunpack.c.h.b16 %v4070
    %v6492 = vunpack.c.l.b16 %v4071
    %v6493 = vunpack.c.h.b16 %v4071
    %v6494 = vunpack.c.l.b16 %v4072
    %v6495 = vunpack.c.h.b16 %v4072
    %v6496 = vunpack.c.l.b16 %v4073
    %v6497 = vunpack.c.h.b16 %v4073
    %v6498 = vunpack.c.l.b16 %v4074
    %v6499 = vunpack.c.h.b16 %v4074
    %v6500 = vunpack.c.l.b16 %v4075
    %v6501 = vunpack.c.h.b16 %v4075
    %v6502 = vunpack.c.l.b16 %v4076
    %v6503 = vunpack.c.h.b16 %v4076
    %v6504 = vunpack.c.l.b16 %v4077
    %v6505 = vunpack.c.h.b16 %v4077
    %v6506 = vunpack.c.l.b16 %v4078
    %v6507 = vunpack.c.h.b16 %v4078
    %v6508 = vunpack.c.l.b16 %v4079
    %v6509 = vunpack.c.h.b16 %v4079
    %v6510 = vunpack.c.l.b16 %v4080
    %v6511 = vunpack.c.h.b16 %v4080
    %v6512 = vunpack.c.l.b16 %v4081
    %v6513 = vunpack.c.h.b16 %v4081
    %v6514 = vunpack.c.l.b16 %v4082
    %v6515 = vunpack.c.h.b16 %v4082
    %v6516 = vunpack.c.l.b16 %v4083
    %v6517 = vunpack.c.h.b16 %v4083
    %v6518 = vunpack.c.l.b16 %v4084
    %v6519 = vunpack.c.h.b16 %v4084
    %v6520 = vunpack.c.l.b16 %v4085
    %v6521 = vunpack.c.h.b16 %v4085
    %v6522 = vunpack.c.l.b16 %v4086
    %v6523 = vunpack.c.h.b16 %v4086
    %v6524 = vunpack.c.l.b16 %v4087
    %v6525 = vunpack.c.h.b16 %v4087
    %v6526 = vunpack.c.l.b16 %v4088
    %v6527 = vunpack.c.h.b16 %v4088
    %v6528 = vunpack.c.l.b16 %v4089
    %v6529 = vunpack.c.h.b16 %v4089
    %v6530 = vunpack.c.l.b16 %v4090
    %v6531 = vunpack.c.h.b16 %v4090
    %v6532 = vunpack.c.l.b16 %v4091
    %v6533 = vunpack.c.h.b16 %v4091
    %v6534 = vunpack.c.l.b16 %v4092
    %v6535 = vunpack.c.h.b16 %v4092
    %v6536 = vunpack.c.l.b16 %v4093
    %v6537 = vunpack.c.h.b16 %v4093
    %v6538 = vunpack.c.l.b16 %v4094
    %v6539 = vunpack.c.h.b16 %v4094
    %v6540 = vunpack.c.l.b16 %v4095
    %v6541 = vunpack.c.h.b16 %v4095
    %v6542 = vunpack.c.l.b16 %v4096
    %v6543 = vunpack.c.h.b16 %v4096
    %v6544 = vunpack.c.l.b16 %v4097
    %v6545 = vunpack.c.h.b16 %v4097
    %v6546 = vunpack.c.l.b16 %v4098
    %v6547 = vunpack.c.h.b16 %v4098
    %v6548 = vunpack.c.l.b16 %v4099
    %v6549 = vunpack.c.h.b16 %v4099
    %v6550 = vunpack.c.l.b16 %v4100
    %v6551 = vunpack.c.h.b16 %v4100
    %v6552 = vunpack.c.l.b16 %v4101
    %v6553 = vunpack.c.h.b16 %v4101
    %v6554 = vunpack.c.l.b16 %v4102
    %v6555 = vunpack.c.h.b16 %v4102
    %v6556 = vunpack.c.l.b16 %v4103
    %v6557 = vunpack.c.h.b16 %v4103
    %v6558 = vunpack.c.l.b16 %v4104
    %v6559 = vunpack.c.h.b16 %v4104
    %v6560 = vunpack.c.l.b16 %v4105
    %v6561 = vunpack.c.h.b16 %v4105
    %v6562 = vunpack.c.l.b16 %v4106
    %v6563 = vunpack.c.h.b16 %v4106
    %v6564 = vunpack.c.l.b16 %v4107
    %v6565 = vunpack.c.h.b16 %v4107
    %v6566 = vunpack.c.l.b16 %v4108
    %v6567 = vunpack.c.h.b16 %v4108
    %v6568 = vunpack.c.l.b16 %v4109
    %v6569 = vunpack.c.h.b16 %v4109
    %v6570 = vunpack.c.l.b16 %v4110
    %v6571 = vunpack.c.h.b16 %v4110
    %v6572 = vunpack.c.l.b16 %v4111
    %v6573 = vunpack.c.h.b16 %v4111
    %v6574 = vunpack.c.l.b16 %v4112
    %v6575 = vunpack.c.h.b16 %v4112
    %v6576 = vunpack.c.l.b16 %v4113
    %v6577 = vunpack.c.h.b16 %v4113
    %v6578 = vunpack.c.l.b16 %v4114
    %v6579 = vunpack.c.h.b16 %v4114
    %v6580 = vunpack.c.l.b16 %v4115
    %v6581 = vunpack.c.h.b16 %v4115
    %v6582 = vunpack.c.l.b16 %v4116
    %v6583 = vunpack.c.h.b16 %v4116
    %v6584 = vunpack.c.l.b16 %v4117
    %v6585 = vunpack.c.h.b16 %v4117
    %v6586 = vunpack.c.l.b16 %v4118
    %v6587 = vunpack.c.h.b16 %v4118
    %v6588 = vunpack.c.l.b16 %v4119
    %v6589 = vunpack.c.h.b16 %v4119
    %v6590 = vunpack.c.l.b16 %v4120
    %v6591 = vunpack.c.h.b16 %v4120
    %v6592 = vunpack.c.l.b16 %v4121
    %v6593 = vunpack.c.h.b16 %v4121
    %v6594 = vunpack.c.l.b16 %v4122
    %v6595 = vunpack.c.h.b16 %v4122
    %v6596 = vunpack.c.l.b16 %v4123
    %v6597 = vunpack.c.h.b16 %v4123
    %v6598 = vunpack.c.l.b16 %v4124
    %v6599 = vunpack.c.h.b16 %v4124
    %v6600 = vunpack.c.l.b16 %v4125
    %v6601 = vunpack.c.h.b16 %v4125
    %v6602 = vunpack.c.l.b16 %v4126
    %v6603 = vunpack.c.h.b16 %v4126
    %v6604 = vunpack.c.l.b16 %v4127
    %v6605 = vunpack.c.h.b16 %v4127
    %v6606 = vunpack.c.l.b16 %v4128
    %v6607 = vunpack.c.h.b16 %v4128
    %v6608 = vunpack.c.l.b16 %v4129
    %v6609 = vunpack.c.h.b16 %v4129
    %v6610 = vunpack.c.l.b16 %v4130
    %v6611 = vunpack.c.h.b16 %v4130
    %v6612 = vunpack.c.l.b16 %v4131
    %v6613 = vunpack.c.h.b16 %v4131
    %v6614 = vunpack.c.l.b16 %v4132
    %v6615 = vunpack.c.h.b16 %v4132
    %v6616 = vunpack.c.l.b16 %v4133
    %v6617 = vunpack.c.h.b16 %v4133
    %v6618 = vunpack.c.l.b16 %v4134
    %v6619 = vunpack.c.h.b16 %v4134
    %v6620 = vunpack.c.l.b16 %v4135
    %v6621 = vunpack.c.h.b16 %v4135
    %v6622 = vunpack.c.l.b16 %v4136
    %v6623 = vunpack.c.h.b16 %v4136
    %v6624 = vunpack.c.l.b16 %v4137
    %v6625 = vunpack.c.h.b16 %v4137
    %v6626 = vunpack.c.l.b16 %v4138
    %v6627 = vunpack.c.h.b16 %v4138
    %v6628 = vunpack.c.l.b16 %v4139
    %v6629 = vunpack.c.h.b16 %v4139
    %v6630 = vunpack.c.l.b16 %v4140
    %v6631 = vunpack.c.h.b16 %v4140
    %v6632 = vunpack.c.l.b16 %v4141
    %v6633 = vunpack.c.h.b16 %v4141
    %v6634 = vunpack.c.l.b16 %v4142
    %v6635 = vunpack.c.h.b16 %v4142
    %v6636 = vunpack.c.l.b16 %v4143
    %v6637 = vunpack.c.h.b16 %v4143
    %v6638 = vunpack.c.l.b16 %v4144
    %v6639 = vunpack.c.h.b16 %v4144
    %v6640 = vunpack.c.l.b16 %v4145
    %v6641 = vunpack.c.h.b16 %v4145
    %v6642 = vunpack.c.l.b16 %v4146
    %v6643 = vunpack.c.h.b16 %v4146
    %v6644 = vunpack.c.l.b16 %v4147
    %v6645 = vunpack.c.h.b16 %v4147
    %v6646 = vunpack.c.l.b16 %v4148
    %v6647 = vunpack.c.h.b16 %v4148
    %v6648 = vunpack.c.l.b16 %v4149
    %v6649 = vunpack.c.h.b16 %v4149
    %v6650 = vunpack.c.l.b16 %v4150
    %v6651 = vunpack.c.h.b16 %v4150
    %v6652 = vunpack.c.l.b16 %v4151
    %v6653 = vunpack.c.h.b16 %v4151
    %v6654 = vunpack.c.l.b16 %v4152
    %v6655 = vunpack.c.h.b16 %v4152
    %v6656 = vunpack.c.l.b16 %v4153
    %v6657 = vunpack.c.h.b16 %v4153
    %v6658 = vunpack.c.l.b16 %v4154
    %v6659 = vunpack.c.h.b16 %v4154
    %v6660 = vunpack.c.l.b16 %v4155
    %v6661 = vunpack.c.h.b16 %v4155
    %v6662 = vunpack.c.l.b16 %v4156
    %v6663 = vunpack.c.h.b16 %v4156
    %v6664 = vunpack.c.l.b16 %v4157
    %v6665 = vunpack.c.h.b16 %v4157
    %v6666 = vunpack.c.l.b16 %v4158
    %v6667 = vunpack.c.h.b16 %v4158
    %v6668 = vunpack.c.l.b16 %v4159
    %v6669 = vunpack.c.h.b16 %v4159
    %v6670 = vunpack.c.l.b16 %v4160
    %v6671 = vunpack.c.h.b16 %v4160
    %v6672 = vunpack.c.l.b16 %v4161
    %v6673 = vunpack.c.h.b16 %v4161
    %v6674 = vunpack.c.l.b16 %v4162
    %v6675 = vunpack.c.h.b16 %v4162
    %v6676 = vunpack.c.l.b16 %v4163
    %v6677 = vunpack.c.h.b16 %v4163
    %v6678 = vunpack.c.l.b16 %v4164
    %v6679 = vunpack.c.h.b16 %v4164
    %v6680 = vunpack.c.l.b16 %v4165
    %v6681 = vunpack.c.h.b16 %v4165
    %v6682 = vunpack.c.l.b16 %v4166
    %v6683 = vunpack.c.h.b16 %v4166
    %v6684 = vunpack.c.l.b16 %v4167
    %v6685 = vunpack.c.h.b16 %v4167
    %v6686 = vunpack.c.l.b16 %v4168
    %v6687 = vunpack.c.h.b16 %v4168
    %v6688 = vunpack.c.l.b16 %v4169
    %v6689 = vunpack.c.h.b16 %v4169
    %v6690 = vunpack.c.l.b16 %v4170
    %v6691 = vunpack.c.h.b16 %v4170
    %v6692 = vunpack.c.l.b16 %v4171
    %v6693 = vunpack.c.h.b16 %v4171
    %v6694 = vunpack.c.l.b16 %v4172
    %v6695 = vunpack.c.h.b16 %v4172
    %v6696 = vunpack.c.l.b16 %v4173
    %v6697 = vunpack.c.h.b16 %v4173
    %v6698 = vunpack.c.l.b16 %v4174
    %v6699 = vunpack.c.h.b16 %v4174
    %v6700 = vunpack.c.l.b16 %v4175
    %v6701 = vunpack.c.h.b16 %v4175
    %v6702 = vunpack.c.l.b16 %v4176
    %v6703 = vunpack.c.h.b16 %v4176
    %v6704 = vunpack.c.l.b16 %v4177
    %v6705 = vunpack.c.h.b16 %v4177
    %v6706 = vunpack.c.l.b16 %v4178
    %v6707 = vunpack.c.h.b16 %v4178
    %v6708 = vunpack.c.l.b16 %v4179
    %v6709 = vunpack.c.h.b16 %v4179
    %v6710 = vunpack.c.l.b16 %v4180
    %v6711 = vunpack.c.h.b16 %v4180
    %v6712 = vunpack.c.l.b16 %v4181
    %v6713 = vunpack.c.h.b16 %v4181
    %v6714 = vunpack.c.l.b16 %v4182
    %v6715 = vunpack.c.h.b16 %v4182
    %v6716 = vunpack.c.l.b16 %v4183
    %v6717 = vunpack.c.h.b16 %v4183
    %v6718 = vunpack.c.l.b16 %v4184
    %v6719 = vunpack.c.h.b16 %v4184
    %v6720 = vunpack.c.l.b16 %v4185
    %v6721 = vunpack.c.h.b16 %v4185
    %v6722 = vunpack.c.l.b16 %v4186
    %v6723 = vunpack.c.h.b16 %v4186
    %v6724 = vunpack.c.l.b16 %v4187
    %v6725 = vunpack.c.h.b16 %v4187
    %v6726 = vunpack.c.l.b16 %v4188
    %v6727 = vunpack.c.h.b16 %v4188
    %v6728 = vunpack.c.l.b16 %v4189
    %v6729 = vunpack.c.h.b16 %v4189
    %v6730 = vunpack.c.l.b16 %v4190
    %v6731 = vunpack.c.h.b16 %v4190
    %v6732 = vunpack.c.l.b16 %v4191
    %v6733 = vunpack.c.h.b16 %v4191
    %v6734 = vunpack.c.l.b16 %v4192
    %v6735 = vunpack.c.h.b16 %v4192
    %v6736 = vunpack.c.l.b16 %v4193
    %v6737 = vunpack.c.h.b16 %v4193
    %v6738 = vunpack.c.l.b16 %v4194
    %v6739 = vunpack.c.h.b16 %v4194
    %v6740 = vunpack.c.l.b16 %v4195
    %v6741 = vunpack.c.h.b16 %v4195
    %v6742 = vunpack.c.l.b16 %v4196
    %v6743 = vunpack.c.h.b16 %v4196
    %v6744 = vunpack.c.l.b16 %v4197
    %v6745 = vunpack.c.h.b16 %v4197
    %v6746 = vunpack.c.l.b16 %v4198
    %v6747 = vunpack.c.h.b16 %v4198
    %v6748 = vunpack.c.l.b16 %v4199
    %v6749 = vunpack.c.h.b16 %v4199
    %v6750 = vunpack.c.l.b16 %v4200
    %v6751 = vunpack.c.h.b16 %v4200
    %v6752 = vunpack.c.l.b16 %v4201
    %v6753 = vunpack.c.h.b16 %v4201
    %v6754 = vunpack.c.l.b16 %v4202
    %v6755 = vunpack.c.h.b16 %v4202
    %v6756 = vunpack.c.l.b16 %v4203
    %v6757 = vunpack.c.h.b16 %v4203
    %v6758 = vunpack.c.l.b16 %v4204
    %v6759 = vunpack.c.h.b16 %v4204
    %v6760 = vunpack.c.l.b16 %v4205
    %v6761 = vunpack.c.h.b16 %v4205
    %v6762 = vunpack.c.l.b16 %v4206
    %v6763 = vunpack.c.h.b16 %v4206
    %v6764 = vunpack.c.l.b16 %v4207
    %v6765 = vunpack.c.h.b16 %v4207
    %v6766 = vunpack.c.l.b16 %v4208
    %v6767 = vunpack.c.h.b16 %v4208
    %v6768 = vunpack.c.l.b16 %v4209
    %v6769 = vunpack.c.h.b16 %v4209
    %v6770 = vunpack.c.l.b16 %v4210
    %v6771 = vunpack.c.h.b16 %v4210
    %v6772 = vunpack.c.l.b16 %v4211
    %v6773 = vunpack.c.h.b16 %v4211
    %v6774 = vunpack.c.l.b16 %v4212
    %v6775 = vunpack.c.h.b16 %v4212
    %v6776 = vunpack.c.l.b16 %v4213
    %v6777 = vunpack.c.h.b16 %v4213
    %v6778 = vunpack.c.l.b16 %v4214
    %v6779 = vunpack.c.h.b16 %v4214
    %v6780 = vunpack.c.l.b16 %v4215
    %v6781 = vunpack.c.h.b16 %v4215
    %v6782 = vunpack.c.l.b16 %v4216
    %v6783 = vunpack.c.h.b16 %v4216
    %v6784 = vunpack.c.l.b16 %v4217
    %v6785 = vunpack.c.h.b16 %v4217
    %v6786 = vunpack.c.l.b16 %v4218
    %v6787 = vunpack.c.h.b16 %v4218
    %v6788 = vunpack.c.l.b16 %v4219
    %v6789 = vunpack.c.h.b16 %v4219
    %v6790 = vunpack.c.l.b16 %v4220
    %v6791 = vunpack.c.h.b16 %v4220
    %v6792 = vunpack.c.l.b16 %v4221
    %v6793 = vunpack.c.h.b16 %v4221
    %v6794 = vunpack.c.l.b16 %v4222
    %v6795 = vunpack.c.h.b16 %v4222
    %v6796 = vunpack.c.l.b16 %v4223
    %v6797 = vunpack.c.h.b16 %v4223
    %v6798 = vunpack.c.l.b16 %v4224
    %v6799 = vunpack.c.h.b16 %v4224
    %v6800 = vunpack.c.l.b16 %v4225
    %v6801 = vunpack.c.h.b16 %v4225
    %v6802 = vunpack.c.l.b16 %v4226
    %v6803 = vunpack.c.h.b16 %v4226
    %v6804 = vunpack.c.l.b16 %v4227
    %v6805 = vunpack.c.h.b16 %v4227
    %v6806 = vunpack.c.l.b16 %v4228
    %v6807 = vunpack.c.h.b16 %v4228
    %v6808 = vunpack.c.l.b16 %v4229
    %v6809 = vunpack.c.h.b16 %v4229
    %v6810 = vunpack.c.l.b16 %v4230
    %v6811 = vunpack.c.h.b16 %v4230
    %v6812 = vunpack.c.l.b16 %v4231
    %v6813 = vunpack.c.h.b16 %v4231
    %v6814 = vunpack.c.l.b16 %v4232
    %v6815 = vunpack.c.h.b16 %v4232
    %v6816 = vunpack.c.l.b16 %v4233
    %v6817 = vunpack.c.h.b16 %v4233
    %v6818 = vunpack.c.l.b16 %v4234
    %v6819 = vunpack.c.h.b16 %v4234
    %v6820 = vunpack.c.l.b16 %v4235
    %v6821 = vunpack.c.h.b16 %v4235
    %v6822 = vunpack.c.l.b16 %v4236
    %v6823 = vunpack.c.h.b16 %v4236
    %v6824 = vunpack.c.l.b16 %v4237
    %v6825 = vunpack.c.h.b16 %v4237
    %v6826 = vunpack.c.l.b16 %v4238
    %v6827 = vunpack.c.h.b16 %v4238
    %v6828 = vunpack.c.l.b16 %v4239
    %v6829 = vunpack.c.h.b16 %v4239
    %v6830 = vunpack.c.l.b16 %v4240
    %v6831 = vunpack.c.h.b16 %v4240
    %v6832 = vunpack.c.l.b16 %v4241
    %v6833 = vunpack.c.h.b16 %v4241
    %v6834 = vunpack.c.l.b16 %v4242
    %v6835 = vunpack.c.h.b16 %v4242
    %v6836 = vunpack.c.l.b16 %v4243
    %v6837 = vunpack.c.h.b16 %v4243
    %v6838 = vunpack.c.l.b16 %v4244
    %v6839 = vunpack.c.h.b16 %v4244
    %v6840 = vunpack.c.l.b16 %v4245
    %v6841 = vunpack.c.h.b16 %v4245
    %v6842 = vunpack.c.l.b16 %v4246
    %v6843 = vunpack.c.h.b16 %v4246
    %v6844 = vunpack.c.l.b16 %v4247
    %v6845 = vunpack.c.h.b16 %v4247
    %v6846 = vunpack.c.l.b16 %v4248
    %v6847 = vunpack.c.h.b16 %v4248
    %v6848 = vunpack.c.l.b16 %v4249
    %v6849 = vunpack.c.h.b16 %v4249
    %v6850 = vunpack.c.l.b16 %v4250
    %v6851 = vunpack.c.h.b16 %v4250
    %v6852 = vunpack.c.l.b16 %v4251
    %v6853 = vunpack.c.h.b16 %v4251
    %v6854 = vunpack.c.l.b16 %v4252
    %v6855 = vunpack.c.h.b16 %v4252
    %v6856 = vunpack.c.l.b16 %v4253
    %v6857 = vunpack.c.h.b16 %v4253
    %v6858 = vunpack.c.l.b16 %v4254
    %v6859 = vunpack.c.h.b16 %v4254
    %v6860 = vunpack.c.l.b16 %v4255
    %v6861 = vunpack.c.h.b16 %v4255
    %v6862 = vunpack.c.l.b16 %v4256
    %v6863 = vunpack.c.h.b16 %v4256
    %v6864 = vunpack.c.l.b16 %v4257
    %v6865 = vunpack.c.h.b16 %v4257
    %v6866 = vunpack.c.l.b16 %v4258
    %v6867 = vunpack.c.h.b16 %v4258
    %v6868 = vunpack.c.l.b16 %v4259
    %v6869 = vunpack.c.h.b16 %v4259
    %v6870 = vunpack.c.l.b16 %v4260
    %v6871 = vunpack.c.h.b16 %v4260
    %v6872 = vunpack.c.l.b16 %v4261
    %v6873 = vunpack.c.h.b16 %v4261
    %v6874 = vunpack.c.l.b16 %v4262
    %v6875 = vunpack.c.h.b16 %v4262
    %v6876 = vunpack.c.l.b16 %v4263
    %v6877 = vunpack.c.h.b16 %v4263
    %v6878 = vunpack.c.l.b16 %v4264
    %v6879 = vunpack.c.h.b16 %v4264
    %v6880 = vunpack.c.l.b16 %v4265
    %v6881 = vunpack.c.h.b16 %v4265
    %v6882 = vunpack.c.l.b16 %v4266
    %v6883 = vunpack.c.h.b16 %v4266
    %v6884 = vunpack.c.l.b16 %v4267
    %v6885 = vunpack.c.h.b16 %v4267
    %v6886 = vunpack.c.l.b16 %v4268
    %v6887 = vunpack.c.h.b16 %v4268
    %v6888 = vunpack.c.l.b16 %v4269
    %v6889 = vunpack.c.h.b16 %v4269
    %v6890 = vunpack.c.l.b16 %v4270
    %v6891 = vunpack.c.h.b16 %v4270
    %v6892 = vunpack.c.l.b16 %v4271
    %v6893 = vunpack.c.h.b16 %v4271
    %v6894 = vunpack.c.l.b16 %v4272
    %v6895 = vunpack.c.h.b16 %v4272
    %v6896 = vunpack.c.l.b16 %v4273
    %v6897 = vunpack.c.h.b16 %v4273
    %v6898 = vunpack.c.l.b16 %v4274
    %v6899 = vunpack.c.h.b16 %v4274
    %v6900 = vunpack.c.l.b16 %v4275
    %v6901 = vunpack.c.h.b16 %v4275
    %v6902 = vunpack.c.l.b16 %v4276
    %v6903 = vunpack.c.h.b16 %v4276
    %v6904 = vunpack.c.l.b16 %v4277
    %v6905 = vunpack.c.h.b16 %v4277
    %v6906 = vunpack.c.l.b16 %v4278
    %v6907 = vunpack.c.h.b16 %v4278
    %v6908 = vunpack.c.l.b16 %v4279
    %v6909 = vunpack.c.h.b16 %v4279
    %v6910 = vunpack.c.l.b16 %v4280
    %v6911 = vunpack.c.h.b16 %v4280
    %v6912 = vunpack.c.l.b16 %v4281
    %v6913 = vunpack.c.h.b16 %v4281
    %v6914 = vunpack.c.l.b16 %v4282
    %v6915 = vunpack.c.h.b16 %v4282
    %v6916 = vunpack.c.l.b16 %v4283
    %v6917 = vunpack.c.h.b16 %v4283
    %v6918 = vunpack.c.l.b16 %v4284
    %v6919 = vunpack.c.h.b16 %v4284
    %v6920 = vunpack.c.l.b16 %v4285
    %v6921 = vunpack.c.h.b16 %v4285
    %v6922 = vunpack.c.l.b16 %v4286
    %v6923 = vunpack.c.h.b16 %v4286
    %v6924 = vunpack.c.l.b16 %v4287
    %v6925 = vunpack.c.h.b16 %v4287
    %v6926 = vunpack.c.l.b16 %v4288
    %v6927 = vunpack.c.h.b16 %v4288
    %v6928 = vunpack.c.l.b16 %v4289
    %v6929 = vunpack.c.h.b16 %v4289
    %v6930 = vunpack.c.l.b16 %v4290
    %v6931 = vunpack.c.h.b16 %v4290
    %v6932 = vunpack.c.l.b16 %v4291
    %v6933 = vunpack.c.h.b16 %v4291
    %v6934 = vunpack.c.l.b16 %v4292
    %v6935 = vunpack.c.h.b16 %v4292
    %v6936 = vunpack.c.l.b16 %v4293
    %v6937 = vunpack.c.h.b16 %v4293
    %v6938 = vunpack.c.l.b16 %v4294
    %v6939 = vunpack.c.h.b16 %v4294
    %v6940 = vunpack.c.l.b16 %v4295
    %v6941 = vunpack.c.h.b16 %v4295
    %v6942 = vunpack.c.l.b16 %v4296
    %v6943 = vunpack.c.h.b16 %v4296
    %v6944 = vunpack.c.l.b16 %v4297
    %v6945 = vunpack.c.h.b16 %v4297
    %v6946 = vunpack.c.l.b16 %v4298
    %v6947 = vunpack.c.h.b16 %v4298
    %v6948 = vunpack.c.l.b16 %v4299
    %v6949 = vunpack.c.h.b16 %v4299
    %v6950 = vunpack.c.l.b16 %v4300
    %v6951 = vunpack.c.h.b16 %v4300
    %v6952 = vunpack.c.l.b16 %v4301
    %v6953 = vunpack.c.h.b16 %v4301
    %v6954 = vunpack.c.l.b16 %v4302
    %v6955 = vunpack.c.h.b16 %v4302
    %v6956 = vunpack.c.l.b16 %v4303
    %v6957 = vunpack.c.h.b16 %v4303
    %v6958 = vunpack.c.l.b16 %v4304
    %v6959 = vunpack.c.h.b16 %v4304
    %v6960 = vunpack.c.l.b16 %v4305
    %v6961 = vunpack.c.h.b16 %v4305
    %v6962 = vunpack.c.l.b16 %v4306
    %v6963 = vunpack.c.h.b16 %v4306
    %v6964 = vunpack.c.l.b16 %v4307
    %v6965 = vunpack.c.h.b16 %v4307
    %v6966 = vunpack.c.l.b16 %v4308
    %v6967 = vunpack.c.h.b16 %v4308
    %v6968 = vunpack.c.l.b16 %v4309
    %v6969 = vunpack.c.h.b16 %v4309
    %v6970 = vunpack.c.l.b16 %v4310
    %v6971 = vunpack.c.h.b16 %v4310
    %v6972 = vunpack.c.l.b16 %v4311
    %v6973 = vunpack.c.h.b16 %v4311
    %v6974 = vunpack.c.l.b16 %v4312
    %v6975 = vunpack.c.h.b16 %v4312
    %v6976 = vunpack.c.l.b16 %v4313
    %v6977 = vunpack.c.h.b16 %v4313
    %v6978 = vunpack.c.l.b16 %v4314
    %v6979 = vunpack.c.h.b16 %v4314
    %v6980 = vunpack.c.l.b16 %v4315
    %v6981 = vunpack.c.h.b16 %v4315
    %v6982 = vunpack.c.l.b16 %v4316
    %v6983 = vunpack.c.h.b16 %v4316
    %v6984 = vunpack.c.l.b16 %v4317
    %v6985 = vunpack.c.h.b16 %v4317
    %v6986 = vunpack.c.l.b16 %v4318
    %v6987 = vunpack.c.h.b16 %v4318
    %v6988 = vunpack.c.l.b16 %v4319
    %v6989 = vunpack.c.h.b16 %v4319
    %v6990 = vunpack.c.l.b16 %v4320
    %v6991 = vunpack.c.h.b16 %v4320
    %v6992 = vunpack.c.l.b16 %v4321
    %v6993 = vunpack.c.h.b16 %v4321
    %v6994 = vunpack.c.l.b16 %v4322
    %v6995 = vunpack.c.h.b16 %v4322
    %v6996 = vunpack.c.l.b16 %v4323
    %v6997 = vunpack.c.h.b16 %v4323
    %v6998 = vunpack.c.l.b16 %v4324
    %v6999 = vunpack.c.h.b16 %v4324
    %v7000 = vunpack.c.l.b16 %v4325
    %v7001 = vunpack.c.h.b16 %v4325
    %v7002 = vunpack.c.l.b16 %v4326
    %v7003 = vunpack.c.h.b16 %v4326
    %v7004 = vunpack.c.l.b16 %v4327
    %v7005 = vunpack.c.h.b16 %v4327
    %v7006 = vunpack.c.l.b16 %v4328
    %v7007 = vunpack.c.h.b16 %v4328
    %v7008 = vunpack.c.l.b16 %v4329
    %v7009 = vunpack.c.h.b16 %v4329
    %v7010 = vunpack.c.l.b16 %v4330
    %v7011 = vunpack.c.h.b16 %v4330
    %v7012 = vunpack.c.l.b16 %v4331
    %v7013 = vunpack.c.h.b16 %v4331
    %v7014 = vunpack.c.l.b16 %v4332
    %v7015 = vunpack.c.h.b16 %v4332
    %v7016 = vunpack.c.l.b16 %v4333
    %v7017 = vunpack.c.h.b16 %v4333
    %v7018 = vunpack.c.l.b16 %v4334
    %v7019 = vunpack.c.h.b16 %v4334
    %v7020 = vunpack.c.l.b16 %v4335
    %v7021 = vunpack.c.h.b16 %v4335
    %v7022 = vunpack.c.l.b16 %v4336
    %v7023 = vunpack.c.h.b16 %v4336
    %v7024 = vunpack.c.l.b16 %v4337
    %v7025 = vunpack.c.h.b16 %v4337
    %v7026 = vunpack.c.l.b16 %v4338
    %v7027 = vunpack.c.h.b16 %v4338
    %v7028 = vunpack.c.l.b16 %v4339
    %v7029 = vunpack.c.h.b16 %v4339
    %v7030 = vunpack.c.l.b16 %v4340
    %v7031 = vunpack.c.h.b16 %v4340
    %v7032 = vunpack.c.l.b16 %v4341
    %v7033 = vunpack.c.h.b16 %v4341
    %v7034 = vunpack.c.l.b16 %v4342
    %v7035 = vunpack.c.h.b16 %v4342
    %v7036 = vunpack.c.l.b16 %v4343
    %v7037 = vunpack.c.h.b16 %v4343
    %v7038 = vunpack.c.l.b16 %v4344
    %v7039 = vunpack.c.h.b16 %v4344
    %v7040 = vunpack.c.l.b16 %v4345
    %v7041 = vunpack.c.h.b16 %v4345
    %v7042 = vunpack.c.l.b16 %v4346
    %v7043 = vunpack.c.h.b16 %v4346
    %v7044 = vunpack.c.l.b16 %v4347
    %v7045 = vunpack.c.h.b16 %v4347
    %v7046 = vunpack.c.l.b16 %v4348
    %v7047 = vunpack.c.h.b16 %v4348
    %v7048 = vunpack.c.l.b16 %v4349
    %v7049 = vunpack.c.h.b16 %v4349
    %v7050 = vunpack.c.l.b16 %v4350
    %v7051 = vunpack.c.h.b16 %v4350
    %v7052 = vunpack.c.l.b16 %v4351
    %v7053 = vunpack.c.h.b16 %v4351
    %v7054 = vunpack.c.l.b16 %v4352
    %v7055 = vunpack.c.h.b16 %v4352
    %v7056 = vunpack.c.l.b16 %v4353
    %v7057 = vunpack.c.h.b16 %v4353
    %v7058 = vunpack.c.l.b16 %v4354
    %v7059 = vunpack.c.h.b16 %v4354
    %v7060 = vunpack.c.l.b16 %v4355
    %v7061 = vunpack.c.h.b16 %v4355
    %v7062 = vunpack.c.l.b16 %v4356
    %v7063 = vunpack.c.h.b16 %v4356
    %v7064 = vunpack.c.l.b16 %v4357
    %v7065 = vunpack.c.h.b16 %v4357
    %v7066 = vunpack.c.l.b16 %v4358
    %v7067 = vunpack.c.h.b16 %v4358
    %v7068 = vunpack.c.l.b16 %v4359
    %v7069 = vunpack.c.h.b16 %v4359
    %v7070 = vunpack.c.l.b16 %v4360
    %v7071 = vunpack.c.h.b16 %v4360
    %v7072 = vunpack.c.l.b16 %v4361
    %v7073 = vunpack.c.h.b16 %v4361
    %v7074 = vunpack.c.l.b16 %v4362
    %v7075 = vunpack.c.h.b16 %v4362
    %v7076 = vunpack.c.l.b16 %v4363
    %v7077 = vunpack.c.h.b16 %v4363
    %v7078 = vunpack.c.l.b16 %v4364
    %v7079 = vunpack.c.h.b16 %v4364
    %v7080 = vunpack.c.l.b16 %v4365
    %v7081 = vunpack.c.h.b16 %v4365
    %v7082 = vunpack.c.l.b16 %v4366
    %v7083 = vunpack.c.h.b16 %v4366
    %v7084 = vunpack.c.l.b16 %v4367
    %v7085 = vunpack.c.h.b16 %v4367
    %v7086 = vunpack.c.l.b16 %v4368
    %v7087 = vunpack.c.h.b16 %v4368
    %v7088 = vunpack.c.l.b16 %v4369
    %v7089 = vunpack.c.h.b16 %v4369
    %v7090 = vunpack.c.l.b16 %v4370
    %v7091 = vunpack.c.h.b16 %v4370
    %v7092 = vunpack.c.l.b16 %v4371
    %v7093 = vunpack.c.h.b16 %v4371
    %v7094 = vunpack.c.l.b16 %v4372
    %v7095 = vunpack.c.h.b16 %v4372
    %v7096 = vunpack.c.l.b16 %v4373
    %v7097 = vunpack.c.h.b16 %v4373
    %v7098 = vunpack.c.l.b16 %v4374
    %v7099 = vunpack.c.h.b16 %v4374
    %v7100 = vunpack.c.l.b16 %v4375
    %v7101 = vunpack.c.h.b16 %v4375
    %v7102 = vunpack.c.l.b16 %v4376
    %v7103 = vunpack.c.h.b16 %v4376
    %v7104 = vunpack.c.l.b16 %v4377
    %v7105 = vunpack.c.h.b16 %v4377
    %v7106 = vunpack.c.l.b16 %v4378
    %v7107 = vunpack.c.h.b16 %v4378
    %v7108 = vunpack.c.l.b16 %v4379
    %v7109 = vunpack.c.h.b16 %v4379
    %v7110 = vunpack.c.l.b16 %v4380
    %v7111 = vunpack.c.h.b16 %v4380
    %v7112 = vunpack.c.l.b16 %v4381
    %v7113 = vunpack.c.h.b16 %v4381
    %v7114 = vunpack.c.l.b16 %v4382
    %v7115 = vunpack.c.h.b16 %v4382
    %v7116 = vunpack.c.l.b16 %v4383
    %v7117 = vunpack.c.h.b16 %v4383
    %v7118 = vunpack.c.l.b16 %v4384
    %v7119 = vunpack.c.h.b16 %v4384
    %v7120 = vunpack.c.l.b16 %v4385
    %v7121 = vunpack.c.h.b16 %v4385
    %v7122 = vunpack.c.l.b16 %v4386
    %v7123 = vunpack.c.h.b16 %v4386
    %v7124 = vunpack.c.l.b16 %v4387
    %v7125 = vunpack.c.h.b16 %v4387
    %v7126 = vunpack.c.l.b16 %v4388
    %v7127 = vunpack.c.h.b16 %v4388
    %v7128 = vunpack.c.l.b16 %v4389
    %v7129 = vunpack.c.h.b16 %v4389
    %v7130 = vunpack.c.l.b16 %v4390
    %v7131 = vunpack.c.h.b16 %v4390
    %v7132 = vunpack.c.l.b16 %v4391
    %v7133 = vunpack.c.h.b16 %v4391
    %v7134 = vunpack.c.l.b16 %v4392
    %v7135 = vunpack.c.h.b16 %v4392
    %v7136 = vunpack.c.l.b16 %v4393
    %v7137 = vunpack.c.h.b16 %v4393
    %v7138 = vunpack.c.l.b16 %v4394
    %v7139 = vunpack.c.h.b16 %v4394
    %v7140 = vunpack.c.l.b16 %v4395
    %v7141 = vunpack.c.h.b16 %v4395
    %v7142 = vunpack.c.l.b16 %v4396
    %v7143 = vunpack.c.h.b16 %v4396
    %v7144 = vunpack.c.l.b16 %v4397
    %v7145 = vunpack.c.h.b16 %v4397
    %v7146 = vunpack.c.l.b16 %v4398
    %v7147 = vunpack.c.h.b16 %v4398
    %v7148 = vunpack.c.l.b16 %v4399
    %v7149 = vunpack.c.h.b16 %v4399
    %v7150 = vunpack.c.l.b16 %v4400
    %v7151 = vunpack.c.h.b16 %v4400
    %v7152 = vunpack.c.l.b16 %v4401
    %v7153 = vunpack.c.h.b16 %v4401
    %v7154 = vunpack.c.l.b16 %v4402
    %v7155 = vunpack.c.h.b16 %v4402
    %v7156 = vunpack.c.l.b16 %v4403
    %v7157 = vunpack.c.h.b16 %v4403
    %v7158 = vunpack.c.l.b16 %v4404
    %v7159 = vunpack.c.h.b16 %v4404
    %v7160 = vunpack.c.l.b16 %v4405
    %v7161 = vunpack.c.h.b16 %v4405
    %v7162 = vunpack.c.l.b16 %v4406
    %v7163 = vunpack.c.h.b16 %v4406
    %v7164 = vunpack.c.l.b16 %v4407
    %v7165 = vunpack.c.h.b16 %v4407
    %v7166 = vunpack.c.l.b16 %v4408
    %v7167 = vunpack.c.h.b16 %v4408
    %v7168 = vunpack.c.l.b16 %v4409
    %v7169 = vunpack.c.h.b16 %v4409
    %v7170 = vunpack.c.l.b16 %v4410
    %v7171 = vunpack.c.h.b16 %v4410
    %v7172 = vunpack.c.l.b16 %v4411
    %v7173 = vunpack.c.h.b16 %v4411
    %v7174 = vunpack.c.l.b16 %v4412
    %v7175 = vunpack.c.h.b16 %v4412
    %v7176 = vunpack.c.l.b16 %v4413
    %v7177 = vunpack.c.h.b16 %v4413
    %v7178 = vunpack.c.l.b16 %v4414
    %v7179 = vunpack.c.h.b16 %v4414
    %v7180 = vunpack.c.l.b16 %v4415
    %v7181 = vunpack.c.h.b16 %v4415
    %v7182 = vunpack.c.l.b16 %v4416
    %v7183 = vunpack.c.h.b16 %v4416
    %v7184 = vunpack.c.l.b16 %v4417
    %v7185 = vunpack.c.h.b16 %v4417
    %v7186 = vunpack.c.l.b16 %v4418
    %v7187 = vunpack.c.h.b16 %v4418
    %v7188 = vunpack.c.l.b16 %v4419
    %v7189 = vunpack.c.h.b16 %v4419
    %v7190 = vunpack.c.l.b16 %v4420
    %v7191 = vunpack.c.h.b16 %v4420
    %v7192 = vunpack.c.l.b16 %v4421
    %v7193 = vunpack.c.h.b16 %v4421
    %v7194 = vunpack.c.l.b16 %v4422
    %v7195 = vunpack.c.h.b16 %v4422
    %v7196 = vunpack.c.l.b16 %v4423
    %v7197 = vunpack.c.h.b16 %v4423
    %v7198 = vunpack.c.l.b16 %v4424
    %v7199 = vunpack.c.h.b16 %v4424
    %v7200 = vunpack.c.l.b16 %v4425
    %v7201 = vunpack.c.h.b16 %v4425
    %v7202 = vunpack.c.l.b16 %v4426
    %v7203 = vunpack.c.h.b16 %v4426
    %v7204 = vunpack.c.l.b16 %v4427
    %v7205 = vunpack.c.h.b16 %v4427
    %v7206 = vunpack.c.l.b16 %v4428
    %v7207 = vunpack.c.h.b16 %v4428
    %v7208 = vunpack.c.l.b16 %v4429
    %v7209 = vunpack.c.h.b16 %v4429
    %v7210 = vunpack.c.l.b16 %v4430
    %v7211 = vunpack.c.h.b16 %v4430
    %v7212 = vunpack.c.l.b16 %v4431
    %v7213 = vunpack.c.h.b16 %v4431
    %v7214 = vunpack.c.l.b16 %v4432
    %v7215 = vunpack.c.h.b16 %v4432
    %v7216 = vunpack.c.l.b16 %v4433
    %v7217 = vunpack.c.h.b16 %v4433
    %v7218 = vunpack.c.l.b16 %v4434
    %v7219 = vunpack.c.h.b16 %v4434
    %v7220 = vunpack.c.l.b16 %v4435
    %v7221 = vunpack.c.h.b16 %v4435
    %v7222 = vunpack.c.l.b16 %v4436
    %v7223 = vunpack.c.h.b16 %v4436
    %v7224 = vunpack.c.l.b16 %v4437
    %v7225 = vunpack.c.h.b16 %v4437
    %v7226 = vunpack.c.l.b16 %v4438
    %v7227 = vunpack.c.h.b16 %v4438
    %v7228 = vunpack.c.l.b16 %v4439
    %v7229 = vunpack.c.h.b16 %v4439
    %v7230 = vunpack.c.l.b16 %v4440
    %v7231 = vunpack.c.h.b16 %v4440
    %v7232 = vunpack.c.l.b16 %v4441
    %v7233 = vunpack.c.h.b16 %v4441
    %v7234 = vunpack.c.l.b16 %v4442
    %v7235 = vunpack.c.h.b16 %v4442
    %v7236 = vunpack.c.l.b16 %v4443
    %v7237 = vunpack.c.h.b16 %v4443
    %v7238 = vunpack.c.l.b16 %v4444
    %v7239 = vunpack.c.h.b16 %v4444
    %v7240 = vunpack.c.l.b16 %v4445
    %v7241 = vunpack.c.h.b16 %v4445
    %v7242 = vunpack.c.l.b16 %v4446
    %v7243 = vunpack.c.h.b16 %v4446
    %v7244 = vunpack.c.l.b16 %v4447
    %v7245 = vunpack.c.h.b16 %v4447
    %v7246 = vunpack.c.l.b16 %v4448
    %v7247 = vunpack.c.h.b16 %v4448
    %v7248 = vunpack.c.l.b16 %v4449
    %v7249 = vunpack.c.h.b16 %v4449
    %v7250 = vunpack.c.l.b16 %v4450
    %v7251 = vunpack.c.h.b16 %v4450
    %v7252 = vunpack.c.l.b16 %v4451
    %v7253 = vunpack.c.h.b16 %v4451
    %v7254 = vunpack.c.l.b16 %v4452
    %v7255 = vunpack.c.h.b16 %v4452
    %v7256 = vunpack.c.l.b16 %v4453
    %v7257 = vunpack.c.h.b16 %v4453
    %v7258 = vunpack.c.l.b16 %v4454
    %v7259 = vunpack.c.h.b16 %v4454
    %v7260 = vunpack.c.l.b16 %v4455
    %v7261 = vunpack.c.h.b16 %v4455
    %v7262 = vunpack.c.l.b16 %v4456
    %v7263 = vunpack.c.h.b16 %v4456
    %v7264 = vunpack.c.l.b16 %v4457
    %v7265 = vunpack.c.h.b16 %v4457
    %v7266 = vunpack.c.l.b16 %v4458
    %v7267 = vunpack.c.h.b16 %v4458
    %v7268 = vunpack.c.l.b16 %v4459
    %v7269 = vunpack.c.h.b16 %v4459
    %v7270 = vunpack.c.l.b16 %v4460
    %v7271 = vunpack.c.h.b16 %v4460
    %v7272 = vunpack.c.l.b16 %v4461
    %v7273 = vunpack.c.h.b16 %v4461
    %v7274 = vunpack.c.l.b16 %v4462
    %v7275 = vunpack.c.h.b16 %v4462
    %v7276 = vunpack.c.l.b16 %v4463
    %v7277 = vunpack.c.h.b16 %v4463
    %v7278 = vunpack.c.l.b16 %v4464
    %v7279 = vunpack.c.h.b16 %v4464
    %v7280 = vunpack.c.l.b16 %v4465
    %v7281 = vunpack.c.h.b16 %v4465
    %v7282 = vunpack.c.l.b16 %v4466
    %v7283 = vunpack.c.h.b16 %v4466
    %v7284 = vunpack.c.l.b16 %v4467
    %v7285 = vunpack.c.h.b16 %v4467
    %v7286 = vunpack.c.l.b16 %v4468
    %v7287 = vunpack.c.h.b16 %v4468
    %v7288 = vunpack.c.l.b16 %v4469
    %v7289 = vunpack.c.h.b16 %v4469
    %v7290 = vunpack.c.l.b16 %v4470
    %v7291 = vunpack.c.h.b16 %v4470
    %v7292 = vunpack.c.l.b16 %v4471
    %v7293 = vunpack.c.h.b16 %v4471
    %v7294 = vunpack.c.l.b16 %v4472
    %v7295 = vunpack.c.h.b16 %v4472
    %v7296 = vunpack.c.l.b16 %v4473
    %v7297 = vunpack.c.h.b16 %v4473
    %v7298 = vunpack.c.l.b16 %v4474
    %v7299 = vunpack.c.h.b16 %v4474
    %v7300 = vunpack.c.l.b16 %v4475
    %v7301 = vunpack.c.h.b16 %v4475
    %v7302 = vunpack.c.l.b16 %v4476
    %v7303 = vunpack.c.h.b16 %v4476
    %v7304 = vunpack.c.l.b16 %v4477
    %v7305 = vunpack.c.h.b16 %v4477
    %v7306 = vunpack.c.l.b16 %v4478
    %v7307 = vunpack.c.h.b16 %v4478
    %v7308 = vunpack.c.l.b16 %v4479
    %v7309 = vunpack.c.h.b16 %v4479
    %v7310 = vunpack.c.l.b16 %v4480
    %v7311 = vunpack.c.h.b16 %v4480
    %v7312 = vunpack.c.l.b16 %v4481
    %v7313 = vunpack.c.h.b16 %v4481
    %v7314 = vunpack.c.l.b16 %v4482
    %v7315 = vunpack.c.h.b16 %v4482
    %v7316 = vunpack.c.l.b16 %v4483
    %v7317 = vunpack.c.h.b16 %v4483
    %v7318 = vunpack.c.l.b16 %v4484
    %v7319 = vunpack.c.h.b16 %v4484
    %v7320 = vunpack.c.l.b16 %v4485
    %v7321 = vunpack.c.h.b16 %v4485
    %v7322 = vunpack.c.l.b16 %v4486
    %v7323 = vunpack.c.h.b16 %v4486
    %v7324 = vunpack.c.l.b16 %v4487
    %v7325 = vunpack.c.h.b16 %v4487
    %v7326 = vunpack.c.l.b16 %v4488
    %v7327 = vunpack.c.h.b16 %v4488
    %v7328 = vunpack.c.l.b16 %v4489
    %v7329 = vunpack.c.h.b16 %v4489
    %v7330 = vunpack.c.l.b16 %v4490
    %v7331 = vunpack.c.h.b16 %v4490
    %v7332 = vunpack.c.l.b16 %v4491
    %v7333 = vunpack.c.h.b16 %v4491
    %v7334 = vunpack.c.l.b16 %v4492
    %v7335 = vunpack.c.h.b16 %v4492
    %v7336 = vunpack.c.l.b16 %v4493
    %v7337 = vunpack.c.h.b16 %v4493
    %v7338 = vunpack.c.l.b16 %v4494
    %v7339 = vunpack.c.h.b16 %v4494
    %v7340 = vunpack.c.l.b16 %v4495
    %v7341 = vunpack.c.h.b16 %v4495
    %v7342 = vunpack.c.l.b16 %v4496
    %v7343 = vunpack.c.h.b16 %v4496
    %v7344 = vunpack.c.l.b16 %v4497
    %v7345 = vunpack.c.h.b16 %v4497
    %v7346 = vunpack.c.l.b16 %v4498
    %v7347 = vunpack.c.h.b16 %v4498
    %v7348 = vunpack.c.l.b16 %v4499
    %v7349 = vunpack.c.h.b16 %v4499
    %v7350 = vunpack.c.l.b16 %v4500
    %v7351 = vunpack.c.h.b16 %v4500
    %v7352 = vunpack.c.l.b16 %v4501
    %v7353 = vunpack.c.h.b16 %v4501
    %v7354 = vunpack.c.l.b16 %v4502
    %v7355 = vunpack.c.h.b16 %v4502
    %v7356 = vunpack.c.l.b16 %v4503
    %v7357 = vunpack.c.h.b16 %v4503
    %v7358 = vunpack.c.l.b16 %v4504
    %v7359 = vunpack.c.h.b16 %v4504
    %v7360 = vunpack.c.l.b16 %v4505
    %v7361 = vunpack.c.h.b16 %v4505
    %v7362 = vunpack.c.l.b16 %v4506
    %v7363 = vunpack.c.h.b16 %v4506
    %v7364 = vunpack.c.l.b16 %v4507
    %v7365 = vunpack.c.h.b16 %v4507
    %v7366 = vunpack.c.l.b16 %v4508
    %v7367 = vunpack.c.h.b16 %v4508
    %v7368 = vunpack.c.l.b16 %v4509
    %v7369 = vunpack.c.h.b16 %v4509
    %v7370 = vunpack.c.l.b16 %v4510
    %v7371 = vunpack.c.h.b16 %v4510
    %v7372 = vunpack.c.l.b16 %v4511
    %v7373 = vunpack.c.h.b16 %v4511
    %v7374 = vunpack.c.l.b16 %v4512
    %v7375 = vunpack.c.h.b16 %v4512
    %v7376 = vunpack.c.l.b16 %v4513
    %v7377 = vunpack.c.h.b16 %v4513
    %v7378 = vunpack.c.l.b16 %v4514
    %v7379 = vunpack.c.h.b16 %v4514
    %v7380 = vunpack.c.l.b16 %v4515
    %v7381 = vunpack.c.h.b16 %v4515
    %v7382 = vunpack.c.l.b16 %v4516
    %v7383 = vunpack.c.h.b16 %v4516
    %v7384 = vunpack.c.l.b16 %v4517
    %v7385 = vunpack.c.h.b16 %v4517
    %v7386 = vunpack.c.l.b16 %v4518
    %v7387 = vunpack.c.h.b16 %v4518
    %v7388 = vunpack.c.l.b16 %v4519
    %v7389 = vunpack.c.h.b16 %v4519
    %v7390 = vunpack.c.l.b16 %v4520
    %v7391 = vunpack.c.h.b16 %v4520
    %v7392 = vunpack.c.l.b16 %v4521
    %v7393 = vunpack.c.h.b16 %v4521
    %v7394 = vunpack.c.l.b16 %v4522
    %v7395 = vunpack.c.h.b16 %v4522
    %v7396 = vunpack.c.l.b16 %v4523
    %v7397 = vunpack.c.h.b16 %v4523
    %v7398 = vunpack.c.l.b16 %v4524
    %v7399 = vunpack.c.h.b16 %v4524
    %v7400 = vunpack.c.l.b16 %v4525
    %v7401 = vunpack.c.h.b16 %v4525
    %v7402 = vunpack.c.l.b16 %v4526
    %v7403 = vunpack.c.h.b16 %v4526
    %v7404 = vunpack.c.l.b16 %v4527
    %v7405 = vunpack.c.h.b16 %v4527
    %v7406 = vunpack.c.l.b16 %v4528
    %v7407 = vunpack.c.h.b16 %v4528
    %v7408 = vunpack.c.l.b16 %v4529
    %v7409 = vunpack.c.h.b16 %v4529
    %v7410 = vunpack.c.l.b16 %v4530
    %v7411 = vunpack.c.h.b16 %v4530
    %v7412 = vunpack.c.l.b16 %v4531
    %v7413 = vunpack.c.h.b16 %v4531
    %v7414 = vunpack.c.l.b16 %v4532
    %v7415 = vunpack.c.h.b16 %v4532
    %v7416 = vunpack.c.l.b16 %v4533
    %v7417 = vunpack.c.h.b16 %v4533
    %v7418 = vunpack.c.l.b16 %v4534
    %v7419 = vunpack.c.h.b16 %v4534
    %v7420 = vunpack.c.l.b16 %v4535
    %v7421 = vunpack.c.h.b16 %v4535
    %v7422 = vunpack.c.l.b16 %v4536
    %v7423 = vunpack.c.h.b16 %v4536
    %v7424 = vunpack.c.l.b16 %v4537
    %v7425 = vunpack.c.h.b16 %v4537
    %v7426 = vunpack.c.l.b16 %v4538
    %v7427 = vunpack.c.h.b16 %v4538
    %v7428 = vunpack.c.l.b16 %v4539
    %v7429 = vunpack.c.h.b16 %v4539
    %v7430 = vunpack.c.l.b16 %v4540
    %v7431 = vunpack.c.h.b16 %v4540
    %v7432 = vunpack.c.l.b16 %v4541
    %v7433 = vunpack.c.h.b16 %v4541
    %v7434 = vunpack.c.l.b16 %v4542
    %v7435 = vunpack.c.h.b16 %v4542
    %v7436 = vunpack.c.l.b16 %v4543
    %v7437 = vunpack.c.h.b16 %v4543
    %v7438 = vunpack.c.l.b16 %v4544
    %v7439 = vunpack.c.h.b16 %v4544
    %v7440 = vunpack.c.l.b16 %v4545
    %v7441 = vunpack.c.h.b16 %v4545
    %v7442 = vunpack.c.l.b16 %v4546
    %v7443 = vunpack.c.h.b16 %v4546
    %v7444 = vunpack.c.l.b16 %v4547
    %v7445 = vunpack.c.h.b16 %v4547
    %v7446 = vunpack.c.l.b16 %v4548
    %v7447 = vunpack.c.h.b16 %v4548
    %v7448 = vunpack.c.l.b16 %v4549
    %v7449 = vunpack.c.h.b16 %v4549
    %v7450 = vunpack.c.l.b16 %v4550
    %v7451 = vunpack.c.h.b16 %v4550
    %v7452 = vunpack.c.l.b16 %v4551
    %v7453 = vunpack.c.h.b16 %v4551
    %v7454 = vunpack.c.l.b16 %v4552
    %v7455 = vunpack.c.h.b16 %v4552
    %v7456 = vunpack.c.l.b16 %v4553
    %v7457 = vunpack.c.h.b16 %v4553
    %v7458 = vunpack.c.l.b16 %v4554
    %v7459 = vunpack.c.h.b16 %v4554
    %v7460 = vunpack.c.l.b16 %v4555
    %v7461 = vunpack.c.h.b16 %v4555
    %v7462 = vunpack.c.l.b16 %v4556
    %v7463 = vunpack.c.h.b16 %v4556
    %v7464 = vunpack.c.l.b16 %v4557
    %v7465 = vunpack.c.h.b16 %v4557
    %v7466 = vunpack.c.l.b16 %v4558
    %v7467 = vunpack.c.h.b16 %v4558
    %v7468 = vunpack.c.l.b16 %v4559
    %v7469 = vunpack.c.h.b16 %v4559
    %v7470 = vunpack.c.l.b16 %v4560
    %v7471 = vunpack.c.h.b16 %v4560
    %v7472 = vunpack.c.l.b16 %v4561
    %v7473 = vunpack.c.h.b16 %v4561
    %v7474 = vunpack.c.l.b16 %v4562
    %v7475 = vunpack.c.h.b16 %v4562
    %v7476 = vunpack.c.l.b16 %v4563
    %v7477 = vunpack.c.h.b16 %v4563
    %v7478 = vunpack.c.l.b16 %v4564
    %v7479 = vunpack.c.h.b16 %v4564
    %v7480 = vunpack.c.l.b16 %v4565
    %v7481 = vunpack.c.h.b16 %v4565
    %v7482 = vunpack.c.l.b16 %v4566
    %v7483 = vunpack.c.h.b16 %v4566
    %v7484 = vunpack.c.l.b16 %v4567
    %v7485 = vunpack.c.h.b16 %v4567
    %v7486 = vunpack.c.l.b16 %v4568
    %v7487 = vunpack.c.h.b16 %v4568
    %v7488 = vunpack.c.l.b16 %v4569
    %v7489 = vunpack.c.h.b16 %v4569
    %v7490 = vunpack.c.l.b16 %v4570
    %v7491 = vunpack.c.h.b16 %v4570
    %v7492 = vunpack.c.l.b16 %v4571
    %v7493 = vunpack.c.h.b16 %v4571
    %v7494 = vunpack.c.l.b16 %v4572
    %v7495 = vunpack.c.h.b16 %v4572
    %v7496 = vunpack.c.l.b16 %v4573
    %v7497 = vunpack.c.h.b16 %v4573
    %v7498 = vunpack.c.l.b16 %v4574
    %v7499 = vunpack.c.h.b16 %v4574
    %v7500 = vunpack.c.l.b16 %v4575
    %v7501 = vunpack.c.h.b16 %v4575
    %v7502 = vunpack.c.l.b16 %v4576
    %v7503 = vunpack.c.h.b16 %v4576
    %v7504 = vunpack.c.l.b16 %v4577
    %v7505 = vunpack.c.h.b16 %v4577
    %v7506 = vunpack.c.l.b16 %v4578
    %v7507 = vunpack.c.h.b16 %v4578
    %v7508 = vunpack.c.l.b16 %v4579
    %v7509 = vunpack.c.h.b16 %v4579
    %v7510 = vunpack.c.l.b16 %v4580
    %v7511 = vunpack.c.h.b16 %v4580
    %v7512 = vunpack.c.l.b16 %v4581
    %v7513 = vunpack.c.h.b16 %v4581
    %v7514 = vunpack.c.l.b16 %v4582
    %v7515 = vunpack.c.h.b16 %v4582
    %v7516 = vunpack.c.l.b16 %v4583
    %v7517 = vunpack.c.h.b16 %v4583
    %v7518 = vunpack.c.l.b16 %v4584
    %v7519 = vunpack.c.h.b16 %v4584
    %v7520 = vunpack.c.l.b16 %v4585
    %v7521 = vunpack.c.h.b16 %v4585
    %v7522 = vunpack.c.l.b16 %v4586
    %v7523 = vunpack.c.h.b16 %v4586
    %v7524 = vunpack.c.l.b16 %v4587
    %v7525 = vunpack.c.h.b16 %v4587
    %v7526 = vunpack.c.l.b16 %v4588
    %v7527 = vunpack.c.h.b16 %v4588
    %v7528 = vunpack.c.l.b16 %v4589
    %v7529 = vunpack.c.h.b16 %v4589
    %v7530 = vunpack.c.l.b16 %v4590
    %v7531 = vunpack.c.h.b16 %v4590
    %v7532 = vunpack.c.l.b16 %v4591
    %v7533 = vunpack.c.h.b16 %v4591
    %v7534 = vunpack.c.l.b16 %v4592
    %v7535 = vunpack.c.h.b16 %v4592
    %v7536 = vunpack.c.l.b16 %v4593
    %v7537 = vunpack.c.h.b16 %v4593
    %v7538 = vunpack.c.l.b16 %v4594
    %v7539 = vunpack.c.h.b16 %v4594
    %v7540 = vunpack.c.l.b16 %v4595
    %v7541 = vunpack.c.h.b16 %v4595
    %v7542 = vunpack.c.l.b16 %v4596
    %v7543 = vunpack.c.h.b16 %v4596
    %v7544 = vunpack.c.l.b16 %v4597
    %v7545 = vunpack.c.h.b16 %v4597
    %v7546 = vunpack.c.l.b16 %v4598
    %v7547 = vunpack.c.h.b16 %v4598
    %v7548 = vunpack.c.l.b16 %v4599
    %v7549 = vunpack.c.h.b16 %v4599
    %v7550 = vunpack.c.l.b16 %v4600
    %v7551 = vunpack.c.h.b16 %v4600
    %v7552 = vunpack.c.l.b16 %v4601
    %v7553 = vunpack.c.h.b16 %v4601
    %v7554 = vunpack.c.l.b16 %v4602
    %v7555 = vunpack.c.h.b16 %v4602
    %v7556 = vunpack.c.l.b16 %v4603
    %v7557 = vunpack.c.h.b16 %v4603
    %v7558 = vunpack.c.l.b16 %v4604
    %v7559 = vunpack.c.h.b16 %v4604
    %v7560 = vunpack.c.l.b16 %v4605
    %v7561 = vunpack.c.h.b16 %v4605
    %v7562 = vunpack.c.l.b16 %v4606
    %v7563 = vunpack.c.h.b16 %v4606
    %v7564 = vunpack.c.l.b16 %v4607
    %v7565 = vunpack.c.h.b16 %v4607
    %v7566 = vunpack.c.l.b16 %v4608
    %v7567 = vunpack.c.h.b16 %v4608
    %v7568 = vunpack.c.l.b16 %v4609
    %v7569 = vunpack.c.h.b16 %v4609
    %v7570 = vunpack.c.l.b16 %v4610
    %v7571 = vunpack.c.h.b16 %v4610
    %v7572 = vunpack.c.l.b16 %v4611
    %v7573 = vunpack.c.h.b16 %v4611
    %v7574 = vunpack.c.l.b16 %v4612
    %v7575 = vunpack.c.h.b16 %v4612
    %v7576 = vunpack.c.l.b16 %v4613
    %v7577 = vunpack.c.h.b16 %v4613
    %v7578 = vunpack.c.l.b16 %v4614
    %v7579 = vunpack.c.h.b16 %v4614
    %v7580 = vunpack.c.l.b16 %v4615
    %v7581 = vunpack.c.h.b16 %v4615
    %v7582 = vunpack.c.l.b16 %v4616
    %v7583 = vunpack.c.h.b16 %v4616
    %v7584 = vunpack.c.l.b16 %v4617
    %v7585 = vunpack.c.h.b16 %v4617
    %v7586 = vunpack.c.l.b16 %v4618
    %v7587 = vunpack.c.h.b16 %v4618
    %v7588 = vunpack.c.l.b16 %v4619
    %v7589 = vunpack.c.h.b16 %v4619
    %v7590 = vunpack.c.l.b16 %v4620
    %v7591 = vunpack.c.h.b16 %v4620
    %v7592 = vunpack.c.l.b16 %v4621
    %v7593 = vunpack.c.h.b16 %v4621
    %v7594 = vunpack.c.l.b16 %v4622
    %v7595 = vunpack.c.h.b16 %v4622
    %v7596 = vunpack.c.l.b16 %v4623
    %v7597 = vunpack.c.h.b16 %v4623
    %v7598 = vunpack.c.l.b16 %v4624
    %v7599 = vunpack.c.h.b16 %v4624
    %v7600 = vunpack.c.l.b16 %v4625
    %v7601 = vunpack.c.h.b16 %v4625
    %v7602 = vunpack.c.l.b16 %v4626
    %v7603 = vunpack.c.h.b16 %v4626
    %v7604 = vunpack.c.l.b16 %v4627
    %v7605 = vunpack.c.h.b16 %v4627
    %v7606 = vunpack.c.l.b16 %v4628
    %v7607 = vunpack.c.h.b16 %v4628
    %v7608 = vunpack.c.l.b16 %v4629
    %v7609 = vunpack.c.h.b16 %v4629
    %v7610 = vunpack.c.l.b16 %v4630
    %v7611 = vunpack.c.h.b16 %v4630
    %v7612 = vunpack.c.l.b16 %v4631
    %v7613 = vunpack.c.h.b16 %v4631
    %v7614 = vunpack.c.l.b16 %v4632
    %v7615 = vunpack.c.h.b16 %v4632
    %v7616 = vunpack.c.l.b16 %v4633
    %v7617 = vunpack.c.h.b16 %v4633
    %v7618 = vunpack.c.l.b16 %v4634
    %v7619 = vunpack.c.h.b16 %v4634
    %v7620 = vunpack.c.l.b16 %v4635
    %v7621 = vunpack.c.h.b16 %v4635
    %v7622 = vunpack.c.l.b16 %v4636
    %v7623 = vunpack.c.h.b16 %v4636
    %v7624 = vunpack.c.l.b16 %v4637
    %v7625 = vunpack.c.h.b16 %v4637
    %v7626 = vunpack.c.l.b16 %v4638
    %v7627 = vunpack.c.h.b16 %v4638
    %v7628 = vunpack.c.l.b16 %v4639
    %v7629 = vunpack.c.h.b16 %v4639
    %v7630 = vunpack.c.l.b16 %v4640
    %v7631 = vunpack.c.h.b16 %v4640
    %v7632 = vunpack.c.l.b16 %v4641
    %v7633 = vunpack.c.h.b16 %v4641
    %v7634 = vunpack.c.l.b16 %v4642
    %v7635 = vunpack.c.h.b16 %v4642
    %v7636 = vunpack.c.l.b16 %v4643
    %v7637 = vunpack.c.h.b16 %v4643
    %v7638 = vunpack.c.l.b16 %v4644
    %v7639 = vunpack.c.h.b16 %v4644
    %v7640 = vunpack.c.l.b16 %v4645
    %v7641 = vunpack.c.h.b16 %v4645
    %v7642 = vunpack.c.l.b16 %v4646
    %v7643 = vunpack.c.h.b16 %v4646
    %v7644 = vunpack.c.l.b16 %v4647
    %v7645 = vunpack.c.h.b16 %v4647
    %v7646 = vunpack.c.l.b16 %v4648
    %v7647 = vunpack.c.h.b16 %v4648
    %v7648 = vunpack.c.l.b16 %v4649
    %v7649 = vunpack.c.h.b16 %v4649
    %v7650 = vunpack.c.l.b16 %v4650
    %v7651 = vunpack.c.h.b16 %v4650
    %v7652 = vunpack.c.l.b16 %v4651
    %v7653 = vunpack.c.h.b16 %v4651
    %v7654 = vunpack.c.l.b16 %v4652
    %v7655 = vunpack.c.h.b16 %v4652
    %v7656 = vunpack.c.l.b16 %v4653
    %v7657 = vunpack.c.h.b16 %v4653
    %v7658 = vunpack.c.l.b16 %v4654
    %v7659 = vunpack.c.h.b16 %v4654
    %v7660 = vunpack.c.l.b16 %v4655
    %v7661 = vunpack.c.h.b16 %v4655
    %v7662 = vunpack.c.l.b16 %v4656
    %v7663 = vunpack.c.h.b16 %v4656
    %v7664 = vunpack.c.l.b16 %v4657
    %v7665 = vunpack.c.h.b16 %v4657
    %v7666 = vunpack.c.l.b16 %v4658
    %v7667 = vunpack.c.h.b16 %v4658
    %v7668 = vunpack.c.l.b16 %v4659
    %v7669 = vunpack.c.h.b16 %v4659
    %v7670 = vunpack.c.l.b16 %v4660
    %v7671 = vunpack.c.h.b16 %v4660
    %v7672 = vunpack.c.l.b16 %v4661
    %v7673 = vunpack.c.h.b16 %v4661
    %v7674 = vunpack.c.l.b16 %v4662
    %v7675 = vunpack.c.h.b16 %v4662
    %v7676 = vunpack.c.l.b16 %v4663
    %v7677 = vunpack.c.h.b16 %v4663
    %v7678 = vunpack.c.l.b16 %v4664
    %v7679 = vunpack.c.h.b16 %v4664
    %v7680 = vunpack.c.l.b16 %v4665
    %v7681 = vunpack.c.h.b16 %v4665
    %v7682 = vunpack.c.l.b16 %v4666
    %v7683 = vunpack.c.h.b16 %v4666
    %v7684 = vunpack.c.l.b16 %v4667
    %v7685 = vunpack.c.h.b16 %v4667
    %v7686 = vunpack.c.l.b16 %v4668
    %v7687 = vunpack.c.h.b16 %v4668
    %v7688 = vunpack.c.l.b16 %v4669
    %v7689 = vunpack.c.h.b16 %v4669
    %v7690 = vunpack.c.l.b16 %v4670
    %v7691 = vunpack.c.h.b16 %v4670
    %v7692 = vunpack.c.l.b16 %v4671
    %v7693 = vunpack.c.h.b16 %v4671
    %v7694 = vunpack.c.l.b16 %v4672
    %v7695 = vunpack.c.h.b16 %v4672
    %v7696 = vunpack.c.l.b16 %v4673
    %v7697 = vunpack.c.h.b16 %v4673
    %v7698 = vunpack.c.l.b16 %v4674
    %v7699 = vunpack.c.h.b16 %v4674
    %v7700 = vunpack.c.l.b16 %v4675
    %v7701 = vunpack.c.h.b16 %v4675
    %v7702 = vunpack.c.l.b16 %v4676
    %v7703 = vunpack.c.h.b16 %v4676
    %v7704 = vunpack.c.l.b16 %v4677
    %v7705 = vunpack.c.h.b16 %v4677
    %v7706 = vunpack.c.l.b16 %v4678
    %v7707 = vunpack.c.h.b16 %v4678
    %v7708 = vunpack.c.l.b16 %v4679
    %v7709 = vunpack.c.h.b16 %v4679
    %v7710 = vunpack.c.l.b16 %v4680
    %v7711 = vunpack.c.h.b16 %v4680
    %v7712 = vunpack.c.l.b16 %v4681
    %v7713 = vunpack.c.h.b16 %v4681
    %v7714 = vunpack.c.l.b16 %v4682
    %v7715 = vunpack.c.h.b16 %v4682
    %v7716 = vunpack.c.l.b16 %v4683
    %v7717 = vunpack.c.h.b16 %v4683
    %v7718 = vunpack.c.l.b16 %v4684
    %v7719 = vunpack.c.h.b16 %v4684
    %v7720 = vunpack.c.l.b16 %v4685
    %v7721 = vunpack.c.h.b16 %v4685
    %v7722 = vunpack.c.l.b16 %v4686
    %v7723 = vunpack.c.h.b16 %v4686
    %v7724 = vunpack.c.l.b16 %v4687
    %v7725 = vunpack.c.h.b16 %v4687
    %v7726 = vunpack.c.l.b16 %v4688
    %v7727 = vunpack.c.h.b16 %v4688
    %v7728 = vunpack.c.l.b16 %v4689
    %v7729 = vunpack.c.h.b16 %v4689
    %v7730 = vunpack.c.l.b16 %v4690
    %v7731 = vunpack.c.h.b16 %v4690
    %v7732 = vunpack.c.l.b16 %v4691
    %v7733 = vunpack.c.h.b16 %v4691
    %v7734 = vunpack.c.l.b16 %v4692
    %v7735 = vunpack.c.h.b16 %v4692
    %v7736 = vunpack.c.l.b16 %v4693
    %v7737 = vunpack.c.h.b16 %v4693
    %v7738 = vunpack.c.l.b16 %v4694
    %v7739 = vunpack.c.h.b16 %v4694
    %v7740 = vunpack.c.l.b16 %v4695
    %v7741 = vunpack.c.h.b16 %v4695
    %v7742 = vunpack.c.l.b16 %v4696
    %v7743 = vunpack.c.h.b16 %v4696
    %v7744 = vunpack.c.l.b16 %v4697
    %v7745 = vunpack.c.h.b16 %v4697
    %v7746 = vunpack.c.l.b16 %v4698
    %v7747 = vunpack.c.h.b16 %v4698
    %v7748 = vunpack.c.l.b16 %v4699
    %v7749 = vunpack.c.h.b16 %v4699
    %v7750 = vunpack.c.l.b16 %v4700
    %v7751 = vunpack.c.h.b16 %v4700
    %v7752 = vunpack.c.l.b16 %v4701
    %v7753 = vunpack.c.h.b16 %v4701
    %v7754 = vunpack.c.l.b16 %v4702
    %v7755 = vunpack.c.h.b16 %v4702
    %v7756 = vunpack.c.l.b16 %v4703
    %v7757 = vunpack.c.h.b16 %v4703
    %v7758 = vunpack.c.l.b16 %v4704
    %v7759 = vunpack.c.h.b16 %v4704
    %v7760 = vunpack.c.l.b16 %v4705
    %v7761 = vunpack.c.h.b16 %v4705
    %v7762 = vunpack.c.l.b16 %v4706
    %v7763 = vunpack.c.h.b16 %v4706
    %v7764 = vunpack.c.l.b16 %v4707
    %v7765 = vunpack.c.h.b16 %v4707
    %v7766 = vunpack.c.l.b16 %v4708
    %v7767 = vunpack.c.h.b16 %v4708
    %v7768 = vunpack.c.l.b16 %v4709
    %v7769 = vunpack.c.h.b16 %v4709
    %v7770 = vunpack.c.l.b16 %v4710
    %v7771 = vunpack.c.h.b16 %v4710
    %v7772 = vunpack.c.l.b16 %v4711
    %v7773 = vunpack.c.h.b16 %v4711
    %v7774 = vunpack.c.l.b16 %v4712
    %v7775 = vunpack.c.h.b16 %v4712
    %v7776 = vunpack.c.l.b16 %v4713
    %v7777 = vunpack.c.h.b16 %v4713
    %v7778 = vunpack.c.l.b16 %v4714
    %v7779 = vunpack.c.h.b16 %v4714
    %v7780 = vunpack.c.l.b16 %v4715
    %v7781 = vunpack.c.h.b16 %v4715
    %v7782 = vunpack.c.l.b16 %v4716
    %v7783 = vunpack.c.h.b16 %v4716
    %v7784 = vunpack.c.l.b16 %v4717
    %v7785 = vunpack.c.h.b16 %v4717
    %v7786 = vunpack.c.l.b16 %v4718
    %v7787 = vunpack.c.h.b16 %v4718
    %v7788 = vunpack.c.l.b16 %v4719
    %v7789 = vunpack.c.h.b16 %v4719
    %v7790 = vunpack.c.l.b16 %v4720
    %v7791 = vunpack.c.h.b16 %v4720
    %v7792 = vunpack.c.l.b16 %v4721
    %v7793 = vunpack.c.h.b16 %v4721
    %v7794 = vunpack.c.l.b16 %v4722
    %v7795 = vunpack.c.h.b16 %v4722
    %v7796 = vunpack.c.l.b16 %v4723
    %v7797 = vunpack.c.h.b16 %v4723
    %v7798 = vunpack.c.l.b16 %v4724
    %v7799 = vunpack.c.h.b16 %v4724
    %v7800 = vunpack.c.l.b16 %v4725
    %v7801 = vunpack.c.h.b16 %v4725
    %v7802 = vunpack.c.l.b16 %v4726
    %v7803 = vunpack.c.h.b16 %v4726
    %v7804 = vunpack.c.l.b16 %v4727
    %v7805 = vunpack.c.h.b16 %v4727
    %v7806 = vunpack.c.l.b16 %v4728
    %v7807 = vunpack.c.h.b16 %v4728
    %v7808 = vunpack.c.l.b16 %v4729
    %v7809 = vunpack.c.h.b16 %v4729
    %v7810 = vunpack.c.l.b16 %v4730
    %v7811 = vunpack.c.h.b16 %v4730
    %v7812 = vunpack.c.l.b16 %v4731
    %v7813 = vunpack.c.h.b16 %v4731
    %v7814 = vpack.c.b16 %v5770, %v5766
    %v7815 = vpack.c.b16 %v5771, %v5767
    %v7816 = vpack.c.b16 %v5772, %v5768
    %v7817 = vpack.c.b16 %v5773, %v5769
    %v7818 = vpack.c.b16 %v5778, %v5774
    %v7819 = vpack.c.b16 %v5779, %v5775
    %v7820 = vpack.c.b16 %v5780, %v5776
    %v7821 = vpack.c.b16 %v5781, %v5777
    %v7822 = vpack.c.b16 %v5786, %v5782
    %v7823 = vpack.c.b16 %v5787, %v5783
    %v7824 = vpack.c.b16 %v5788, %v5784
    %v7825 = vpack.c.b16 %v5789, %v5785
    %v7826 = vpack.c.b16 %v5794, %v5790
    %v7827 = vpack.c.b16 %v5795, %v5791
    %v7828 = vpack.c.b16 %v5796, %v5792
    %v7829 = vpack.c.b16 %v5797, %v5793
    %v7830 = vpack.c.b16 %v5802, %v5798
    %v7831 = vpack.c.b16 %v5803, %v5799
    %v7832 = vpack.c.b16 %v5804, %v5800
    %v7833 = vpack.c.b16 %v5805, %v5801
    %v7834 = vpack.c.b16 %v5810, %v5806
    %v7835 = vpack.c.b16 %v5811, %v5807
    %v7836 = vpack.c.b16 %v5812, %v5808
    %v7837 = vpack.c.b16 %v5813, %v5809
    %v7838 = vpack.c.b16 %v5818, %v5814
    %v7839 = vpack.c.b16 %v5819, %v5815
    %v7840 = vpack.c.b16 %v5820, %v5816
    %v7841 = vpack.c.b16 %v5821, %v5817
    %v7842 = vpack.c.b16 %v5826, %v5822
    %v7843 = vpack.c.b16 %v5827, %v5823
    %v7844 = vpack.c.b16 %v5828, %v5824
    %v7845 = vpack.c.b16 %v5829, %v5825
    %v7846 = vpack.c.b16 %v5834, %v5830
    %v7847 = vpack.c.b16 %v5835, %v5831
    %v7848 = vpack.c.b16 %v5836, %v5832
    %v7849 = vpack.c.b16 %v5837, %v5833
    %v7850 = vpack.c.b16 %v5842, %v5838
    %v7851 = vpack.c.b16 %v5843, %v5839
    %v7852 = vpack.c.b16 %v5844, %v5840
    %v7853 = vpack.c.b16 %v5845, %v5841
    %v7854 = vpack.c.b16 %v5850, %v5846
    %v7855 = vpack.c.b16 %v5851, %v5847
    %v7856 = vpack.c.b16 %v5852, %v5848
    %v7857 = vpack.c.b16 %v5853, %v5849
    %v7858 = vpack.c.b16 %v5858, %v5854
    %v7859 = vpack.c.b16 %v5859, %v5855
    %v7860 = vpack.c.b16 %v5860, %v5856
    %v7861 = vpack.c.b16 %v5861, %v5857
    %v7862 = vpack.c.b16 %v5866, %v5862
    %v7863 = vpack.c.b16 %v5867, %v5863
    %v7864 = vpack.c.b16 %v5868, %v5864
    %v7865 = vpack.c.b16 %v5869, %v5865
    %v7866 = vpack.c.b16 %v5874, %v5870
    %v7867 = vpack.c.b16 %v5875, %v5871
    %v7868 = vpack.c.b16 %v5876, %v5872
    %v7869 = vpack.c.b16 %v5877, %v5873
    %v7870 = vpack.c.b16 %v5882, %v5878
    %v7871 = vpack.c.b16 %v5883, %v5879
    %v7872 = vpack.c.b16 %v5884, %v5880
    %v7873 = vpack.c.b16 %v5885, %v5881
    %v7874 = vpack.c.b16 %v5890, %v5886
    %v7875 = vpack.c.b16 %v5891, %v5887
    %v7876 = vpack.c.b16 %v5892, %v5888
    %v7877 = vpack.c.b16 %v5893, %v5889
    %v7878 = vpack.c.b16 %v5898, %v5894
    %v7879 = vpack.c.b16 %v5899, %v5895
    %v7880 = vpack.c.b16 %v5900, %v5896
    %v7881 = vpack.c.b16 %v5901, %v5897
    %v7882 = vpack.c.b16 %v5906, %v5902
    %v7883 = vpack.c.b16 %v5907, %v5903
    %v7884 = vpack.c.b16 %v5908, %v5904
    %v7885 = vpack.c.b16 %v5909, %v5905
    %v7886 = vpack.c.b16 %v5914, %v5910
    %v7887 = vpack.c.b16 %v5915, %v5911
    %v7888 = vpack.c.b16 %v5916, %v5912
    %v7889 = vpack.c.b16 %v5917, %v5913
    %v7890 = vpack.c.b16 %v5922, %v5918
    %v7891 = vpack.c.b16 %v5923, %v5919
    %v7892 = vpack.c.b16 %v5924, %v5920
    %v7893 = vpack.c.b16 %v5925, %v5921
    %v7894 = vpack.c.b16 %v5930, %v5926
    %v7895 = vpack.c.b16 %v5931, %v5927
    %v7896 = vpack.c.b16 %v5932, %v5928
    %v7897 = vpack.c.b16 %v5933, %v5929
    %v7898 = vpack.c.b16 %v5938, %v5934
    %v7899 = vpack.c.b16 %v5939, %v5935
    %v7900 = vpack.c.b16 %v5940, %v5936
    %v7901 = vpack.c.b16 %v5941, %v5937
    %v7902 = vpack.c.b16 %v5946, %v5942
    %v7903 = vpack.c.b16 %v5947, %v5943
    %v7904 = vpack.c.b16 %v5948, %v5944
    %v7905 = vpack.c.b16 %v5949, %v5945
    %v7906 = vpack.c.b16 %v5954, %v5950
    %v7907 = vpack.c.b16 %v5955, %v5951
    %v7908 = vpack.c.b16 %v5956, %v5952
    %v7909 = vpack.c.b16 %v5957, %v5953
    %v7910 = vpack.c.b16 %v5962, %v5958
    %v7911 = vpack.c.b16 %v5963, %v5959
    %v7912 = vpack.c.b16 %v5964, %v5960
    %v7913 = vpack.c.b16 %v5965, %v5961
    %v7914 = vpack.c.b16 %v5970, %v5966
    %v7915 = vpack.c.b16 %v5971, %v5967
    %v7916 = vpack.c.b16 %v5972, %v5968
    %v7917 = vpack.c.b16 %v5973, %v5969
    %v7918 = vpack.c.b16 %v5978, %v5974
    %v7919 = vpack.c.b16 %v5979, %v5975
    %v7920 = vpack.c.b16 %v5980, %v5976
    %v7921 = vpack.c.b16 %v5981, %v5977
    %v7922 = vpack.c.b16 %v5986, %v5982
    %v7923 = vpack.c.b16 %v5987, %v5983
    %v7924 = vpack.c.b16 %v5988, %v5984
    %v7925 = vpack.c.b16 %v5989, %v5985
    %v7926 = vpack.c.b16 %v5994, %v5990
    %v7927 = vpack.c.b16 %v5995, %v5991
    %v7928 = vpack.c.b16 %v5996, %v5992
    %v7929 = vpack.c.b16 %v5997, %v5993
    %v7930 = vpack.c.b16 %v6002, %v5998
    %v7931 = vpack.c.b16 %v6003, %v5999
    %v7932 = vpack.c.b16 %v6004, %v6000
    %v7933 = vpack.c.b16 %v6005, %v6001
    %v7934 = vpack.c.b16 %v6010, %v6006
    %v7935 = vpack.c.b16 %v6011, %v6007
    %v7936 = vpack.c.b16 %v6012, %v6008
    %v7937 = vpack.c.b16 %v6013, %v6009
    %v7938 = vpack.c.b16 %v6018, %v6014
    %v7939 = vpack.c.b16 %v6019, %v6015
    %v7940 = vpack.c.b16 %v6020, %v6016
    %v7941 = vpack.c.b16 %v6021, %v6017
    %v7942 = vpack.c.b16 %v6026, %v6022
    %v7943 = vpack.c.b16 %v6027, %v6023
    %v7944 = vpack.c.b16 %v6028, %v6024
    %v7945 = vpack.c.b16 %v6029, %v6025
    %v7946 = vpack.c.b16 %v6034, %v6030
    %v7947 = vpack.c.b16 %v6035, %v6031
    %v7948 = vpack.c.b16 %v6036, %v6032
    %v7949 = vpack.c.b16 %v6037, %v6033
    %v7950 = vpack.c.b16 %v6042, %v6038
    %v7951 = vpack.c.b16 %v6043, %v6039
    %v7952 = vpack.c.b16 %v6044, %v6040
    %v7953 = vpack.c.b16 %v6045, %v6041
    %v7954 = vpack.c.b16 %v6050, %v6046
    %v7955 = vpack.c.b16 %v6051, %v6047
    %v7956 = vpack.c.b16 %v6052, %v6048
    %v7957 = vpack.c.b16 %v6053, %v6049
    %v7958 = vpack.c.b16 %v6058, %v6054
    %v7959 = vpack.c.b16 %v6059, %v6055
    %v7960 = vpack.c.b16 %v6060, %v6056
    %v7961 = vpack.c.b16 %v6061, %v6057
    %v7962 = vpack.c.b16 %v6066, %v6062
    %v7963 = vpack.c.b16 %v6067, %v6063
    %v7964 = vpack.c.b16 %v6068, %v6064
    %v7965 = vpack.c.b16 %v6069, %v6065
    %v7966 = vpack.c.b16 %v6074, %v6070
    %v7967 = vpack.c.b16 %v6075, %v6071
    %v7968 = vpack.c.b16 %v6076, %v6072
    %v7969 = vpack.c.b16 %v6077, %v6073
    %v7970 = vpack.c.b16 %v6082, %v6078
    %v7971 = vpack.c.b16 %v6083, %v6079
    %v7972 = vpack.c.b16 %v6084, %v6080
    %v7973 = vpack.c.b16 %v6085, %v6081
    %v7974 = vpack.c.b16 %v6090, %v6086
    %v7975 = vpack.c.b16 %v6091, %v6087
    %v7976 = vpack.c.b16 %v6092, %v6088
    %v7977 = vpack.c.b16 %v6093, %v6089
    %v7978 = vpack.c.b16 %v6098, %v6094
    %v7979 = vpack.c.b16 %v6099, %v6095
    %v7980 = vpack.c.b16 %v6100, %v6096
    %v7981 = vpack.c.b16 %v6101, %v6097
    %v7982 = vpack.c.b16 %v6106, %v6102
    %v7983 = vpack.c.b16 %v6107, %v6103
    %v7984 = vpack.c.b16 %v6108, %v6104
    %v7985 = vpack.c.b16 %v6109, %v6105
    %v7986 = vpack.c.b16 %v6114, %v6110
    %v7987 = vpack.c.b16 %v6115, %v6111
    %v7988 = vpack.c.b16 %v6116, %v6112
    %v7989 = vpack.c.b16 %v6117, %v6113
    %v7990 = vpack.c.b16 %v6122, %v6118
    %v7991 = vpack.c.b16 %v6123, %v6119
    %v7992 = vpack.c.b16 %v6124, %v6120
    %v7993 = vpack.c.b16 %v6125, %v6121
    %v7994 = vpack.c.b16 %v6130, %v6126
    %v7995 = vpack.c.b16 %v6131, %v6127
    %v7996 = vpack.c.b16 %v6132, %v6128
    %v7997 = vpack.c.b16 %v6133, %v6129
    %v7998 = vpack.c.b16 %v6138, %v6134
    %v7999 = vpack.c.b16 %v6139, %v6135
    %v8000 = vpack.c.b16 %v6140, %v6136
    %v8001 = vpack.c.b16 %v6141, %v6137
    %v8002 = vpack.c.b16 %v6146, %v6142
    %v8003 = vpack.c.b16 %v6147, %v6143
    %v8004 = vpack.c.b16 %v6148, %v6144
    %v8005 = vpack.c.b16 %v6149, %v6145
    %v8006 = vpack.c.b16 %v6154, %v6150
    %v8007 = vpack.c.b16 %v6155, %v6151
    %v8008 = vpack.c.b16 %v6156, %v6152
    %v8009 = vpack.c.b16 %v6157, %v6153
    %v8010 = vpack.c.b16 %v6162, %v6158
    %v8011 = vpack.c.b16 %v6163, %v6159
    %v8012 = vpack.c.b16 %v6164, %v6160
    %v8013 = vpack.c.b16 %v6165, %v6161
    %v8014 = vpack.c.b16 %v6170, %v6166
    %v8015 = vpack.c.b16 %v6171, %v6167
    %v8016 = vpack.c.b16 %v6172, %v6168
    %v8017 = vpack.c.b16 %v6173, %v6169
    %v8018 = vpack.c.b16 %v6178, %v6174
    %v8019 = vpack.c.b16 %v6179, %v6175
    %v8020 = vpack.c.b16 %v6180, %v6176
    %v8021 = vpack.c.b16 %v6181, %v6177
    %v8022 = vpack.c.b16 %v6186, %v6182
    %v8023 = vpack.c.b16 %v6187, %v6183
    %v8024 = vpack.c.b16 %v6188, %v6184
    %v8025 = vpack.c.b16 %v6189, %v6185
    %v8026 = vpack.c.b16 %v6194, %v6190
    %v8027 = vpack.c.b16 %v6195, %v6191
    %v8028 = vpack.c.b16 %v6196, %v6192
    %v8029 = vpack.c.b16 %v6197, %v6193
    %v8030 = vpack.c.b16 %v6202, %v6198
    %v8031 = vpack.c.b16 %v6203, %v6199
    %v8032 = vpack.c.b16 %v6204, %v6200
    %v8033 = vpack.c.b16 %v6205, %v6201
    %v8034 = vpack.c.b16 %v6210, %v6206
    %v8035 = vpack.c.b16 %v6211, %v6207
    %v8036 = vpack.c.b16 %v6212, %v6208
    %v8037 = vpack.c.b16 %v6213, %v6209
    %v8038 = vpack.c.b16 %v6218, %v6214
    %v8039 = vpack.c.b16 %v6219, %v6215
    %v8040 = vpack.c.b16 %v6220, %v6216
    %v8041 = vpack.c.b16 %v6221, %v6217
    %v8042 = vpack.c.b16 %v6226, %v6222
    %v8043 = vpack.c.b16 %v6227, %v6223
    %v8044 = vpack.c.b16 %v6228, %v6224
    %v8045 = vpack.c.b16 %v6229, %v6225
    %v8046 = vpack.c.b16 %v6234, %v6230
    %v8047 = vpack.c.b16 %v6235, %v6231
    %v8048 = vpack.c.b16 %v6236, %v6232
    %v8049 = vpack.c.b16 %v6237, %v6233
    %v8050 = vpack.c.b16 %v6242, %v6238
    %v8051 = vpack.c.b16 %v6243, %v6239
    %v8052 = vpack.c.b16 %v6244, %v6240
    %v8053 = vpack.c.b16 %v6245, %v6241
    %v8054 = vpack.c.b16 %v6250, %v6246
    %v8055 = vpack.c.b16 %v6251, %v6247
    %v8056 = vpack.c.b16 %v6252, %v6248
    %v8057 = vpack.c.b16 %v6253, %v6249
    %v8058 = vpack.c.b16 %v6258, %v6254
    %v8059 = vpack.c.b16 %v6259, %v6255
    %v8060 = vpack.c.b16 %v6260, %v6256
    %v8061 = vpack.c.b16 %v6261, %v6257
    %v8062 = vpack.c.b16 %v6266, %v6262
    %v8063 = vpack.c.b16 %v6267, %v6263
    %v8064 = vpack.c.b16 %v6268, %v6264
    %v8065 = vpack.c.b16 %v6269, %v6265
    %v8066 = vpack.c.b16 %v6274, %v6270
    %v8067 = vpack.c.b16 %v6275, %v6271
    %v8068 = vpack.c.b16 %v6276, %v6272
    %v8069 = vpack.c.b16 %v6277, %v6273
    %v8070 = vpack.c.b16 %v6282, %v6278
    %v8071 = vpack.c.b16 %v6283, %v6279
    %v8072 = vpack.c.b16 %v6284, %v6280
    %v8073 = vpack.c.b16 %v6285, %v6281
    %v8074 = vpack.c.b16 %v6290, %v6286
    %v8075 = vpack.c.b16 %v6291, %v6287
    %v8076 = vpack.c.b16 %v6292, %v6288
    %v8077 = vpack.c.b16 %v6293, %v6289
    %v8078 = vpack.c.b16 %v6298, %v6294
    %v8079 = vpack.c.b16 %v6299, %v6295
    %v8080 = vpack.c.b16 %v6300, %v6296
    %v8081 = vpack.c.b16 %v6301, %v6297
    %v8082 = vpack.c.b16 %v6306, %v6302
    %v8083 = vpack.c.b16 %v6307, %v6303
    %v8084 = vpack.c.b16 %v6308, %v6304
    %v8085 = vpack.c.b16 %v6309, %v6305
    %v8086 = vpack.c.b16 %v6314, %v6310
    %v8087 = vpack.c.b16 %v6315, %v6311
    %v8088 = vpack.c.b16 %v6316, %v6312
    %v8089 = vpack.c.b16 %v6317, %v6313
    %v8090 = vpack.c.b16 %v6322, %v6318
    %v8091 = vpack.c.b16 %v6323, %v6319
    %v8092 = vpack.c.b16 %v6324, %v6320
    %v8093 = vpack.c.b16 %v6325, %v6321
    %v8094 = vpack.c.b16 %v6330, %v6326
    %v8095 = vpack.c.b16 %v6331, %v6327
    %v8096 = vpack.c.b16 %v6332, %v6328
    %v8097 = vpack.c.b16 %v6333, %v6329
    %v8098 = vpack.c.b16 %v6338, %v6334
    %v8099 = vpack.c.b16 %v6339, %v6335
    %v8100 = vpack.c.b16 %v6340, %v6336
    %v8101 = vpack.c.b16 %v6341, %v6337
    %v8102 = vpack.c.b16 %v6346, %v6342
    %v8103 = vpack.c.b16 %v6347, %v6343
    %v8104 = vpack.c.b16 %v6348, %v6344
    %v8105 = vpack.c.b16 %v6349, %v6345
    %v8106 = vpack.c.b16 %v6354, %v6350
    %v8107 = vpack.c.b16 %v6355, %v6351
    %v8108 = vpack.c.b16 %v6356, %v6352
    %v8109 = vpack.c.b16 %v6357, %v6353
    %v8110 = vpack.c.b16 %v6362, %v6358
    %v8111 = vpack.c.b16 %v6363, %v6359
    %v8112 = vpack.c.b16 %v6364, %v6360
    %v8113 = vpack.c.b16 %v6365, %v6361
    %v8114 = vpack.c.b16 %v6370, %v6366
    %v8115 = vpack.c.b16 %v6371, %v6367
    %v8116 = vpack.c.b16 %v6372, %v6368
    %v8117 = vpack.c.b16 %v6373, %v6369
    %v8118 = vpack.c.b16 %v6378, %v6374
    %v8119 = vpack.c.b16 %v6379, %v6375
    %v8120 = vpack.c.b16 %v6380, %v6376
    %v8121 = vpack.c.b16 %v6381, %v6377
    %v8122 = vpack.c.b16 %v6386, %v6382
    %v8123 = vpack.c.b16 %v6387, %v6383
    %v8124 = vpack.c.b16 %v6388, %v6384
    %v8125 = vpack.c.b16 %v6389, %v6385
    %v8126 = vpack.c.b16 %v6394, %v6390
    %v8127 = vpack.c.b16 %v6395, %v6391
    %v8128 = vpack.c.b16 %v6396, %v6392
    %v8129 = vpack.c.b16 %v6397, %v6393
    %v8130 = vpack.c.b16 %v6402, %v6398
    %v8131 = vpack.c.b16 %v6403, %v6399
    %v8132 = vpack.c.b16 %v6404, %v6400
    %v8133 = vpack.c.b16 %v6405, %v6401
    %v8134 = vpack.c.b16 %v6410, %v6406
    %v8135 = vpack.c.b16 %v6411, %v6407
    %v8136 = vpack.c.b16 %v6412, %v6408
    %v8137 = vpack.c.b16 %v6413, %v6409
    %v8138 = vpack.c.b16 %v6418, %v6414
    %v8139 = vpack.c.b16 %v6419, %v6415
    %v8140 = vpack.c.b16 %v6420, %v6416
    %v8141 = vpack.c.b16 %v6421, %v6417
    %v8142 = vpack.c.b16 %v6426, %v6422
    %v8143 = vpack.c.b16 %v6427, %v6423
    %v8144 = vpack.c.b16 %v6428, %v6424
    %v8145 = vpack.c.b16 %v6429, %v6425
    %v8146 = vpack.c.b16 %v6434, %v6430
    %v8147 = vpack.c.b16 %v6435, %v6431
    %v8148 = vpack.c.b16 %v6436, %v6432
    %v8149 = vpack.c.b16 %v6437, %v6433
    %v8150 = vpack.c.b16 %v6442, %v6438
    %v8151 = vpack.c.b16 %v6443, %v6439
    %v8152 = vpack.c.b16 %v6444, %v6440
    %v8153 = vpack.c.b16 %v6445, %v6441
    %v8154 = vpack.c.b16 %v6450, %v6446
    %v8155 = vpack.c.b16 %v6451, %v6447
    %v8156 = vpack.c.b16 %v6452, %v6448
    %v8157 = vpack.c.b16 %v6453, %v6449
    %v8158 = vpack.c.b16 %v6458, %v6454
    %v8159 = vpack.c.b16 %v6459, %v6455
    %v8160 = vpack.c.b16 %v6460, %v6456
    %v8161 = vpack.c.b16 %v6461, %v6457
    %v8162 = vpack.c.b16 %v6466, %v6462
    %v8163 = vpack.c.b16 %v6467, %v6463
    %v8164 = vpack.c.b16 %v6468, %v6464
    %v8165 = vpack.c.b16 %v6469, %v6465
    %v8166 = vpack.c.b16 %v6474, %v6470
    %v8167 = vpack.c.b16 %v6475, %v6471
    %v8168 = vpack.c.b16 %v6476, %v6472
    %v8169 = vpack.c.b16 %v6477, %v6473
    %v8170 = vpack.c.b16 %v6482, %v6478
    %v8171 = vpack.c.b16 %v6483, %v6479
    %v8172 = vpack.c.b16 %v6484, %v6480
    %v8173 = vpack.c.b16 %v6485, %v6481
    %v8174 = vpack.c.b16 %v6490, %v6486
    %v8175 = vpack.c.b16 %v6491, %v6487
    %v8176 = vpack.c.b16 %v6492, %v6488
    %v8177 = vpack.c.b16 %v6493, %v6489
    %v8178 = vpack.c.b16 %v6498, %v6494
    %v8179 = vpack.c.b16 %v6499, %v6495
    %v8180 = vpack.c.b16 %v6500, %v6496
    %v8181 = vpack.c.b16 %v6501, %v6497
    %v8182 = vpack.c.b16 %v6506, %v6502
    %v8183 = vpack.c.b16 %v6507, %v6503
    %v8184 = vpack.c.b16 %v6508, %v6504
    %v8185 = vpack.c.b16 %v6509, %v6505
    %v8186 = vpack.c.b16 %v6514, %v6510
    %v8187 = vpack.c.b16 %v6515, %v6511
    %v8188 = vpack.c.b16 %v6516, %v6512
    %v8189 = vpack.c.b16 %v6517, %v6513
    %v8190 = vpack.c.b16 %v6522, %v6518
    %v8191 = vpack.c.b16 %v6523, %v6519
    %v8192 = vpack.c.b16 %v6524, %v6520
    %v8193 = vpack.c.b16 %v6525, %v6521
    %v8194 = vpack.c.b16 %v6530, %v6526
    %v8195 = vpack.c.b16 %v6531, %v6527
    %v8196 = vpack.c.b16 %v6532, %v6528
    %v8197 = vpack.c.b16 %v6533, %v6529
    %v8198 = vpack.c.b16 %v6538, %v6534
    %v8199 = vpack.c.b16 %v6539, %v6535
    %v8200 = vpack.c.b16 %v6540, %v6536
    %v8201 = vpack.c.b16 %v6541, %v6537
    %v8202 = vpack.c.b16 %v6546, %v6542
    %v8203 = vpack.c.b16 %v6547, %v6543
    %v8204 = vpack.c.b16 %v6548, %v6544
    %v8205 = vpack.c.b16 %v6549, %v6545
    %v8206 = vpack.c.b16 %v6554, %v6550
    %v8207 = vpack.c.b16 %v6555, %v6551
    %v8208 = vpack.c.b16 %v6556, %v6552
    %v8209 = vpack.c.b16 %v6557, %v6553
    %v8210 = vpack.c.b16 %v6562, %v6558
    %v8211 = vpack.c.b16 %v6563, %v6559
    %v8212 = vpack.c.b16 %v6564, %v6560
    %v8213 = vpack.c.b16 %v6565, %v6561
    %v8214 = vpack.c.b16 %v6570, %v6566
    %v8215 = vpack.c.b16 %v6571, %v6567
    %v8216 = vpack.c.b16 %v6572, %v6568
    %v8217 = vpack.c.b16 %v6573, %v6569
    %v8218 = vpack.c.b16 %v6578, %v6574
    %v8219 = vpack.c.b16 %v6579, %v6575
    %v8220 = vpack.c.b16 %v6580, %v6576
    %v8221 = vpack.c.b16 %v6581, %v6577
    %v8222 = vpack.c.b16 %v6586, %v6582
    %v8223 = vpack.c.b16 %v6587, %v6583
    %v8224 = vpack.c.b16 %v6588, %v6584
    %v8225 = vpack.c.b16 %v6589, %v6585
    %v8226 = vpack.c.b16 %v6594, %v6590
    %v8227 = vpack.c.b16 %v6595, %v6591
    %v8228 = vpack.c.b16 %v6596, %v6592
    %v8229 = vpack.c.b16 %v6597, %v6593
    %v8230 = vpack.c.b16 %v6602, %v6598
    %v8231 = vpack.c.b16 %v6603, %v6599
    %v8232 = vpack.c.b16 %v6604, %v6600
    %v8233 = vpack.c.b16 %v6605, %v6601
    %v8234 = vpack.c.b16 %v6610, %v6606
    %v8235 = vpack.c.b16 %v6611, %v6607
    %v8236 = vpack.c.b16 %v6612, %v6608
    %v8237 = vpack.c.b16 %v6613, %v6609
    %v8238 = vpack.c.b16 %v6618, %v6614
    %v8239 = vpack.c.b16 %v6619, %v6615
    %v8240 = vpack.c.b16 %v6620, %v6616
    %v8241 = vpack.c.b16 %v6621, %v6617
    %v8242 = vpack.c.b16 %v6626, %v6622
    %v8243 = vpack.c.b16 %v6627, %v6623
    %v8244 = vpack.c.b16 %v6628, %v6624
    %v8245 = vpack.c.b16 %v6629, %v6625
    %v8246 = vpack.c.b16 %v6634, %v6630
    %v8247 = vpack.c.b16 %v6635, %v6631
    %v8248 = vpack.c.b16 %v6636, %v6632
    %v8249 = vpack.c.b16 %v6637, %v6633
    %v8250 = vpack.c.b16 %v6642, %v6638
    %v8251 = vpack.c.b16 %v6643, %v6639
    %v8252 = vpack.c.b16 %v6644, %v6640
    %v8253 = vpack.c.b16 %v6645, %v6641
    %v8254 = vpack.c.b16 %v6650, %v6646
    %v8255 = vpack.c.b16 %v6651, %v6647
    %v8256 = vpack.c.b16 %v6652, %v6648
    %v8257 = vpack.c.b16 %v6653, %v6649
    %v8258 = vpack.c.b16 %v6658, %v6654
    %v8259 = vpack.c.b16 %v6659, %v6655
    %v8260 = vpack.c.b16 %v6660, %v6656
    %v8261 = vpack.c.b16 %v6661, %v6657
    %v8262 = vpack.c.b16 %v6666, %v6662
    %v8263 = vpack.c.b16 %v6667, %v6663
    %v8264 = vpack.c.b16 %v6668, %v6664
    %v8265 = vpack.c.b16 %v6669, %v6665
    %v8266 = vpack.c.b16 %v6674, %v6670
    %v8267 = vpack.c.b16 %v6675, %v6671
    %v8268 = vpack.c.b16 %v6676, %v6672
    %v8269 = vpack.c.b16 %v6677, %v6673
    %v8270 = vpack.c.b16 %v6682, %v6678
    %v8271 = vpack.c.b16 %v6683, %v6679
    %v8272 = vpack.c.b16 %v6684, %v6680
    %v8273 = vpack.c.b16 %v6685, %v6681
    %v8274 = vpack.c.b16 %v6690, %v6686
    %v8275 = vpack.c.b16 %v6691, %v6687
    %v8276 = vpack.c.b16 %v6692, %v6688
    %v8277 = vpack.c.b16 %v6693, %v6689
    %v8278 = vpack.c.b16 %v6698, %v6694
    %v8279 = vpack.c.b16 %v6699, %v6695
    %v8280 = vpack.c.b16 %v6700, %v6696
    %v8281 = vpack.c.b16 %v6701, %v6697
    %v8282 = vpack.c.b16 %v6706, %v6702
    %v8283 = vpack.c.b16 %v6707, %v6703
    %v8284 = vpack.c.b16 %v6708, %v6704
    %v8285 = vpack.c.b16 %v6709, %v6705
    %v8286 = vpack.c.b16 %v6714, %v6710
    %v8287 = vpack.c.b16 %v6715, %v6711
    %v8288 = vpack.c.b16 %v6716, %v6712
    %v8289 = vpack.c.b16 %v6717, %v6713
    %v8290 = vpack.c.b16 %v6722, %v6718
    %v8291 = vpack.c.b16 %v6723, %v6719
    %v8292 = vpack.c.b16 %v6724, %v6720
    %v8293 = vpack.c.b16 %v6725, %v6721
    %v8294 = vpack.c.b16 %v6730, %v6726
    %v8295 = vpack.c.b16 %v6731, %v6727
    %v8296 = vpack.c.b16 %v6732, %v6728
    %v8297 = vpack.c.b16 %v6733, %v6729
    %v8298 = vpack.c.b16 %v6738, %v6734
    %v8299 = vpack.c.b16 %v6739, %v6735
    %v8300 = vpack.c.b16 %v6740, %v6736
    %v8301 = vpack.c.b16 %v6741, %v6737
    %v8302 = vpack.c.b16 %v6746, %v6742
    %v8303 = vpack.c.b16 %v6747, %v6743
    %v8304 = vpack.c.b16 %v6748, %v6744
    %v8305 = vpack.c.b16 %v6749, %v6745
    %v8306 = vpack.c.b16 %v6754, %v6750
    %v8307 = vpack.c.b16 %v6755, %v6751
    %v8308 = vpack.c.b16 %v6756, %v6752
    %v8309 = vpack.c.b16 %v6757, %v6753
    %v8310 = vpack.c.b16 %v6762, %v6758
    %v8311 = vpack.c.b16 %v6763, %v6759
    %v8312 = vpack.c.b16 %v6764, %v6760
    %v8313 = vpack.c.b16 %v6765, %v6761
    %v8314 = vpack.c.b16 %v6770, %v6766
    %v8315 = vpack.c.b16 %v6771, %v6767
    %v8316 = vpack.c.b16 %v6772, %v6768
    %v8317 = vpack.c.b16 %v6773, %v6769
    %v8318 = vpack.c.b16 %v6778, %v6774
    %v8319 = vpack.c.b16 %v6779, %v6775
    %v8320 = vpack.c.b16 %v6780, %v6776
    %v8321 = vpack.c.b16 %v6781, %v6777
    %v8322 = vpack.c.b16 %v6786, %v6782
    %v8323 = vpack.c.b16 %v6787, %v6783
    %v8324 = vpack.c.b16 %v6788, %v6784
    %v8325 = vpack.c.b16 %v6789, %v6785
    %v8326 = vpack.c.b16 %v6794, %v6790
    %v8327 = vpack.c.b16 %v6795, %v6791
    %v8328 = vpack.c.b16 %v6796, %v6792
    %v8329 = vpack.c.b16 %v6797, %v6793
    %v8330 = vpack.c.b16 %v6802, %v6798
    %v8331 = vpack.c.b16 %v6803, %v6799
    %v8332 = vpack.c.b16 %v6804, %v6800
    %v8333 = vpack.c.b16 %v6805, %v6801
    %v8334 = vpack.c.b16 %v6810, %v6806
    %v8335 = vpack.c.b16 %v6811, %v6807
    %v8336 = vpack.c.b16 %v6812, %v6808
    %v8337 = vpack.c.b16 %v6813, %v6809
    %v8338 = vpack.c.b16 %v6818, %v6814
    %v8339 = vpack.c.b16 %v6819, %v6815
    %v8340 = vpack.c.b16 %v6820, %v6816
    %v8341 = vpack.c.b16 %v6821, %v6817
    %v8342 = vpack.c.b16 %v6826, %v6822
    %v8343 = vpack.c.b16 %v6827, %v6823
    %v8344 = vpack.c.b16 %v6828, %v6824
    %v8345 = vpack.c.b16 %v6829, %v6825
    %v8346 = vpack.c.b16 %v6834, %v6830
    %v8347 = vpack.c.b16 %v6835, %v6831
    %v8348 = vpack.c.b16 %v6836, %v6832
    %v8349 = vpack.c.b16 %v6837, %v6833
    %v8350 = vpack.c.b16 %v6842, %v6838
    %v8351 = vpack.c.b16 %v6843, %v6839
    %v8352 = vpack.c.b16 %v6844, %v6840
    %v8353 = vpack.c.b16 %v6845, %v6841
    %v8354 = vpack.c.b16 %v6850, %v6846
    %v8355 = vpack.c.b16 %v6851, %v6847
    %v8356 = vpack.c.b16 %v6852, %v6848
    %v8357 = vpack.c.b16 %v6853, %v6849
    %v8358 = vpack.c.b16 %v6858, %v6854
    %v8359 = vpack.c.b16 %v6859, %v6855
    %v8360 = vpack.c.b16 %v6860, %v6856
    %v8361 = vpack.c.b16 %v6861, %v6857
    %v8362 = vpack.c.b16 %v6866, %v6862
    %v8363 = vpack.c.b16 %v6867, %v6863
    %v8364 = vpack.c.b16 %v6868, %v6864
    %v8365 = vpack.c.b16 %v6869, %v6865
    %v8366 = vpack.c.b16 %v6874, %v6870
    %v8367 = vpack.c.b16 %v6875, %v6871
    %v8368 = vpack.c.b16 %v6876, %v6872
    %v8369 = vpack.c.b16 %v6877, %v6873
    %v8370 = vpack.c.b16 %v6882, %v6878
    %v8371 = vpack.c.b16 %v6883, %v6879
    %v8372 = vpack.c.b16 %v6884, %v6880
    %v8373 = vpack.c.b16 %v6885, %v6881
    %v8374 = vpack.c.b16 %v6890, %v6886
    %v8375 = vpack.c.b16 %v6891, %v6887
    %v8376 = vpack.c.b16 %v6892, %v6888
    %v8377 = vpack.c.b16 %v6893, %v6889
    %v8378 = vpack.c.b16 %v6898, %v6894
    %v8379 = vpack.c.b16 %v6899, %v6895
    %v8380 = vpack.c.b16 %v6900, %v6896
    %v8381 = vpack.c.b16 %v6901, %v6897
    %v8382 = vpack.c.b16 %v6906, %v6902
    %v8383 = vpack.c.b16 %v6907, %v6903
    %v8384 = vpack.c.b16 %v6908, %v6904
    %v8385 = vpack.c.b16 %v6909, %v6905
    %v8386 = vpack.c.b16 %v6914, %v6910
    %v8387 = vpack.c.b16 %v6915, %v6911
    %v8388 = vpack.c.b16 %v6916, %v6912
    %v8389 = vpack.c.b16 %v6917, %v6913
    %v8390 = vpack.c.b16 %v6922, %v6918
    %v8391 = vpack.c.b16 %v6923, %v6919
    %v8392 = vpack.c.b16 %v6924, %v6920
    %v8393 = vpack.c.b16 %v6925, %v6921
    %v8394 = vpack.c.b16 %v6930, %v6926
    %v8395 = vpack.c.b16 %v6931, %v6927
    %v8396 = vpack.c.b16 %v6932, %v6928
    %v8397 = vpack.c.b16 %v6933, %v6929
    %v8398 = vpack.c.b16 %v6938, %v6934
    %v8399 = vpack.c.b16 %v6939, %v6935
    %v8400 = vpack.c.b16 %v6940, %v6936
    %v8401 = vpack.c.b16 %v6941, %v6937
    %v8402 = vpack.c.b16 %v6946, %v6942
    %v8403 = vpack.c.b16 %v6947, %v6943
    %v8404 = vpack.c.b16 %v6948, %v6944
    %v8405 = vpack.c.b16 %v6949, %v6945
    %v8406 = vpack.c.b16 %v6954, %v6950
    %v8407 = vpack.c.b16 %v6955, %v6951
    %v8408 = vpack.c.b16 %v6956, %v6952
    %v8409 = vpack.c.b16 %v6957, %v6953
    %v8410 = vpack.c.b16 %v6962, %v6958
    %v8411 = vpack.c.b16 %v6963, %v6959
    %v8412 = vpack.c.b16 %v6964, %v6960
    %v8413 = vpack.c.b16 %v6965, %v6961
    %v8414 = vpack.c.b16 %v6970, %v6966
    %v8415 = vpack.c.b16 %v6971, %v6967
    %v8416 = vpack.c.b16 %v6972, %v6968
    %v8417 = vpack.c.b16 %v6973, %v6969
    %v8418 = vpack.c.b16 %v6978, %v6974
    %v8419 = vpack.c.b16 %v6979, %v6975
    %v8420 = vpack.c.b16 %v6980, %v6976
    %v8421 = vpack.c.b16 %v6981, %v6977
    %v8422 = vpack.c.b16 %v6986, %v6982
    %v8423 = vpack.c.b16 %v6987, %v6983
    %v8424 = vpack.c.b16 %v6988, %v6984
    %v8425 = vpack.c.b16 %v6989, %v6985
    %v8426 = vpack.c.b16 %v6994, %v6990
    %v8427 = vpack.c.b16 %v6995, %v6991
    %v8428 = vpack.c.b16 %v6996, %v6992
    %v8429 = vpack.c.b16 %v6997, %v6993
    %v8430 = vpack.c.b16 %v7002, %v6998
    %v8431 = vpack.c.b16 %v7003, %v6999
    %v8432 = vpack.c.b16 %v7004, %v7000
    %v8433 = vpack.c.b16 %v7005, %v7001
    %v8434 = vpack.c.b16 %v7010, %v7006
    %v8435 = vpack.c.b16 %v7011, %v7007
    %v8436 = vpack.c.b16 %v7012, %v7008
    %v8437 = vpack.c.b16 %v7013, %v7009
    %v8438 = vpack.c.b16 %v7018, %v7014
    %v8439 = vpack.c.b16 %v7019, %v7015
    %v8440 = vpack.c.b16 %v7020, %v7016
    %v8441 = vpack.c.b16 %v7021, %v7017
    %v8442 = vpack.c.b16 %v7026, %v7022
    %v8443 = vpack.c.b16 %v7027, %v7023
    %v8444 = vpack.c.b16 %v7028, %v7024
    %v8445 = vpack.c.b16 %v7029, %v7025
    %v8446 = vpack.c.b16 %v7034, %v7030
    %v8447 = vpack.c.b16 %v7035, %v7031
    %v8448 = vpack.c.b16 %v7036, %v7032
    %v8449 = vpack.c.b16 %v7037, %v7033
    %v8450 = vpack.c.b16 %v7042, %v7038
    %v8451 = vpack.c.b16 %v7043, %v7039
    %v8452 = vpack.c.b16 %v7044, %v7040
    %v8453 = vpack.c.b16 %v7045, %v7041
    %v8454 = vpack.c.b16 %v7050, %v7046
    %v8455 = vpack.c.b16 %v7051, %v7047
    %v8456 = vpack.c.b16 %v7052, %v7048
    %v8457 = vpack.c.b16 %v7053, %v7049
    %v8458 = vpack.c.b16 %v7058, %v7054
    %v8459 = vpack.c.b16 %v7059, %v7055
    %v8460 = vpack.c.b16 %v7060, %v7056
    %v8461 = vpack.c.b16 %v7061, %v7057
    %v8462 = vpack.c.b16 %v7066, %v7062
    %v8463 = vpack.c.b16 %v7067, %v7063
    %v8464 = vpack.c.b16 %v7068, %v7064
    %v8465 = vpack.c.b16 %v7069, %v7065
    %v8466 = vpack.c.b16 %v7074, %v7070
    %v8467 = vpack.c.b16 %v7075, %v7071
    %v8468 = vpack.c.b16 %v7076, %v7072
    %v8469 = vpack.c.b16 %v7077, %v7073
    %v8470 = vpack.c.b16 %v7082, %v7078
    %v8471 = vpack.c.b16 %v7083, %v7079
    %v8472 = vpack.c.b16 %v7084, %v7080
    %v8473 = vpack.c.b16 %v7085, %v7081
    %v8474 = vpack.c.b16 %v7090, %v7086
    %v8475 = vpack.c.b16 %v7091, %v7087
    %v8476 = vpack.c.b16 %v7092, %v7088
    %v8477 = vpack.c.b16 %v7093, %v7089
    %v8478 = vpack.c.b16 %v7098, %v7094
    %v8479 = vpack.c.b16 %v7099, %v7095
    %v8480 = vpack.c.b16 %v7100, %v7096
    %v8481 = vpack.c.b16 %v7101, %v7097
    %v8482 = vpack.c.b16 %v7106, %v7102
    %v8483 = vpack.c.b16 %v7107, %v7103
    %v8484 = vpack.c.b16 %v7108, %v7104
    %v8485 = vpack.c.b16 %v7109, %v7105
    %v8486 = vpack.c.b16 %v7114, %v7110
    %v8487 = vpack.c.b16 %v7115, %v7111
    %v8488 = vpack.c.b16 %v7116, %v7112
    %v8489 = vpack.c.b16 %v7117, %v7113
    %v8490 = vpack.c.b16 %v7122, %v7118
    %v8491 = vpack.c.b16 %v7123, %v7119
    %v8492 = vpack.c.b16 %v7124, %v7120
    %v8493 = vpack.c.b16 %v7125, %v7121
    %v8494 = vpack.c.b16 %v7130, %v7126
    %v8495 = vpack.c.b16 %v7131, %v7127
    %v8496 = vpack.c.b16 %v7132, %v7128
    %v8497 = vpack.c.b16 %v7133, %v7129
    %v8498 = vpack.c.b16 %v7138, %v7134
    %v8499 = vpack.c.b16 %v7139, %v7135
    %v8500 = vpack.c.b16 %v7140, %v7136
    %v8501 = vpack.c.b16 %v7141, %v7137
    %v8502 = vpack.c.b16 %v7146, %v7142
    %v8503 = vpack.c.b16 %v7147, %v7143
    %v8504 = vpack.c.b16 %v7148, %v7144
    %v8505 = vpack.c.b16 %v7149, %v7145
    %v8506 = vpack.c.b16 %v7154, %v7150
    %v8507 = vpack.c.b16 %v7155, %v7151
    %v8508 = vpack.c.b16 %v7156, %v7152
    %v8509 = vpack.c.b16 %v7157, %v7153
    %v8510 = vpack.c.b16 %v7162, %v7158
    %v8511 = vpack.c.b16 %v7163, %v7159
    %v8512 = vpack.c.b16 %v7164, %v7160
    %v8513 = vpack.c.b16 %v7165, %v7161
    %v8514 = vpack.c.b16 %v7170, %v7166
    %v8515 = vpack.c.b16 %v7171, %v7167
    %v8516 = vpack.c.b16 %v7172, %v7168
    %v8517 = vpack.c.b16 %v7173, %v7169
    %v8518 = vpack.c.b16 %v7178, %v7174
    %v8519 = vpack.c.b16 %v7179, %v7175
    %v8520 = vpack.c.b16 %v7180, %v7176
    %v8521 = vpack.c.b16 %v7181, %v7177
    %v8522 = vpack.c.b16 %v7186, %v7182
    %v8523 = vpack.c.b16 %v7187, %v7183
    %v8524 = vpack.c.b16 %v7188, %v7184
    %v8525 = vpack.c.b16 %v7189, %v7185
    %v8526 = vpack.c.b16 %v7194, %v7190
    %v8527 = vpack.c.b16 %v7195, %v7191
    %v8528 = vpack.c.b16 %v7196, %v7192
    %v8529 = vpack.c.b16 %v7197, %v7193
    %v8530 = vpack.c.b16 %v7202, %v7198
    %v8531 = vpack.c.b16 %v7203, %v7199
    %v8532 = vpack.c.b16 %v7204, %v7200
    %v8533 = vpack.c.b16 %v7205, %v7201
    %v8534 = vpack.c.b16 %v7210, %v7206
    %v8535 = vpack.c.b16 %v7211, %v7207
    %v8536 = vpack.c.b16 %v7212, %v7208
    %v8537 = vpack.c.b16 %v7213, %v7209
    %v8538 = vpack.c.b16 %v7218, %v7214
    %v8539 = vpack.c.b16 %v7219, %v7215
    %v8540 = vpack.c.b16 %v7220, %v7216
    %v8541 = vpack.c.b16 %v7221, %v7217
    %v8542 = vpack.c.b16 %v7226, %v7222
    %v8543 = vpack.c.b16 %v7227, %v7223
    %v8544 = vpack.c.b16 %v7228, %v7224
    %v8545 = vpack.c.b16 %v7229, %v7225
    %v8546 = vpack.c.b16 %v7234, %v7230
    %v8547 = vpack.c.b16 %v7235, %v7231
    %v8548 = vpack.c.b16 %v7236, %v7232
    %v8549 = vpack.c.b16 %v7237, %v7233
    %v8550 = vpack.c.b16 %v7242, %v7238
    %v8551 = vpack.c.b16 %v7243, %v7239
    %v8552 = vpack.c.b16 %v7244, %v7240
    %v8553 = vpack.c.b16 %v7245, %v7241
    %v8554 = vpack.c.b16 %v7250, %v7246
    %v8555 = vpack.c.b16 %v7251, %v7247
    %v8556 = vpack.c.b16 %v7252, %v7248
    %v8557 = vpack.c.b16 %v7253, %v7249
    %v8558 = vpack.c.b16 %v7258, %v7254
    %v8559 = vpack.c.b16 %v7259, %v7255
    %v8560 = vpack.c.b16 %v7260, %v7256
    %v8561 = vpack.c.b16 %v7261, %v7257
    %v8562 = vpack.c.b16 %v7266, %v7262
    %v8563 = vpack.c.b16 %v7267, %v7263
    %v8564 = vpack.c.b16 %v7268, %v7264
    %v8565 = vpack.c.b16 %v7269, %v7265
    %v8566 = vpack.c.b16 %v7274, %v7270
    %v8567 = vpack.c.b16 %v7275, %v7271
    %v8568 = vpack.c.b16 %v7276, %v7272
    %v8569 = vpack.c.b16 %v7277, %v7273
    %v8570 = vpack.c.b16 %v7282, %v7278
    %v8571 = vpack.c.b16 %v7283, %v7279
    %v8572 = vpack.c.b16 %v7284, %v7280
    %v8573 = vpack.c.b16 %v7285, %v7281
    %v8574 = vpack.c.b16 %v7290, %v7286
    %v8575 = vpack.c.b16 %v7291, %v7287
    %v8576 = vpack.c.b16 %v7292, %v7288
    %v8577 = vpack.c.b16 %v7293, %v7289
    %v8578 = vpack.c.b16 %v7298, %v7294
    %v8579 = vpack.c.b16 %v7299, %v7295
    %v8580 = vpack.c.b16 %v7300, %v7296
    %v8581 = vpack.c.b16 %v7301, %v7297
    %v8582 = vpack.c.b16 %v7306, %v7302
    %v8583 = vpack.c.b16 %v7307, %v7303
    %v8584 = vpack.c.b16 %v7308, %v7304
    %v8585 = vpack.c.b16 %v7309, %v7305
    %v8586 = vpack.c.b16 %v7314, %v7310
    %v8587 = vpack.c.b16 %v7315, %v7311
    %v8588 = vpack.c.b16 %v7316, %v7312
    %v8589 = vpack.c.b16 %v7317, %v7313
    %v8590 = vpack.c.b16 %v7322, %v7318
    %v8591 = vpack.c.b16 %v7323, %v7319
    %v8592 = vpack.c.b16 %v7324, %v7320
    %v8593 = vpack.c.b16 %v7325, %v7321
    %v8594 = vpack.c.b16 %v7330, %v7326
    %v8595 = vpack.c.b16 %v7331, %v7327
    %v8596 = vpack.c.b16 %v7332, %v7328
    %v8597 = vpack.c.b16 %v7333, %v7329
    %v8598 = vpack.c.b16 %v7338, %v7334
    %v8599 = vpack.c.b16 %v7339, %v7335
    %v8600 = vpack.c.b16 %v7340, %v7336
    %v8601 = vpack.c.b16 %v7341, %v7337
    %v8602 = vpack.c.b16 %v7346, %v7342
    %v8603 = vpack.c.b16 %v7347, %v7343
    %v8604 = vpack.c.b16 %v7348, %v7344
    %v8605 = vpack.c.b16 %v7349, %v7345
    %v8606 = vpack.c.b16 %v7354, %v7350
    %v8607 = vpack.c.b16 %v7355, %v7351
    %v8608 = vpack.c.b16 %v7356, %v7352
    %v8609 = vpack.c.b16 %v7357, %v7353
    %v8610 = vpack.c.b16 %v7362, %v7358
    %v8611 = vpack.c.b16 %v7363, %v7359
    %v8612 = vpack.c.b16 %v7364, %v7360
    %v8613 = vpack.c.b16 %v7365, %v7361
    %v8614 = vpack.c.b16 %v7370, %v7366
    %v8615 = vpack.c.b16 %v7371, %v7367
    %v8616 = vpack.c.b16 %v7372, %v7368
    %v8617 = vpack.c.b16 %v7373, %v7369
    %v8618 = vpack.c.b16 %v7378, %v7374
    %v8619 = vpack.c.b16 %v7379, %v7375
    %v8620 = vpack.c.b16 %v7380, %v7376
    %v8621 = vpack.c.b16 %v7381, %v7377
    %v8622 = vpack.c.b16 %v7386, %v7382
    %v8623 = vpack.c.b16 %v7387, %v7383
    %v8624 = vpack.c.b16 %v7388, %v7384
    %v8625 = vpack.c.b16 %v7389, %v7385
    %v8626 = vpack.c.b16 %v7394, %v7390
    %v8627 = vpack.c.b16 %v7395, %v7391
    %v8628 = vpack.c.b16 %v7396, %v7392
    %v8629 = vpack.c.b16 %v7397, %v7393
    %v8630 = vpack.c.b16 %v7402, %v7398
    %v8631 = vpack.c.b16 %v7403, %v7399
    %v8632 = vpack.c.b16 %v7404, %v7400
    %v8633 = vpack.c.b16 %v7405, %v7401
    %v8634 = vpack.c.b16 %v7410, %v7406
    %v8635 = vpack.c.b16 %v7411, %v7407
    %v8636 = vpack.c.b16 %v7412, %v7408
    %v8637 = vpack.c.b16 %v7413, %v7409
    %v8638 = vpack.c.b16 %v7418, %v7414
    %v8639 = vpack.c.b16 %v7419, %v7415
    %v8640 = vpack.c.b16 %v7420, %v7416
    %v8641 = vpack.c.b16 %v7421, %v7417
    %v8642 = vpack.c.b16 %v7426, %v7422
    %v8643 = vpack.c.b16 %v7427, %v7423
    %v8644 = vpack.c.b16 %v7428, %v7424
    %v8645 = vpack.c.b16 %v7429, %v7425
    %v8646 = vpack.c.b16 %v7434, %v7430
    %v8647 = vpack.c.b16 %v7435, %v7431
    %v8648 = vpack.c.b16 %v7436, %v7432
    %v8649 = vpack.c.b16 %v7437, %v7433
    %v8650 = vpack.c.b16 %v7442, %v7438
    %v8651 = vpack.c.b16 %v7443, %v7439
    %v8652 = vpack.c.b16 %v7444, %v7440
    %v8653 = vpack.c.b16 %v7445, %v7441
    %v8654 = vpack.c.b16 %v7450, %v7446
    %v8655 = vpack.c.b16 %v7451, %v7447
    %v8656 = vpack.c.b16 %v7452, %v7448
    %v8657 = vpack.c.b16 %v7453, %v7449
    %v8658 = vpack.c.b16 %v7458, %v7454
    %v8659 = vpack.c.b16 %v7459, %v7455
    %v8660 = vpack.c.b16 %v7460, %v7456
    %v8661 = vpack.c.b16 %v7461, %v7457
    %v8662 = vpack.c.b16 %v7466, %v7462
    %v8663 = vpack.c.b16 %v7467, %v7463
    %v8664 = vpack.c.b16 %v7468, %v7464
    %v8665 = vpack.c.b16 %v7469, %v7465
    %v8666 = vpack.c.b16 %v7474, %v7470
    %v8667 = vpack.c.b16 %v7475, %v7471
    %v8668 = vpack.c.b16 %v7476, %v7472
    %v8669 = vpack.c.b16 %v7477, %v7473
    %v8670 = vpack.c.b16 %v7482, %v7478
    %v8671 = vpack.c.b16 %v7483, %v7479
    %v8672 = vpack.c.b16 %v7484, %v7480
    %v8673 = vpack.c.b16 %v7485, %v7481
    %v8674 = vpack.c.b16 %v7490, %v7486
    %v8675 = vpack.c.b16 %v7491, %v7487
    %v8676 = vpack.c.b16 %v7492, %v7488
    %v8677 = vpack.c.b16 %v7493, %v7489
    %v8678 = vpack.c.b16 %v7498, %v7494
    %v8679 = vpack.c.b16 %v7499, %v7495
    %v8680 = vpack.c.b16 %v7500, %v7496
    %v8681 = vpack.c.b16 %v7501, %v7497
    %v8682 = vpack.c.b16 %v7506, %v7502
    %v8683 = vpack.c.b16 %v7507, %v7503
    %v8684 = vpack.c.b16 %v7508, %v7504
    %v8685 = vpack.c.b16 %v7509, %v7505
    %v8686 = vpack.c.b16 %v7514, %v7510
    %v8687 = vpack.c.b16 %v7515, %v7511
    %v8688 = vpack.c.b16 %v7516, %v7512
    %v8689 = vpack.c.b16 %v7517, %v7513
    %v8690 = vpack.c.b16 %v7522, %v7518
    %v8691 = vpack.c.b16 %v7523, %v7519
    %v8692 = vpack.c.b16 %v7524, %v7520
    %v8693 = vpack.c.b16 %v7525, %v7521
    %v8694 = vpack.c.b16 %v7530, %v7526
    %v8695 = vpack.c.b16 %v7531, %v7527
    %v8696 = vpack.c.b16 %v7532, %v7528
    %v8697 = vpack.c.b16 %v7533, %v7529
    %v8698 = vpack.c.b16 %v7538, %v7534
    %v8699 = vpack.c.b16 %v7539, %v7535
    %v8700 = vpack.c.b16 %v7540, %v7536
    %v8701 = vpack.c.b16 %v7541, %v7537
    %v8702 = vpack.c.b16 %v7546, %v7542
    %v8703 = vpack.c.b16 %v7547, %v7543
    %v8704 = vpack.c.b16 %v7548, %v7544
    %v8705 = vpack.c.b16 %v7549, %v7545
    %v8706 = vpack.c.b16 %v7554, %v7550
    %v8707 = vpack.c.b16 %v7555, %v7551
    %v8708 = vpack.c.b16 %v7556, %v7552
    %v8709 = vpack.c.b16 %v7557, %v7553
    %v8710 = vpack.c.b16 %v7562, %v7558
    %v8711 = vpack.c.b16 %v7563, %v7559
    %v8712 = vpack.c.b16 %v7564, %v7560
    %v8713 = vpack.c.b16 %v7565, %v7561
    %v8714 = vpack.c.b16 %v7570, %v7566
    %v8715 = vpack.c.b16 %v7571, %v7567
    %v8716 = vpack.c.b16 %v7572, %v7568
    %v8717 = vpack.c.b16 %v7573, %v7569
    %v8718 = vpack.c.b16 %v7578, %v7574
    %v8719 = vpack.c.b16 %v7579, %v7575
    %v8720 = vpack.c.b16 %v7580, %v7576
    %v8721 = vpack.c.b16 %v7581, %v7577
    %v8722 = vpack.c.b16 %v7586, %v7582
    %v8723 = vpack.c.b16 %v7587, %v7583
    %v8724 = vpack.c.b16 %v7588, %v7584
    %v8725 = vpack.c.b16 %v7589, %v7585
    %v8726 = vpack.c.b16 %v7594, %v7590
    %v8727 = vpack.c.b16 %v7595, %v7591
    %v8728 = vpack.c.b16 %v7596, %v7592
    %v8729 = vpack.c.b16 %v7597, %v7593
    %v8730 = vpack.c.b16 %v7602, %v7598
    %v8731 = vpack.c.b16 %v7603, %v7599
    %v8732 = vpack.c.b16 %v7604, %v7600
    %v8733 = vpack.c.b16 %v7605, %v7601
    %v8734 = vpack.c.b16 %v7610, %v7606
    %v8735 = vpack.c.b16 %v7611, %v7607
    %v8736 = vpack.c.b16 %v7612, %v7608
    %v8737 = vpack.c.b16 %v7613, %v7609
    %v8738 = vpack.c.b16 %v7618, %v7614
    %v8739 = vpack.c.b16 %v7619, %v7615
    %v8740 = vpack.c.b16 %v7620, %v7616
    %v8741 = vpack.c.b16 %v7621, %v7617
    %v8742 = vpack.c.b16 %v7626, %v7622
    %v8743 = vpack.c.b16 %v7627, %v7623
    %v8744 = vpack.c.b16 %v7628, %v7624
    %v8745 = vpack.c.b16 %v7629, %v7625
    %v8746 = vpack.c.b16 %v7634, %v7630
    %v8747 = vpack.c.b16 %v7635, %v7631
    %v8748 = vpack.c.b16 %v7636, %v7632
    %v8749 = vpack.c.b16 %v7637, %v7633
    %v8750 = vpack.c.b16 %v7642, %v7638
    %v8751 = vpack.c.b16 %v7643, %v7639
    %v8752 = vpack.c.b16 %v7644, %v7640
    %v8753 = vpack.c.b16 %v7645, %v7641
    %v8754 = vpack.c.b16 %v7650, %v7646
    %v8755 = vpack.c.b16 %v7651, %v7647
    %v8756 = vpack.c.b16 %v7652, %v7648
    %v8757 = vpack.c.b16 %v7653, %v7649
    %v8758 = vpack.c.b16 %v7658, %v7654
    %v8759 = vpack.c.b16 %v7659, %v7655
    %v8760 = vpack.c.b16 %v7660, %v7656
    %v8761 = vpack.c.b16 %v7661, %v7657
    %v8762 = vpack.c.b16 %v7666, %v7662
    %v8763 = vpack.c.b16 %v7667, %v7663
    %v8764 = vpack.c.b16 %v7668, %v7664
    %v8765 = vpack.c.b16 %v7669, %v7665
    %v8766 = vpack.c.b16 %v7674, %v7670
    %v8767 = vpack.c.b16 %v7675, %v7671
    %v8768 = vpack.c.b16 %v7676, %v7672
    %v8769 = vpack.c.b16 %v7677, %v7673
    %v8770 = vpack.c.b16 %v7682, %v7678
    %v8771 = vpack.c.b16 %v7683, %v7679
    %v8772 = vpack.c.b16 %v7684, %v7680
    %v8773 = vpack.c.b16 %v7685, %v7681
    %v8774 = vpack.c.b16 %v7690, %v7686
    %v8775 = vpack.c.b16 %v7691, %v7687
    %v8776 = vpack.c.b16 %v7692, %v7688
    %v8777 = vpack.c.b16 %v7693, %v7689
    %v8778 = vpack.c.b16 %v7698, %v7694
    %v8779 = vpack.c.b16 %v7699, %v7695
    %v8780 = vpack.c.b16 %v7700, %v7696
    %v8781 = vpack.c.b16 %v7701, %v7697
    %v8782 = vpack.c.b16 %v7706, %v7702
    %v8783 = vpack.c.b16 %v7707, %v7703
    %v8784 = vpack.c.b16 %v7708, %v7704
    %v8785 = vpack.c.b16 %v7709, %v7705
    %v8786 = vpack.c.b16 %v7714, %v7710
    %v8787 = vpack.c.b16 %v7715, %v7711
    %v8788 = vpack.c.b16 %v7716, %v7712
    %v8789 = vpack.c.b16 %v7717, %v7713
    %v8790 = vpack.c.b16 %v7722, %v7718
    %v8791 = vpack.c.b16 %v7723, %v7719
    %v8792 = vpack.c.b16 %v7724, %v7720
    %v8793 = vpack.c.b16 %v7725, %v7721
    %v8794 = vpack.c.b16 %v7730, %v7726
    %v8795 = vpack.c.b16 %v7731, %v7727
    %v8796 = vpack.c.b16 %v7732, %v7728
    %v8797 = vpack.c.b16 %v7733, %v7729
    %v8798 = vpack.c.b16 %v7738, %v7734
    %v8799 = vpack.c.b16 %v7739, %v7735
    %v8800 = vpack.c.b16 %v7740, %v7736
    %v8801 = vpack.c.b16 %v7741, %v7737
    %v8802 = vpack.c.b16 %v7746, %v7742
    %v8803 = vpack.c.b16 %v7747, %v7743
    %v8804 = vpack.c.b16 %v7748, %v7744
    %v8805 = vpack.c.b16 %v7749, %v7745
    %v8806 = vpack.c.b16 %v7754, %v7750
    %v8807 = vpack.c.b16 %v7755, %v7751
    %v8808 = vpack.c.b16 %v7756, %v7752
    %v8809 = vpack.c.b16 %v7757, %v7753
    %v8810 = vpack.c.b16 %v7762, %v7758
    %v8811 = vpack.c.b16 %v7763, %v7759
    %v8812 = vpack.c.b16 %v7764, %v7760
    %v8813 = vpack.c.b16 %v7765, %v7761
    %v8814 = vpack.c.b16 %v7770, %v7766
    %v8815 = vpack.c.b16 %v7771, %v7767
    %v8816 = vpack.c.b16 %v7772, %v7768
    %v8817 = vpack.c.b16 %v7773, %v7769
    %v8818 = vpack.c.b16 %v7778, %v7774
    %v8819 = vpack.c.b16 %v7779, %v7775
    %v8820 = vpack.c.b16 %v7780, %v7776
    %v8821 = vpack.c.b16 %v7781, %v7777
    %v8822 = vpack.c.b16 %v7786, %v7782
    %v8823 = vpack.c.b16 %v7787, %v7783
    %v8824 = vpack.c.b16 %v7788, %v7784
    %v8825 = vpack.c.b16 %v7789, %v7785
    %v8826 = vpack.c.b16 %v7794, %v7790
    %v8827 = vpack.c.b16 %v7795, %v7791
    %v8828 = vpack.c.b16 %v7796, %v7792
    %v8829 = vpack.c.b16 %v7797, %v7793
    %v8830 = vpack.c.b16 %v7802, %v7798
    %v8831 = vpack.c.b16 %v7803, %v7799
    %v8832 = vpack.c.b16 %v7804, %v7800
    %v8833 = vpack.c.b16 %v7805, %v7801
    %v8834 = vpack.c.b16 %v7810, %v7806
    %v8835 = vpack.c.b16 %v7811, %v7807
    %v8836 = vpack.c.b16 %v7812, %v7808
    %v8837 = vpack.c.b16 %v7813, %v7809
    %9862 = vmatpush.bf16.msra.mxu0 %v7842
    %9863 = vmatpush.bf16.msra.mxu0 %v7838
    %9864 = vmatpush.bf16.msra.mxu0 %v7834
    %9865 = vmatpush.bf16.msra.mxu0 %v7830
    %9866 = vmatpush.bf16.msra.mxu0 %v7826
    %9867 = vmatpush.bf16.msra.mxu0 %v7822
    %9868 = vmatpush.bf16.msra.mxu0 %v7818
    %9869 = vmatpush.bf16.msra.mxu0 %v7814
    %9870 = vmatmul.bf16.gmra.mxu0 %v3676
    %v9871 = vpop.f32.mrf.mxu0
    %v9872 = vadd.f32 %v4734, %v9871
    %v9873 = vpop.f32.mrf.mxu0
    %9874 = vdwg.mxu0
    %9875 = vmatpush.bf16.msra.mxu0 %v7874
    %9876 = vmatpush.bf16.msra.mxu0 %v7870
    %9877 = vmatpush.bf16.msra.mxu0 %v7866
    %9878 = vmatpush.bf16.msra.mxu0 %v7862
    %9879 = vmatpush.bf16.msra.mxu0 %v7858
    %9880 = vmatpush.bf16.msra.mxu0 %v7854
    %9881 = vmatpush.bf16.msra.mxu0 %v7850
    %9882 = vmatpush.bf16.msra.mxu0 %v7846
    %9883 = vmatmul.bf16.gmra.mxu0 %v3677
    %v9884 = vpop.f32.mrf.mxu0
    %v9885 = vadd.f32 %v9872, %v9884
    %v9886 = vpop.f32.mrf.mxu0
    %9887 = vdwg.mxu0
    %9888 = vmatpush.bf16.msra.mxu0 %v7906
    %9889 = vmatpush.bf16.msra.mxu0 %v7902
    %9890 = vmatpush.bf16.msra.mxu0 %v7898
    %9891 = vmatpush.bf16.msra.mxu0 %v7894
    %9892 = vmatpush.bf16.msra.mxu0 %v7890
    %9893 = vmatpush.bf16.msra.mxu0 %v7886
    %9894 = vmatpush.bf16.msra.mxu0 %v7882
    %9895 = vmatpush.bf16.msra.mxu0 %v7878
    %9896 = vmatmul.bf16.gmra.mxu0 %v3678
    %v9897 = vpop.f32.mrf.mxu0
    %v9898 = vadd.f32 %v9885, %v9897
    %v9899 = vpop.f32.mrf.mxu0
    %9900 = vdwg.mxu0
    %9901 = vmatpush.bf16.msra.mxu0 %v7938
    %9902 = vmatpush.bf16.msra.mxu0 %v7934
    %9903 = vmatpush.bf16.msra.mxu0 %v7930
    %9904 = vmatpush.bf16.msra.mxu0 %v7926
    %9905 = vmatpush.bf16.msra.mxu0 %v7922
    %9906 = vmatpush.bf16.msra.mxu0 %v7918
    %9907 = vmatpush.bf16.msra.mxu0 %v7914
    %9908 = vmatpush.bf16.msra.mxu0 %v7910
    %9909 = vmatmul.bf16.gmra.mxu0 %v3679
    %v9910 = vpop.f32.mrf.mxu0
    %v9911 = vadd.f32 %v9898, %v9910
    %v9912 = vpop.f32.mrf.mxu0
    %9913 = vdwg.mxu0
    %9914 = vmatpush.bf16.msra.mxu0 %v7970
    %9915 = vmatpush.bf16.msra.mxu0 %v7966
    %9916 = vmatpush.bf16.msra.mxu0 %v7962
    %9917 = vmatpush.bf16.msra.mxu0 %v7958
    %9918 = vmatpush.bf16.msra.mxu0 %v7954
    %9919 = vmatpush.bf16.msra.mxu0 %v7950
    %9920 = vmatpush.bf16.msra.mxu0 %v7946
    %9921 = vmatpush.bf16.msra.mxu0 %v7942
    %9922 = vmatmul.bf16.gmra.mxu0 %v3680
    %v9923 = vpop.f32.mrf.mxu0
    %v9924 = vadd.f32 %v9911, %v9923
    %v9925 = vpop.f32.mrf.mxu0
    %9926 = vdwg.mxu0
    %9927 = vmatpush.bf16.msra.mxu0 %v8002
    %9928 = vmatpush.bf16.msra.mxu0 %v7998
    %9929 = vmatpush.bf16.msra.mxu0 %v7994
    %9930 = vmatpush.bf16.msra.mxu0 %v7990
    %9931 = vmatpush.bf16.msra.mxu0 %v7986
    %9932 = vmatpush.bf16.msra.mxu0 %v7982
    %9933 = vmatpush.bf16.msra.mxu0 %v7978
    %9934 = vmatpush.bf16.msra.mxu0 %v7974
    %9935 = vmatmul.bf16.gmra.mxu0 %v3681
    %v9936 = vpop.f32.mrf.mxu0
    %v9937 = vadd.f32 %v9924, %v9936
    %v9938 = vpop.f32.mrf.mxu0
    %9939 = vdwg.mxu0
    %9940 = vmatpush.bf16.msra.mxu0 %v8034
    %9941 = vmatpush.bf16.msra.mxu0 %v8030
    %9942 = vmatpush.bf16.msra.mxu0 %v8026
    %9943 = vmatpush.bf16.msra.mxu0 %v8022
    %9944 = vmatpush.bf16.msra.mxu0 %v8018
    %9945 = vmatpush.bf16.msra.mxu0 %v8014
    %9946 = vmatpush.bf16.msra.mxu0 %v8010
    %9947 = vmatpush.bf16.msra.mxu0 %v8006
    %9948 = vmatmul.bf16.gmra.mxu0 %v3682
    %v9949 = vpop.f32.mrf.mxu0
    %v9950 = vadd.f32 %v9937, %v9949
    %v9951 = vpop.f32.mrf.mxu0
    %9952 = vdwg.mxu0
    %9953 = vmatpush.bf16.msra.mxu0 %v8066
    %9954 = vmatpush.bf16.msra.mxu0 %v8062
    %9955 = vmatpush.bf16.msra.mxu0 %v8058
    %9956 = vmatpush.bf16.msra.mxu0 %v8054
    %9957 = vmatpush.bf16.msra.mxu0 %v8050
    %9958 = vmatpush.bf16.msra.mxu0 %v8046
    %9959 = vmatpush.bf16.msra.mxu0 %v8042
    %9960 = vmatpush.bf16.msra.mxu0 %v8038
    %9961 = vmatmul.bf16.gmra.mxu0 %v3683
    %v9962 = vpop.f32.mrf.mxu0
    %v9963 = vadd.f32 %v9950, %v9962
    %v9964 = vpop.f32.mrf.mxu0
    %9965 = vdwg.mxu0
    %9966 = vmatpush.bf16.msra.mxu0 %v8098
    %9967 = vmatpush.bf16.msra.mxu0 %v8094
    %9968 = vmatpush.bf16.msra.mxu0 %v8090
    %9969 = vmatpush.bf16.msra.mxu0 %v8086
    %9970 = vmatpush.bf16.msra.mxu0 %v8082
    %9971 = vmatpush.bf16.msra.mxu0 %v8078
    %9972 = vmatpush.bf16.msra.mxu0 %v8074
    %9973 = vmatpush.bf16.msra.mxu0 %v8070
    %9974 = vmatmul.bf16.gmra.mxu0 %v3684
    %v9975 = vpop.f32.mrf.mxu0
    %v9976 = vadd.f32 %v9963, %v9975
    %v9977 = vpop.f32.mrf.mxu0
    %9978 = vdwg.mxu0
    %9979 = vmatpush.bf16.msra.mxu0 %v8130
    %9980 = vmatpush.bf16.msra.mxu0 %v8126
    %9981 = vmatpush.bf16.msra.mxu0 %v8122
    %9982 = vmatpush.bf16.msra.mxu0 %v8118
    %9983 = vmatpush.bf16.msra.mxu0 %v8114
    %9984 = vmatpush.bf16.msra.mxu0 %v8110
    %9985 = vmatpush.bf16.msra.mxu0 %v8106
    %9986 = vmatpush.bf16.msra.mxu0 %v8102
    %9987 = vmatmul.bf16.gmra.mxu0 %v3685
    %v9988 = vpop.f32.mrf.mxu0
    %v9989 = vadd.f32 %v9976, %v9988
    %v9990 = vpop.f32.mrf.mxu0
    %9991 = vdwg.mxu0
    %9992 = vmatpush.bf16.msra.mxu0 %v8162
    %9993 = vmatpush.bf16.msra.mxu0 %v8158
    %9994 = vmatpush.bf16.msra.mxu0 %v8154
    %9995 = vmatpush.bf16.msra.mxu0 %v8150
    %9996 = vmatpush.bf16.msra.mxu0 %v8146
    %9997 = vmatpush.bf16.msra.mxu0 %v8142
    %9998 = vmatpush.bf16.msra.mxu0 %v8138
    %9999 = vmatpush.bf16.msra.mxu0 %v8134
    %10000 = vmatmul.bf16.gmra.mxu0 %v3686
    %v10001 = vpop.f32.mrf.mxu0
    %v10002 = vadd.f32 %v9989, %v10001
    %v10003 = vpop.f32.mrf.mxu0
    %10004 = vdwg.mxu0
    %10005 = vmatpush.bf16.msra.mxu0 %v8194
    %10006 = vmatpush.bf16.msra.mxu0 %v8190
    %10007 = vmatpush.bf16.msra.mxu0 %v8186
    %10008 = vmatpush.bf16.msra.mxu0 %v8182
    %10009 = vmatpush.bf16.msra.mxu0 %v8178
    %10010 = vmatpush.bf16.msra.mxu0 %v8174
    %10011 = vmatpush.bf16.msra.mxu0 %v8170
    %10012 = vmatpush.bf16.msra.mxu0 %v8166
    %10013 = vmatmul.bf16.gmra.mxu0 %v3687
    %v10014 = vpop.f32.mrf.mxu0
    %v10015 = vadd.f32 %v10002, %v10014
    %v10016 = vpop.f32.mrf.mxu0
    %10017 = vdwg.mxu0
    %10018 = vmatpush.bf16.msra.mxu0 %v8226
    %10019 = vmatpush.bf16.msra.mxu0 %v8222
    %10020 = vmatpush.bf16.msra.mxu0 %v8218
    %10021 = vmatpush.bf16.msra.mxu0 %v8214
    %10022 = vmatpush.bf16.msra.mxu0 %v8210
    %10023 = vmatpush.bf16.msra.mxu0 %v8206
    %10024 = vmatpush.bf16.msra.mxu0 %v8202
    %10025 = vmatpush.bf16.msra.mxu0 %v8198
    %10026 = vmatmul.bf16.gmra.mxu0 %v3688
    %v10027 = vpop.f32.mrf.mxu0
    %v10028 = vadd.f32 %v10015, %v10027
    %v10029 = vpop.f32.mrf.mxu0
    %10030 = vdwg.mxu0
    %10031 = vmatpush.bf16.msra.mxu0 %v8258
    %10032 = vmatpush.bf16.msra.mxu0 %v8254
    %10033 = vmatpush.bf16.msra.mxu0 %v8250
    %10034 = vmatpush.bf16.msra.mxu0 %v8246
    %10035 = vmatpush.bf16.msra.mxu0 %v8242
    %10036 = vmatpush.bf16.msra.mxu0 %v8238
    %10037 = vmatpush.bf16.msra.mxu0 %v8234
    %10038 = vmatpush.bf16.msra.mxu0 %v8230
    %10039 = vmatmul.bf16.gmra.mxu0 %v3689
    %v10040 = vpop.f32.mrf.mxu0
    %v10041 = vadd.f32 %v10028, %v10040
    %v10042 = vpop.f32.mrf.mxu0
    %10043 = vdwg.mxu0
    %10044 = vmatpush.bf16.msra.mxu0 %v8290
    %10045 = vmatpush.bf16.msra.mxu0 %v8286
    %10046 = vmatpush.bf16.msra.mxu0 %v8282
    %10047 = vmatpush.bf16.msra.mxu0 %v8278
    %10048 = vmatpush.bf16.msra.mxu0 %v8274
    %10049 = vmatpush.bf16.msra.mxu0 %v8270
    %10050 = vmatpush.bf16.msra.mxu0 %v8266
    %10051 = vmatpush.bf16.msra.mxu0 %v8262
    %10052 = vmatmul.bf16.gmra.mxu0 %v3690
    %v10053 = vpop.f32.mrf.mxu0
    %v10054 = vadd.f32 %v10041, %v10053
    %v10055 = vpop.f32.mrf.mxu0
    %10056 = vdwg.mxu0
    %10057 = vmatpush.bf16.msra.mxu0 %v8322
    %10058 = vmatpush.bf16.msra.mxu0 %v8318
    %10059 = vmatpush.bf16.msra.mxu0 %v8314
    %10060 = vmatpush.bf16.msra.mxu0 %v8310
    %10061 = vmatpush.bf16.msra.mxu0 %v8306
    %10062 = vmatpush.bf16.msra.mxu0 %v8302
    %10063 = vmatpush.bf16.msra.mxu0 %v8298
    %10064 = vmatpush.bf16.msra.mxu0 %v8294
    %10065 = vmatmul.bf16.gmra.mxu0 %v3691
    %v10066 = vpop.f32.mrf.mxu0
    %v10067 = vadd.f32 %v10054, %v10066
    %v10068 = vpop.f32.mrf.mxu0
    %10069 = vdwg.mxu0
    %10070 = vmatpush.bf16.msra.mxu0 %v8354
    %10071 = vmatpush.bf16.msra.mxu0 %v8350
    %10072 = vmatpush.bf16.msra.mxu0 %v8346
    %10073 = vmatpush.bf16.msra.mxu0 %v8342
    %10074 = vmatpush.bf16.msra.mxu0 %v8338
    %10075 = vmatpush.bf16.msra.mxu0 %v8334
    %10076 = vmatpush.bf16.msra.mxu0 %v8330
    %10077 = vmatpush.bf16.msra.mxu0 %v8326
    %10078 = vmatmul.bf16.gmra.mxu0 %v3692
    %v10079 = vpop.f32.mrf.mxu0
    %v10080 = vadd.f32 %v10067, %v10079
    %v10081 = vpop.f32.mrf.mxu0
    %10082 = vdwg.mxu0
    %10083 = vmatpush.bf16.msra.mxu0 %v8386
    %10084 = vmatpush.bf16.msra.mxu0 %v8382
    %10085 = vmatpush.bf16.msra.mxu0 %v8378
    %10086 = vmatpush.bf16.msra.mxu0 %v8374
    %10087 = vmatpush.bf16.msra.mxu0 %v8370
    %10088 = vmatpush.bf16.msra.mxu0 %v8366
    %10089 = vmatpush.bf16.msra.mxu0 %v8362
    %10090 = vmatpush.bf16.msra.mxu0 %v8358
    %10091 = vmatmul.bf16.gmra.mxu0 %v3693
    %v10092 = vpop.f32.mrf.mxu0
    %v10093 = vadd.f32 %v10080, %v10092
    %v10094 = vpop.f32.mrf.mxu0
    %10095 = vdwg.mxu0
    %10096 = vmatpush.bf16.msra.mxu0 %v8418
    %10097 = vmatpush.bf16.msra.mxu0 %v8414
    %10098 = vmatpush.bf16.msra.mxu0 %v8410
    %10099 = vmatpush.bf16.msra.mxu0 %v8406
    %10100 = vmatpush.bf16.msra.mxu0 %v8402
    %10101 = vmatpush.bf16.msra.mxu0 %v8398
    %10102 = vmatpush.bf16.msra.mxu0 %v8394
    %10103 = vmatpush.bf16.msra.mxu0 %v8390
    %10104 = vmatmul.bf16.gmra.mxu0 %v3694
    %v10105 = vpop.f32.mrf.mxu0
    %v10106 = vadd.f32 %v10093, %v10105
    %v10107 = vpop.f32.mrf.mxu0
    %10108 = vdwg.mxu0
    %10109 = vmatpush.bf16.msra.mxu0 %v8450
    %10110 = vmatpush.bf16.msra.mxu0 %v8446
    %10111 = vmatpush.bf16.msra.mxu0 %v8442
    %10112 = vmatpush.bf16.msra.mxu0 %v8438
    %10113 = vmatpush.bf16.msra.mxu0 %v8434
    %10114 = vmatpush.bf16.msra.mxu0 %v8430
    %10115 = vmatpush.bf16.msra.mxu0 %v8426
    %10116 = vmatpush.bf16.msra.mxu0 %v8422
    %10117 = vmatmul.bf16.gmra.mxu0 %v3695
    %v10118 = vpop.f32.mrf.mxu0
    %v10119 = vadd.f32 %v10106, %v10118
    %v10120 = vpop.f32.mrf.mxu0
    %10121 = vdwg.mxu0
    %10122 = vmatpush.bf16.msra.mxu0 %v8482
    %10123 = vmatpush.bf16.msra.mxu0 %v8478
    %10124 = vmatpush.bf16.msra.mxu0 %v8474
    %10125 = vmatpush.bf16.msra.mxu0 %v8470
    %10126 = vmatpush.bf16.msra.mxu0 %v8466
    %10127 = vmatpush.bf16.msra.mxu0 %v8462
    %10128 = vmatpush.bf16.msra.mxu0 %v8458
    %10129 = vmatpush.bf16.msra.mxu0 %v8454
    %10130 = vmatmul.bf16.gmra.mxu0 %v3696
    %v10131 = vpop.f32.mrf.mxu0
    %v10132 = vadd.f32 %v10119, %v10131
    %v10133 = vpop.f32.mrf.mxu0
    %10134 = vdwg.mxu0
    %10135 = vmatpush.bf16.msra.mxu0 %v8514
    %10136 = vmatpush.bf16.msra.mxu0 %v8510
    %10137 = vmatpush.bf16.msra.mxu0 %v8506
    %10138 = vmatpush.bf16.msra.mxu0 %v8502
    %10139 = vmatpush.bf16.msra.mxu0 %v8498
    %10140 = vmatpush.bf16.msra.mxu0 %v8494
    %10141 = vmatpush.bf16.msra.mxu0 %v8490
    %10142 = vmatpush.bf16.msra.mxu0 %v8486
    %10143 = vmatmul.bf16.gmra.mxu0 %v3697
    %v10144 = vpop.f32.mrf.mxu0
    %v10145 = vadd.f32 %v10132, %v10144
    %v10146 = vpop.f32.mrf.mxu0
    %10147 = vdwg.mxu0
    %10148 = vmatpush.bf16.msra.mxu0 %v8546
    %10149 = vmatpush.bf16.msra.mxu0 %v8542
    %10150 = vmatpush.bf16.msra.mxu0 %v8538
    %10151 = vmatpush.bf16.msra.mxu0 %v8534
    %10152 = vmatpush.bf16.msra.mxu0 %v8530
    %10153 = vmatpush.bf16.msra.mxu0 %v8526
    %10154 = vmatpush.bf16.msra.mxu0 %v8522
    %10155 = vmatpush.bf16.msra.mxu0 %v8518
    %10156 = vmatmul.bf16.gmra.mxu0 %v3698
    %v10157 = vpop.f32.mrf.mxu0
    %v10158 = vadd.f32 %v10145, %v10157
    %v10159 = vpop.f32.mrf.mxu0
    %10160 = vdwg.mxu0
    %10161 = vmatpush.bf16.msra.mxu0 %v8578
    %10162 = vmatpush.bf16.msra.mxu0 %v8574
    %10163 = vmatpush.bf16.msra.mxu0 %v8570
    %10164 = vmatpush.bf16.msra.mxu0 %v8566
    %10165 = vmatpush.bf16.msra.mxu0 %v8562
    %10166 = vmatpush.bf16.msra.mxu0 %v8558
    %10167 = vmatpush.bf16.msra.mxu0 %v8554
    %10168 = vmatpush.bf16.msra.mxu0 %v8550
    %10169 = vmatmul.bf16.gmra.mxu0 %v3699
    %v10170 = vpop.f32.mrf.mxu0
    %v10171 = vadd.f32 %v10158, %v10170
    %v10172 = vpop.f32.mrf.mxu0
    %10173 = vdwg.mxu0
    %10174 = vmatpush.bf16.msra.mxu0 %v8610
    %10175 = vmatpush.bf16.msra.mxu0 %v8606
    %10176 = vmatpush.bf16.msra.mxu0 %v8602
    %10177 = vmatpush.bf16.msra.mxu0 %v8598
    %10178 = vmatpush.bf16.msra.mxu0 %v8594
    %10179 = vmatpush.bf16.msra.mxu0 %v8590
    %10180 = vmatpush.bf16.msra.mxu0 %v8586
    %10181 = vmatpush.bf16.msra.mxu0 %v8582
    %10182 = vmatmul.bf16.gmra.mxu0 %v3700
    %v10183 = vpop.f32.mrf.mxu0
    %v10184 = vadd.f32 %v10171, %v10183
    %v10185 = vpop.f32.mrf.mxu0
    %10186 = vdwg.mxu0
    %10187 = vmatpush.bf16.msra.mxu0 %v8642
    %10188 = vmatpush.bf16.msra.mxu0 %v8638
    %10189 = vmatpush.bf16.msra.mxu0 %v8634
    %10190 = vmatpush.bf16.msra.mxu0 %v8630
    %10191 = vmatpush.bf16.msra.mxu0 %v8626
    %10192 = vmatpush.bf16.msra.mxu0 %v8622
    %10193 = vmatpush.bf16.msra.mxu0 %v8618
    %10194 = vmatpush.bf16.msra.mxu0 %v8614
    %10195 = vmatmul.bf16.gmra.mxu0 %v3701
    %v10196 = vpop.f32.mrf.mxu0
    %v10197 = vadd.f32 %v10184, %v10196
    %v10198 = vpop.f32.mrf.mxu0
    %10199 = vdwg.mxu0
    %10200 = vmatpush.bf16.msra.mxu0 %v8674
    %10201 = vmatpush.bf16.msra.mxu0 %v8670
    %10202 = vmatpush.bf16.msra.mxu0 %v8666
    %10203 = vmatpush.bf16.msra.mxu0 %v8662
    %10204 = vmatpush.bf16.msra.mxu0 %v8658
    %10205 = vmatpush.bf16.msra.mxu0 %v8654
    %10206 = vmatpush.bf16.msra.mxu0 %v8650
    %10207 = vmatpush.bf16.msra.mxu0 %v8646
    %10208 = vmatmul.bf16.gmra.mxu0 %v3702
    %v10209 = vpop.f32.mrf.mxu0
    %v10210 = vadd.f32 %v10197, %v10209
    %v10211 = vpop.f32.mrf.mxu0
    %10212 = vdwg.mxu0
    %10213 = vmatpush.bf16.msra.mxu0 %v8706
    %10214 = vmatpush.bf16.msra.mxu0 %v8702
    %10215 = vmatpush.bf16.msra.mxu0 %v8698
    %10216 = vmatpush.bf16.msra.mxu0 %v8694
    %10217 = vmatpush.bf16.msra.mxu0 %v8690
    %10218 = vmatpush.bf16.msra.mxu0 %v8686
    %10219 = vmatpush.bf16.msra.mxu0 %v8682
    %10220 = vmatpush.bf16.msra.mxu0 %v8678
    %10221 = vmatmul.bf16.gmra.mxu0 %v3703
    %v10222 = vpop.f32.mrf.mxu0
    %v10223 = vadd.f32 %v10210, %v10222
    %v10224 = vpop.f32.mrf.mxu0
    %10225 = vdwg.mxu0
    %10226 = vmatpush.bf16.msra.mxu0 %v8738
    %10227 = vmatpush.bf16.msra.mxu0 %v8734
    %10228 = vmatpush.bf16.msra.mxu0 %v8730
    %10229 = vmatpush.bf16.msra.mxu0 %v8726
    %10230 = vmatpush.bf16.msra.mxu0 %v8722
    %10231 = vmatpush.bf16.msra.mxu0 %v8718
    %10232 = vmatpush.bf16.msra.mxu0 %v8714
    %10233 = vmatpush.bf16.msra.mxu0 %v8710
    %10234 = vmatmul.bf16.gmra.mxu0 %v3704
    %v10235 = vpop.f32.mrf.mxu0
    %v10236 = vadd.f32 %v10223, %v10235
    %v10237 = vpop.f32.mrf.mxu0
    %10238 = vdwg.mxu0
    %10239 = vmatpush.bf16.msra.mxu0 %v8770
    %10240 = vmatpush.bf16.msra.mxu0 %v8766
    %10241 = vmatpush.bf16.msra.mxu0 %v8762
    %10242 = vmatpush.bf16.msra.mxu0 %v8758
    %10243 = vmatpush.bf16.msra.mxu0 %v8754
    %10244 = vmatpush.bf16.msra.mxu0 %v8750
    %10245 = vmatpush.bf16.msra.mxu0 %v8746
    %10246 = vmatpush.bf16.msra.mxu0 %v8742
    %10247 = vmatmul.bf16.gmra.mxu0 %v3705
    %v10248 = vpop.f32.mrf.mxu0
    %v10249 = vadd.f32 %v10236, %v10248
    %v10250 = vpop.f32.mrf.mxu0
    %10251 = vdwg.mxu0
    %10252 = vmatpush.bf16.msra.mxu0 %v8802
    %10253 = vmatpush.bf16.msra.mxu0 %v8798
    %10254 = vmatpush.bf16.msra.mxu0 %v8794
    %10255 = vmatpush.bf16.msra.mxu0 %v8790
    %10256 = vmatpush.bf16.msra.mxu0 %v8786
    %10257 = vmatpush.bf16.msra.mxu0 %v8782
    %10258 = vmatpush.bf16.msra.mxu0 %v8778
    %10259 = vmatpush.bf16.msra.mxu0 %v8774
    %10260 = vmatmul.bf16.gmra.mxu0 %v3706
    %v10261 = vpop.f32.mrf.mxu0
    %v10262 = vadd.f32 %v10249, %v10261
    %v10263 = vpop.f32.mrf.mxu0
    %10264 = vdwg.mxu0
    %10265 = vmatpush.bf16.msra.mxu0 %v8834
    %10266 = vmatpush.bf16.msra.mxu0 %v8830
    %10267 = vmatpush.bf16.msra.mxu0 %v8826
    %10268 = vmatpush.bf16.msra.mxu0 %v8822
    %10269 = vmatpush.bf16.msra.mxu0 %v8818
    %10270 = vmatpush.bf16.msra.mxu0 %v8814
    %10271 = vmatpush.bf16.msra.mxu0 %v8810
    %10272 = vmatpush.bf16.msra.mxu0 %v8806
    %10273 = vmatmul.bf16.gmra.mxu0 %v3707
    %v10274 = vpop.f32.mrf.mxu0
    %v10275 = vadd.f32 %v10262, %v10274
    %v10276 = vpop.f32.mrf.mxu0
    %10277 = vdwg.mxu0
    %10278 = vmatpush.bf16.msra.mxu0 %v7843
    %10279 = vmatpush.bf16.msra.mxu0 %v7839
    %10280 = vmatpush.bf16.msra.mxu0 %v7835
    %10281 = vmatpush.bf16.msra.mxu0 %v7831
    %10282 = vmatpush.bf16.msra.mxu0 %v7827
    %10283 = vmatpush.bf16.msra.mxu0 %v7823
    %10284 = vmatpush.bf16.msra.mxu0 %v7819
    %10285 = vmatpush.bf16.msra.mxu0 %v7815
    %10286 = vmatmul.bf16.gmra.mxu0 %v3676
    %v10287 = vpop.f32.mrf.mxu0
    %v10288 = vadd.f32 %v4735, %v10287
    %v10289 = vpop.f32.mrf.mxu0
    %10290 = vdwg.mxu0
    %10291 = vmatpush.bf16.msra.mxu0 %v7875
    %10292 = vmatpush.bf16.msra.mxu0 %v7871
    %10293 = vmatpush.bf16.msra.mxu0 %v7867
    %10294 = vmatpush.bf16.msra.mxu0 %v7863
    %10295 = vmatpush.bf16.msra.mxu0 %v7859
    %10296 = vmatpush.bf16.msra.mxu0 %v7855
    %10297 = vmatpush.bf16.msra.mxu0 %v7851
    %10298 = vmatpush.bf16.msra.mxu0 %v7847
    %10299 = vmatmul.bf16.gmra.mxu0 %v3677
    %v10300 = vpop.f32.mrf.mxu0
    %v10301 = vadd.f32 %v10288, %v10300
    %v10302 = vpop.f32.mrf.mxu0
    %10303 = vdwg.mxu0
    %10304 = vmatpush.bf16.msra.mxu0 %v7907
    %10305 = vmatpush.bf16.msra.mxu0 %v7903
    %10306 = vmatpush.bf16.msra.mxu0 %v7899
    %10307 = vmatpush.bf16.msra.mxu0 %v7895
    %10308 = vmatpush.bf16.msra.mxu0 %v7891
    %10309 = vmatpush.bf16.msra.mxu0 %v7887
    %10310 = vmatpush.bf16.msra.mxu0 %v7883
    %10311 = vmatpush.bf16.msra.mxu0 %v7879
    %10312 = vmatmul.bf16.gmra.mxu0 %v3678
    %v10313 = vpop.f32.mrf.mxu0
    %v10314 = vadd.f32 %v10301, %v10313
    %v10315 = vpop.f32.mrf.mxu0
    %10316 = vdwg.mxu0
    %10317 = vmatpush.bf16.msra.mxu0 %v7939
    %10318 = vmatpush.bf16.msra.mxu0 %v7935
    %10319 = vmatpush.bf16.msra.mxu0 %v7931
    %10320 = vmatpush.bf16.msra.mxu0 %v7927
    %10321 = vmatpush.bf16.msra.mxu0 %v7923
    %10322 = vmatpush.bf16.msra.mxu0 %v7919
    %10323 = vmatpush.bf16.msra.mxu0 %v7915
    %10324 = vmatpush.bf16.msra.mxu0 %v7911
    %10325 = vmatmul.bf16.gmra.mxu0 %v3679
    %v10326 = vpop.f32.mrf.mxu0
    %v10327 = vadd.f32 %v10314, %v10326
    %v10328 = vpop.f32.mrf.mxu0
    %10329 = vdwg.mxu0
    %10330 = vmatpush.bf16.msra.mxu0 %v7971
    %10331 = vmatpush.bf16.msra.mxu0 %v7967
    %10332 = vmatpush.bf16.msra.mxu0 %v7963
    %10333 = vmatpush.bf16.msra.mxu0 %v7959
    %10334 = vmatpush.bf16.msra.mxu0 %v7955
    %10335 = vmatpush.bf16.msra.mxu0 %v7951
    %10336 = vmatpush.bf16.msra.mxu0 %v7947
    %10337 = vmatpush.bf16.msra.mxu0 %v7943
    %10338 = vmatmul.bf16.gmra.mxu0 %v3680
    %v10339 = vpop.f32.mrf.mxu0
    %v10340 = vadd.f32 %v10327, %v10339
    %v10341 = vpop.f32.mrf.mxu0
    %10342 = vdwg.mxu0
    %10343 = vmatpush.bf16.msra.mxu0 %v8003
    %10344 = vmatpush.bf16.msra.mxu0 %v7999
    %10345 = vmatpush.bf16.msra.mxu0 %v7995
    %10346 = vmatpush.bf16.msra.mxu0 %v7991
    %10347 = vmatpush.bf16.msra.mxu0 %v7987
    %10348 = vmatpush.bf16.msra.mxu0 %v7983
    %10349 = vmatpush.bf16.msra.mxu0 %v7979
    %10350 = vmatpush.bf16.msra.mxu0 %v7975
    %10351 = vmatmul.bf16.gmra.mxu0 %v3681
    %v10352 = vpop.f32.mrf.mxu0
    %v10353 = vadd.f32 %v10340, %v10352
    %v10354 = vpop.f32.mrf.mxu0
    %10355 = vdwg.mxu0
    %10356 = vmatpush.bf16.msra.mxu0 %v8035
    %10357 = vmatpush.bf16.msra.mxu0 %v8031
    %10358 = vmatpush.bf16.msra.mxu0 %v8027
    %10359 = vmatpush.bf16.msra.mxu0 %v8023
    %10360 = vmatpush.bf16.msra.mxu0 %v8019
    %10361 = vmatpush.bf16.msra.mxu0 %v8015
    %10362 = vmatpush.bf16.msra.mxu0 %v8011
    %10363 = vmatpush.bf16.msra.mxu0 %v8007
    %10364 = vmatmul.bf16.gmra.mxu0 %v3682
    %v10365 = vpop.f32.mrf.mxu0
    %v10366 = vadd.f32 %v10353, %v10365
    %v10367 = vpop.f32.mrf.mxu0
    %10368 = vdwg.mxu0
    %10369 = vmatpush.bf16.msra.mxu0 %v8067
    %10370 = vmatpush.bf16.msra.mxu0 %v8063
    %10371 = vmatpush.bf16.msra.mxu0 %v8059
    %10372 = vmatpush.bf16.msra.mxu0 %v8055
    %10373 = vmatpush.bf16.msra.mxu0 %v8051
    %10374 = vmatpush.bf16.msra.mxu0 %v8047
    %10375 = vmatpush.bf16.msra.mxu0 %v8043
    %10376 = vmatpush.bf16.msra.mxu0 %v8039
    %10377 = vmatmul.bf16.gmra.mxu0 %v3683
    %v10378 = vpop.f32.mrf.mxu0
    %v10379 = vadd.f32 %v10366, %v10378
    %v10380 = vpop.f32.mrf.mxu0
    %10381 = vdwg.mxu0
    %10382 = vmatpush.bf16.msra.mxu0 %v8099
    %10383 = vmatpush.bf16.msra.mxu0 %v8095
    %10384 = vmatpush.bf16.msra.mxu0 %v8091
    %10385 = vmatpush.bf16.msra.mxu0 %v8087
    %10386 = vmatpush.bf16.msra.mxu0 %v8083
    %10387 = vmatpush.bf16.msra.mxu0 %v8079
    %10388 = vmatpush.bf16.msra.mxu0 %v8075
    %10389 = vmatpush.bf16.msra.mxu0 %v8071
    %10390 = vmatmul.bf16.gmra.mxu0 %v3684
    %v10391 = vpop.f32.mrf.mxu0
    %v10392 = vadd.f32 %v10379, %v10391
    %v10393 = vpop.f32.mrf.mxu0
    %10394 = vdwg.mxu0
    %10395 = vmatpush.bf16.msra.mxu0 %v8131
    %10396 = vmatpush.bf16.msra.mxu0 %v8127
    %10397 = vmatpush.bf16.msra.mxu0 %v8123
    %10398 = vmatpush.bf16.msra.mxu0 %v8119
    %10399 = vmatpush.bf16.msra.mxu0 %v8115
    %10400 = vmatpush.bf16.msra.mxu0 %v8111
    %10401 = vmatpush.bf16.msra.mxu0 %v8107
    %10402 = vmatpush.bf16.msra.mxu0 %v8103
    %10403 = vmatmul.bf16.gmra.mxu0 %v3685
    %v10404 = vpop.f32.mrf.mxu0
    %v10405 = vadd.f32 %v10392, %v10404
    %v10406 = vpop.f32.mrf.mxu0
    %10407 = vdwg.mxu0
    %10408 = vmatpush.bf16.msra.mxu0 %v8163
    %10409 = vmatpush.bf16.msra.mxu0 %v8159
    %10410 = vmatpush.bf16.msra.mxu0 %v8155
    %10411 = vmatpush.bf16.msra.mxu0 %v8151
    %10412 = vmatpush.bf16.msra.mxu0 %v8147
    %10413 = vmatpush.bf16.msra.mxu0 %v8143
    %10414 = vmatpush.bf16.msra.mxu0 %v8139
    %10415 = vmatpush.bf16.msra.mxu0 %v8135
    %10416 = vmatmul.bf16.gmra.mxu0 %v3686
    %v10417 = vpop.f32.mrf.mxu0
    %v10418 = vadd.f32 %v10405, %v10417
    %v10419 = vpop.f32.mrf.mxu0
    %10420 = vdwg.mxu0
    %10421 = vmatpush.bf16.msra.mxu0 %v8195
    %10422 = vmatpush.bf16.msra.mxu0 %v8191
    %10423 = vmatpush.bf16.msra.mxu0 %v8187
    %10424 = vmatpush.bf16.msra.mxu0 %v8183
    %10425 = vmatpush.bf16.msra.mxu0 %v8179
    %10426 = vmatpush.bf16.msra.mxu0 %v8175
    %10427 = vmatpush.bf16.msra.mxu0 %v8171
    %10428 = vmatpush.bf16.msra.mxu0 %v8167
    %10429 = vmatmul.bf16.gmra.mxu0 %v3687
    %v10430 = vpop.f32.mrf.mxu0
    %v10431 = vadd.f32 %v10418, %v10430
    %v10432 = vpop.f32.mrf.mxu0
    %10433 = vdwg.mxu0
    %10434 = vmatpush.bf16.msra.mxu0 %v8227
    %10435 = vmatpush.bf16.msra.mxu0 %v8223
    %10436 = vmatpush.bf16.msra.mxu0 %v8219
    %10437 = vmatpush.bf16.msra.mxu0 %v8215
    %10438 = vmatpush.bf16.msra.mxu0 %v8211
    %10439 = vmatpush.bf16.msra.mxu0 %v8207
    %10440 = vmatpush.bf16.msra.mxu0 %v8203
    %10441 = vmatpush.bf16.msra.mxu0 %v8199
    %10442 = vmatmul.bf16.gmra.mxu0 %v3688
    %v10443 = vpop.f32.mrf.mxu0
    %v10444 = vadd.f32 %v10431, %v10443
    %v10445 = vpop.f32.mrf.mxu0
    %10446 = vdwg.mxu0
    %10447 = vmatpush.bf16.msra.mxu0 %v8259
    %10448 = vmatpush.bf16.msra.mxu0 %v8255
    %10449 = vmatpush.bf16.msra.mxu0 %v8251
    %10450 = vmatpush.bf16.msra.mxu0 %v8247
    %10451 = vmatpush.bf16.msra.mxu0 %v8243
    %10452 = vmatpush.bf16.msra.mxu0 %v8239
    %10453 = vmatpush.bf16.msra.mxu0 %v8235
    %10454 = vmatpush.bf16.msra.mxu0 %v8231
    %10455 = vmatmul.bf16.gmra.mxu0 %v3689
    %v10456 = vpop.f32.mrf.mxu0
    %v10457 = vadd.f32 %v10444, %v10456
    %v10458 = vpop.f32.mrf.mxu0
    %10459 = vdwg.mxu0
    %10460 = vmatpush.bf16.msra.mxu0 %v8291
    %10461 = vmatpush.bf16.msra.mxu0 %v8287
    %10462 = vmatpush.bf16.msra.mxu0 %v8283
    %10463 = vmatpush.bf16.msra.mxu0 %v8279
    %10464 = vmatpush.bf16.msra.mxu0 %v8275
    %10465 = vmatpush.bf16.msra.mxu0 %v8271
    %10466 = vmatpush.bf16.msra.mxu0 %v8267
    %10467 = vmatpush.bf16.msra.mxu0 %v8263
    %10468 = vmatmul.bf16.gmra.mxu0 %v3690
    %v10469 = vpop.f32.mrf.mxu0
    %v10470 = vadd.f32 %v10457, %v10469
    %v10471 = vpop.f32.mrf.mxu0
    %10472 = vdwg.mxu0
    %10473 = vmatpush.bf16.msra.mxu0 %v8323
    %10474 = vmatpush.bf16.msra.mxu0 %v8319
    %10475 = vmatpush.bf16.msra.mxu0 %v8315
    %10476 = vmatpush.bf16.msra.mxu0 %v8311
    %10477 = vmatpush.bf16.msra.mxu0 %v8307
    %10478 = vmatpush.bf16.msra.mxu0 %v8303
    %10479 = vmatpush.bf16.msra.mxu0 %v8299
    %10480 = vmatpush.bf16.msra.mxu0 %v8295
    %10481 = vmatmul.bf16.gmra.mxu0 %v3691
    %v10482 = vpop.f32.mrf.mxu0
    %v10483 = vadd.f32 %v10470, %v10482
    %v10484 = vpop.f32.mrf.mxu0
    %10485 = vdwg.mxu0
    %10486 = vmatpush.bf16.msra.mxu0 %v8355
    %10487 = vmatpush.bf16.msra.mxu0 %v8351
    %10488 = vmatpush.bf16.msra.mxu0 %v8347
    %10489 = vmatpush.bf16.msra.mxu0 %v8343
    %10490 = vmatpush.bf16.msra.mxu0 %v8339
    %10491 = vmatpush.bf16.msra.mxu0 %v8335
    %10492 = vmatpush.bf16.msra.mxu0 %v8331
    %10493 = vmatpush.bf16.msra.mxu0 %v8327
    %10494 = vmatmul.bf16.gmra.mxu0 %v3692
    %v10495 = vpop.f32.mrf.mxu0
    %v10496 = vadd.f32 %v10483, %v10495
    %v10497 = vpop.f32.mrf.mxu0
    %10498 = vdwg.mxu0
    %10499 = vmatpush.bf16.msra.mxu0 %v8387
    %10500 = vmatpush.bf16.msra.mxu0 %v8383
    %10501 = vmatpush.bf16.msra.mxu0 %v8379
    %10502 = vmatpush.bf16.msra.mxu0 %v8375
    %10503 = vmatpush.bf16.msra.mxu0 %v8371
    %10504 = vmatpush.bf16.msra.mxu0 %v8367
    %10505 = vmatpush.bf16.msra.mxu0 %v8363
    %10506 = vmatpush.bf16.msra.mxu0 %v8359
    %10507 = vmatmul.bf16.gmra.mxu0 %v3693
    %v10508 = vpop.f32.mrf.mxu0
    %v10509 = vadd.f32 %v10496, %v10508
    %v10510 = vpop.f32.mrf.mxu0
    %10511 = vdwg.mxu0
    %10512 = vmatpush.bf16.msra.mxu0 %v8419
    %10513 = vmatpush.bf16.msra.mxu0 %v8415
    %10514 = vmatpush.bf16.msra.mxu0 %v8411
    %10515 = vmatpush.bf16.msra.mxu0 %v8407
    %10516 = vmatpush.bf16.msra.mxu0 %v8403
    %10517 = vmatpush.bf16.msra.mxu0 %v8399
    %10518 = vmatpush.bf16.msra.mxu0 %v8395
    %10519 = vmatpush.bf16.msra.mxu0 %v8391
    %10520 = vmatmul.bf16.gmra.mxu0 %v3694
    %v10521 = vpop.f32.mrf.mxu0
    %v10522 = vadd.f32 %v10509, %v10521
    %v10523 = vpop.f32.mrf.mxu0
    %10524 = vdwg.mxu0
    %10525 = vmatpush.bf16.msra.mxu0 %v8451
    %10526 = vmatpush.bf16.msra.mxu0 %v8447
    %10527 = vmatpush.bf16.msra.mxu0 %v8443
    %10528 = vmatpush.bf16.msra.mxu0 %v8439
    %10529 = vmatpush.bf16.msra.mxu0 %v8435
    %10530 = vmatpush.bf16.msra.mxu0 %v8431
    %10531 = vmatpush.bf16.msra.mxu0 %v8427
    %10532 = vmatpush.bf16.msra.mxu0 %v8423
    %10533 = vmatmul.bf16.gmra.mxu0 %v3695
    %v10534 = vpop.f32.mrf.mxu0
    %v10535 = vadd.f32 %v10522, %v10534
    %v10536 = vpop.f32.mrf.mxu0
    %10537 = vdwg.mxu0
    %10538 = vmatpush.bf16.msra.mxu0 %v8483
    %10539 = vmatpush.bf16.msra.mxu0 %v8479
    %10540 = vmatpush.bf16.msra.mxu0 %v8475
    %10541 = vmatpush.bf16.msra.mxu0 %v8471
    %10542 = vmatpush.bf16.msra.mxu0 %v8467
    %10543 = vmatpush.bf16.msra.mxu0 %v8463
    %10544 = vmatpush.bf16.msra.mxu0 %v8459
    %10545 = vmatpush.bf16.msra.mxu0 %v8455
    %10546 = vmatmul.bf16.gmra.mxu0 %v3696
    %v10547 = vpop.f32.mrf.mxu0
    %v10548 = vadd.f32 %v10535, %v10547
    %v10549 = vpop.f32.mrf.mxu0
    %10550 = vdwg.mxu0
    %10551 = vmatpush.bf16.msra.mxu0 %v8515
    %10552 = vmatpush.bf16.msra.mxu0 %v8511
    %10553 = vmatpush.bf16.msra.mxu0 %v8507
    %10554 = vmatpush.bf16.msra.mxu0 %v8503
    %10555 = vmatpush.bf16.msra.mxu0 %v8499
    %10556 = vmatpush.bf16.msra.mxu0 %v8495
    %10557 = vmatpush.bf16.msra.mxu0 %v8491
    %10558 = vmatpush.bf16.msra.mxu0 %v8487
    %10559 = vmatmul.bf16.gmra.mxu0 %v3697
    %v10560 = vpop.f32.mrf.mxu0
    %v10561 = vadd.f32 %v10548, %v10560
    %v10562 = vpop.f32.mrf.mxu0
    %10563 = vdwg.mxu0
    %10564 = vmatpush.bf16.msra.mxu0 %v8547
    %10565 = vmatpush.bf16.msra.mxu0 %v8543
    %10566 = vmatpush.bf16.msra.mxu0 %v8539
    %10567 = vmatpush.bf16.msra.mxu0 %v8535
    %10568 = vmatpush.bf16.msra.mxu0 %v8531
    %10569 = vmatpush.bf16.msra.mxu0 %v8527
    %10570 = vmatpush.bf16.msra.mxu0 %v8523
    %10571 = vmatpush.bf16.msra.mxu0 %v8519
    %10572 = vmatmul.bf16.gmra.mxu0 %v3698
    %v10573 = vpop.f32.mrf.mxu0
    %v10574 = vadd.f32 %v10561, %v10573
    %v10575 = vpop.f32.mrf.mxu0
    %10576 = vdwg.mxu0
    %10577 = vmatpush.bf16.msra.mxu0 %v8579
    %10578 = vmatpush.bf16.msra.mxu0 %v8575
    %10579 = vmatpush.bf16.msra.mxu0 %v8571
    %10580 = vmatpush.bf16.msra.mxu0 %v8567
    %10581 = vmatpush.bf16.msra.mxu0 %v8563
    %10582 = vmatpush.bf16.msra.mxu0 %v8559
    %10583 = vmatpush.bf16.msra.mxu0 %v8555
    %10584 = vmatpush.bf16.msra.mxu0 %v8551
    %10585 = vmatmul.bf16.gmra.mxu0 %v3699
    %v10586 = vpop.f32.mrf.mxu0
    %v10587 = vadd.f32 %v10574, %v10586
    %v10588 = vpop.f32.mrf.mxu0
    %10589 = vdwg.mxu0
    %10590 = vmatpush.bf16.msra.mxu0 %v8611
    %10591 = vmatpush.bf16.msra.mxu0 %v8607
    %10592 = vmatpush.bf16.msra.mxu0 %v8603
    %10593 = vmatpush.bf16.msra.mxu0 %v8599
    %10594 = vmatpush.bf16.msra.mxu0 %v8595
    %10595 = vmatpush.bf16.msra.mxu0 %v8591
    %10596 = vmatpush.bf16.msra.mxu0 %v8587
    %10597 = vmatpush.bf16.msra.mxu0 %v8583
    %10598 = vmatmul.bf16.gmra.mxu0 %v3700
    %v10599 = vpop.f32.mrf.mxu0
    %v10600 = vadd.f32 %v10587, %v10599
    %v10601 = vpop.f32.mrf.mxu0
    %10602 = vdwg.mxu0
    %10603 = vmatpush.bf16.msra.mxu0 %v8643
    %10604 = vmatpush.bf16.msra.mxu0 %v8639
    %10605 = vmatpush.bf16.msra.mxu0 %v8635
    %10606 = vmatpush.bf16.msra.mxu0 %v8631
    %10607 = vmatpush.bf16.msra.mxu0 %v8627
    %10608 = vmatpush.bf16.msra.mxu0 %v8623
    %10609 = vmatpush.bf16.msra.mxu0 %v8619
    %10610 = vmatpush.bf16.msra.mxu0 %v8615
    %10611 = vmatmul.bf16.gmra.mxu0 %v3701
    %v10612 = vpop.f32.mrf.mxu0
    %v10613 = vadd.f32 %v10600, %v10612
    %v10614 = vpop.f32.mrf.mxu0
    %10615 = vdwg.mxu0
    %10616 = vmatpush.bf16.msra.mxu0 %v8675
    %10617 = vmatpush.bf16.msra.mxu0 %v8671
    %10618 = vmatpush.bf16.msra.mxu0 %v8667
    %10619 = vmatpush.bf16.msra.mxu0 %v8663
    %10620 = vmatpush.bf16.msra.mxu0 %v8659
    %10621 = vmatpush.bf16.msra.mxu0 %v8655
    %10622 = vmatpush.bf16.msra.mxu0 %v8651
    %10623 = vmatpush.bf16.msra.mxu0 %v8647
    %10624 = vmatmul.bf16.gmra.mxu0 %v3702
    %v10625 = vpop.f32.mrf.mxu0
    %v10626 = vadd.f32 %v10613, %v10625
    %v10627 = vpop.f32.mrf.mxu0
    %10628 = vdwg.mxu0
    %10629 = vmatpush.bf16.msra.mxu0 %v8707
    %10630 = vmatpush.bf16.msra.mxu0 %v8703
    %10631 = vmatpush.bf16.msra.mxu0 %v8699
    %10632 = vmatpush.bf16.msra.mxu0 %v8695
    %10633 = vmatpush.bf16.msra.mxu0 %v8691
    %10634 = vmatpush.bf16.msra.mxu0 %v8687
    %10635 = vmatpush.bf16.msra.mxu0 %v8683
    %10636 = vmatpush.bf16.msra.mxu0 %v8679
    %10637 = vmatmul.bf16.gmra.mxu0 %v3703
    %v10638 = vpop.f32.mrf.mxu0
    %v10639 = vadd.f32 %v10626, %v10638
    %v10640 = vpop.f32.mrf.mxu0
    %10641 = vdwg.mxu0
    %10642 = vmatpush.bf16.msra.mxu0 %v8739
    %10643 = vmatpush.bf16.msra.mxu0 %v8735
    %10644 = vmatpush.bf16.msra.mxu0 %v8731
    %10645 = vmatpush.bf16.msra.mxu0 %v8727
    %10646 = vmatpush.bf16.msra.mxu0 %v8723
    %10647 = vmatpush.bf16.msra.mxu0 %v8719
    %10648 = vmatpush.bf16.msra.mxu0 %v8715
    %10649 = vmatpush.bf16.msra.mxu0 %v8711
    %10650 = vmatmul.bf16.gmra.mxu0 %v3704
    %v10651 = vpop.f32.mrf.mxu0
    %v10652 = vadd.f32 %v10639, %v10651
    %v10653 = vpop.f32.mrf.mxu0
    %10654 = vdwg.mxu0
    %10655 = vmatpush.bf16.msra.mxu0 %v8771
    %10656 = vmatpush.bf16.msra.mxu0 %v8767
    %10657 = vmatpush.bf16.msra.mxu0 %v8763
    %10658 = vmatpush.bf16.msra.mxu0 %v8759
    %10659 = vmatpush.bf16.msra.mxu0 %v8755
    %10660 = vmatpush.bf16.msra.mxu0 %v8751
    %10661 = vmatpush.bf16.msra.mxu0 %v8747
    %10662 = vmatpush.bf16.msra.mxu0 %v8743
    %10663 = vmatmul.bf16.gmra.mxu0 %v3705
    %v10664 = vpop.f32.mrf.mxu0
    %v10665 = vadd.f32 %v10652, %v10664
    %v10666 = vpop.f32.mrf.mxu0
    %10667 = vdwg.mxu0
    %10668 = vmatpush.bf16.msra.mxu0 %v8803
    %10669 = vmatpush.bf16.msra.mxu0 %v8799
    %10670 = vmatpush.bf16.msra.mxu0 %v8795
    %10671 = vmatpush.bf16.msra.mxu0 %v8791
    %10672 = vmatpush.bf16.msra.mxu0 %v8787
    %10673 = vmatpush.bf16.msra.mxu0 %v8783
    %10674 = vmatpush.bf16.msra.mxu0 %v8779
    %10675 = vmatpush.bf16.msra.mxu0 %v8775
    %10676 = vmatmul.bf16.gmra.mxu0 %v3706
    %v10677 = vpop.f32.mrf.mxu0
    %v10678 = vadd.f32 %v10665, %v10677
    %v10679 = vpop.f32.mrf.mxu0
    %10680 = vdwg.mxu0
    %10681 = vmatpush.bf16.msra.mxu0 %v8835
    %10682 = vmatpush.bf16.msra.mxu0 %v8831
    %10683 = vmatpush.bf16.msra.mxu0 %v8827
    %10684 = vmatpush.bf16.msra.mxu0 %v8823
    %10685 = vmatpush.bf16.msra.mxu0 %v8819
    %10686 = vmatpush.bf16.msra.mxu0 %v8815
    %10687 = vmatpush.bf16.msra.mxu0 %v8811
    %10688 = vmatpush.bf16.msra.mxu0 %v8807
    %10689 = vmatmul.bf16.gmra.mxu0 %v3707
    %v10690 = vpop.f32.mrf.mxu0
    %v10691 = vadd.f32 %v10678, %v10690
    %v10692 = vpop.f32.mrf.mxu0
    %10693 = vdwg.mxu0
    %10694 = vmatpush.bf16.msra.mxu0 %v7844
    %10695 = vmatpush.bf16.msra.mxu0 %v7840
    %10696 = vmatpush.bf16.msra.mxu0 %v7836
    %10697 = vmatpush.bf16.msra.mxu0 %v7832
    %10698 = vmatpush.bf16.msra.mxu0 %v7828
    %10699 = vmatpush.bf16.msra.mxu0 %v7824
    %10700 = vmatpush.bf16.msra.mxu0 %v7820
    %10701 = vmatpush.bf16.msra.mxu0 %v7816
    %10702 = vmatmul.bf16.gmra.mxu0 %v3676
    %v10703 = vpop.f32.mrf.mxu0
    %v10704 = vadd.f32 %v4736, %v10703
    %v10705 = vpop.f32.mrf.mxu0
    %10706 = vdwg.mxu0
    %10707 = vmatpush.bf16.msra.mxu0 %v7876
    %10708 = vmatpush.bf16.msra.mxu0 %v7872
    %10709 = vmatpush.bf16.msra.mxu0 %v7868
    %10710 = vmatpush.bf16.msra.mxu0 %v7864
    %10711 = vmatpush.bf16.msra.mxu0 %v7860
    %10712 = vmatpush.bf16.msra.mxu0 %v7856
    %10713 = vmatpush.bf16.msra.mxu0 %v7852
    %10714 = vmatpush.bf16.msra.mxu0 %v7848
    %10715 = vmatmul.bf16.gmra.mxu0 %v3677
    %v10716 = vpop.f32.mrf.mxu0
    %v10717 = vadd.f32 %v10704, %v10716
    %v10718 = vpop.f32.mrf.mxu0
    %10719 = vdwg.mxu0
    %10720 = vmatpush.bf16.msra.mxu0 %v7908
    %10721 = vmatpush.bf16.msra.mxu0 %v7904
    %10722 = vmatpush.bf16.msra.mxu0 %v7900
    %10723 = vmatpush.bf16.msra.mxu0 %v7896
    %10724 = vmatpush.bf16.msra.mxu0 %v7892
    %10725 = vmatpush.bf16.msra.mxu0 %v7888
    %10726 = vmatpush.bf16.msra.mxu0 %v7884
    %10727 = vmatpush.bf16.msra.mxu0 %v7880
    %10728 = vmatmul.bf16.gmra.mxu0 %v3678
    %v10729 = vpop.f32.mrf.mxu0
    %v10730 = vadd.f32 %v10717, %v10729
    %v10731 = vpop.f32.mrf.mxu0
    %10732 = vdwg.mxu0
    %10733 = vmatpush.bf16.msra.mxu0 %v7940
    %10734 = vmatpush.bf16.msra.mxu0 %v7936
    %10735 = vmatpush.bf16.msra.mxu0 %v7932
    %10736 = vmatpush.bf16.msra.mxu0 %v7928
    %10737 = vmatpush.bf16.msra.mxu0 %v7924
    %10738 = vmatpush.bf16.msra.mxu0 %v7920
    %10739 = vmatpush.bf16.msra.mxu0 %v7916
    %10740 = vmatpush.bf16.msra.mxu0 %v7912
    %10741 = vmatmul.bf16.gmra.mxu0 %v3679
    %v10742 = vpop.f32.mrf.mxu0
    %v10743 = vadd.f32 %v10730, %v10742
    %v10744 = vpop.f32.mrf.mxu0
    %10745 = vdwg.mxu0
    %10746 = vmatpush.bf16.msra.mxu0 %v7972
    %10747 = vmatpush.bf16.msra.mxu0 %v7968
    %10748 = vmatpush.bf16.msra.mxu0 %v7964
    %10749 = vmatpush.bf16.msra.mxu0 %v7960
    %10750 = vmatpush.bf16.msra.mxu0 %v7956
    %10751 = vmatpush.bf16.msra.mxu0 %v7952
    %10752 = vmatpush.bf16.msra.mxu0 %v7948
    %10753 = vmatpush.bf16.msra.mxu0 %v7944
    %10754 = vmatmul.bf16.gmra.mxu0 %v3680
    %v10755 = vpop.f32.mrf.mxu0
    %v10756 = vadd.f32 %v10743, %v10755
    %v10757 = vpop.f32.mrf.mxu0
    %10758 = vdwg.mxu0
    %10759 = vmatpush.bf16.msra.mxu0 %v8004
    %10760 = vmatpush.bf16.msra.mxu0 %v8000
    %10761 = vmatpush.bf16.msra.mxu0 %v7996
    %10762 = vmatpush.bf16.msra.mxu0 %v7992
    %10763 = vmatpush.bf16.msra.mxu0 %v7988
    %10764 = vmatpush.bf16.msra.mxu0 %v7984
    %10765 = vmatpush.bf16.msra.mxu0 %v7980
    %10766 = vmatpush.bf16.msra.mxu0 %v7976
    %10767 = vmatmul.bf16.gmra.mxu0 %v3681
    %v10768 = vpop.f32.mrf.mxu0
    %v10769 = vadd.f32 %v10756, %v10768
    %v10770 = vpop.f32.mrf.mxu0
    %10771 = vdwg.mxu0
    %10772 = vmatpush.bf16.msra.mxu0 %v8036
    %10773 = vmatpush.bf16.msra.mxu0 %v8032
    %10774 = vmatpush.bf16.msra.mxu0 %v8028
    %10775 = vmatpush.bf16.msra.mxu0 %v8024
    %10776 = vmatpush.bf16.msra.mxu0 %v8020
    %10777 = vmatpush.bf16.msra.mxu0 %v8016
    %10778 = vmatpush.bf16.msra.mxu0 %v8012
    %10779 = vmatpush.bf16.msra.mxu0 %v8008
    %10780 = vmatmul.bf16.gmra.mxu0 %v3682
    %v10781 = vpop.f32.mrf.mxu0
    %v10782 = vadd.f32 %v10769, %v10781
    %v10783 = vpop.f32.mrf.mxu0
    %10784 = vdwg.mxu0
    %10785 = vmatpush.bf16.msra.mxu0 %v8068
    %10786 = vmatpush.bf16.msra.mxu0 %v8064
    %10787 = vmatpush.bf16.msra.mxu0 %v8060
    %10788 = vmatpush.bf16.msra.mxu0 %v8056
    %10789 = vmatpush.bf16.msra.mxu0 %v8052
    %10790 = vmatpush.bf16.msra.mxu0 %v8048
    %10791 = vmatpush.bf16.msra.mxu0 %v8044
    %10792 = vmatpush.bf16.msra.mxu0 %v8040
    %10793 = vmatmul.bf16.gmra.mxu0 %v3683
    %v10794 = vpop.f32.mrf.mxu0
    %v10795 = vadd.f32 %v10782, %v10794
    %v10796 = vpop.f32.mrf.mxu0
    %10797 = vdwg.mxu0
    %10798 = vmatpush.bf16.msra.mxu0 %v8100
    %10799 = vmatpush.bf16.msra.mxu0 %v8096
    %10800 = vmatpush.bf16.msra.mxu0 %v8092
    %10801 = vmatpush.bf16.msra.mxu0 %v8088
    %10802 = vmatpush.bf16.msra.mxu0 %v8084
    %10803 = vmatpush.bf16.msra.mxu0 %v8080
    %10804 = vmatpush.bf16.msra.mxu0 %v8076
    %10805 = vmatpush.bf16.msra.mxu0 %v8072
    %10806 = vmatmul.bf16.gmra.mxu0 %v3684
    %v10807 = vpop.f32.mrf.mxu0
    %v10808 = vadd.f32 %v10795, %v10807
    %v10809 = vpop.f32.mrf.mxu0
    %10810 = vdwg.mxu0
    %10811 = vmatpush.bf16.msra.mxu0 %v8132
    %10812 = vmatpush.bf16.msra.mxu0 %v8128
    %10813 = vmatpush.bf16.msra.mxu0 %v8124
    %10814 = vmatpush.bf16.msra.mxu0 %v8120
    %10815 = vmatpush.bf16.msra.mxu0 %v8116
    %10816 = vmatpush.bf16.msra.mxu0 %v8112
    %10817 = vmatpush.bf16.msra.mxu0 %v8108
    %10818 = vmatpush.bf16.msra.mxu0 %v8104
    %10819 = vmatmul.bf16.gmra.mxu0 %v3685
    %v10820 = vpop.f32.mrf.mxu0
    %v10821 = vadd.f32 %v10808, %v10820
    %v10822 = vpop.f32.mrf.mxu0
    %10823 = vdwg.mxu0
    %10824 = vmatpush.bf16.msra.mxu0 %v8164
    %10825 = vmatpush.bf16.msra.mxu0 %v8160
    %10826 = vmatpush.bf16.msra.mxu0 %v8156
    %10827 = vmatpush.bf16.msra.mxu0 %v8152
    %10828 = vmatpush.bf16.msra.mxu0 %v8148
    %10829 = vmatpush.bf16.msra.mxu0 %v8144
    %10830 = vmatpush.bf16.msra.mxu0 %v8140
    %10831 = vmatpush.bf16.msra.mxu0 %v8136
    %10832 = vmatmul.bf16.gmra.mxu0 %v3686
    %v10833 = vpop.f32.mrf.mxu0
    %v10834 = vadd.f32 %v10821, %v10833
    %v10835 = vpop.f32.mrf.mxu0
    %10836 = vdwg.mxu0
    %10837 = vmatpush.bf16.msra.mxu0 %v8196
    %10838 = vmatpush.bf16.msra.mxu0 %v8192
    %10839 = vmatpush.bf16.msra.mxu0 %v8188
    %10840 = vmatpush.bf16.msra.mxu0 %v8184
    %10841 = vmatpush.bf16.msra.mxu0 %v8180
    %10842 = vmatpush.bf16.msra.mxu0 %v8176
    %10843 = vmatpush.bf16.msra.mxu0 %v8172
    %10844 = vmatpush.bf16.msra.mxu0 %v8168
    %10845 = vmatmul.bf16.gmra.mxu0 %v3687
    %v10846 = vpop.f32.mrf.mxu0
    %v10847 = vadd.f32 %v10834, %v10846
    %v10848 = vpop.f32.mrf.mxu0
    %10849 = vdwg.mxu0
    %10850 = vmatpush.bf16.msra.mxu0 %v8228
    %10851 = vmatpush.bf16.msra.mxu0 %v8224
    %10852 = vmatpush.bf16.msra.mxu0 %v8220
    %10853 = vmatpush.bf16.msra.mxu0 %v8216
    %10854 = vmatpush.bf16.msra.mxu0 %v8212
    %10855 = vmatpush.bf16.msra.mxu0 %v8208
    %10856 = vmatpush.bf16.msra.mxu0 %v8204
    %10857 = vmatpush.bf16.msra.mxu0 %v8200
    %10858 = vmatmul.bf16.gmra.mxu0 %v3688
    %v10859 = vpop.f32.mrf.mxu0
    %v10860 = vadd.f32 %v10847, %v10859
    %v10861 = vpop.f32.mrf.mxu0
    %10862 = vdwg.mxu0
    %10863 = vmatpush.bf16.msra.mxu0 %v8260
    %10864 = vmatpush.bf16.msra.mxu0 %v8256
    %10865 = vmatpush.bf16.msra.mxu0 %v8252
    %10866 = vmatpush.bf16.msra.mxu0 %v8248
    %10867 = vmatpush.bf16.msra.mxu0 %v8244
    %10868 = vmatpush.bf16.msra.mxu0 %v8240
    %10869 = vmatpush.bf16.msra.mxu0 %v8236
    %10870 = vmatpush.bf16.msra.mxu0 %v8232
    %10871 = vmatmul.bf16.gmra.mxu0 %v3689
    %v10872 = vpop.f32.mrf.mxu0
    %v10873 = vadd.f32 %v10860, %v10872
    %v10874 = vpop.f32.mrf.mxu0
    %10875 = vdwg.mxu0
    %10876 = vmatpush.bf16.msra.mxu0 %v8292
    %10877 = vmatpush.bf16.msra.mxu0 %v8288
    %10878 = vmatpush.bf16.msra.mxu0 %v8284
    %10879 = vmatpush.bf16.msra.mxu0 %v8280
    %10880 = vmatpush.bf16.msra.mxu0 %v8276
    %10881 = vmatpush.bf16.msra.mxu0 %v8272
    %10882 = vmatpush.bf16.msra.mxu0 %v8268
    %10883 = vmatpush.bf16.msra.mxu0 %v8264
    %10884 = vmatmul.bf16.gmra.mxu0 %v3690
    %v10885 = vpop.f32.mrf.mxu0
    %v10886 = vadd.f32 %v10873, %v10885
    %v10887 = vpop.f32.mrf.mxu0
    %10888 = vdwg.mxu0
    %10889 = vmatpush.bf16.msra.mxu0 %v8324
    %10890 = vmatpush.bf16.msra.mxu0 %v8320
    %10891 = vmatpush.bf16.msra.mxu0 %v8316
    %10892 = vmatpush.bf16.msra.mxu0 %v8312
    %10893 = vmatpush.bf16.msra.mxu0 %v8308
    %10894 = vmatpush.bf16.msra.mxu0 %v8304
    %10895 = vmatpush.bf16.msra.mxu0 %v8300
    %10896 = vmatpush.bf16.msra.mxu0 %v8296
    %10897 = vmatmul.bf16.gmra.mxu0 %v3691
    %v10898 = vpop.f32.mrf.mxu0
    %v10899 = vadd.f32 %v10886, %v10898
    %v10900 = vpop.f32.mrf.mxu0
    %10901 = vdwg.mxu0
    %10902 = vmatpush.bf16.msra.mxu0 %v8356
    %10903 = vmatpush.bf16.msra.mxu0 %v8352
    %10904 = vmatpush.bf16.msra.mxu0 %v8348
    %10905 = vmatpush.bf16.msra.mxu0 %v8344
    %10906 = vmatpush.bf16.msra.mxu0 %v8340
    %10907 = vmatpush.bf16.msra.mxu0 %v8336
    %10908 = vmatpush.bf16.msra.mxu0 %v8332
    %10909 = vmatpush.bf16.msra.mxu0 %v8328
    %10910 = vmatmul.bf16.gmra.mxu0 %v3692
    %v10911 = vpop.f32.mrf.mxu0
    %v10912 = vadd.f32 %v10899, %v10911
    %v10913 = vpop.f32.mrf.mxu0
    %10914 = vdwg.mxu0
    %10915 = vmatpush.bf16.msra.mxu0 %v8388
    %10916 = vmatpush.bf16.msra.mxu0 %v8384
    %10917 = vmatpush.bf16.msra.mxu0 %v8380
    %10918 = vmatpush.bf16.msra.mxu0 %v8376
    %10919 = vmatpush.bf16.msra.mxu0 %v8372
    %10920 = vmatpush.bf16.msra.mxu0 %v8368
    %10921 = vmatpush.bf16.msra.mxu0 %v8364
    %10922 = vmatpush.bf16.msra.mxu0 %v8360
    %10923 = vmatmul.bf16.gmra.mxu0 %v3693
    %v10924 = vpop.f32.mrf.mxu0
    %v10925 = vadd.f32 %v10912, %v10924
    %v10926 = vpop.f32.mrf.mxu0
    %10927 = vdwg.mxu0
    %10928 = vmatpush.bf16.msra.mxu0 %v8420
    %10929 = vmatpush.bf16.msra.mxu0 %v8416
    %10930 = vmatpush.bf16.msra.mxu0 %v8412
    %10931 = vmatpush.bf16.msra.mxu0 %v8408
    %10932 = vmatpush.bf16.msra.mxu0 %v8404
    %10933 = vmatpush.bf16.msra.mxu0 %v8400
    %10934 = vmatpush.bf16.msra.mxu0 %v8396
    %10935 = vmatpush.bf16.msra.mxu0 %v8392
    %10936 = vmatmul.bf16.gmra.mxu0 %v3694
    %v10937 = vpop.f32.mrf.mxu0
    %v10938 = vadd.f32 %v10925, %v10937
    %v10939 = vpop.f32.mrf.mxu0
    %10940 = vdwg.mxu0
    %10941 = vmatpush.bf16.msra.mxu0 %v8452
    %10942 = vmatpush.bf16.msra.mxu0 %v8448
    %10943 = vmatpush.bf16.msra.mxu0 %v8444
    %10944 = vmatpush.bf16.msra.mxu0 %v8440
    %10945 = vmatpush.bf16.msra.mxu0 %v8436
    %10946 = vmatpush.bf16.msra.mxu0 %v8432
    %10947 = vmatpush.bf16.msra.mxu0 %v8428
    %10948 = vmatpush.bf16.msra.mxu0 %v8424
    %10949 = vmatmul.bf16.gmra.mxu0 %v3695
    %v10950 = vpop.f32.mrf.mxu0
    %v10951 = vadd.f32 %v10938, %v10950
    %v10952 = vpop.f32.mrf.mxu0
    %10953 = vdwg.mxu0
    %10954 = vmatpush.bf16.msra.mxu0 %v8484
    %10955 = vmatpush.bf16.msra.mxu0 %v8480
    %10956 = vmatpush.bf16.msra.mxu0 %v8476
    %10957 = vmatpush.bf16.msra.mxu0 %v8472
    %10958 = vmatpush.bf16.msra.mxu0 %v8468
    %10959 = vmatpush.bf16.msra.mxu0 %v8464
    %10960 = vmatpush.bf16.msra.mxu0 %v8460
    %10961 = vmatpush.bf16.msra.mxu0 %v8456
    %10962 = vmatmul.bf16.gmra.mxu0 %v3696
    %v10963 = vpop.f32.mrf.mxu0
    %v10964 = vadd.f32 %v10951, %v10963
    %v10965 = vpop.f32.mrf.mxu0
    %10966 = vdwg.mxu0
    %10967 = vmatpush.bf16.msra.mxu0 %v8516
    %10968 = vmatpush.bf16.msra.mxu0 %v8512
    %10969 = vmatpush.bf16.msra.mxu0 %v8508
    %10970 = vmatpush.bf16.msra.mxu0 %v8504
    %10971 = vmatpush.bf16.msra.mxu0 %v8500
    %10972 = vmatpush.bf16.msra.mxu0 %v8496
    %10973 = vmatpush.bf16.msra.mxu0 %v8492
    %10974 = vmatpush.bf16.msra.mxu0 %v8488
    %10975 = vmatmul.bf16.gmra.mxu0 %v3697
    %v10976 = vpop.f32.mrf.mxu0
    %v10977 = vadd.f32 %v10964, %v10976
    %v10978 = vpop.f32.mrf.mxu0
    %10979 = vdwg.mxu0
    %10980 = vmatpush.bf16.msra.mxu0 %v8548
    %10981 = vmatpush.bf16.msra.mxu0 %v8544
    %10982 = vmatpush.bf16.msra.mxu0 %v8540
    %10983 = vmatpush.bf16.msra.mxu0 %v8536
    %10984 = vmatpush.bf16.msra.mxu0 %v8532
    %10985 = vmatpush.bf16.msra.mxu0 %v8528
    %10986 = vmatpush.bf16.msra.mxu0 %v8524
    %10987 = vmatpush.bf16.msra.mxu0 %v8520
    %10988 = vmatmul.bf16.gmra.mxu0 %v3698
    %v10989 = vpop.f32.mrf.mxu0
    %v10990 = vadd.f32 %v10977, %v10989
    %v10991 = vpop.f32.mrf.mxu0
    %10992 = vdwg.mxu0
    %10993 = vmatpush.bf16.msra.mxu0 %v8580
    %10994 = vmatpush.bf16.msra.mxu0 %v8576
    %10995 = vmatpush.bf16.msra.mxu0 %v8572
    %10996 = vmatpush.bf16.msra.mxu0 %v8568
    %10997 = vmatpush.bf16.msra.mxu0 %v8564
    %10998 = vmatpush.bf16.msra.mxu0 %v8560
    %10999 = vmatpush.bf16.msra.mxu0 %v8556
    %11000 = vmatpush.bf16.msra.mxu0 %v8552
    %11001 = vmatmul.bf16.gmra.mxu0 %v3699
    %v11002 = vpop.f32.mrf.mxu0
    %v11003 = vadd.f32 %v10990, %v11002
    %v11004 = vpop.f32.mrf.mxu0
    %11005 = vdwg.mxu0
    %11006 = vmatpush.bf16.msra.mxu0 %v8612
    %11007 = vmatpush.bf16.msra.mxu0 %v8608
    %11008 = vmatpush.bf16.msra.mxu0 %v8604
    %11009 = vmatpush.bf16.msra.mxu0 %v8600
    %11010 = vmatpush.bf16.msra.mxu0 %v8596
    %11011 = vmatpush.bf16.msra.mxu0 %v8592
    %11012 = vmatpush.bf16.msra.mxu0 %v8588
    %11013 = vmatpush.bf16.msra.mxu0 %v8584
    %11014 = vmatmul.bf16.gmra.mxu0 %v3700
    %v11015 = vpop.f32.mrf.mxu0
    %v11016 = vadd.f32 %v11003, %v11015
    %v11017 = vpop.f32.mrf.mxu0
    %11018 = vdwg.mxu0
    %11019 = vmatpush.bf16.msra.mxu0 %v8644
    %11020 = vmatpush.bf16.msra.mxu0 %v8640
    %11021 = vmatpush.bf16.msra.mxu0 %v8636
    %11022 = vmatpush.bf16.msra.mxu0 %v8632
    %11023 = vmatpush.bf16.msra.mxu0 %v8628
    %11024 = vmatpush.bf16.msra.mxu0 %v8624
    %11025 = vmatpush.bf16.msra.mxu0 %v8620
    %11026 = vmatpush.bf16.msra.mxu0 %v8616
    %11027 = vmatmul.bf16.gmra.mxu0 %v3701
    %v11028 = vpop.f32.mrf.mxu0
    %v11029 = vadd.f32 %v11016, %v11028
    %v11030 = vpop.f32.mrf.mxu0
    %11031 = vdwg.mxu0
    %11032 = vmatpush.bf16.msra.mxu0 %v8676
    %11033 = vmatpush.bf16.msra.mxu0 %v8672
    %11034 = vmatpush.bf16.msra.mxu0 %v8668
    %11035 = vmatpush.bf16.msra.mxu0 %v8664
    %11036 = vmatpush.bf16.msra.mxu0 %v8660
    %11037 = vmatpush.bf16.msra.mxu0 %v8656
    %11038 = vmatpush.bf16.msra.mxu0 %v8652
    %11039 = vmatpush.bf16.msra.mxu0 %v8648
    %11040 = vmatmul.bf16.gmra.mxu0 %v3702
    %v11041 = vpop.f32.mrf.mxu0
    %v11042 = vadd.f32 %v11029, %v11041
    %v11043 = vpop.f32.mrf.mxu0
    %11044 = vdwg.mxu0
    %11045 = vmatpush.bf16.msra.mxu0 %v8708
    %11046 = vmatpush.bf16.msra.mxu0 %v8704
    %11047 = vmatpush.bf16.msra.mxu0 %v8700
    %11048 = vmatpush.bf16.msra.mxu0 %v8696
    %11049 = vmatpush.bf16.msra.mxu0 %v8692
    %11050 = vmatpush.bf16.msra.mxu0 %v8688
    %11051 = vmatpush.bf16.msra.mxu0 %v8684
    %11052 = vmatpush.bf16.msra.mxu0 %v8680
    %11053 = vmatmul.bf16.gmra.mxu0 %v3703
    %v11054 = vpop.f32.mrf.mxu0
    %v11055 = vadd.f32 %v11042, %v11054
    %v11056 = vpop.f32.mrf.mxu0
    %11057 = vdwg.mxu0
    %11058 = vmatpush.bf16.msra.mxu0 %v8740
    %11059 = vmatpush.bf16.msra.mxu0 %v8736
    %11060 = vmatpush.bf16.msra.mxu0 %v8732
    %11061 = vmatpush.bf16.msra.mxu0 %v8728
    %11062 = vmatpush.bf16.msra.mxu0 %v8724
    %11063 = vmatpush.bf16.msra.mxu0 %v8720
    %11064 = vmatpush.bf16.msra.mxu0 %v8716
    %11065 = vmatpush.bf16.msra.mxu0 %v8712
    %11066 = vmatmul.bf16.gmra.mxu0 %v3704
    %v11067 = vpop.f32.mrf.mxu0
    %v11068 = vadd.f32 %v11055, %v11067
    %v11069 = vpop.f32.mrf.mxu0
    %11070 = vdwg.mxu0
    %11071 = vmatpush.bf16.msra.mxu0 %v8772
    %11072 = vmatpush.bf16.msra.mxu0 %v8768
    %11073 = vmatpush.bf16.msra.mxu0 %v8764
    %11074 = vmatpush.bf16.msra.mxu0 %v8760
    %11075 = vmatpush.bf16.msra.mxu0 %v8756
    %11076 = vmatpush.bf16.msra.mxu0 %v8752
    %11077 = vmatpush.bf16.msra.mxu0 %v8748
    %11078 = vmatpush.bf16.msra.mxu0 %v8744
    %11079 = vmatmul.bf16.gmra.mxu0 %v3705
    %v11080 = vpop.f32.mrf.mxu0
    %v11081 = vadd.f32 %v11068, %v11080
    %v11082 = vpop.f32.mrf.mxu0
    %11083 = vdwg.mxu0
    %11084 = vmatpush.bf16.msra.mxu0 %v8804
    %11085 = vmatpush.bf16.msra.mxu0 %v8800
    %11086 = vmatpush.bf16.msra.mxu0 %v8796
    %11087 = vmatpush.bf16.msra.mxu0 %v8792
    %11088 = vmatpush.bf16.msra.mxu0 %v8788
    %11089 = vmatpush.bf16.msra.mxu0 %v8784
    %11090 = vmatpush.bf16.msra.mxu0 %v8780
    %11091 = vmatpush.bf16.msra.mxu0 %v8776
    %11092 = vmatmul.bf16.gmra.mxu0 %v3706
    %v11093 = vpop.f32.mrf.mxu0
    %v11094 = vadd.f32 %v11081, %v11093
    %v11095 = vpop.f32.mrf.mxu0
    %11096 = vdwg.mxu0
    %11097 = vmatpush.bf16.msra.mxu0 %v8836
    %11098 = vmatpush.bf16.msra.mxu0 %v8832
    %11099 = vmatpush.bf16.msra.mxu0 %v8828
    %11100 = vmatpush.bf16.msra.mxu0 %v8824
    %11101 = vmatpush.bf16.msra.mxu0 %v8820
    %11102 = vmatpush.bf16.msra.mxu0 %v8816
    %11103 = vmatpush.bf16.msra.mxu0 %v8812
    %11104 = vmatpush.bf16.msra.mxu0 %v8808
    %11105 = vmatmul.bf16.gmra.mxu0 %v3707
    %v11106 = vpop.f32.mrf.mxu0
    %v11107 = vadd.f32 %v11094, %v11106
    %v11108 = vpop.f32.mrf.mxu0
    %11109 = vdwg.mxu0
    %11110 = vmatpush.bf16.msra.mxu0 %v7845
    %11111 = vmatpush.bf16.msra.mxu0 %v7841
    %11112 = vmatpush.bf16.msra.mxu0 %v7837
    %11113 = vmatpush.bf16.msra.mxu0 %v7833
    %11114 = vmatpush.bf16.msra.mxu0 %v7829
    %11115 = vmatpush.bf16.msra.mxu0 %v7825
    %11116 = vmatpush.bf16.msra.mxu0 %v7821
    %11117 = vmatpush.bf16.msra.mxu0 %v7817
    %11118 = vmatmul.bf16.gmra.mxu0 %v3676
    %v11119 = vpop.f32.mrf.mxu0
    %v11120 = vadd.f32 %v4737, %v11119
    %v11121 = vpop.f32.mrf.mxu0
    %11122 = vdwg.mxu0
    %11123 = vmatpush.bf16.msra.mxu0 %v7877
    %11124 = vmatpush.bf16.msra.mxu0 %v7873
    %11125 = vmatpush.bf16.msra.mxu0 %v7869
    %11126 = vmatpush.bf16.msra.mxu0 %v7865
    %11127 = vmatpush.bf16.msra.mxu0 %v7861
    %11128 = vmatpush.bf16.msra.mxu0 %v7857
    %11129 = vmatpush.bf16.msra.mxu0 %v7853
    %11130 = vmatpush.bf16.msra.mxu0 %v7849
    %11131 = vmatmul.bf16.gmra.mxu0 %v3677
    %v11132 = vpop.f32.mrf.mxu0
    %v11133 = vadd.f32 %v11120, %v11132
    %v11134 = vpop.f32.mrf.mxu0
    %11135 = vdwg.mxu0
    %11136 = vmatpush.bf16.msra.mxu0 %v7909
    %11137 = vmatpush.bf16.msra.mxu0 %v7905
    %11138 = vmatpush.bf16.msra.mxu0 %v7901
    %11139 = vmatpush.bf16.msra.mxu0 %v7897
    %11140 = vmatpush.bf16.msra.mxu0 %v7893
    %11141 = vmatpush.bf16.msra.mxu0 %v7889
    %11142 = vmatpush.bf16.msra.mxu0 %v7885
    %11143 = vmatpush.bf16.msra.mxu0 %v7881
    %11144 = vmatmul.bf16.gmra.mxu0 %v3678
    %v11145 = vpop.f32.mrf.mxu0
    %v11146 = vadd.f32 %v11133, %v11145
    %v11147 = vpop.f32.mrf.mxu0
    %11148 = vdwg.mxu0
    %11149 = vmatpush.bf16.msra.mxu0 %v7941
    %11150 = vmatpush.bf16.msra.mxu0 %v7937
    %11151 = vmatpush.bf16.msra.mxu0 %v7933
    %11152 = vmatpush.bf16.msra.mxu0 %v7929
    %11153 = vmatpush.bf16.msra.mxu0 %v7925
    %11154 = vmatpush.bf16.msra.mxu0 %v7921
    %11155 = vmatpush.bf16.msra.mxu0 %v7917
    %11156 = vmatpush.bf16.msra.mxu0 %v7913
    %11157 = vmatmul.bf16.gmra.mxu0 %v3679
    %v11158 = vpop.f32.mrf.mxu0
    %v11159 = vadd.f32 %v11146, %v11158
    %v11160 = vpop.f32.mrf.mxu0
    %11161 = vdwg.mxu0
    %11162 = vmatpush.bf16.msra.mxu0 %v7973
    %11163 = vmatpush.bf16.msra.mxu0 %v7969
    %11164 = vmatpush.bf16.msra.mxu0 %v7965
    %11165 = vmatpush.bf16.msra.mxu0 %v7961
    %11166 = vmatpush.bf16.msra.mxu0 %v7957
    %11167 = vmatpush.bf16.msra.mxu0 %v7953
    %11168 = vmatpush.bf16.msra.mxu0 %v7949
    %11169 = vmatpush.bf16.msra.mxu0 %v7945
    %11170 = vmatmul.bf16.gmra.mxu0 %v3680
    %v11171 = vpop.f32.mrf.mxu0
    %v11172 = vadd.f32 %v11159, %v11171
    %v11173 = vpop.f32.mrf.mxu0
    %11174 = vdwg.mxu0
    %11175 = vmatpush.bf16.msra.mxu0 %v8005
    %11176 = vmatpush.bf16.msra.mxu0 %v8001
    %11177 = vmatpush.bf16.msra.mxu0 %v7997
    %11178 = vmatpush.bf16.msra.mxu0 %v7993
    %11179 = vmatpush.bf16.msra.mxu0 %v7989
    %11180 = vmatpush.bf16.msra.mxu0 %v7985
    %11181 = vmatpush.bf16.msra.mxu0 %v7981
    %11182 = vmatpush.bf16.msra.mxu0 %v7977
    %11183 = vmatmul.bf16.gmra.mxu0 %v3681
    %v11184 = vpop.f32.mrf.mxu0
    %v11185 = vadd.f32 %v11172, %v11184
    %v11186 = vpop.f32.mrf.mxu0
    %11187 = vdwg.mxu0
    %11188 = vmatpush.bf16.msra.mxu0 %v8037
    %11189 = vmatpush.bf16.msra.mxu0 %v8033
    %11190 = vmatpush.bf16.msra.mxu0 %v8029
    %11191 = vmatpush.bf16.msra.mxu0 %v8025
    %11192 = vmatpush.bf16.msra.mxu0 %v8021
    %11193 = vmatpush.bf16.msra.mxu0 %v8017
    %11194 = vmatpush.bf16.msra.mxu0 %v8013
    %11195 = vmatpush.bf16.msra.mxu0 %v8009
    %11196 = vmatmul.bf16.gmra.mxu0 %v3682
    %v11197 = vpop.f32.mrf.mxu0
    %v11198 = vadd.f32 %v11185, %v11197
    %v11199 = vpop.f32.mrf.mxu0
    %11200 = vdwg.mxu0
    %11201 = vmatpush.bf16.msra.mxu0 %v8069
    %11202 = vmatpush.bf16.msra.mxu0 %v8065
    %11203 = vmatpush.bf16.msra.mxu0 %v8061
    %11204 = vmatpush.bf16.msra.mxu0 %v8057
    %11205 = vmatpush.bf16.msra.mxu0 %v8053
    %11206 = vmatpush.bf16.msra.mxu0 %v8049
    %11207 = vmatpush.bf16.msra.mxu0 %v8045
    %11208 = vmatpush.bf16.msra.mxu0 %v8041
    %11209 = vmatmul.bf16.gmra.mxu0 %v3683
    %v11210 = vpop.f32.mrf.mxu0
    %v11211 = vadd.f32 %v11198, %v11210
    %v11212 = vpop.f32.mrf.mxu0
    %11213 = vdwg.mxu0
    %11214 = vmatpush.bf16.msra.mxu0 %v8101
    %11215 = vmatpush.bf16.msra.mxu0 %v8097
    %11216 = vmatpush.bf16.msra.mxu0 %v8093
    %11217 = vmatpush.bf16.msra.mxu0 %v8089
    %11218 = vmatpush.bf16.msra.mxu0 %v8085
    %11219 = vmatpush.bf16.msra.mxu0 %v8081
    %11220 = vmatpush.bf16.msra.mxu0 %v8077
    %11221 = vmatpush.bf16.msra.mxu0 %v8073
    %11222 = vmatmul.bf16.gmra.mxu0 %v3684
    %v11223 = vpop.f32.mrf.mxu0
    %v11224 = vadd.f32 %v11211, %v11223
    %v11225 = vpop.f32.mrf.mxu0
    %11226 = vdwg.mxu0
    %11227 = vmatpush.bf16.msra.mxu0 %v8133
    %11228 = vmatpush.bf16.msra.mxu0 %v8129
    %11229 = vmatpush.bf16.msra.mxu0 %v8125
    %11230 = vmatpush.bf16.msra.mxu0 %v8121
    %11231 = vmatpush.bf16.msra.mxu0 %v8117
    %11232 = vmatpush.bf16.msra.mxu0 %v8113
    %11233 = vmatpush.bf16.msra.mxu0 %v8109
    %11234 = vmatpush.bf16.msra.mxu0 %v8105
    %11235 = vmatmul.bf16.gmra.mxu0 %v3685
    %v11236 = vpop.f32.mrf.mxu0
    %v11237 = vadd.f32 %v11224, %v11236
    %v11238 = vpop.f32.mrf.mxu0
    %11239 = vdwg.mxu0
    %11240 = vmatpush.bf16.msra.mxu0 %v8165
    %11241 = vmatpush.bf16.msra.mxu0 %v8161
    %11242 = vmatpush.bf16.msra.mxu0 %v8157
    %11243 = vmatpush.bf16.msra.mxu0 %v8153
    %11244 = vmatpush.bf16.msra.mxu0 %v8149
    %11245 = vmatpush.bf16.msra.mxu0 %v8145
    %11246 = vmatpush.bf16.msra.mxu0 %v8141
    %11247 = vmatpush.bf16.msra.mxu0 %v8137
    %11248 = vmatmul.bf16.gmra.mxu0 %v3686
    %v11249 = vpop.f32.mrf.mxu0
    %v11250 = vadd.f32 %v11237, %v11249
    %v11251 = vpop.f32.mrf.mxu0
    %11252 = vdwg.mxu0
    %11253 = vmatpush.bf16.msra.mxu0 %v8197
    %11254 = vmatpush.bf16.msra.mxu0 %v8193
    %11255 = vmatpush.bf16.msra.mxu0 %v8189
    %11256 = vmatpush.bf16.msra.mxu0 %v8185
    %11257 = vmatpush.bf16.msra.mxu0 %v8181
    %11258 = vmatpush.bf16.msra.mxu0 %v8177
    %11259 = vmatpush.bf16.msra.mxu0 %v8173
    %11260 = vmatpush.bf16.msra.mxu0 %v8169
    %11261 = vmatmul.bf16.gmra.mxu0 %v3687
    %v11262 = vpop.f32.mrf.mxu0
    %v11263 = vadd.f32 %v11250, %v11262
    %v11264 = vpop.f32.mrf.mxu0
    %11265 = vdwg.mxu0
    %11266 = vmatpush.bf16.msra.mxu0 %v8229
    %11267 = vmatpush.bf16.msra.mxu0 %v8225
    %11268 = vmatpush.bf16.msra.mxu0 %v8221
    %11269 = vmatpush.bf16.msra.mxu0 %v8217
    %11270 = vmatpush.bf16.msra.mxu0 %v8213
    %11271 = vmatpush.bf16.msra.mxu0 %v8209
    %11272 = vmatpush.bf16.msra.mxu0 %v8205
    %11273 = vmatpush.bf16.msra.mxu0 %v8201
    %11274 = vmatmul.bf16.gmra.mxu0 %v3688
    %v11275 = vpop.f32.mrf.mxu0
    %v11276 = vadd.f32 %v11263, %v11275
    %v11277 = vpop.f32.mrf.mxu0
    %11278 = vdwg.mxu0
    %11279 = vmatpush.bf16.msra.mxu0 %v8261
    %11280 = vmatpush.bf16.msra.mxu0 %v8257
    %11281 = vmatpush.bf16.msra.mxu0 %v8253
    %11282 = vmatpush.bf16.msra.mxu0 %v8249
    %11283 = vmatpush.bf16.msra.mxu0 %v8245
    %11284 = vmatpush.bf16.msra.mxu0 %v8241
    %11285 = vmatpush.bf16.msra.mxu0 %v8237
    %11286 = vmatpush.bf16.msra.mxu0 %v8233
    %11287 = vmatmul.bf16.gmra.mxu0 %v3689
    %v11288 = vpop.f32.mrf.mxu0
    %v11289 = vadd.f32 %v11276, %v11288
    %v11290 = vpop.f32.mrf.mxu0
    %11291 = vdwg.mxu0
    %11292 = vmatpush.bf16.msra.mxu0 %v8293
    %11293 = vmatpush.bf16.msra.mxu0 %v8289
    %11294 = vmatpush.bf16.msra.mxu0 %v8285
    %11295 = vmatpush.bf16.msra.mxu0 %v8281
    %11296 = vmatpush.bf16.msra.mxu0 %v8277
    %11297 = vmatpush.bf16.msra.mxu0 %v8273
    %11298 = vmatpush.bf16.msra.mxu0 %v8269
    %11299 = vmatpush.bf16.msra.mxu0 %v8265
    %11300 = vmatmul.bf16.gmra.mxu0 %v3690
    %v11301 = vpop.f32.mrf.mxu0
    %v11302 = vadd.f32 %v11289, %v11301
    %v11303 = vpop.f32.mrf.mxu0
    %11304 = vdwg.mxu0
    %11305 = vmatpush.bf16.msra.mxu0 %v8325
    %11306 = vmatpush.bf16.msra.mxu0 %v8321
    %11307 = vmatpush.bf16.msra.mxu0 %v8317
    %11308 = vmatpush.bf16.msra.mxu0 %v8313
    %11309 = vmatpush.bf16.msra.mxu0 %v8309
    %11310 = vmatpush.bf16.msra.mxu0 %v8305
    %11311 = vmatpush.bf16.msra.mxu0 %v8301
    %11312 = vmatpush.bf16.msra.mxu0 %v8297
    %11313 = vmatmul.bf16.gmra.mxu0 %v3691
    %v11314 = vpop.f32.mrf.mxu0
    %v11315 = vadd.f32 %v11302, %v11314
    %v11316 = vpop.f32.mrf.mxu0
    %11317 = vdwg.mxu0
    %11318 = vmatpush.bf16.msra.mxu0 %v8357
    %11319 = vmatpush.bf16.msra.mxu0 %v8353
    %11320 = vmatpush.bf16.msra.mxu0 %v8349
    %11321 = vmatpush.bf16.msra.mxu0 %v8345
    %11322 = vmatpush.bf16.msra.mxu0 %v8341
    %11323 = vmatpush.bf16.msra.mxu0 %v8337
    %11324 = vmatpush.bf16.msra.mxu0 %v8333
    %11325 = vmatpush.bf16.msra.mxu0 %v8329
    %11326 = vmatmul.bf16.gmra.mxu0 %v3692
    %v11327 = vpop.f32.mrf.mxu0
    %v11328 = vadd.f32 %v11315, %v11327
    %v11329 = vpop.f32.mrf.mxu0
    %11330 = vdwg.mxu0
    %11331 = vmatpush.bf16.msra.mxu0 %v8389
    %11332 = vmatpush.bf16.msra.mxu0 %v8385
    %11333 = vmatpush.bf16.msra.mxu0 %v8381
    %11334 = vmatpush.bf16.msra.mxu0 %v8377
    %11335 = vmatpush.bf16.msra.mxu0 %v8373
    %11336 = vmatpush.bf16.msra.mxu0 %v8369
    %11337 = vmatpush.bf16.msra.mxu0 %v8365
    %11338 = vmatpush.bf16.msra.mxu0 %v8361
    %11339 = vmatmul.bf16.gmra.mxu0 %v3693
    %v11340 = vpop.f32.mrf.mxu0
    %v11341 = vadd.f32 %v11328, %v11340
    %v11342 = vpop.f32.mrf.mxu0
    %11343 = vdwg.mxu0
    %11344 = vmatpush.bf16.msra.mxu0 %v8421
    %11345 = vmatpush.bf16.msra.mxu0 %v8417
    %11346 = vmatpush.bf16.msra.mxu0 %v8413
    %11347 = vmatpush.bf16.msra.mxu0 %v8409
    %11348 = vmatpush.bf16.msra.mxu0 %v8405
    %11349 = vmatpush.bf16.msra.mxu0 %v8401
    %11350 = vmatpush.bf16.msra.mxu0 %v8397
    %11351 = vmatpush.bf16.msra.mxu0 %v8393
    %11352 = vmatmul.bf16.gmra.mxu0 %v3694
    %v11353 = vpop.f32.mrf.mxu0
    %v11354 = vadd.f32 %v11341, %v11353
    %v11355 = vpop.f32.mrf.mxu0
    %11356 = vdwg.mxu0
    %11357 = vmatpush.bf16.msra.mxu0 %v8453
    %11358 = vmatpush.bf16.msra.mxu0 %v8449
    %11359 = vmatpush.bf16.msra.mxu0 %v8445
    %11360 = vmatpush.bf16.msra.mxu0 %v8441
    %11361 = vmatpush.bf16.msra.mxu0 %v8437
    %11362 = vmatpush.bf16.msra.mxu0 %v8433
    %11363 = vmatpush.bf16.msra.mxu0 %v8429
    %11364 = vmatpush.bf16.msra.mxu0 %v8425
    %11365 = vmatmul.bf16.gmra.mxu0 %v3695
    %v11366 = vpop.f32.mrf.mxu0
    %v11367 = vadd.f32 %v11354, %v11366
    %v11368 = vpop.f32.mrf.mxu0
    %11369 = vdwg.mxu0
    %11370 = vmatpush.bf16.msra.mxu0 %v8485
    %11371 = vmatpush.bf16.msra.mxu0 %v8481
    %11372 = vmatpush.bf16.msra.mxu0 %v8477
    %11373 = vmatpush.bf16.msra.mxu0 %v8473
    %11374 = vmatpush.bf16.msra.mxu0 %v8469
    %11375 = vmatpush.bf16.msra.mxu0 %v8465
    %11376 = vmatpush.bf16.msra.mxu0 %v8461
    %11377 = vmatpush.bf16.msra.mxu0 %v8457
    %11378 = vmatmul.bf16.gmra.mxu0 %v3696
    %v11379 = vpop.f32.mrf.mxu0
    %v11380 = vadd.f32 %v11367, %v11379
    %v11381 = vpop.f32.mrf.mxu0
    %11382 = vdwg.mxu0
    %11383 = vmatpush.bf16.msra.mxu0 %v8517
    %11384 = vmatpush.bf16.msra.mxu0 %v8513
    %11385 = vmatpush.bf16.msra.mxu0 %v8509
    %11386 = vmatpush.bf16.msra.mxu0 %v8505
    %11387 = vmatpush.bf16.msra.mxu0 %v8501
    %11388 = vmatpush.bf16.msra.mxu0 %v8497
    %11389 = vmatpush.bf16.msra.mxu0 %v8493
    %11390 = vmatpush.bf16.msra.mxu0 %v8489
    %11391 = vmatmul.bf16.gmra.mxu0 %v3697
    %v11392 = vpop.f32.mrf.mxu0
    %v11393 = vadd.f32 %v11380, %v11392
    %v11394 = vpop.f32.mrf.mxu0
    %11395 = vdwg.mxu0
    %11396 = vmatpush.bf16.msra.mxu0 %v8549
    %11397 = vmatpush.bf16.msra.mxu0 %v8545
    %11398 = vmatpush.bf16.msra.mxu0 %v8541
    %11399 = vmatpush.bf16.msra.mxu0 %v8537
    %11400 = vmatpush.bf16.msra.mxu0 %v8533
    %11401 = vmatpush.bf16.msra.mxu0 %v8529
    %11402 = vmatpush.bf16.msra.mxu0 %v8525
    %11403 = vmatpush.bf16.msra.mxu0 %v8521
    %11404 = vmatmul.bf16.gmra.mxu0 %v3698
    %v11405 = vpop.f32.mrf.mxu0
    %v11406 = vadd.f32 %v11393, %v11405
    %v11407 = vpop.f32.mrf.mxu0
    %11408 = vdwg.mxu0
    %11409 = vmatpush.bf16.msra.mxu0 %v8581
    %11410 = vmatpush.bf16.msra.mxu0 %v8577
    %11411 = vmatpush.bf16.msra.mxu0 %v8573
    %11412 = vmatpush.bf16.msra.mxu0 %v8569
    %11413 = vmatpush.bf16.msra.mxu0 %v8565
    %11414 = vmatpush.bf16.msra.mxu0 %v8561
    %11415 = vmatpush.bf16.msra.mxu0 %v8557
    %11416 = vmatpush.bf16.msra.mxu0 %v8553
    %11417 = vmatmul.bf16.gmra.mxu0 %v3699
    %v11418 = vpop.f32.mrf.mxu0
    %v11419 = vadd.f32 %v11406, %v11418
    %v11420 = vpop.f32.mrf.mxu0
    %11421 = vdwg.mxu0
    %11422 = vmatpush.bf16.msra.mxu0 %v8613
    %11423 = vmatpush.bf16.msra.mxu0 %v8609
    %11424 = vmatpush.bf16.msra.mxu0 %v8605
    %11425 = vmatpush.bf16.msra.mxu0 %v8601
    %11426 = vmatpush.bf16.msra.mxu0 %v8597
    %11427 = vmatpush.bf16.msra.mxu0 %v8593
    %11428 = vmatpush.bf16.msra.mxu0 %v8589
    %11429 = vmatpush.bf16.msra.mxu0 %v8585
    %11430 = vmatmul.bf16.gmra.mxu0 %v3700
    %v11431 = vpop.f32.mrf.mxu0
    %v11432 = vadd.f32 %v11419, %v11431
    %v11433 = vpop.f32.mrf.mxu0
    %11434 = vdwg.mxu0
    %11435 = vmatpush.bf16.msra.mxu0 %v8645
    %11436 = vmatpush.bf16.msra.mxu0 %v8641
    %11437 = vmatpush.bf16.msra.mxu0 %v8637
    %11438 = vmatpush.bf16.msra.mxu0 %v8633
    %11439 = vmatpush.bf16.msra.mxu0 %v8629
    %11440 = vmatpush.bf16.msra.mxu0 %v8625
    %11441 = vmatpush.bf16.msra.mxu0 %v8621
    %11442 = vmatpush.bf16.msra.mxu0 %v8617
    %11443 = vmatmul.bf16.gmra.mxu0 %v3701
    %v11444 = vpop.f32.mrf.mxu0
    %v11445 = vadd.f32 %v11432, %v11444
    %v11446 = vpop.f32.mrf.mxu0
    %11447 = vdwg.mxu0
    %11448 = vmatpush.bf16.msra.mxu0 %v8677
    %11449 = vmatpush.bf16.msra.mxu0 %v8673
    %11450 = vmatpush.bf16.msra.mxu0 %v8669
    %11451 = vmatpush.bf16.msra.mxu0 %v8665
    %11452 = vmatpush.bf16.msra.mxu0 %v8661
    %11453 = vmatpush.bf16.msra.mxu0 %v8657
    %11454 = vmatpush.bf16.msra.mxu0 %v8653
    %11455 = vmatpush.bf16.msra.mxu0 %v8649
    %11456 = vmatmul.bf16.gmra.mxu0 %v3702
    %v11457 = vpop.f32.mrf.mxu0
    %v11458 = vadd.f32 %v11445, %v11457
    %v11459 = vpop.f32.mrf.mxu0
    %11460 = vdwg.mxu0
    %11461 = vmatpush.bf16.msra.mxu0 %v8709
    %11462 = vmatpush.bf16.msra.mxu0 %v8705
    %11463 = vmatpush.bf16.msra.mxu0 %v8701
    %11464 = vmatpush.bf16.msra.mxu0 %v8697
    %11465 = vmatpush.bf16.msra.mxu0 %v8693
    %11466 = vmatpush.bf16.msra.mxu0 %v8689
    %11467 = vmatpush.bf16.msra.mxu0 %v8685
    %11468 = vmatpush.bf16.msra.mxu0 %v8681
    %11469 = vmatmul.bf16.gmra.mxu0 %v3703
    %v11470 = vpop.f32.mrf.mxu0
    %v11471 = vadd.f32 %v11458, %v11470
    %v11472 = vpop.f32.mrf.mxu0
    %11473 = vdwg.mxu0
    %11474 = vmatpush.bf16.msra.mxu0 %v8741
    %11475 = vmatpush.bf16.msra.mxu0 %v8737
    %11476 = vmatpush.bf16.msra.mxu0 %v8733
    %11477 = vmatpush.bf16.msra.mxu0 %v8729
    %11478 = vmatpush.bf16.msra.mxu0 %v8725
    %11479 = vmatpush.bf16.msra.mxu0 %v8721
    %11480 = vmatpush.bf16.msra.mxu0 %v8717
    %11481 = vmatpush.bf16.msra.mxu0 %v8713
    %11482 = vmatmul.bf16.gmra.mxu0 %v3704
    %v11483 = vpop.f32.mrf.mxu0
    %v11484 = vadd.f32 %v11471, %v11483
    %v11485 = vpop.f32.mrf.mxu0
    %11486 = vdwg.mxu0
    %11487 = vmatpush.bf16.msra.mxu0 %v8773
    %11488 = vmatpush.bf16.msra.mxu0 %v8769
    %11489 = vmatpush.bf16.msra.mxu0 %v8765
    %11490 = vmatpush.bf16.msra.mxu0 %v8761
    %11491 = vmatpush.bf16.msra.mxu0 %v8757
    %11492 = vmatpush.bf16.msra.mxu0 %v8753
    %11493 = vmatpush.bf16.msra.mxu0 %v8749
    %11494 = vmatpush.bf16.msra.mxu0 %v8745
    %11495 = vmatmul.bf16.gmra.mxu0 %v3705
    %v11496 = vpop.f32.mrf.mxu0
    %v11497 = vadd.f32 %v11484, %v11496
    %v11498 = vpop.f32.mrf.mxu0
    %11499 = vdwg.mxu0
    %11500 = vmatpush.bf16.msra.mxu0 %v8805
    %11501 = vmatpush.bf16.msra.mxu0 %v8801
    %11502 = vmatpush.bf16.msra.mxu0 %v8797
    %11503 = vmatpush.bf16.msra.mxu0 %v8793
    %11504 = vmatpush.bf16.msra.mxu0 %v8789
    %11505 = vmatpush.bf16.msra.mxu0 %v8785
    %11506 = vmatpush.bf16.msra.mxu0 %v8781
    %11507 = vmatpush.bf16.msra.mxu0 %v8777
    %11508 = vmatmul.bf16.gmra.mxu0 %v3706
    %v11509 = vpop.f32.mrf.mxu0
    %v11510 = vadd.f32 %v11497, %v11509
    %v11511 = vpop.f32.mrf.mxu0
    %11512 = vdwg.mxu0
    %11513 = vmatpush.bf16.msra.mxu0 %v8837
    %11514 = vmatpush.bf16.msra.mxu0 %v8833
    %11515 = vmatpush.bf16.msra.mxu0 %v8829
    %11516 = vmatpush.bf16.msra.mxu0 %v8825
    %11517 = vmatpush.bf16.msra.mxu0 %v8821
    %11518 = vmatpush.bf16.msra.mxu0 %v8817
    %11519 = vmatpush.bf16.msra.mxu0 %v8813
    %11520 = vmatpush.bf16.msra.mxu0 %v8809
    %11521 = vmatmul.bf16.gmra.mxu0 %v3707
    %v11522 = vpop.f32.mrf.mxu0
    %v11523 = vadd.f32 %v11510, %v11522
    %v11524 = vpop.f32.mrf.mxu0
    %11525 = vdwg.mxu0
    %v11526 = vpack.c.bf16 %v10275, %v10275
    %v11527 = vpack.c.bf16 %v10691, %v10691
    %v11528 = vpack.c.bf16 %v11107, %v11107
    %v11529 = vpack.c.bf16 %v11523, %v11523
    %v11530 = vld [vmem:[#allocation10] sm:$0xff]
    %v11531 = vld [vmem:[#allocation10 + $0x8] sm:$0xff]
    %v11532 = vld [vmem:[#allocation10 + $0x10] sm:$0xff]
    %v11533 = vld [vmem:[#allocation10 + $0x18] sm:$0xff]
    %v11534 = vld [vmem:[#allocation10 + $0x20] sm:$0xff]
    %v11535 = vld [vmem:[#allocation10 + $0x28] sm:$0xff]
    %v11536 = vld [vmem:[#allocation10 + $0x30] sm:$0xff]
    %v11537 = vld [vmem:[#allocation10 + $0x38] sm:$0xff]
    %v11538 = vld [vmem:[#allocation10 + $0x40] sm:$0xff]
    %v11539 = vld [vmem:[#allocation10 + $0x48] sm:$0xff]
    %v11540 = vld [vmem:[#allocation10 + $0x50] sm:$0xff]
    %v11541 = vld [vmem:[#allocation10 + $0x58] sm:$0xff]
    %v11542 = vld [vmem:[#allocation10 + $0x60] sm:$0xff]
    %v11543 = vld [vmem:[#allocation10 + $0x68] sm:$0xff]
    %v11544 = vld [vmem:[#allocation10 + $0x70] sm:$0xff]
    %v11545 = vld [vmem:[#allocation10 + $0x78] sm:$0xff]
    %v11546 = vld [vmem:[#allocation10 + $0x80] sm:$0xff]
    %v11547 = vld [vmem:[#allocation10 + $0x88] sm:$0xff]
    %v11548 = vld [vmem:[#allocation10 + $0x90] sm:$0xff]
    %v11549 = vld [vmem:[#allocation10 + $0x98] sm:$0xff]
    %v11550 = vld [vmem:[#allocation10 + $0xa0] sm:$0xff]
    %v11551 = vld [vmem:[#allocation10 + $0xa8] sm:$0xff]
    %v11552 = vld [vmem:[#allocation10 + $0xb0] sm:$0xff]
    %v11553 = vld [vmem:[#allocation10 + $0xb8] sm:$0xff]
    %v11554 = vld [vmem:[#allocation10 + $0xc0] sm:$0xff]
    %v11555 = vld [vmem:[#allocation10 + $0xc8] sm:$0xff]
    %v11556 = vld [vmem:[#allocation10 + $0xd0] sm:$0xff]
    %v11557 = vld [vmem:[#allocation10 + $0xd8] sm:$0xff]
    %v11558 = vld [vmem:[#allocation10 + $0xe0] sm:$0xff]
    %v11559 = vld [vmem:[#allocation10 + $0xe8] sm:$0xff]
    %v11560 = vld [vmem:[#allocation10 + $0xf0] sm:$0xff]
    %v11561 = vld [vmem:[#allocation10 + $0xf8] sm:$0xff]
    %v11562 = vld [vmem:[#allocation10 + $0x100] sm:$0xff]
    %v11563 = vld [vmem:[#allocation10 + $0x108] sm:$0xff]
    %v11564 = vld [vmem:[#allocation10 + $0x110] sm:$0xff]
    %v11565 = vld [vmem:[#allocation10 + $0x118] sm:$0xff]
    %v11566 = vld [vmem:[#allocation10 + $0x120] sm:$0xff]
    %v11567 = vld [vmem:[#allocation10 + $0x128] sm:$0xff]
    %v11568 = vld [vmem:[#allocation10 + $0x130] sm:$0xff]
    %v11569 = vld [vmem:[#allocation10 + $0x138] sm:$0xff]
    %v11570 = vld [vmem:[#allocation10 + $0x140] sm:$0xff]
    %v11571 = vld [vmem:[#allocation10 + $0x148] sm:$0xff]
    %v11572 = vld [vmem:[#allocation10 + $0x150] sm:$0xff]
    %v11573 = vld [vmem:[#allocation10 + $0x158] sm:$0xff]
    %v11574 = vld [vmem:[#allocation10 + $0x160] sm:$0xff]
    %v11575 = vld [vmem:[#allocation10 + $0x168] sm:$0xff]
    %v11576 = vld [vmem:[#allocation10 + $0x170] sm:$0xff]
    %v11577 = vld [vmem:[#allocation10 + $0x178] sm:$0xff]
    %v11578 = vld [vmem:[#allocation10 + $0x180] sm:$0xff]
    %v11579 = vld [vmem:[#allocation10 + $0x188] sm:$0xff]
    %v11580 = vld [vmem:[#allocation10 + $0x190] sm:$0xff]
    %v11581 = vld [vmem:[#allocation10 + $0x198] sm:$0xff]
    %v11582 = vld [vmem:[#allocation10 + $0x1a0] sm:$0xff]
    %v11583 = vld [vmem:[#allocation10 + $0x1a8] sm:$0xff]
    %v11584 = vld [vmem:[#allocation10 + $0x1b0] sm:$0xff]
    %v11585 = vld [vmem:[#allocation10 + $0x1b8] sm:$0xff]
    %v11586 = vld [vmem:[#allocation10 + $0x1c0] sm:$0xff]
    %v11587 = vld [vmem:[#allocation10 + $0x1c8] sm:$0xff]
    %v11588 = vld [vmem:[#allocation10 + $0x1d0] sm:$0xff]
    %v11589 = vld [vmem:[#allocation10 + $0x1d8] sm:$0xff]
    %v11590 = vld [vmem:[#allocation10 + $0x1e0] sm:$0xff]
    %v11591 = vld [vmem:[#allocation10 + $0x1e8] sm:$0xff]
    %v11592 = vld [vmem:[#allocation10 + $0x1f0] sm:$0xff]
    %v11593 = vld [vmem:[#allocation10 + $0x1f8] sm:$0xff]
    %v11594 = vld [vmem:[#allocation12] sm:$0x3]
    %v11596 = vperm.slane %v11594, 0
    %v11597 = vperm.slane %v11594, 1
    %v11664 = vunpack.c.l.b16 %v11530
    %v11665 = vunpack.c.h.b16 %v11530
    %v11666 = vunpack.c.l.b16 %v11531
    %v11667 = vunpack.c.h.b16 %v11531
    %v11668 = vunpack.c.l.b16 %v11532
    %v11669 = vunpack.c.h.b16 %v11532
    %v11670 = vunpack.c.l.b16 %v11533
    %v11671 = vunpack.c.h.b16 %v11533
    %v11672 = vunpack.c.l.b16 %v11534
    %v11673 = vunpack.c.h.b16 %v11534
    %v11674 = vunpack.c.l.b16 %v11535
    %v11675 = vunpack.c.h.b16 %v11535
    %v11676 = vunpack.c.l.b16 %v11536
    %v11677 = vunpack.c.h.b16 %v11536
    %v11678 = vunpack.c.l.b16 %v11537
    %v11679 = vunpack.c.h.b16 %v11537
    %v11680 = vunpack.c.l.b16 %v11538
    %v11681 = vunpack.c.h.b16 %v11538
    %v11682 = vunpack.c.l.b16 %v11539
    %v11683 = vunpack.c.h.b16 %v11539
    %v11684 = vunpack.c.l.b16 %v11540
    %v11685 = vunpack.c.h.b16 %v11540
    %v11686 = vunpack.c.l.b16 %v11541
    %v11687 = vunpack.c.h.b16 %v11541
    %v11688 = vunpack.c.l.b16 %v11542
    %v11689 = vunpack.c.h.b16 %v11542
    %v11690 = vunpack.c.l.b16 %v11543
    %v11691 = vunpack.c.h.b16 %v11543
    %v11692 = vunpack.c.l.b16 %v11544
    %v11693 = vunpack.c.h.b16 %v11544
    %v11694 = vunpack.c.l.b16 %v11545
    %v11695 = vunpack.c.h.b16 %v11545
    %v11696 = vunpack.c.l.b16 %v11546
    %v11697 = vunpack.c.h.b16 %v11546
    %v11698 = vunpack.c.l.b16 %v11547
    %v11699 = vunpack.c.h.b16 %v11547
    %v11700 = vunpack.c.l.b16 %v11548
    %v11701 = vunpack.c.h.b16 %v11548
    %v11702 = vunpack.c.l.b16 %v11549
    %v11703 = vunpack.c.h.b16 %v11549
    %v11704 = vunpack.c.l.b16 %v11550
    %v11705 = vunpack.c.h.b16 %v11550
    %v11706 = vunpack.c.l.b16 %v11551
    %v11707 = vunpack.c.h.b16 %v11551
    %v11708 = vunpack.c.l.b16 %v11552
    %v11709 = vunpack.c.h.b16 %v11552
    %v11710 = vunpack.c.l.b16 %v11553
    %v11711 = vunpack.c.h.b16 %v11553
    %v11712 = vunpack.c.l.b16 %v11554
    %v11713 = vunpack.c.h.b16 %v11554
    %v11714 = vunpack.c.l.b16 %v11555
    %v11715 = vunpack.c.h.b16 %v11555
    %v11716 = vunpack.c.l.b16 %v11556
    %v11717 = vunpack.c.h.b16 %v11556
    %v11718 = vunpack.c.l.b16 %v11557
    %v11719 = vunpack.c.h.b16 %v11557
    %v11720 = vunpack.c.l.b16 %v11558
    %v11721 = vunpack.c.h.b16 %v11558
    %v11722 = vunpack.c.l.b16 %v11559
    %v11723 = vunpack.c.h.b16 %v11559
    %v11724 = vunpack.c.l.b16 %v11560
    %v11725 = vunpack.c.h.b16 %v11560
    %v11726 = vunpack.c.l.b16 %v11561
    %v11727 = vunpack.c.h.b16 %v11561
    %v11728 = vunpack.c.l.b16 %v11562
    %v11729 = vunpack.c.h.b16 %v11562
    %v11730 = vunpack.c.l.b16 %v11563
    %v11731 = vunpack.c.h.b16 %v11563
    %v11732 = vunpack.c.l.b16 %v11564
    %v11733 = vunpack.c.h.b16 %v11564
    %v11734 = vunpack.c.l.b16 %v11565
    %v11735 = vunpack.c.h.b16 %v11565
    %v11736 = vunpack.c.l.b16 %v11566
    %v11737 = vunpack.c.h.b16 %v11566
    %v11738 = vunpack.c.l.b16 %v11567
    %v11739 = vunpack.c.h.b16 %v11567
    %v11740 = vunpack.c.l.b16 %v11568
    %v11741 = vunpack.c.h.b16 %v11568
    %v11742 = vunpack.c.l.b16 %v11569
    %v11743 = vunpack.c.h.b16 %v11569
    %v11744 = vunpack.c.l.b16 %v11570
    %v11745 = vunpack.c.h.b16 %v11570
    %v11746 = vunpack.c.l.b16 %v11571
    %v11747 = vunpack.c.h.b16 %v11571
    %v11748 = vunpack.c.l.b16 %v11572
    %v11749 = vunpack.c.h.b16 %v11572
    %v11750 = vunpack.c.l.b16 %v11573
    %v11751 = vunpack.c.h.b16 %v11573
    %v11752 = vunpack.c.l.b16 %v11574
    %v11753 = vunpack.c.h.b16 %v11574
    %v11754 = vunpack.c.l.b16 %v11575
    %v11755 = vunpack.c.h.b16 %v11575
    %v11756 = vunpack.c.l.b16 %v11576
    %v11757 = vunpack.c.h.b16 %v11576
    %v11758 = vunpack.c.l.b16 %v11577
    %v11759 = vunpack.c.h.b16 %v11577
    %v11760 = vunpack.c.l.b16 %v11578
    %v11761 = vunpack.c.h.b16 %v11578
    %v11762 = vunpack.c.l.b16 %v11579
    %v11763 = vunpack.c.h.b16 %v11579
    %v11764 = vunpack.c.l.b16 %v11580
    %v11765 = vunpack.c.h.b16 %v11580
    %v11766 = vunpack.c.l.b16 %v11581
    %v11767 = vunpack.c.h.b16 %v11581
    %v11768 = vunpack.c.l.b16 %v11582
    %v11769 = vunpack.c.h.b16 %v11582
    %v11770 = vunpack.c.l.b16 %v11583
    %v11771 = vunpack.c.h.b16 %v11583
    %v11772 = vunpack.c.l.b16 %v11584
    %v11773 = vunpack.c.h.b16 %v11584
    %v11774 = vunpack.c.l.b16 %v11585
    %v11775 = vunpack.c.h.b16 %v11585
    %v11776 = vunpack.c.l.b16 %v11586
    %v11777 = vunpack.c.h.b16 %v11586
    %v11778 = vunpack.c.l.b16 %v11587
    %v11779 = vunpack.c.h.b16 %v11587
    %v11780 = vunpack.c.l.b16 %v11588
    %v11781 = vunpack.c.h.b16 %v11588
    %v11782 = vunpack.c.l.b16 %v11589
    %v11783 = vunpack.c.h.b16 %v11589
    %v11784 = vunpack.c.l.b16 %v11590
    %v11785 = vunpack.c.h.b16 %v11590
    %v11786 = vunpack.c.l.b16 %v11591
    %v11787 = vunpack.c.h.b16 %v11591
    %v11788 = vunpack.c.l.b16 %v11592
    %v11789 = vunpack.c.h.b16 %v11592
    %v11790 = vunpack.c.l.b16 %v11593
    %v11791 = vunpack.c.h.b16 %v11593
    %v11792 = vpack.c.b16 %v11666, %v11664
    %v11793 = vpack.c.b16 %v11667, %v11665
    %v11794 = vpack.c.b16 %v11670, %v11668
    %v11795 = vpack.c.b16 %v11671, %v11669
    %v11796 = vpack.c.b16 %v11674, %v11672
    %v11797 = vpack.c.b16 %v11675, %v11673
    %v11798 = vpack.c.b16 %v11678, %v11676
    %v11799 = vpack.c.b16 %v11679, %v11677
    %v11800 = vpack.c.b16 %v11682, %v11680
    %v11801 = vpack.c.b16 %v11683, %v11681
    %v11802 = vpack.c.b16 %v11686, %v11684
    %v11803 = vpack.c.b16 %v11687, %v11685
    %v11804 = vpack.c.b16 %v11690, %v11688
    %v11805 = vpack.c.b16 %v11691, %v11689
    %v11806 = vpack.c.b16 %v11694, %v11692
    %v11807 = vpack.c.b16 %v11695, %v11693
    %v11808 = vpack.c.b16 %v11698, %v11696
    %v11809 = vpack.c.b16 %v11699, %v11697
    %v11810 = vpack.c.b16 %v11702, %v11700
    %v11811 = vpack.c.b16 %v11703, %v11701
    %v11812 = vpack.c.b16 %v11706, %v11704
    %v11813 = vpack.c.b16 %v11707, %v11705
    %v11814 = vpack.c.b16 %v11710, %v11708
    %v11815 = vpack.c.b16 %v11711, %v11709
    %v11816 = vpack.c.b16 %v11714, %v11712
    %v11817 = vpack.c.b16 %v11715, %v11713
    %v11818 = vpack.c.b16 %v11718, %v11716
    %v11819 = vpack.c.b16 %v11719, %v11717
    %v11820 = vpack.c.b16 %v11722, %v11720
    %v11821 = vpack.c.b16 %v11723, %v11721
    %v11822 = vpack.c.b16 %v11726, %v11724
    %v11823 = vpack.c.b16 %v11727, %v11725
    %v11824 = vpack.c.b16 %v11730, %v11728
    %v11825 = vpack.c.b16 %v11731, %v11729
    %v11826 = vpack.c.b16 %v11734, %v11732
    %v11827 = vpack.c.b16 %v11735, %v11733
    %v11828 = vpack.c.b16 %v11738, %v11736
    %v11829 = vpack.c.b16 %v11739, %v11737
    %v11830 = vpack.c.b16 %v11742, %v11740
    %v11831 = vpack.c.b16 %v11743, %v11741
    %v11832 = vpack.c.b16 %v11746, %v11744
    %v11833 = vpack.c.b16 %v11747, %v11745
    %v11834 = vpack.c.b16 %v11750, %v11748
    %v11835 = vpack.c.b16 %v11751, %v11749
    %v11836 = vpack.c.b16 %v11754, %v11752
    %v11837 = vpack.c.b16 %v11755, %v11753
    %v11838 = vpack.c.b16 %v11758, %v11756
    %v11839 = vpack.c.b16 %v11759, %v11757
    %v11840 = vpack.c.b16 %v11762, %v11760
    %v11841 = vpack.c.b16 %v11763, %v11761
    %v11842 = vpack.c.b16 %v11766, %v11764
    %v11843 = vpack.c.b16 %v11767, %v11765
    %v11844 = vpack.c.b16 %v11770, %v11768
    %v11845 = vpack.c.b16 %v11771, %v11769
    %v11846 = vpack.c.b16 %v11774, %v11772
    %v11847 = vpack.c.b16 %v11775, %v11773
    %v11848 = vpack.c.b16 %v11778, %v11776
    %v11849 = vpack.c.b16 %v11779, %v11777
    %v11850 = vpack.c.b16 %v11782, %v11780
    %v11851 = vpack.c.b16 %v11783, %v11781
    %v11852 = vpack.c.b16 %v11786, %v11784
    %v11853 = vpack.c.b16 %v11787, %v11785
    %v11854 = vpack.c.b16 %v11790, %v11788
    %v11855 = vpack.c.b16 %v11791, %v11789
    %11920 = vmatpush.bf16.msra.mxu0 %v11806
    %11921 = vmatpush.bf16.msra.mxu0 %v11804
    %11922 = vmatpush.bf16.msra.mxu0 %v11802
    %11923 = vmatpush.bf16.msra.mxu0 %v11800
    %11924 = vmatpush.bf16.msra.mxu0 %v11798
    %11925 = vmatpush.bf16.msra.mxu0 %v11796
    %11926 = vmatpush.bf16.msra.mxu0 %v11794
    %11927 = vmatpush.bf16.msra.mxu0 %v11792
    %11928 = vmatmul.bf16.gmra.mxu0 %v11526
    %v11929 = vpop.f32.mrf.mxu0
    %v11930 = vadd.f32 %v11596, %v11929
    %v11931 = vpop.f32.mrf.mxu0
    %11932 = vdwg.mxu0
    %11933 = vmatpush.bf16.msra.mxu0 %v11822
    %11934 = vmatpush.bf16.msra.mxu0 %v11820
    %11935 = vmatpush.bf16.msra.mxu0 %v11818
    %11936 = vmatpush.bf16.msra.mxu0 %v11816
    %11937 = vmatpush.bf16.msra.mxu0 %v11814
    %11938 = vmatpush.bf16.msra.mxu0 %v11812
    %11939 = vmatpush.bf16.msra.mxu0 %v11810
    %11940 = vmatpush.bf16.msra.mxu0 %v11808
    %11941 = vmatmul.bf16.gmra.mxu0 %v11527
    %v11942 = vpop.f32.mrf.mxu0
    %v11943 = vadd.f32 %v11930, %v11942
    %v11944 = vpop.f32.mrf.mxu0
    %11945 = vdwg.mxu0
    %11946 = vmatpush.bf16.msra.mxu0 %v11838
    %11947 = vmatpush.bf16.msra.mxu0 %v11836
    %11948 = vmatpush.bf16.msra.mxu0 %v11834
    %11949 = vmatpush.bf16.msra.mxu0 %v11832
    %11950 = vmatpush.bf16.msra.mxu0 %v11830
    %11951 = vmatpush.bf16.msra.mxu0 %v11828
    %11952 = vmatpush.bf16.msra.mxu0 %v11826
    %11953 = vmatpush.bf16.msra.mxu0 %v11824
    %11954 = vmatmul.bf16.gmra.mxu0 %v11528
    %v11955 = vpop.f32.mrf.mxu0
    %v11956 = vadd.f32 %v11943, %v11955
    %v11957 = vpop.f32.mrf.mxu0
    %11958 = vdwg.mxu0
    %11959 = vmatpush.bf16.msra.mxu0 %v11854
    %11960 = vmatpush.bf16.msra.mxu0 %v11852
    %11961 = vmatpush.bf16.msra.mxu0 %v11850
    %11962 = vmatpush.bf16.msra.mxu0 %v11848
    %11963 = vmatpush.bf16.msra.mxu0 %v11846
    %11964 = vmatpush.bf16.msra.mxu0 %v11844
    %11965 = vmatpush.bf16.msra.mxu0 %v11842
    %11966 = vmatpush.bf16.msra.mxu0 %v11840
    %11967 = vmatmul.bf16.gmra.mxu0 %v11529
    %v11968 = vpop.f32.mrf.mxu0
    %v11969 = vadd.f32 %v11956, %v11968
    %v11970 = vpop.f32.mrf.mxu0
    %11971 = vdwg.mxu0
    %11972 = vmatpush.bf16.msra.mxu0 %v11807
    %11973 = vmatpush.bf16.msra.mxu0 %v11805
    %11974 = vmatpush.bf16.msra.mxu0 %v11803
    %11975 = vmatpush.bf16.msra.mxu0 %v11801
    %11976 = vmatpush.bf16.msra.mxu0 %v11799
    %11977 = vmatpush.bf16.msra.mxu0 %v11797
    %11978 = vmatpush.bf16.msra.mxu0 %v11795
    %11979 = vmatpush.bf16.msra.mxu0 %v11793
    %11980 = vmatmul.bf16.gmra.mxu0 %v11526
    %v11981 = vpop.f32.mrf.mxu0
    %v11982 = vadd.f32 %v11597, %v11981
    %v11983 = vpop.f32.mrf.mxu0
    %11984 = vdwg.mxu0
    %11985 = vmatpush.bf16.msra.mxu0 %v11823
    %11986 = vmatpush.bf16.msra.mxu0 %v11821
    %11987 = vmatpush.bf16.msra.mxu0 %v11819
    %11988 = vmatpush.bf16.msra.mxu0 %v11817
    %11989 = vmatpush.bf16.msra.mxu0 %v11815
    %11990 = vmatpush.bf16.msra.mxu0 %v11813
    %11991 = vmatpush.bf16.msra.mxu0 %v11811
    %11992 = vmatpush.bf16.msra.mxu0 %v11809
    %11993 = vmatmul.bf16.gmra.mxu0 %v11527
    %v11994 = vpop.f32.mrf.mxu0
    %v11995 = vadd.f32 %v11982, %v11994
    %v11996 = vpop.f32.mrf.mxu0
    %11997 = vdwg.mxu0
    %11998 = vmatpush.bf16.msra.mxu0 %v11839
    %11999 = vmatpush.bf16.msra.mxu0 %v11837
    %12000 = vmatpush.bf16.msra.mxu0 %v11835
    %12001 = vmatpush.bf16.msra.mxu0 %v11833
    %12002 = vmatpush.bf16.msra.mxu0 %v11831
    %12003 = vmatpush.bf16.msra.mxu0 %v11829
    %12004 = vmatpush.bf16.msra.mxu0 %v11827
    %12005 = vmatpush.bf16.msra.mxu0 %v11825
    %12006 = vmatmul.bf16.gmra.mxu0 %v11528
    %v12007 = vpop.f32.mrf.mxu0
    %v12008 = vadd.f32 %v11995, %v12007
    %v12009 = vpop.f32.mrf.mxu0
    %12010 = vdwg.mxu0
    %12011 = vmatpush.bf16.msra.mxu0 %v11855
    %12012 = vmatpush.bf16.msra.mxu0 %v11853
    %12013 = vmatpush.bf16.msra.mxu0 %v11851
    %12014 = vmatpush.bf16.msra.mxu0 %v11849
    %12015 = vmatpush.bf16.msra.mxu0 %v11847
    %12016 = vmatpush.bf16.msra.mxu0 %v11845
    %12017 = vmatpush.bf16.msra.mxu0 %v11843
    %12018 = vmatpush.bf16.msra.mxu0 %v11841
    %12019 = vmatmul.bf16.gmra.mxu0 %v11529
    %v12020 = vpop.f32.mrf.mxu0
    %v12021 = vadd.f32 %v12008, %v12020
    %v12022 = vpop.f32.mrf.mxu0
    %12023 = vdwg.mxu0
    %v12024 = vld [vmem:[%s7] sm:$0xff]
    %v12025 = vld [vmem:[%s7 + $0x8] sm:$0xff]
    %v12026 = vld [vmem:[%s7 + $0x10] sm:$0xff]
    %v12027 = vld [vmem:[%s7 + $0x18] sm:$0xff]
    %v12028 = vld [vmem:[%s7 + $0x20] sm:$0xff]
    %v12029 = vld [vmem:[%s7 + $0x28] sm:$0xff]
    %v12030 = vld [vmem:[%s7 + $0x30] sm:$0xff]
    %v12031 = vld [vmem:[%s7 + $0x38] sm:$0xff]
    %v12032 = vld [vmem:[%s7 + $0x40] sm:$0xff]
    %v12033 = vld [vmem:[%s7 + $0x48] sm:$0xff]
    %v12034 = vld [vmem:[%s7 + $0x50] sm:$0xff]
    %v12035 = vld [vmem:[%s7 + $0x58] sm:$0xff]
    %v12036 = vld [vmem:[%s7 + $0x60] sm:$0xff]
    %v12037 = vld [vmem:[%s7 + $0x68] sm:$0xff]
    %v12038 = vld [vmem:[%s7 + $0x70] sm:$0xff]
    %v12039 = vld [vmem:[%s7 + $0x78] sm:$0xff]
    %v12040 = vld [vmem:[%s7 + $0x80] sm:$0xff]
    %v12041 = vld [vmem:[%s7 + $0x88] sm:$0xff]
    %v12042 = vld [vmem:[%s7 + $0x90] sm:$0xff]
    %v12043 = vld [vmem:[%s7 + $0x98] sm:$0xff]
    %v12044 = vld [vmem:[%s7 + $0xa0] sm:$0xff]
    %v12045 = vld [vmem:[%s7 + $0xa8] sm:$0xff]
    %v12046 = vld [vmem:[%s7 + $0xb0] sm:$0xff]
    %v12047 = vld [vmem:[%s7 + $0xb8] sm:$0xff]
    %v12048 = vld [vmem:[%s7 + $0xc0] sm:$0xff]
    %v12049 = vld [vmem:[%s7 + $0xc8] sm:$0xff]
    %v12050 = vld [vmem:[%s7 + $0xd0] sm:$0xff]
    %v12051 = vld [vmem:[%s7 + $0xd8] sm:$0xff]
    %v12052 = vld [vmem:[%s7 + $0xe0] sm:$0xff]
    %v12053 = vld [vmem:[%s7 + $0xe8] sm:$0xff]
    %v12054 = vld [vmem:[%s7 + $0xf0] sm:$0xff]
    %v12055 = vld [vmem:[%s7 + $0xf8] sm:$0xff]
    %v12056 = vld [vmem:[#allocation13] sm:$0x1]
    %v12058 = vperm.slane %v12056, 0
    %12060 = vmatpush.msra.mxu0 %v12039
    %12061 = vmatpush.msra.mxu0 %v12038
    %12062 = vmatpush.msra.mxu0 %v12037
    %12063 = vmatpush.msra.mxu0 %v12036
    %12064 = vmatpush.msra.mxu0 %v12035
    %12065 = vmatpush.msra.mxu0 %v12034
    %12066 = vmatpush.msra.mxu0 %v12033
    %12067 = vmatpush.msra.mxu0 %v12032
    %12068 = vmatpush.msra.mxu0 %v12031
    %12069 = vmatpush.msra.mxu0 %v12030
    %12070 = vmatpush.msra.mxu0 %v12029
    %12071 = vmatpush.msra.mxu0 %v12028
    %12072 = vmatpush.msra.mxu0 %v12027
    %12073 = vmatpush.msra.mxu0 %v12026
    %12074 = vmatpush.msra.mxu0 %v12025
    %12075 = vmatpush.msra.mxu0 %v12024
    %12076 = vmatmul.f32.gmra.mxu0 %v11969
    %v12077 = vpop.f32.mrf.mxu0
    %v12078 = vadd.f32 %v12058, %v12077
    %12079 = vdwg.mxu0
    %12080 = vmatpush.msra.mxu0 %v12055
    %12081 = vmatpush.msra.mxu0 %v12054
    %12082 = vmatpush.msra.mxu0 %v12053
    %12083 = vmatpush.msra.mxu0 %v12052
    %12084 = vmatpush.msra.mxu0 %v12051
    %12085 = vmatpush.msra.mxu0 %v12050
    %12086 = vmatpush.msra.mxu0 %v12049
    %12087 = vmatpush.msra.mxu0 %v12048
    %12088 = vmatpush.msra.mxu0 %v12047
    %12089 = vmatpush.msra.mxu0 %v12046
    %12090 = vmatpush.msra.mxu0 %v12045
    %12091 = vmatpush.msra.mxu0 %v12044
    %12092 = vmatpush.msra.mxu0 %v12043
    %12093 = vmatpush.msra.mxu0 %v12042
    %12094 = vmatpush.msra.mxu0 %v12041
    %12095 = vmatpush.msra.mxu0 %v12040
    %12096 = vmatmul.f32.gmra.mxu0 %v12021
    %v12097 = vpop.f32.mrf.mxu0
    %v12098 = vadd.f32 %v12078, %v12097
    %12099 = vdwg.mxu0
    %vm12100 = vcmask 11264
    %v12101 = vsel %vm12100, %v12098, -inf
    %12102 = vmax.xlane.f32.xlu0 %v12101
    %v12103 = vpop.xlane.xlu0 %12102
    %v12104 = vsub.f32 %v12098, %v12103
    %v12105 = vmul.f32 %v12104, 1.442695
    %v12106 = vpow.pop %v12105
    %v12107 = vsel %vm12100, %v12106, 0.0
    %12108 = vadd.xlane.f32.xlu0 %v12107
    %v12109 = vpop.xlane.xlu0 %12108
    %v12110 = vrcp.pop %v12109
    %v12111 = vmul.f32 %v12109, %v12110
    %v12112 = vsub.f32 1.0, %v12111
    %v12113 = vmul.f32 %v12110, %v12112
    %v12114 = vadd.f32 %v12110, %v12113
    %vm12115 = vweird.f32 %v12109
    %vm12116 = vweird.f32 %v12110
    %vm12117 = vmor %vm12115, %vm12116
    %v12118 = vsel %vm12117, %v12110, %v12114
    %v12119 = vand.u32 2147483647, %v12109
    %vm12120 = vcmp.eq.f32.partialorder %v12119, 8.507059e+37
    %v12121 = vand.u32 %v12109, 2147483648
    %v12122 = vor.u32 1.1754944e-38, %v12121
    %v12123 = vsel %vm12120, %v12122, %v12118
    %v12124 = vmul.f32 %v12106, %v12123
    %12125 = vst.msk [vmem:[%s9] sm:$0xf] %vm12100, %v12124
    // Predicated region
    $region70: #{model_forward.1} parent=1 // pred_check
      _
    $region71: #{model_forward.1} parent=1 // pred_check_branch
      %12127 = sbr.rel (0) target = $region73
    $region72: #{model_forward.1} parent=1 // pred_region
      _
    $region73: #{model_forward.1} parent=1 // pred_fallthru
      _
    // Predicated region
    $region74: #{model_forward.1} parent=1 // pred_check
      _
    $region75: #{model_forward.1} parent=1 // pred_check_branch
      %12129 = sbr.rel (0) target = $region77
    $region76: #{model_forward.1} parent=1 // pred_region
      _
    $region77: #{model_forward.1} parent=1 // pred_fallthru
      _
    %12130 = vsyncpa [#allocation3], 1
    %12131 = vsyncpa [#allocation5], 1
    %12132 = vsyncpa [#allocation8], 1
    %12133 = vsyncpa [#allocation11], 1
    %12134 = vsyncpa [#allocation14], 1

</llo_original>
